<compile_context>
chip_gen: v5e
topology: v5e:2x2
jax: 0.10.0
libtpu: 0.0.40
codegen_flags: <defaults>
</compile_context>

<pallas_src>
import numpy as np
import jax
import jax.numpy as jnp
from jax import lax
from jax.experimental import pallas as pl
from jax.experimental.pallas import tpu as pltpu


# ---------------------------------------------------------------------------
# Pallas kernel: full AE forward for one image per grid step
# ---------------------------------------------------------------------------
def _mm(a, b):
    return jnp.dot(a, b, preferred_element_type=jnp.float32)


def ae_kernel(x_ref,
              Bec1, bec1, SW1, SH1,
              Bec2, bec2, SW2, SH2,
              Wel1, bel1, Wel2, bel2, Wel3, bel3,
              Wdl1, bdl1, Wdl2, bdl2, Wdl3, bdl3,
              RW1, RH1, Bdc1, bdc1, RW2, RH2, Bdc2, bdc2,
              o_ref, drows):
    relu = lambda v: jnp.maximum(v, 0.0)

    def conv3x3(xpad, B_ref, b_ref, H):
        # xpad: [H+2, W*Cin] (rows 0 / H+1 are zero pad); B_ref: [3, W*Cin, W*Cout]
        acc = _mm(xpad[0:H, :], B_ref[0])
        acc = acc + _mm(xpad[1:H + 1, :], B_ref[1])
        acc = acc + _mm(xpad[2:H + 2, :], B_ref[2])
        return acc + b_ref[...]

    def pool2x2(y, SW_ref, SH_ref):
        # exact 0/1 selectors: max over the 4 corners of each 2x2 window
        m = jnp.maximum(_mm(y, SW_ref[0]), _mm(y, SW_ref[1]))
        return jnp.maximum(_mm(SH_ref[0], m), _mm(SH_ref[1], m))

    def upsample2x(y, RW_ref, RH_ref):
        # nearest-neighbour x2 via replication matrices (RH also adds zero pad rows)
        return _mm(RH_ref[...], _mm(y, RW_ref[...]))

    # ----------------- encoder conv stack -----------------
    x = x_ref[0]                                   # [30, 28]   padded input (Cin=1)
    h = relu(conv3x3(x, Bec1, bec1, 28))           # [28, 28*16]
    h = pool2x2(h, SW1, SH1)                       # [16, 14*16] (vert. padded)
    h = relu(conv3x3(h, Bec2, bec2, 14))           # [14, 14*32]
    p = pool2x2(h, SW2, SH2)                       # [7, 7*32]

    # ----------------- encoder MLP (NCHW flatten folded into Wel1) -----------------
    z = bel1[...]
    for hh in range(7):
        z = z + _mm(p[hh:hh + 1, :], Wel1[hh])     # [1, 256]
    z = relu(z)
    z = relu(_mm(z, Wel2[...]) + bel2[...])        # [1, 128]
    code = _mm(z, Wel3[...]) + bel3[...]           # [1, 10]

    # ----------------- decoder MLP (unflatten folded into Wdl3) -----------------
    z = relu(_mm(code, Wdl1[...]) + bdl1[...])     # [1, 128]
    z = relu(_mm(z, Wdl2[...]) + bdl2[...])        # [1, 256]
    b6 = bdl3[...]                                 # [7, 224]
    for hh in range(7):
        drows[hh:hh + 1, :] = relu(_mm(z, Wdl3[hh]) + b6[hh:hh + 1, :])
    d = drows[...]                                 # [7, 7*32]

    # ----------------- decoder conv stack -----------------
    u = upsample2x(d, RW1, RH1)                    # [16, 14*32] (vert. padded)
    h = relu(conv3x3(u, Bdc1, bdc1, 14))           # [14, 14*16]
    u = upsample2x(h, RW2, RH2)                    # [30, 28*16] (vert. padded)
    y = conv3x3(u, Bdc2, bdc2, 28)                 # [28, 28]
    y = 2.0 * jax.nn.sigmoid(y) - 0.5
    o_ref[0] = y.astype(o_ref.dtype)


# ---------------------------------------------------------------------------
# Wrapper
# ---------------------------------------------------------------------------
def ae_forward(packed, x_nchw):
    N = x_nchw.shape[0]
    assert x_nchw.shape[1:] == (1, 28, 28)
    # only JAX-side glue: vertical zero-pad of the raw input (tiny, single op)
    xpad = jnp.pad(x_nchw.reshape(N, 28, 28), ((0, 0), (1, 1), (0, 0)))  # [N,30,28]

    in_specs = [pl.BlockSpec((1, 30, 28), lambda n: (n, 0, 0))]
    for a in packed:  # whole-array VMEM-resident weight blocks (constant index map)
        shp = a.shape
        in_specs.append(pl.BlockSpec(shp, lambda n, _r=len(shp): (0,) * _r))

    out_specs = pl.BlockSpec((1, 28, 28), lambda n: (n, 0, 0))

    cost = pl.CostEstimate(
        flops=int(N * 4.5e7),
        transcendentals=N * 28 * 28,
        bytes_accessed=int(9.5e6 + N * 4 * (30 * 28 + 28 * 28)),
    )

    out = pl.pallas_call(
        ae_kernel,
        out_shape=jax.ShapeDtypeStruct((N, 28, 28), jnp.float32),
        grid_spec=pltpu.PrefetchScalarGridSpec(
            num_scalar_prefetch=0,
            grid=(N,),
            in_specs=in_specs,
            out_specs=out_specs,
            scratch_shapes=[pltpu.VMEM((7, 224), jnp.float32)],
        ),
        compiler_params=pltpu.CompilerParams(
            dimension_semantics=("parallel",),      # v7x: shard images over 2 TCs
            vmem_limit_bytes=40 * 1024 * 1024,      # ~19 MiB actually used
        ),
        cost_estimate=cost,
    )(xpad, *packed)
    return out.reshape(N, 1, 28, 28)


# ---------------------------------------------------------------------------
# Parameter init (PyTorch layouts) and packing into kernel operands
# ---------------------------------------------------------------------------
def init_torch_params(key):
    ks = jax.random.split(key, 20)

    def u(k, shape, fan_in):
        b = 1.0 / np.sqrt(fan_in)
        return jax.random.uniform(k, shape, jnp.float32, -b, b)

    p = {}
    p["ec1_w"] = u(ks[0], (16, 1, 3, 3), 9);        p["ec1_b"] = u(ks[1], (16,), 9)
    p["ec2_w"] = u(ks[2], (32, 16, 3, 3), 144);     p["ec2_b"] = u(ks[3], (32,), 144)
    p["el1_w"] = u(ks[4], (256, 1568), 1568);       p["el1_b"] = u(ks[5], (256,), 1568)
    p["el2_w"] = u(ks[6], (128, 256), 256);         p["el2_b"] = u(ks[7], (128,), 256)
    p["el3_w"] = u(ks[8], (10, 128), 128);          p["el3_b"] = u(ks[9], (10,), 128)
    p["dl1_w"] = u(ks[10], (128, 10), 10);          p["dl1_b"] = u(ks[11], (128,), 10)
    p["dl2_w"] = u(ks[12], (256, 128), 128);        p["dl2_b"] = u(ks[13], (256,), 128)
    p["dl3_w"] = u(ks[14], (1568, 256), 256);       p["dl3_b"] = u(ks[15], (1568,), 256)
    p["dc1_w"] = u(ks[16], (16, 32, 3, 3), 288);    p["dc1_b"] = u(ks[17], (16,), 288)
    p["dc2_w"] = u(ks[18], (1, 16, 3, 3), 144);     p["dc2_b"] = u(ks[19], (1,), 144)
    return p


def _conv_band(Wt, Win):
    """torch conv weight [co,ci,3,3] -> band matrices B[ky]: [Win*ci, Win*co]."""
    co, ci = Wt.shape[0], Wt.shape[1]
    B = np.zeros((3, Win * ci, Win * co), np.float32)
    for ky in range(3):
        for w in range(Win):
            for kx in range(3):
                w_in = w + kx - 1
                if 0 <= w_in < Win:
                    B[ky, w_in * ci:(w_in + 1) * ci, w * co:(w + 1) * co] = Wt[:, :, ky, kx].T
    return B


def _pool_w(W, C):
    S = np.zeros((2, W * C, (W // 2) * C), np.float32)
    eye = np.eye(C, dtype=np.float32)
    for pw in range(2):
        for j in range(W // 2):
            w = 2 * j + pw
            S[pw, w * C:(w + 1) * C, j * C:(j + 1) * C] = eye
    return S


def _pool_h(H, pad):
    rows = H // 2 + (2 if pad else 0)
    off = 1 if pad else 0
    S = np.zeros((2, rows, H), np.float32)
    for ph in range(2):
        for i in range(H // 2):
            S[ph, i + off, 2 * i + ph] = 1.0
    return S


def _up_w(W, C):
    R = np.zeros((W * C, 2 * W * C), np.float32)
    eye = np.eye(C, dtype=np.float32)
    for w2 in range(2 * W):
        w = w2 // 2
        R[w * C:(w + 1) * C, w2 * C:(w2 + 1) * C] = eye
    return R


def _up_h_pad(H):
    R = np.zeros((2 * H + 2, H), np.float32)
    for r in range(1, 2 * H + 1):
        R[r, (r - 1) // 2] = 1.0
    return R


def pack_params(tw):
    t = {k: np.asarray(v, np.float32) for k, v in tw.items()}

    # NCHW flat index for element (h, w, c): c*49 + h*7 + w  (torch .view order)
    hh, ww, cc = np.meshgrid(np.arange(7), np.arange(7), np.arange(32), indexing="ij")
    idx = (cc * 49 + hh * 7 + ww).reshape(7, 7 * 32)          # [7, (w*32+c)]

    Wel1 = t["el1_w"].T[idx]                                  # [7, 224, 256]
    Wdl3 = np.transpose(t["dl3_w"][idx], (0, 2, 1))           # [7, 256, 224]
    bdl3 = t["dl3_b"][idx]                                    # [7, 224]

    packed = [
        _conv_band(t["ec1_w"], 28), np.tile(t["ec1_b"], 28)[None, :],
        _pool_w(28, 16), _pool_h(28, pad=True),
        _conv_band(t["ec2_w"], 14), np.tile(t["ec2_b"], 14)[None, :],
        _pool_w(14, 32), _pool_h(14, pad=False),
        Wel1, t["el1_b"][None, :],
        t["el2_w"].T, t["el2_b"][None, :],
        t["el3_w"].T, t["el3_b"][None, :],
        t["dl1_w"].T, t["dl1_b"][None, :],
        t["dl2_w"].T, t["dl2_b"][None, :],
        Wdl3, bdl3,
        _up_w(7, 32), _up_h_pad(7),
        _conv_band(t["dc1_w"], 14), np.tile(t["dc1_b"], 14)[None, :],
        _up_w(14, 16), _up_h_pad(14),
        _conv_band(t["dc2_w"], 28), np.tile(t["dc2_b"], 28)[None, :],
    ]
    return tuple(jnp.asarray(a, jnp.float32) for a in packed)


# ---------------------------------------------------------------------------
# Pure-JAX reference (mirrors the PyTorch module) for runtime validation
# ---------------------------------------------------------------------------
def ae_reference(tw, x):
    P = lax.Precision.HIGHEST

    def conv(h, W, b):
        y = lax.conv_general_dilated(h, W, (1, 1), ((1, 1), (1, 1)),
                                     dimension_numbers=("NCHW", "OIHW", "NCHW"),
                                     precision=P)
        return y + b.reshape(1, -1, 1, 1)

    def pool(h):
        return lax.reduce_window(h, -jnp.inf, lax.max, (1, 1, 2, 2), (1, 1, 2, 2), "VALID")

    def up(h):
        return jnp.repeat(jnp.repeat(h, 2, axis=2), 2, axis=3)

    def lin(h, W, b):
        return jnp.dot(h, W.T, precision=P) + b

    N = x.shape[0]
    h = pool(jax.nn.relu(conv(x, tw["ec1_w"], tw["ec1_b"])))
    h = pool(jax.nn.relu(conv(h, tw["ec2_w"], tw["ec2_b"])))
    h = h.reshape(N, 32 * 7 * 7)
    h = jax.nn.relu(lin(h, tw["el1_w"], tw["el1_b"]))
    h = jax.nn.relu(lin(h, tw["el2_w"], tw["el2_b"]))
    code = lin(h, tw["el3_w"], tw["el3_b"])
    h = jax.nn.relu(lin(code, tw["dl1_w"], tw["dl1_b"]))
    h = jax.nn.relu(lin(h, tw["dl2_w"], tw["dl2_b"]))
    h = jax.nn.relu(lin(h, tw["dl3_w"], tw["dl3_b"]))
    h = h.reshape(N, 32, 7, 7)
    h = jax.nn.relu(conv(up(h), tw["dc1_w"], tw["dc1_b"]))
    h = conv(up(h), tw["dc2_w"], tw["dc2_b"])
    return 2.0 * jax.nn.sigmoid(h) - 0.5


# ---------------------------------------------------------------------------
if __name__ == "__main__":
    key = jax.random.PRNGKey(0)
    kx, kp = jax.random.split(key)
    # the AE architecture hard-codes 28x28 inputs (32*7*7 flatten); batch = 2
    x = jax.random.uniform(kx, (2, 1, 28, 28), dtype=jnp.float32)
    tw = init_torch_params(kp)
    packed = pack_params(tw)

    y = jax.jit(ae_forward)(packed, x)
    y = jax.block_until_ready(y)

    assert y.shape == (2, 1, 28, 28), y.shape
    assert y.dtype == jnp.float32
    assert bool(jnp.all(jnp.isfinite(y)))

    y_ref = jax.block_until_ready(jax.jit(ae_reference)(tw, x))
    assert bool(jnp.allclose(y, y_ref, atol=2e-2, rtol=2e-2)), \
        float(jnp.max(jnp.abs(y - y_ref)))

    print("KERNEL_OK")
</pallas_src>

<mosaic_0001>
module attributes {stable_mosaic.version = 11 : i64} {
  func.func @ae_kernel(%arg0: i32, %arg1: memref<1x30x28xf32, #tpu.memory_space<vmem>>, %arg2: memref<3x28x448xf32, #tpu.memory_space<vmem>>, %arg3: memref<1x448xf32, #tpu.memory_space<vmem>>, %arg4: memref<2x448x224xf32, #tpu.memory_space<vmem>>, %arg5: memref<2x16x28xf32, #tpu.memory_space<vmem>>, %arg6: memref<3x224x448xf32, #tpu.memory_space<vmem>>, %arg7: memref<1x448xf32, #tpu.memory_space<vmem>>, %arg8: memref<2x448x224xf32, #tpu.memory_space<vmem>>, %arg9: memref<2x7x14xf32, #tpu.memory_space<vmem>>, %arg10: memref<7x224x256xf32, #tpu.memory_space<vmem>>, %arg11: memref<1x256xf32, #tpu.memory_space<vmem>>, %arg12: memref<256x128xf32, #tpu.memory_space<vmem>>, %arg13: memref<1x128xf32, #tpu.memory_space<vmem>>, %arg14: memref<128x10xf32, #tpu.memory_space<vmem>>, %arg15: memref<1x10xf32, #tpu.memory_space<vmem>>, %arg16: memref<10x128xf32, #tpu.memory_space<vmem>>, %arg17: memref<1x128xf32, #tpu.memory_space<vmem>>, %arg18: memref<128x256xf32, #tpu.memory_space<vmem>>, %arg19: memref<1x256xf32, #tpu.memory_space<vmem>>, %arg20: memref<7x256x224xf32, #tpu.memory_space<vmem>>, %arg21: memref<7x224xf32, #tpu.memory_space<vmem>>, %arg22: memref<224x448xf32, #tpu.memory_space<vmem>>, %arg23: memref<16x7xf32, #tpu.memory_space<vmem>>, %arg24: memref<3x448x224xf32, #tpu.memory_space<vmem>>, %arg25: memref<1x224xf32, #tpu.memory_space<vmem>>, %arg26: memref<224x448xf32, #tpu.memory_space<vmem>>, %arg27: memref<30x14xf32, #tpu.memory_space<vmem>>, %arg28: memref<3x448x28xf32, #tpu.memory_space<vmem>>, %arg29: memref<1x28xf32, #tpu.memory_space<vmem>>, %arg30: memref<1x28x28xf32, #tpu.memory_space<vmem>>, %arg31: memref<7x224xf32, #tpu.memory_space<vmem>>) attributes {dimension_semantics = [#tpu.dimension_semantics<parallel>], iteration_bounds = array<i64: 2>, scalar_prefetch = 0 : i64, scratch_operands = 1 : i64, tpu.core_type = #tpu.core_type<tc>, window_params = [{transform_indices = @transform_0, window_bounds = array<i64: 1, 30, 28>}, {pipeline_mode = #tpu.pipeline_mode<synchronous>, transform_indices = @transform_1, window_bounds = array<i64: 3, 28, 448>}, {pipeline_mode = #tpu.pipeline_mode<synchronous>, transform_indices = @transform_2, window_bounds = array<i64: 1, 448>}, {pipeline_mode = #tpu.pipeline_mode<synchronous>, transform_indices = @transform_3, window_bounds = array<i64: 2, 448, 224>}, {pipeline_mode = #tpu.pipeline_mode<synchronous>, transform_indices = @transform_4, window_bounds = array<i64: 2, 16, 28>}, {pipeline_mode = #tpu.pipeline_mode<synchronous>, transform_indices = @transform_5, window_bounds = array<i64: 3, 224, 448>}, {pipeline_mode = #tpu.pipeline_mode<synchronous>, transform_indices = @transform_6, window_bounds = array<i64: 1, 448>}, {pipeline_mode = #tpu.pipeline_mode<synchronous>, transform_indices = @transform_7, window_bounds = array<i64: 2, 448, 224>}, {pipeline_mode = #tpu.pipeline_mode<synchronous>, transform_indices = @transform_8, window_bounds = array<i64: 2, 7, 14>}, {pipeline_mode = #tpu.pipeline_mode<synchronous>, transform_indices = @transform_9, window_bounds = array<i64: 7, 224, 256>}, {pipeline_mode = #tpu.pipeline_mode<synchronous>, transform_indices = @transform_10, window_bounds = array<i64: 1, 256>}, {pipeline_mode = #tpu.pipeline_mode<synchronous>, transform_indices = @transform_11, window_bounds = array<i64: 256, 128>}, {pipeline_mode = #tpu.pipeline_mode<synchronous>, transform_indices = @transform_12, window_bounds = array<i64: 1, 128>}, {pipeline_mode = #tpu.pipeline_mode<synchronous>, transform_indices = @transform_13, window_bounds = array<i64: 128, 10>}, {pipeline_mode = #tpu.pipeline_mode<synchronous>, transform_indices = @transform_14, window_bounds = array<i64: 1, 10>}, {pipeline_mode = #tpu.pipeline_mode<synchronous>, transform_indices = @transform_15, window_bounds = array<i64: 10, 128>}, {pipeline_mode = #tpu.pipeline_mode<synchronous>, transform_indices = @transform_16, window_bounds = array<i64: 1, 128>}, {pipeline_mode = #tpu.pipeline_mode<synchronous>, transform_indices = @transform_17, window_bounds = array<i64: 128, 256>}, {pipeline_mode = #tpu.pipeline_mode<synchronous>, transform_indices = @transform_18, window_bounds = array<i64: 1, 256>}, {pipeline_mode = #tpu.pipeline_mode<synchronous>, transform_indices = @transform_19, window_bounds = array<i64: 7, 256, 224>}, {pipeline_mode = #tpu.pipeline_mode<synchronous>, transform_indices = @transform_20, window_bounds = array<i64: 7, 224>}, {pipeline_mode = #tpu.pipeline_mode<synchronous>, transform_indices = @transform_21, window_bounds = array<i64: 224, 448>}, {pipeline_mode = #tpu.pipeline_mode<synchronous>, transform_indices = @transform_22, window_bounds = array<i64: 16, 7>}, {pipeline_mode = #tpu.pipeline_mode<synchronous>, transform_indices = @transform_23, window_bounds = array<i64: 3, 448, 224>}, {pipeline_mode = #tpu.pipeline_mode<synchronous>, transform_indices = @transform_24, window_bounds = array<i64: 1, 224>}, {pipeline_mode = #tpu.pipeline_mode<synchronous>, transform_indices = @transform_25, window_bounds = array<i64: 224, 448>}, {pipeline_mode = #tpu.pipeline_mode<synchronous>, transform_indices = @transform_26, window_bounds = array<i64: 30, 14>}, {pipeline_mode = #tpu.pipeline_mode<synchronous>, transform_indices = @transform_27, window_bounds = array<i64: 3, 448, 28>}, {pipeline_mode = #tpu.pipeline_mode<synchronous>, transform_indices = @transform_28, window_bounds = array<i64: 1, 28>}, {transform_indices = @transform_29, window_bounds = array<i64: 1, 28, 28>}]} {
    %c0 = arith.constant 0 : index
    %c0_0 = arith.constant 0 : index
    %c0_1 = arith.constant 0 : index
    %0 = vector.load %arg1[%c0, %c0_0, %c0_1] : memref<1x30x28xf32, #tpu.memory_space<vmem>>, vector<1x30x28xf32>
    %1 = vector.shape_cast %0 : vector<1x30x28xf32> to vector<30x28xf32>
    %2 = vector.extract_strided_slice %1 {offsets = [0, 0], sizes = [28, 28], strides = [1, 1]} : vector<30x28xf32> to vector<28x28xf32>
    %c0_2 = arith.constant 0 : index
    %c0_3 = arith.constant 0 : index
    %c0_4 = arith.constant 0 : index
    %3 = vector.load %arg2[%c0_2, %c0_3, %c0_4] : memref<3x28x448xf32, #tpu.memory_space<vmem>>, vector<1x28x448xf32>
    %4 = vector.shape_cast %3 : vector<1x28x448xf32> to vector<28x448xf32>
    %cst = arith.constant dense<0.000000e+00> : vector<28x448xf32>
    %5 = tpu.matmul %2, %4, %cst {dimension_numbers = #tpu.dot_dimension_numbers<[1], [0], [0], [1], [0, 0, 1, 1], [], []>} : vector<28x28xf32>, vector<28x448xf32>, vector<28x448xf32> -> vector<28x448xf32>
    %6 = vector.extract_strided_slice %1 {offsets = [1, 0], sizes = [28, 28], strides = [1, 1]} : vector<30x28xf32> to vector<28x28xf32>
    %c1 = arith.constant 1 : index
    %c0_5 = arith.constant 0 : index
    %c0_6 = arith.constant 0 : index
    %7 = vector.load %arg2[%c1, %c0_5, %c0_6] : memref<3x28x448xf32, #tpu.memory_space<vmem>>, vector<1x28x448xf32>
    %8 = vector.shape_cast %7 : vector<1x28x448xf32> to vector<28x448xf32>
    %cst_7 = arith.constant dense<0.000000e+00> : vector<28x448xf32>
    %9 = tpu.matmul %6, %8, %cst_7 {dimension_numbers = #tpu.dot_dimension_numbers<[1], [0], [0], [1], [0, 0, 1, 1], [], []>} : vector<28x28xf32>, vector<28x448xf32>, vector<28x448xf32> -> vector<28x448xf32>
    %10 = arith.addf %5, %9 : vector<28x448xf32>
    %11 = vector.extract_strided_slice %1 {offsets = [2, 0], sizes = [28, 28], strides = [1, 1]} : vector<30x28xf32> to vector<28x28xf32>
    %c2 = arith.constant 2 : index
    %c0_8 = arith.constant 0 : index
    %c0_9 = arith.constant 0 : index
    %12 = vector.load %arg2[%c2, %c0_8, %c0_9] : memref<3x28x448xf32, #tpu.memory_space<vmem>>, vector<1x28x448xf32>
    %13 = vector.shape_cast %12 : vector<1x28x448xf32> to vector<28x448xf32>
    %cst_10 = arith.constant dense<0.000000e+00> : vector<28x448xf32>
    %14 = tpu.matmul %11, %13, %cst_10 {dimension_numbers = #tpu.dot_dimension_numbers<[1], [0], [0], [1], [0, 0, 1, 1], [], []>} : vector<28x28xf32>, vector<28x448xf32>, vector<28x448xf32> -> vector<28x448xf32>
    %15 = arith.addf %10, %14 : vector<28x448xf32>
    %c0_11 = arith.constant 0 : index
    %c0_12 = arith.constant 0 : index
    %16 = vector.load %arg3[%c0_11, %c0_12] : memref<1x448xf32, #tpu.memory_space<vmem>>, vector<1x448xf32>
    %17 = vector.broadcast %16 : vector<1x448xf32> to vector<28x448xf32>
    %18 = arith.addf %15, %17 : vector<28x448xf32>
    %cst_13 = arith.constant 0.000000e+00 : f32
    %19 = vector.broadcast %cst_13 : f32 to vector<28x448xf32>
    %20 = arith.maximumf %18, %19 : vector<28x448xf32>
    %c0_14 = arith.constant 0 : index
    %c0_15 = arith.constant 0 : index
    %c0_16 = arith.constant 0 : index
    %21 = vector.load %arg4[%c0_14, %c0_15, %c0_16] : memref<2x448x224xf32, #tpu.memory_space<vmem>>, vector<1x448x224xf32>
    %22 = vector.shape_cast %21 : vector<1x448x224xf32> to vector<448x224xf32>
    %cst_17 = arith.constant dense<0.000000e+00> : vector<28x224xf32>
    %23 = tpu.matmul %20, %22, %cst_17 {dimension_numbers = #tpu.dot_dimension_numbers<[1], [0], [0], [1], [0, 0, 1, 1], [], []>} : vector<28x448xf32>, vector<448x224xf32>, vector<28x224xf32> -> vector<28x224xf32>
    %c1_18 = arith.constant 1 : index
    %c0_19 = arith.constant 0 : index
    %c0_20 = arith.constant 0 : index
    %24 = vector.load %arg4[%c1_18, %c0_19, %c0_20] : memref<2x448x224xf32, #tpu.memory_space<vmem>>, vector<1x448x224xf32>
    %25 = vector.shape_cast %24 : vector<1x448x224xf32> to vector<448x224xf32>
    %cst_21 = arith.constant dense<0.000000e+00> : vector<28x224xf32>
    %26 = tpu.matmul %20, %25, %cst_21 {dimension_numbers = #tpu.dot_dimension_numbers<[1], [0], [0], [1], [0, 0, 1, 1], [], []>} : vector<28x448xf32>, vector<448x224xf32>, vector<28x224xf32> -> vector<28x224xf32>
    %27 = arith.maximumf %23, %26 : vector<28x224xf32>
    %c0_22 = arith.constant 0 : index
    %c0_23 = arith.constant 0 : index
    %c0_24 = arith.constant 0 : index
    %28 = vector.load %arg5[%c0_22, %c0_23, %c0_24] : memref<2x16x28xf32, #tpu.memory_space<vmem>>, vector<1x16x28xf32>
    %29 = vector.shape_cast %28 : vector<1x16x28xf32> to vector<16x28xf32>
    %cst_25 = arith.constant dense<0.000000e+00> : vector<16x224xf32>
    %30 = tpu.matmul %29, %27, %cst_25 {dimension_numbers = #tpu.dot_dimension_numbers<[1], [0], [0], [1], [0, 0, 1, 1], [], []>} : vector<16x28xf32>, vector<28x224xf32>, vector<16x224xf32> -> vector<16x224xf32>
    %c1_26 = arith.constant 1 : index
    %c0_27 = arith.constant 0 : index
    %c0_28 = arith.constant 0 : index
    %31 = vector.load %arg5[%c1_26, %c0_27, %c0_28] : memref<2x16x28xf32, #tpu.memory_space<vmem>>, vector<1x16x28xf32>
    %32 = vector.shape_cast %31 : vector<1x16x28xf32> to vector<16x28xf32>
    %cst_29 = arith.constant dense<0.000000e+00> : vector<16x224xf32>
    %33 = tpu.matmul %32, %27, %cst_29 {dimension_numbers = #tpu.dot_dimension_numbers<[1], [0], [0], [1], [0, 0, 1, 1], [], []>} : vector<16x28xf32>, vector<28x224xf32>, vector<16x224xf32> -> vector<16x224xf32>
    %34 = arith.maximumf %30, %33 : vector<16x224xf32>
    %35 = vector.extract_strided_slice %34 {offsets = [0, 0], sizes = [14, 224], strides = [1, 1]} : vector<16x224xf32> to vector<14x224xf32>
    %c0_30 = arith.constant 0 : index
    %c0_31 = arith.constant 0 : index
    %c0_32 = arith.constant 0 : index
    %36 = vector.load %arg6[%c0_30, %c0_31, %c0_32] : memref<3x224x448xf32, #tpu.memory_space<vmem>>, vector<1x224x448xf32>
    %37 = vector.shape_cast %36 : vector<1x224x448xf32> to vector<224x448xf32>
    %cst_33 = arith.constant dense<0.000000e+00> : vector<14x448xf32>
    %38 = tpu.matmul %35, %37, %cst_33 {dimension_numbers = #tpu.dot_dimension_numbers<[1], [0], [0], [1], [0, 0, 1, 1], [], []>} : vector<14x224xf32>, vector<224x448xf32>, vector<14x448xf32> -> vector<14x448xf32>
    %39 = vector.extract_strided_slice %34 {offsets = [1, 0], sizes = [14, 224], strides = [1, 1]} : vector<16x224xf32> to vector<14x224xf32>
    %c1_34 = arith.constant 1 : index
    %c0_35 = arith.constant 0 : index
    %c0_36 = arith.constant 0 : index
    %40 = vector.load %arg6[%c1_34, %c0_35, %c0_36] : memref<3x224x448xf32, #tpu.memory_space<vmem>>, vector<1x224x448xf32>
    %41 = vector.shape_cast %40 : vector<1x224x448xf32> to vector<224x448xf32>
    %cst_37 = arith.constant dense<0.000000e+00> : vector<14x448xf32>
    %42 = tpu.matmul %39, %41, %cst_37 {dimension_numbers = #tpu.dot_dimension_numbers<[1], [0], [0], [1], [0, 0, 1, 1], [], []>} : vector<14x224xf32>, vector<224x448xf32>, vector<14x448xf32> -> vector<14x448xf32>
    %43 = arith.addf %38, %42 : vector<14x448xf32>
    %44 = vector.extract_strided_slice %34 {offsets = [2, 0], sizes = [14, 224], strides = [1, 1]} : vector<16x224xf32> to vector<14x224xf32>
    %c2_38 = arith.constant 2 : index
    %c0_39 = arith.constant 0 : index
    %c0_40 = arith.constant 0 : index
    %45 = vector.load %arg6[%c2_38, %c0_39, %c0_40] : memref<3x224x448xf32, #tpu.memory_space<vmem>>, vector<1x224x448xf32>
    %46 = vector.shape_cast %45 : vector<1x224x448xf32> to vector<224x448xf32>
    %cst_41 = arith.constant dense<0.000000e+00> : vector<14x448xf32>
    %47 = tpu.matmul %44, %46, %cst_41 {dimension_numbers = #tpu.dot_dimension_numbers<[1], [0], [0], [1], [0, 0, 1, 1], [], []>} : vector<14x224xf32>, vector<224x448xf32>, vector<14x448xf32> -> vector<14x448xf32>
    %48 = arith.addf %43, %47 : vector<14x448xf32>
    %c0_42 = arith.constant 0 : index
    %c0_43 = arith.constant 0 : index
    %49 = vector.load %arg7[%c0_42, %c0_43] : memref<1x448xf32, #tpu.memory_space<vmem>>, vector<1x448xf32>
    %50 = vector.broadcast %49 : vector<1x448xf32> to vector<14x448xf32>
    %51 = arith.addf %48, %50 : vector<14x448xf32>
    %cst_44 = arith.constant 0.000000e+00 : f32
    %52 = vector.broadcast %cst_44 : f32 to vector<14x448xf32>
    %53 = arith.maximumf %51, %52 : vector<14x448xf32>
    %c0_45 = arith.constant 0 : index
    %c0_46 = arith.constant 0 : index
    %c0_47 = arith.constant 0 : index
    %54 = vector.load %arg8[%c0_45, %c0_46, %c0_47] : memref<2x448x224xf32, #tpu.memory_space<vmem>>, vector<1x448x224xf32>
    %55 = vector.shape_cast %54 : vector<1x448x224xf32> to vector<448x224xf32>
    %cst_48 = arith.constant dense<0.000000e+00> : vector<14x224xf32>
    %56 = tpu.matmul %53, %55, %cst_48 {dimension_numbers = #tpu.dot_dimension_numbers<[1], [0], [0], [1], [0, 0, 1, 1], [], []>} : vector<14x448xf32>, vector<448x224xf32>, vector<14x224xf32> -> vector<14x224xf32>
    %c1_49 = arith.constant 1 : index
    %c0_50 = arith.constant 0 : index
    %c0_51 = arith.constant 0 : index
    %57 = vector.load %arg8[%c1_49, %c0_50, %c0_51] : memref<2x448x224xf32, #tpu.memory_space<vmem>>, vector<1x448x224xf32>
    %58 = vector.shape_cast %57 : vector<1x448x224xf32> to vector<448x224xf32>
    %cst_52 = arith.constant dense<0.000000e+00> : vector<14x224xf32>
    %59 = tpu.matmul %53, %58, %cst_52 {dimension_numbers = #tpu.dot_dimension_numbers<[1], [0], [0], [1], [0, 0, 1, 1], [], []>} : vector<14x448xf32>, vector<448x224xf32>, vector<14x224xf32> -> vector<14x224xf32>
    %60 = arith.maximumf %56, %59 : vector<14x224xf32>
    %c0_53 = arith.constant 0 : index
    %c0_54 = arith.constant 0 : index
    %c0_55 = arith.constant 0 : index
    %61 = vector.load %arg9[%c0_53, %c0_54, %c0_55] : memref<2x7x14xf32, #tpu.memory_space<vmem>>, vector<1x7x14xf32>
    %62 = vector.shape_cast %61 : vector<1x7x14xf32> to vector<7x14xf32>
    %cst_56 = arith.constant dense<0.000000e+00> : vector<7x224xf32>
    %63 = tpu.matmul %62, %60, %cst_56 {dimension_numbers = #tpu.dot_dimension_numbers<[1], [0], [0], [1], [0, 0, 1, 1], [], []>} : vector<7x14xf32>, vector<14x224xf32>, vector<7x224xf32> -> vector<7x224xf32>
    %c1_57 = arith.constant 1 : index
    %c0_58 = arith.constant 0 : index
    %c0_59 = arith.constant 0 : index
    %64 = vector.load %arg9[%c1_57, %c0_58, %c0_59] : memref<2x7x14xf32, #tpu.memory_space<vmem>>, vector<1x7x14xf32>
    %65 = vector.shape_cast %64 : vector<1x7x14xf32> to vector<7x14xf32>
    %cst_60 = arith.constant dense<0.000000e+00> : vector<7x224xf32>
    %66 = tpu.matmul %65, %60, %cst_60 {dimension_numbers = #tpu.dot_dimension_numbers<[1], [0], [0], [1], [0, 0, 1, 1], [], []>} : vector<7x14xf32>, vector<14x224xf32>, vector<7x224xf32> -> vector<7x224xf32>
    %67 = arith.maximumf %63, %66 : vector<7x224xf32>
    %c0_61 = arith.constant 0 : index
    %c0_62 = arith.constant 0 : index
    %68 = vector.load %arg11[%c0_61, %c0_62] : memref<1x256xf32, #tpu.memory_space<vmem>>, vector<1x256xf32>
    %69 = vector.extract_strided_slice %67 {offsets = [0, 0], sizes = [1, 224], strides = [1, 1]} : vector<7x224xf32> to vector<1x224xf32>
    %c0_63 = arith.constant 0 : index
    %c0_64 = arith.constant 0 : index
    %c0_65 = arith.constant 0 : index
    %70 = vector.load %arg10[%c0_63, %c0_64, %c0_65] : memref<7x224x256xf32, #tpu.memory_space<vmem>>, vector<1x224x256xf32>
    %71 = vector.shape_cast %70 : vector<1x224x256xf32> to vector<224x256xf32>
    %cst_66 = arith.constant dense<0.000000e+00> : vector<1x256xf32>
    %72 = tpu.matmul %69, %71, %cst_66 {dimension_numbers = #tpu.dot_dimension_numbers<[1], [0], [0], [1], [0, 0, 1, 1], [], []>} : vector<1x224xf32>, vector<224x256xf32>, vector<1x256xf32> -> vector<1x256xf32>
    %73 = arith.addf %68, %72 : vector<1x256xf32>
    %74 = vector.extract_strided_slice %67 {offsets = [1, 0], sizes = [1, 224], strides = [1, 1]} : vector<7x224xf32> to vector<1x224xf32>
    %c1_67 = arith.constant 1 : index
    %c0_68 = arith.constant 0 : index
    %c0_69 = arith.constant 0 : index
    %75 = vector.load %arg10[%c1_67, %c0_68, %c0_69] : memref<7x224x256xf32, #tpu.memory_space<vmem>>, vector<1x224x256xf32>
    %76 = vector.shape_cast %75 : vector<1x224x256xf32> to vector<224x256xf32>
    %cst_70 = arith.constant dense<0.000000e+00> : vector<1x256xf32>
    %77 = tpu.matmul %74, %76, %cst_70 {dimension_numbers = #tpu.dot_dimension_numbers<[1], [0], [0], [1], [0, 0, 1, 1], [], []>} : vector<1x224xf32>, vector<224x256xf32>, vector<1x256xf32> -> vector<1x256xf32>
    %78 = arith.addf %73, %77 : vector<1x256xf32>
    %79 = vector.extract_strided_slice %67 {offsets = [2, 0], sizes = [1, 224], strides = [1, 1]} : vector<7x224xf32> to vector<1x224xf32>
    %c2_71 = arith.constant 2 : index
    %c0_72 = arith.constant 0 : index
    %c0_73 = arith.constant 0 : index
    %80 = vector.load %arg10[%c2_71, %c0_72, %c0_73] : memref<7x224x256xf32, #tpu.memory_space<vmem>>, vector<1x224x256xf32>
    %81 = vector.shape_cast %80 : vector<1x224x256xf32> to vector<224x256xf32>
    %cst_74 = arith.constant dense<0.000000e+00> : vector<1x256xf32>
    %82 = tpu.matmul %79, %81, %cst_74 {dimension_numbers = #tpu.dot_dimension_numbers<[1], [0], [0], [1], [0, 0, 1, 1], [], []>} : vector<1x224xf32>, vector<224x256xf32>, vector<1x256xf32> -> vector<1x256xf32>
    %83 = arith.addf %78, %82 : vector<1x256xf32>
    %84 = vector.extract_strided_slice %67 {offsets = [3, 0], sizes = [1, 224], strides = [1, 1]} : vector<7x224xf32> to vector<1x224xf32>
    %c3 = arith.constant 3 : index
    %c0_75 = arith.constant 0 : index
    %c0_76 = arith.constant 0 : index
    %85 = vector.load %arg10[%c3, %c0_75, %c0_76] : memref<7x224x256xf32, #tpu.memory_space<vmem>>, vector<1x224x256xf32>
    %86 = vector.shape_cast %85 : vector<1x224x256xf32> to vector<224x256xf32>
    %cst_77 = arith.constant dense<0.000000e+00> : vector<1x256xf32>
    %87 = tpu.matmul %84, %86, %cst_77 {dimension_numbers = #tpu.dot_dimension_numbers<[1], [0], [0], [1], [0, 0, 1, 1], [], []>} : vector<1x224xf32>, vector<224x256xf32>, vector<1x256xf32> -> vector<1x256xf32>
    %88 = arith.addf %83, %87 : vector<1x256xf32>
    %89 = vector.extract_strided_slice %67 {offsets = [4, 0], sizes = [1, 224], strides = [1, 1]} : vector<7x224xf32> to vector<1x224xf32>
    %c4 = arith.constant 4 : index
    %c0_78 = arith.constant 0 : index
    %c0_79 = arith.constant 0 : index
    %90 = vector.load %arg10[%c4, %c0_78, %c0_79] : memref<7x224x256xf32, #tpu.memory_space<vmem>>, vector<1x224x256xf32>
    %91 = vector.shape_cast %90 : vector<1x224x256xf32> to vector<224x256xf32>
    %cst_80 = arith.constant dense<0.000000e+00> : vector<1x256xf32>
    %92 = tpu.matmul %89, %91, %cst_80 {dimension_numbers = #tpu.dot_dimension_numbers<[1], [0], [0], [1], [0, 0, 1, 1], [], []>} : vector<1x224xf32>, vector<224x256xf32>, vector<1x256xf32> -> vector<1x256xf32>
    %93 = arith.addf %88, %92 : vector<1x256xf32>
    %94 = vector.extract_strided_slice %67 {offsets = [5, 0], sizes = [1, 224], strides = [1, 1]} : vector<7x224xf32> to vector<1x224xf32>
    %c5 = arith.constant 5 : index
    %c0_81 = arith.constant 0 : index
    %c0_82 = arith.constant 0 : index
    %95 = vector.load %arg10[%c5, %c0_81, %c0_82] : memref<7x224x256xf32, #tpu.memory_space<vmem>>, vector<1x224x256xf32>
    %96 = vector.shape_cast %95 : vector<1x224x256xf32> to vector<224x256xf32>
    %cst_83 = arith.constant dense<0.000000e+00> : vector<1x256xf32>
    %97 = tpu.matmul %94, %96, %cst_83 {dimension_numbers = #tpu.dot_dimension_numbers<[1], [0], [0], [1], [0, 0, 1, 1], [], []>} : vector<1x224xf32>, vector<224x256xf32>, vector<1x256xf32> -> vector<1x256xf32>
    %98 = arith.addf %93, %97 : vector<1x256xf32>
    %99 = vector.extract_strided_slice %67 {offsets = [6, 0], sizes = [1, 224], strides = [1, 1]} : vector<7x224xf32> to vector<1x224xf32>
    %c6 = arith.constant 6 : index
    %c0_84 = arith.constant 0 : index
    %c0_85 = arith.constant 0 : index
    %100 = vector.load %arg10[%c6, %c0_84, %c0_85] : memref<7x224x256xf32, #tpu.memory_space<vmem>>, vector<1x224x256xf32>
    %101 = vector.shape_cast %100 : vector<1x224x256xf32> to vector<224x256xf32>
    %cst_86 = arith.constant dense<0.000000e+00> : vector<1x256xf32>
    %102 = tpu.matmul %99, %101, %cst_86 {dimension_numbers = #tpu.dot_dimension_numbers<[1], [0], [0], [1], [0, 0, 1, 1], [], []>} : vector<1x224xf32>, vector<224x256xf32>, vector<1x256xf32> -> vector<1x256xf32>
    %103 = arith.addf %98, %102 : vector<1x256xf32>
    %cst_87 = arith.constant 0.000000e+00 : f32
    %104 = vector.broadcast %cst_87 : f32 to vector<1x256xf32>
    %105 = arith.maximumf %103, %104 : vector<1x256xf32>
    %c0_88 = arith.constant 0 : index
    %c0_89 = arith.constant 0 : index
    %106 = vector.load %arg12[%c0_88, %c0_89] : memref<256x128xf32, #tpu.memory_space<vmem>>, vector<256x128xf32>
    %cst_90 = arith.constant dense<0.000000e+00> : vector<1x128xf32>
    %107 = tpu.matmul %105, %106, %cst_90 {dimension_numbers = #tpu.dot_dimension_numbers<[1], [0], [0], [1], [0, 0, 1, 1], [], []>} : vector<1x256xf32>, vector<256x128xf32>, vector<1x128xf32> -> vector<1x128xf32>
    %c0_91 = arith.constant 0 : index
    %c0_92 = arith.constant 0 : index
    %108 = vector.load %arg13[%c0_91, %c0_92] : memref<1x128xf32, #tpu.memory_space<vmem>>, vector<1x128xf32>
    %109 = arith.addf %107, %108 : vector<1x128xf32>
    %cst_93 = arith.constant 0.000000e+00 : f32
    %110 = vector.broadcast %cst_93 : f32 to vector<1x128xf32>
    %111 = arith.maximumf %109, %110 : vector<1x128xf32>
    %c0_94 = arith.constant 0 : index
    %c0_95 = arith.constant 0 : index
    %112 = vector.load %arg14[%c0_94, %c0_95] : memref<128x10xf32, #tpu.memory_space<vmem>>, vector<128x10xf32>
    %cst_96 = arith.constant dense<0.000000e+00> : vector<1x10xf32>
    %113 = tpu.matmul %111, %112, %cst_96 {dimension_numbers = #tpu.dot_dimension_numbers<[1], [0], [0], [1], [0, 0, 1, 1], [], []>} : vector<1x128xf32>, vector<128x10xf32>, vector<1x10xf32> -> vector<1x10xf32>
    %c0_97 = arith.constant 0 : index
    %c0_98 = arith.constant 0 : index
    %114 = vector.load %arg15[%c0_97, %c0_98] : memref<1x10xf32, #tpu.memory_space<vmem>>, vector<1x10xf32>
    %115 = arith.addf %113, %114 : vector<1x10xf32>
    %c0_99 = arith.constant 0 : index
    %c0_100 = arith.constant 0 : index
    %116 = vector.load %arg16[%c0_99, %c0_100] : memref<10x128xf32, #tpu.memory_space<vmem>>, vector<10x128xf32>
    %cst_101 = arith.constant dense<0.000000e+00> : vector<1x128xf32>
    %117 = tpu.matmul %115, %116, %cst_101 {dimension_numbers = #tpu.dot_dimension_numbers<[1], [0], [0], [1], [0, 0, 1, 1], [], []>} : vector<1x10xf32>, vector<10x128xf32>, vector<1x128xf32> -> vector<1x128xf32>
    %c0_102 = arith.constant 0 : index
    %c0_103 = arith.constant 0 : index
    %118 = vector.load %arg17[%c0_102, %c0_103] : memref<1x128xf32, #tpu.memory_space<vmem>>, vector<1x128xf32>
    %119 = arith.addf %117, %118 : vector<1x128xf32>
    %cst_104 = arith.constant 0.000000e+00 : f32
    %120 = vector.broadcast %cst_104 : f32 to vector<1x128xf32>
    %121 = arith.maximumf %119, %120 : vector<1x128xf32>
    %c0_105 = arith.constant 0 : index
    %c0_106 = arith.constant 0 : index
    %122 = vector.load %arg18[%c0_105, %c0_106] : memref<128x256xf32, #tpu.memory_space<vmem>>, vector<128x256xf32>
    %cst_107 = arith.constant dense<0.000000e+00> : vector<1x256xf32>
    %123 = tpu.matmul %121, %122, %cst_107 {dimension_numbers = #tpu.dot_dimension_numbers<[1], [0], [0], [1], [0, 0, 1, 1], [], []>} : vector<1x128xf32>, vector<128x256xf32>, vector<1x256xf32> -> vector<1x256xf32>
    %c0_108 = arith.constant 0 : index
    %c0_109 = arith.constant 0 : index
    %124 = vector.load %arg19[%c0_108, %c0_109] : memref<1x256xf32, #tpu.memory_space<vmem>>, vector<1x256xf32>
    %125 = arith.addf %123, %124 : vector<1x256xf32>
    %cst_110 = arith.constant 0.000000e+00 : f32
    %126 = vector.broadcast %cst_110 : f32 to vector<1x256xf32>
    %127 = arith.maximumf %125, %126 : vector<1x256xf32>
    %c0_111 = arith.constant 0 : index
    %c0_112 = arith.constant 0 : index
    %128 = vector.load %arg21[%c0_111, %c0_112] : memref<7x224xf32, #tpu.memory_space<vmem>>, vector<7x224xf32>
    %c0_113 = arith.constant 0 : index
    %c0_114 = arith.constant 0 : index
    %c0_115 = arith.constant 0 : index
    %129 = vector.load %arg20[%c0_113, %c0_114, %c0_115] : memref<7x256x224xf32, #tpu.memory_space<vmem>>, vector<1x256x224xf32>
    %130 = vector.shape_cast %129 : vector<1x256x224xf32> to vector<256x224xf32>
    %cst_116 = arith.constant dense<0.000000e+00> : vector<1x224xf32>
    %131 = tpu.matmul %127, %130, %cst_116 {dimension_numbers = #tpu.dot_dimension_numbers<[1], [0], [0], [1], [0, 0, 1, 1], [], []>} : vector<1x256xf32>, vector<256x224xf32>, vector<1x224xf32> -> vector<1x224xf32>
    %132 = vector.extract_strided_slice %128 {offsets = [0, 0], sizes = [1, 224], strides = [1, 1]} : vector<7x224xf32> to vector<1x224xf32>
    %133 = arith.addf %131, %132 : vector<1x224xf32>
    %cst_117 = arith.constant 0.000000e+00 : f32
    %134 = vector.broadcast %cst_117 : f32 to vector<1x224xf32>
    %135 = arith.maximumf %133, %134 : vector<1x224xf32>
    %c0_118 = arith.constant 0 : index
    %c0_119 = arith.constant 0 : index
    %136 = vector.load %arg31[%c0_118, %c0_119] : memref<7x224xf32, #tpu.memory_space<vmem>>, vector<1x224xf32>
    tpu.vector_store %arg31[%c0_118, %c0_119], %135 {strides = array<i32>} : memref<7x224xf32, #tpu.memory_space<vmem>>, vector<1x224xf32>,
    %c1_120 = arith.constant 1 : index
    %c0_121 = arith.constant 0 : index
    %c0_122 = arith.constant 0 : index
    %137 = vector.load %arg20[%c1_120, %c0_121, %c0_122] : memref<7x256x224xf32, #tpu.memory_space<vmem>>, vector<1x256x224xf32>
    %138 = vector.shape_cast %137 : vector<1x256x224xf32> to vector<256x224xf32>
    %cst_123 = arith.constant dense<0.000000e+00> : vector<1x224xf32>
    %139 = tpu.matmul %127, %138, %cst_123 {dimension_numbers = #tpu.dot_dimension_numbers<[1], [0], [0], [1], [0, 0, 1, 1], [], []>} : vector<1x256xf32>, vector<256x224xf32>, vector<1x224xf32> -> vector<1x224xf32>
    %140 = vector.extract_strided_slice %128 {offsets = [1, 0], sizes = [1, 224], strides = [1, 1]} : vector<7x224xf32> to vector<1x224xf32>
    %141 = arith.addf %139, %140 : vector<1x224xf32>
    %cst_124 = arith.constant 0.000000e+00 : f32
    %142 = vector.broadcast %cst_124 : f32 to vector<1x224xf32>
    %143 = arith.maximumf %141, %142 : vector<1x224xf32>
    %c1_125 = arith.constant 1 : index
    %c0_126 = arith.constant 0 : index
    %144 = vector.load %arg31[%c1_125, %c0_126] : memref<7x224xf32, #tpu.memory_space<vmem>>, vector<1x224xf32>
    tpu.vector_store %arg31[%c1_125, %c0_126], %143 {strides = array<i32>} : memref<7x224xf32, #tpu.memory_space<vmem>>, vector<1x224xf32>,
    %c2_127 = arith.constant 2 : index
    %c0_128 = arith.constant 0 : index
    %c0_129 = arith.constant 0 : index
    %145 = vector.load %arg20[%c2_127, %c0_128, %c0_129] : memref<7x256x224xf32, #tpu.memory_space<vmem>>, vector<1x256x224xf32>
    %146 = vector.shape_cast %145 : vector<1x256x224xf32> to vector<256x224xf32>
    %cst_130 = arith.constant dense<0.000000e+00> : vector<1x224xf32>
    %147 = tpu.matmul %127, %146, %cst_130 {dimension_numbers = #tpu.dot_dimension_numbers<[1], [0], [0], [1], [0, 0, 1, 1], [], []>} : vector<1x256xf32>, vector<256x224xf32>, vector<1x224xf32> -> vector<1x224xf32>
    %148 = vector.extract_strided_slice %128 {offsets = [2, 0], sizes = [1, 224], strides = [1, 1]} : vector<7x224xf32> to vector<1x224xf32>
    %149 = arith.addf %147, %148 : vector<1x224xf32>
    %cst_131 = arith.constant 0.000000e+00 : f32
    %150 = vector.broadcast %cst_131 : f32 to vector<1x224xf32>
    %151 = arith.maximumf %149, %150 : vector<1x224xf32>
    %c2_132 = arith.constant 2 : index
    %c0_133 = arith.constant 0 : index
    %152 = vector.load %arg31[%c2_132, %c0_133] : memref<7x224xf32, #tpu.memory_space<vmem>>, vector<1x224xf32>
    tpu.vector_store %arg31[%c2_132, %c0_133], %151 {strides = array<i32>} : memref<7x224xf32, #tpu.memory_space<vmem>>, vector<1x224xf32>,
    %c3_134 = arith.constant 3 : index
    %c0_135 = arith.constant 0 : index
    %c0_136 = arith.constant 0 : index
    %153 = vector.load %arg20[%c3_134, %c0_135, %c0_136] : memref<7x256x224xf32, #tpu.memory_space<vmem>>, vector<1x256x224xf32>
    %154 = vector.shape_cast %153 : vector<1x256x224xf32> to vector<256x224xf32>
    %cst_137 = arith.constant dense<0.000000e+00> : vector<1x224xf32>
    %155 = tpu.matmul %127, %154, %cst_137 {dimension_numbers = #tpu.dot_dimension_numbers<[1], [0], [0], [1], [0, 0, 1, 1], [], []>} : vector<1x256xf32>, vector<256x224xf32>, vector<1x224xf32> -> vector<1x224xf32>
    %156 = vector.extract_strided_slice %128 {offsets = [3, 0], sizes = [1, 224], strides = [1, 1]} : vector<7x224xf32> to vector<1x224xf32>
    %157 = arith.addf %155, %156 : vector<1x224xf32>
    %cst_138 = arith.constant 0.000000e+00 : f32
    %158 = vector.broadcast %cst_138 : f32 to vector<1x224xf32>
    %159 = arith.maximumf %157, %158 : vector<1x224xf32>
    %c3_139 = arith.constant 3 : index
    %c0_140 = arith.constant 0 : index
    %160 = vector.load %arg31[%c3_139, %c0_140] : memref<7x224xf32, #tpu.memory_space<vmem>>, vector<1x224xf32>
    tpu.vector_store %arg31[%c3_139, %c0_140], %159 {strides = array<i32>} : memref<7x224xf32, #tpu.memory_space<vmem>>, vector<1x224xf32>,
    %c4_141 = arith.constant 4 : index
    %c0_142 = arith.constant 0 : index
    %c0_143 = arith.constant 0 : index
    %161 = vector.load %arg20[%c4_141, %c0_142, %c0_143] : memref<7x256x224xf32, #tpu.memory_space<vmem>>, vector<1x256x224xf32>
    %162 = vector.shape_cast %161 : vector<1x256x224xf32> to vector<256x224xf32>
    %cst_144 = arith.constant dense<0.000000e+00> : vector<1x224xf32>
    %163 = tpu.matmul %127, %162, %cst_144 {dimension_numbers = #tpu.dot_dimension_numbers<[1], [0], [0], [1], [0, 0, 1, 1], [], []>} : vector<1x256xf32>, vector<256x224xf32>, vector<1x224xf32> -> vector<1x224xf32>
    %164 = vector.extract_strided_slice %128 {offsets = [4, 0], sizes = [1, 224], strides = [1, 1]} : vector<7x224xf32> to vector<1x224xf32>
    %165 = arith.addf %163, %164 : vector<1x224xf32>
    %cst_145 = arith.constant 0.000000e+00 : f32
    %166 = vector.broadcast %cst_145 : f32 to vector<1x224xf32>
    %167 = arith.maximumf %165, %166 : vector<1x224xf32>
    %c4_146 = arith.constant 4 : index
    %c0_147 = arith.constant 0 : index
    %168 = vector.load %arg31[%c4_146, %c0_147] : memref<7x224xf32, #tpu.memory_space<vmem>>, vector<1x224xf32>
    tpu.vector_store %arg31[%c4_146, %c0_147], %167 {strides = array<i32>} : memref<7x224xf32, #tpu.memory_space<vmem>>, vector<1x224xf32>,
    %c5_148 = arith.constant 5 : index
    %c0_149 = arith.constant 0 : index
    %c0_150 = arith.constant 0 : index
    %169 = vector.load %arg20[%c5_148, %c0_149, %c0_150] : memref<7x256x224xf32, #tpu.memory_space<vmem>>, vector<1x256x224xf32>
    %170 = vector.shape_cast %169 : vector<1x256x224xf32> to vector<256x224xf32>
    %cst_151 = arith.constant dense<0.000000e+00> : vector<1x224xf32>
    %171 = tpu.matmul %127, %170, %cst_151 {dimension_numbers = #tpu.dot_dimension_numbers<[1], [0], [0], [1], [0, 0, 1, 1], [], []>} : vector<1x256xf32>, vector<256x224xf32>, vector<1x224xf32> -> vector<1x224xf32>
    %172 = vector.extract_strided_slice %128 {offsets = [5, 0], sizes = [1, 224], strides = [1, 1]} : vector<7x224xf32> to vector<1x224xf32>
    %173 = arith.addf %171, %172 : vector<1x224xf32>
    %cst_152 = arith.constant 0.000000e+00 : f32
    %174 = vector.broadcast %cst_152 : f32 to vector<1x224xf32>
    %175 = arith.maximumf %173, %174 : vector<1x224xf32>
    %c5_153 = arith.constant 5 : index
    %c0_154 = arith.constant 0 : index
    %176 = vector.load %arg31[%c5_153, %c0_154] : memref<7x224xf32, #tpu.memory_space<vmem>>, vector<1x224xf32>
    tpu.vector_store %arg31[%c5_153, %c0_154], %175 {strides = array<i32>} : memref<7x224xf32, #tpu.memory_space<vmem>>, vector<1x224xf32>,
    %c6_155 = arith.constant 6 : index
    %c0_156 = arith.constant 0 : index
    %c0_157 = arith.constant 0 : index
    %177 = vector.load %arg20[%c6_155, %c0_156, %c0_157] : memref<7x256x224xf32, #tpu.memory_space<vmem>>, vector<1x256x224xf32>
    %178 = vector.shape_cast %177 : vector<1x256x224xf32> to vector<256x224xf32>
    %cst_158 = arith.constant dense<0.000000e+00> : vector<1x224xf32>
    %179 = tpu.matmul %127, %178, %cst_158 {dimension_numbers = #tpu.dot_dimension_numbers<[1], [0], [0], [1], [0, 0, 1, 1], [], []>} : vector<1x256xf32>, vector<256x224xf32>, vector<1x224xf32> -> vector<1x224xf32>
    %180 = vector.extract_strided_slice %128 {offsets = [6, 0], sizes = [1, 224], strides = [1, 1]} : vector<7x224xf32> to vector<1x224xf32>
    %181 = arith.addf %179, %180 : vector<1x224xf32>
    %cst_159 = arith.constant 0.000000e+00 : f32
    %182 = vector.broadcast %cst_159 : f32 to vector<1x224xf32>
    %183 = arith.maximumf %181, %182 : vector<1x224xf32>
    %c6_160 = arith.constant 6 : index
    %c0_161 = arith.constant 0 : index
    %184 = vector.load %arg31[%c6_160, %c0_161] : memref<7x224xf32, #tpu.memory_space<vmem>>, vector<1x224xf32>
    tpu.vector_store %arg31[%c6_160, %c0_161], %183 {strides = array<i32>} : memref<7x224xf32, #tpu.memory_space<vmem>>, vector<1x224xf32>,
    %c0_162 = arith.constant 0 : index
    %c0_163 = arith.constant 0 : index
    %185 = vector.load %arg31[%c0_162, %c0_163] : memref<7x224xf32, #tpu.memory_space<vmem>>, vector<7x224xf32>
    %c0_164 = arith.constant 0 : index
    %c0_165 = arith.constant 0 : index
    %186 = vector.load %arg23[%c0_164, %c0_165] : memref<16x7xf32, #tpu.memory_space<vmem>>, vector<16x7xf32>
    %c0_166 = arith.constant 0 : index
    %c0_167 = arith.constant 0 : index
    %187 = vector.load %arg22[%c0_166, %c0_167] : memref<224x448xf32, #tpu.memory_space<vmem>>, vector<224x448xf32>
    %cst_168 = arith.constant dense<0.000000e+00> : vector<7x448xf32>
    %188 = tpu.matmul %185, %187, %cst_168 {dimension_numbers = #tpu.dot_dimension_numbers<[1], [0], [0], [1], [0, 0, 1, 1], [], []>} : vector<7x224xf32>, vector<224x448xf32>, vector<7x448xf32> -> vector<7x448xf32>
    %cst_169 = arith.constant dense<0.000000e+00> : vector<16x448xf32>
    %189 = tpu.matmul %186, %188, %cst_169 {dimension_numbers = #tpu.dot_dimension_numbers<[1], [0], [0], [1], [0, 0, 1, 1], [], []>} : vector<16x7xf32>, vector<7x448xf32>, vector<16x448xf32> -> vector<16x448xf32>
    %190 = vector.extract_strided_slice %189 {offsets = [0, 0], sizes = [14, 448], strides = [1, 1]} : vector<16x448xf32> to vector<14x448xf32>
    %c0_170 = arith.constant 0 : index
    %c0_171 = arith.constant 0 : index
    %c0_172 = arith.constant 0 : index
    %191 = vector.load %arg24[%c0_170, %c0_171, %c0_172] : memref<3x448x224xf32, #tpu.memory_space<vmem>>, vector<1x448x224xf32>
    %192 = vector.shape_cast %191 : vector<1x448x224xf32> to vector<448x224xf32>
    %cst_173 = arith.constant dense<0.000000e+00> : vector<14x224xf32>
    %193 = tpu.matmul %190, %192, %cst_173 {dimension_numbers = #tpu.dot_dimension_numbers<[1], [0], [0], [1], [0, 0, 1, 1], [], []>} : vector<14x448xf32>, vector<448x224xf32>, vector<14x224xf32> -> vector<14x224xf32>
    %194 = vector.extract_strided_slice %189 {offsets = [1, 0], sizes = [14, 448], strides = [1, 1]} : vector<16x448xf32> to vector<14x448xf32>
    %c1_174 = arith.constant 1 : index
    %c0_175 = arith.constant 0 : index
    %c0_176 = arith.constant 0 : index
    %195 = vector.load %arg24[%c1_174, %c0_175, %c0_176] : memref<3x448x224xf32, #tpu.memory_space<vmem>>, vector<1x448x224xf32>
    %196 = vector.shape_cast %195 : vector<1x448x224xf32> to vector<448x224xf32>
    %cst_177 = arith.constant dense<0.000000e+00> : vector<14x224xf32>
    %197 = tpu.matmul %194, %196, %cst_177 {dimension_numbers = #tpu.dot_dimension_numbers<[1], [0], [0], [1], [0, 0, 1, 1], [], []>} : vector<14x448xf32>, vector<448x224xf32>, vector<14x224xf32> -> vector<14x224xf32>
    %198 = arith.addf %193, %197 : vector<14x224xf32>
    %199 = vector.extract_strided_slice %189 {offsets = [2, 0], sizes = [14, 448], strides = [1, 1]} : vector<16x448xf32> to vector<14x448xf32>
    %c2_178 = arith.constant 2 : index
    %c0_179 = arith.constant 0 : index
    %c0_180 = arith.constant 0 : index
    %200 = vector.load %arg24[%c2_178, %c0_179, %c0_180] : memref<3x448x224xf32, #tpu.memory_space<vmem>>, vector<1x448x224xf32>
    %201 = vector.shape_cast %200 : vector<1x448x224xf32> to vector<448x224xf32>
    %cst_181 = arith.constant dense<0.000000e+00> : vector<14x224xf32>
    %202 = tpu.matmul %199, %201, %cst_181 {dimension_numbers = #tpu.dot_dimension_numbers<[1], [0], [0], [1], [0, 0, 1, 1], [], []>} : vector<14x448xf32>, vector<448x224xf32>, vector<14x224xf32> -> vector<14x224xf32>
    %203 = arith.addf %198, %202 : vector<14x224xf32>
    %c0_182 = arith.constant 0 : index
    %c0_183 = arith.constant 0 : index
    %204 = vector.load %arg25[%c0_182, %c0_183] : memref<1x224xf32, #tpu.memory_space<vmem>>, vector<1x224xf32>
    %205 = vector.broadcast %204 : vector<1x224xf32> to vector<14x224xf32>
    %206 = arith.addf %203, %205 : vector<14x224xf32>
    %cst_184 = arith.constant 0.000000e+00 : f32
    %207 = vector.broadcast %cst_184 : f32 to vector<14x224xf32>
    %208 = arith.maximumf %206, %207 : vector<14x224xf32>
    %c0_185 = arith.constant 0 : index
    %c0_186 = arith.constant 0 : index
    %209 = vector.load %arg27[%c0_185, %c0_186] : memref<30x14xf32, #tpu.memory_space<vmem>>, vector<30x14xf32>
    %c0_187 = arith.constant 0 : index
    %c0_188 = arith.constant 0 : index
    %210 = vector.load %arg26[%c0_187, %c0_188] : memref<224x448xf32, #tpu.memory_space<vmem>>, vector<224x448xf32>
    %cst_189 = arith.constant dense<0.000000e+00> : vector<14x448xf32>
    %211 = tpu.matmul %208, %210, %cst_189 {dimension_numbers = #tpu.dot_dimension_numbers<[1], [0], [0], [1], [0, 0, 1, 1], [], []>} : vector<14x224xf32>, vector<224x448xf32>, vector<14x448xf32> -> vector<14x448xf32>
    %cst_190 = arith.constant dense<0.000000e+00> : vector<30x448xf32>
    %212 = tpu.matmul %209, %211, %cst_190 {dimension_numbers = #tpu.dot_dimension_numbers<[1], [0], [0], [1], [0, 0, 1, 1], [], []>} : vector<30x14xf32>, vector<14x448xf32>, vector<30x448xf32> -> vector<30x448xf32>
    %213 = vector.extract_strided_slice %212 {offsets = [0, 0], sizes = [28, 448], strides = [1, 1]} : vector<30x448xf32> to vector<28x448xf32>
    %c0_191 = arith.constant 0 : index
    %c0_192 = arith.constant 0 : index
    %c0_193 = arith.constant 0 : index
    %214 = vector.load %arg28[%c0_191, %c0_192, %c0_193] : memref<3x448x28xf32, #tpu.memory_space<vmem>>, vector<1x448x28xf32>
    %215 = vector.shape_cast %214 : vector<1x448x28xf32> to vector<448x28xf32>
    %cst_194 = arith.constant dense<0.000000e+00> : vector<28x28xf32>
    %216 = tpu.matmul %213, %215, %cst_194 {dimension_numbers = #tpu.dot_dimension_numbers<[1], [0], [0], [1], [0, 0, 1, 1], [], []>} : vector<28x448xf32>, vector<448x28xf32>, vector<28x28xf32> -> vector<28x28xf32>
    %217 = vector.extract_strided_slice %212 {offsets = [1, 0], sizes = [28, 448], strides = [1, 1]} : vector<30x448xf32> to vector<28x448xf32>
    %c1_195 = arith.constant 1 : index
    %c0_196 = arith.constant 0 : index
    %c0_197 = arith.constant 0 : index
    %218 = vector.load %arg28[%c1_195, %c0_196, %c0_197] : memref<3x448x28xf32, #tpu.memory_space<vmem>>, vector<1x448x28xf32>
    %219 = vector.shape_cast %218 : vector<1x448x28xf32> to vector<448x28xf32>
    %cst_198 = arith.constant dense<0.000000e+00> : vector<28x28xf32>
    %220 = tpu.matmul %217, %219, %cst_198 {dimension_numbers = #tpu.dot_dimension_numbers<[1], [0], [0], [1], [0, 0, 1, 1], [], []>} : vector<28x448xf32>, vector<448x28xf32>, vector<28x28xf32> -> vector<28x28xf32>
    %221 = arith.addf %216, %220 : vector<28x28xf32>
    %222 = vector.extract_strided_slice %212 {offsets = [2, 0], sizes = [28, 448], strides = [1, 1]} : vector<30x448xf32> to vector<28x448xf32>
    %c2_199 = arith.constant 2 : index
    %c0_200 = arith.constant 0 : index
    %c0_201 = arith.constant 0 : index
    %223 = vector.load %arg28[%c2_199, %c0_200, %c0_201] : memref<3x448x28xf32, #tpu.memory_space<vmem>>, vector<1x448x28xf32>
    %224 = vector.shape_cast %223 : vector<1x448x28xf32> to vector<448x28xf32>
    %cst_202 = arith.constant dense<0.000000e+00> : vector<28x28xf32>
    %225 = tpu.matmul %222, %224, %cst_202 {dimension_numbers = #tpu.dot_dimension_numbers<[1], [0], [0], [1], [0, 0, 1, 1], [], []>} : vector<28x448xf32>, vector<448x28xf32>, vector<28x28xf32> -> vector<28x28xf32>
    %226 = arith.addf %221, %225 : vector<28x28xf32>
    %c0_203 = arith.constant 0 : index
    %c0_204 = arith.constant 0 : index
    %227 = vector.load %arg29[%c0_203, %c0_204] : memref<1x28xf32, #tpu.memory_space<vmem>>, vector<1x28xf32>
    %228 = vector.broadcast %227 : vector<1x28xf32> to vector<28x28xf32>
    %229 = arith.addf %226, %228 : vector<28x28xf32>
    %230 = arith.negf %229 : vector<28x28xf32>
    %231 = math.exp %230 : vector<28x28xf32>
    %cst_205 = arith.constant 1.000000e+00 : f32
    %232 = vector.broadcast %cst_205 : f32 to vector<28x28xf32>
    %233 = arith.addf %232, %231 : vector<28x28xf32>
    %234 = arith.divf %232, %233 : vector<28x28xf32>
    %cst_206 = arith.constant 2.000000e+00 : f32
    %235 = vector.broadcast %cst_206 : f32 to vector<28x28xf32>
    %236 = arith.mulf %235, %234 : vector<28x28xf32>
    %cst_207 = arith.constant 5.000000e-01 : f32
    %237 = vector.broadcast %cst_207 : f32 to vector<28x28xf32>
    %238 = arith.subf %236, %237 : vector<28x28xf32>
    %c0_208 = arith.constant 0 : index
    %c0_209 = arith.constant 0 : index
    %c0_210 = arith.constant 0 : index
    %239 = vector.load %arg30[%c0_208, %c0_209, %c0_210] : memref<1x28x28xf32, #tpu.memory_space<vmem>>, vector<1x28x28xf32>
    %240 = vector.shape_cast %239 : vector<1x28x28xf32> to vector<28x28xf32>
    %241 = vector.shape_cast %238 : vector<28x28xf32> to vector<1x28x28xf32>
    tpu.vector_store %arg30[%c0_208, %c0_209, %c0_210], %241 {strides = array<i32>} : memref<1x28x28xf32, #tpu.memory_space<vmem>>, vector<1x28x28xf32>,
    return
  }
  func.func @transform_0(%arg0: i32) -> (i32, i32, i32) {
    %c0_i32 = arith.constant 0 : i32
    %c0_i32_0 = arith.constant 0 : i32
    %c0_i32_1 = arith.constant 0 : i32
    return %arg0, %c0_i32, %c0_i32_0 : i32, i32, i32
  }
  func.func @transform_1(%arg0: i32) -> (i32, i32, i32) {
    %c0_i32 = arith.constant 0 : i32
    %c0_i32_0 = arith.constant 0 : i32
    %c0_i32_1 = arith.constant 0 : i32
    %c0_i32_2 = arith.constant 0 : i32
    return %c0_i32, %c0_i32_0, %c0_i32_1 : i32, i32, i32
  }
  func.func @transform_2(%arg0: i32) -> (i32, i32) {
    %c0_i32 = arith.constant 0 : i32
    %c0_i32_0 = arith.constant 0 : i32
    %c0_i32_1 = arith.constant 0 : i32
    return %c0_i32, %c0_i32_0 : i32, i32
  }
  func.func @transform_3(%arg0: i32) -> (i32, i32, i32) {
    %c0_i32 = arith.constant 0 : i32
    %c0_i32_0 = arith.constant 0 : i32
    %c0_i32_1 = arith.constant 0 : i32
    %c0_i32_2 = arith.constant 0 : i32
    return %c0_i32, %c0_i32_0, %c0_i32_1 : i32, i32, i32
  }
  func.func @transform_4(%arg0: i32) -> (i32, i32, i32) {
    %c0_i32 = arith.constant 0 : i32
    %c0_i32_0 = arith.constant 0 : i32
    %c0_i32_1 = arith.constant 0 : i32
    %c0_i32_2 = arith.constant 0 : i32
    return %c0_i32, %c0_i32_0, %c0_i32_1 : i32, i32, i32
  }
  func.func @transform_5(%arg0: i32) -> (i32, i32, i32) {
    %c0_i32 = arith.constant 0 : i32
    %c0_i32_0 = arith.constant 0 : i32
    %c0_i32_1 = arith.constant 0 : i32
    %c0_i32_2 = arith.constant 0 : i32
    return %c0_i32, %c0_i32_0, %c0_i32_1 : i32, i32, i32
  }
  func.func @transform_6(%arg0: i32) -> (i32, i32) {
    %c0_i32 = arith.constant 0 : i32
    %c0_i32_0 = arith.constant 0 : i32
    %c0_i32_1 = arith.constant 0 : i32
    return %c0_i32, %c0_i32_0 : i32, i32
  }
  func.func @transform_7(%arg0: i32) -> (i32, i32, i32) {
    %c0_i32 = arith.constant 0 : i32
    %c0_i32_0 = arith.constant 0 : i32
    %c0_i32_1 = arith.constant 0 : i32
    %c0_i32_2 = arith.constant 0 : i32
    return %c0_i32, %c0_i32_0, %c0_i32_1 : i32, i32, i32
  }
  func.func @transform_8(%arg0: i32) -> (i32, i32, i32) {
    %c0_i32 = arith.constant 0 : i32
    %c0_i32_0 = arith.constant 0 : i32
    %c0_i32_1 = arith.constant 0 : i32
    %c0_i32_2 = arith.constant 0 : i32
    return %c0_i32, %c0_i32_0, %c0_i32_1 : i32, i32, i32
  }
  func.func @transform_9(%arg0: i32) -> (i32, i32, i32) {
    %c0_i32 = arith.constant 0 : i32
    %c0_i32_0 = arith.constant 0 : i32
    %c0_i32_1 = arith.constant 0 : i32
    %c0_i32_2 = arith.constant 0 : i32
    return %c0_i32, %c0_i32_0, %c0_i32_1 : i32, i32, i32
  }
  func.func @transform_10(%arg0: i32) -> (i32, i32) {
    %c0_i32 = arith.constant 0 : i32
    %c0_i32_0 = arith.constant 0 : i32
    %c0_i32_1 = arith.constant 0 : i32
    return %c0_i32, %c0_i32_0 : i32, i32
  }
  func.func @transform_11(%arg0: i32) -> (i32, i32) {
    %c0_i32 = arith.constant 0 : i32
    %c0_i32_0 = arith.constant 0 : i32
    %c0_i32_1 = arith.constant 0 : i32
    return %c0_i32, %c0_i32_0 : i32, i32
  }
  func.func @transform_12(%arg0: i32) -> (i32, i32) {
    %c0_i32 = arith.constant 0 : i32
    %c0_i32_0 = arith.constant 0 : i32
    %c0_i32_1 = arith.constant 0 : i32
    return %c0_i32, %c0_i32_0 : i32, i32
  }
  func.func @transform_13(%arg0: i32) -> (i32, i32) {
    %c0_i32 = arith.constant 0 : i32
    %c0_i32_0 = arith.constant 0 : i32
    %c0_i32_1 = arith.constant 0 : i32
    return %c0_i32, %c0_i32_0 : i32, i32
  }
  func.func @transform_14(%arg0: i32) -> (i32, i32) {
    %c0_i32 = arith.constant 0 : i32
    %c0_i32_0 = arith.constant 0 : i32
    %c0_i32_1 = arith.constant 0 : i32
    return %c0_i32, %c0_i32_0 : i32, i32
  }
  func.func @transform_15(%arg0: i32) -> (i32, i32) {
    %c0_i32 = arith.constant 0 : i32
    %c0_i32_0 = arith.constant 0 : i32
    %c0_i32_1 = arith.constant 0 : i32
    return %c0_i32, %c0_i32_0 : i32, i32
  }
  func.func @transform_16(%arg0: i32) -> (i32, i32) {
    %c0_i32 = arith.constant 0 : i32
    %c0_i32_0 = arith.constant 0 : i32
    %c0_i32_1 = arith.constant 0 : i32
    return %c0_i32, %c0_i32_0 : i32, i32
  }
  func.func @transform_17(%arg0: i32) -> (i32, i32) {
    %c0_i32 = arith.constant 0 : i32
    %c0_i32_0 = arith.constant 0 : i32
    %c0_i32_1 = arith.constant 0 : i32
    return %c0_i32, %c0_i32_0 : i32, i32
  }
  func.func @transform_18(%arg0: i32) -> (i32, i32) {
    %c0_i32 = arith.constant 0 : i32
    %c0_i32_0 = arith.constant 0 : i32
    %c0_i32_1 = arith.constant 0 : i32
    return %c0_i32, %c0_i32_0 : i32, i32
  }
  func.func @transform_19(%arg0: i32) -> (i32, i32, i32) {
    %c0_i32 = arith.constant 0 : i32
    %c0_i32_0 = arith.constant 0 : i32
    %c0_i32_1 = arith.constant 0 : i32
    %c0_i32_2 = arith.constant 0 : i32
    return %c0_i32, %c0_i32_0, %c0_i32_1 : i32, i32, i32
  }
  func.func @transform_20(%arg0: i32) -> (i32, i32) {
    %c0_i32 = arith.constant 0 : i32
    %c0_i32_0 = arith.constant 0 : i32
    %c0_i32_1 = arith.constant 0 : i32
    return %c0_i32, %c0_i32_0 : i32, i32
  }
  func.func @transform_21(%arg0: i32) -> (i32, i32) {
    %c0_i32 = arith.constant 0 : i32
    %c0_i32_0 = arith.constant 0 : i32
    %c0_i32_1 = arith.constant 0 : i32
    return %c0_i32, %c0_i32_0 : i32, i32
  }
  func.func @transform_22(%arg0: i32) -> (i32, i32) {
    %c0_i32 = arith.constant 0 : i32
    %c0_i32_0 = arith.constant 0 : i32
    %c0_i32_1 = arith.constant 0 : i32
    return %c0_i32, %c0_i32_0 : i32, i32
  }
  func.func @transform_23(%arg0: i32) -> (i32, i32, i32) {
    %c0_i32 = arith.constant 0 : i32
    %c0_i32_0 = arith.constant 0 : i32
    %c0_i32_1 = arith.constant 0 : i32
    %c0_i32_2 = arith.constant 0 : i32
    return %c0_i32, %c0_i32_0, %c0_i32_1 : i32, i32, i32
  }
  func.func @transform_24(%arg0: i32) -> (i32, i32) {
    %c0_i32 = arith.constant 0 : i32
    %c0_i32_0 = arith.constant 0 : i32
    %c0_i32_1 = arith.constant 0 : i32
    return %c0_i32, %c0_i32_0 : i32, i32
  }
  func.func @transform_25(%arg0: i32) -> (i32, i32) {
    %c0_i32 = arith.constant 0 : i32
    %c0_i32_0 = arith.constant 0 : i32
    %c0_i32_1 = arith.constant 0 : i32
    return %c0_i32, %c0_i32_0 : i32, i32
  }
  func.func @transform_26(%arg0: i32) -> (i32, i32) {
    %c0_i32 = arith.constant 0 : i32
    %c0_i32_0 = arith.constant 0 : i32
    %c0_i32_1 = arith.constant 0 : i32
    return %c0_i32, %c0_i32_0 : i32, i32
  }
  func.func @transform_27(%arg0: i32) -> (i32, i32, i32) {
    %c0_i32 = arith.constant 0 : i32
    %c0_i32_0 = arith.constant 0 : i32
    %c0_i32_1 = arith.constant 0 : i32
    %c0_i32_2 = arith.constant 0 : i32
    return %c0_i32, %c0_i32_0, %c0_i32_1 : i32, i32, i32
  }
  func.func @transform_28(%arg0: i32) -> (i32, i32) {
    %c0_i32 = arith.constant 0 : i32
    %c0_i32_0 = arith.constant 0 : i32
    %c0_i32_1 = arith.constant 0 : i32
    return %c0_i32, %c0_i32_0 : i32, i32
  }
  func.func @transform_29(%arg0: i32) -> (i32, i32, i32) {
    %c0_i32 = arith.constant 0 : i32
    %c0_i32_0 = arith.constant 0 : i32
    %c0_i32_1 = arith.constant 0 : i32
    return %arg0, %c0_i32, %c0_i32_0 : i32, i32, i32
  }
}

</mosaic_0001>

<llo_original>
// kernel: ae_forward.1
$region0: #{ae_forward.1}
  #allocation0 [shape = 'u32[]', space=smem, size = 0x4, offset = 0x4, fixed_abs, tag = 'smem constant byte address 0x4 - core index']
  #allocation1 [shape = 'u32[72,128]{1,0:T(1,128)}', space=vmem, size = 0x9000, scoped, tag = 'internal scratch']
  #allocation2 [shape = 'f32[7,224]{1,0:T(8,128)}', space=vmem, size = 0x2000, scoped, tag = 'scratch operand']
  %s0 = inlined_call_operand.smem [shape: u32[30], index: -1, kind: input, shape index: {}]
  %s1 = sld [smem:[%s0]]
  %s2 = scalar_lea.smem %s0, 1
  %s3 = sld [smem:[%s2]]
  %s4 = scalar_lea.smem %s0, 2
  %s5 = sld [smem:[%s4]]
  %s6 = scalar_lea.smem %s0, 3
  %s7 = sld [smem:[%s6]]
  %s8 = scalar_lea.smem %s0, 4
  %s9 = sld [smem:[%s8]]
  %s10 = scalar_lea.smem %s0, 5
  %s11 = sld [smem:[%s10]]
  %s12 = scalar_lea.smem %s0, 6
  %s13 = sld [smem:[%s12]]
  %s14 = scalar_lea.smem %s0, 7
  %s15 = sld [smem:[%s14]]
  %s16 = scalar_lea.smem %s0, 8
  %s17 = sld [smem:[%s16]]
  %s18 = scalar_lea.smem %s0, 9
  %s19 = sld [smem:[%s18]]
  %s20 = scalar_lea.smem %s0, 10
  %s21 = sld [smem:[%s20]]
  %s22 = scalar_lea.smem %s0, 11
  %s23 = sld [smem:[%s22]]
  %s24 = scalar_lea.smem %s0, 12
  %s25 = sld [smem:[%s24]]
  %s26 = scalar_lea.smem %s0, 13
  %s27 = sld [smem:[%s26]]
  %s28 = scalar_lea.smem %s0, 14
  %s29 = sld [smem:[%s28]]
  %s30 = scalar_lea.smem %s0, 15
  %s31 = sld [smem:[%s30]]
  %s32 = scalar_lea.smem %s0, 16
  %s33 = sld [smem:[%s32]]
  %s34 = scalar_lea.smem %s0, 17
  %s35 = sld [smem:[%s34]]
  %s36 = scalar_lea.smem %s0, 18
  %s37 = sld [smem:[%s36]]
  %s38 = scalar_lea.smem %s0, 19
  %s39 = sld [smem:[%s38]]
  %s40 = scalar_lea.smem %s0, 20
  %s41 = sld [smem:[%s40]]
  %s42 = scalar_lea.smem %s0, 21
  %s43 = sld [smem:[%s42]]
  %s44 = scalar_lea.smem %s0, 22
  %s45 = sld [smem:[%s44]]
  %s46 = scalar_lea.smem %s0, 23
  %s47 = sld [smem:[%s46]]
  %s48 = scalar_lea.smem %s0, 24
  %s49 = sld [smem:[%s48]]
  %s50 = scalar_lea.smem %s0, 25
  %s51 = sld [smem:[%s50]]
  %s52 = scalar_lea.smem %s0, 26
  %s53 = sld [smem:[%s52]]
  %s54 = scalar_lea.smem %s0, 27
  %s55 = sld [smem:[%s54]]
  %s56 = scalar_lea.smem %s0, 28
  %s57 = sld [smem:[%s56]]
  %s58 = scalar_lea.smem %s0, 29
  %s59 = sld [smem:[%s58]]
  %s60 = sld [smem:[#allocation0]]
  $region173: #{ae_forward.1} parent=0
    _
  %s62 = ssub.s32 1, %s60
  %s63 = scalar_select 0, %s62, %s60
  $region1: #{ae_forward.1} parent=0
    #allocation3 [shape = 'u8[917504]{0}', space=vmem, size = 0xe0000, scoped, tag = 'input window, operand 3, single buffered']
    #allocation4 [shape = 's32[2]{0}', space=sflag, size = 0x8, scoped, tag = 'scoped memory for ae_forward.1']
    #allocation5 [shape = 'u8[917504]{0}', space=vmem, size = 0xe0000, scoped, tag = 'input window, operand 7, single buffered']
    #allocation6 [shape = 's32[1]{0}', space=sflag, size = 0x4, scoped, tag = 'scoped memory for ae_forward.1']
    #allocation7 [shape = 'u8[131072]{0}', space=vmem, size = 0x20000, scoped, tag = 'input window, operand 11, single buffered']
    #allocation8 [shape = 'u8[131072]{0}', space=vmem, size = 0x20000, scoped, tag = 'input window, operand 17, single buffered']
    #allocation9 [shape = 's32[1]{0}', space=sflag, size = 0x4, scoped, tag = 'scoped memory for ae_forward.1']
    #allocation10 [shape = 'u8[458752]{0}', space=vmem, size = 0x70000, scoped, tag = 'input window, operand 21, single buffered']
    #allocation11 [shape = 'u8[458752]{0}', space=vmem, size = 0x70000, scoped, tag = 'input window, operand 25, single buffered']
    #allocation12 [shape = 's32[1]{0}', space=sflag, size = 0x4, scoped, tag = 'scoped memory for ae_forward.1']
    %64 = vsyncpa [#allocation4], 0
    %65 = vsyncpa [#allocation6], 0
    %66 = vsyncpa [#allocation9], 0
    %67 = vsyncpa [#allocation12], 0
    loop: start=0, step=1, limit=4
    $region2: #{ae_forward.1} parent=1 // loop_pre_header
      _
    $region3: #{ae_forward.1} parent=1 // loop_header
      %s69 = sphi 0, %s73
      %p70 = scmp.ge.s32.totalorder %s69, 4
      %s79 = sphi 0, %s81
      %s82 = sphi 0, %s79
      %s83 = sphi 0, %s82
      %s99 = sphi 0, %s83
      %s103 = sphi 0, %s103
      %s105 = sphi 0, %s103
      %s106 = sphi 0, %s105
      %s120 = sphi 0, %s106
      %s124 = sphi 0, %s124
      %s126 = sphi 0, %s124
      %s127 = sphi 0, %s126
      %s141 = sphi 0, %s127
      %s145 = sphi 0, %s145
      %s147 = sphi 0, %s145
      %s148 = sphi 0, %s147
      %s162 = sphi 0, %s148
      %s166 = sphi 0, %s166
      %s168 = sphi 0, %s166
      %s169 = sphi 0, %s168
      %s183 = sphi 0, %s169
      %s187 = sphi 0, %s187
      %s189 = sphi 0, %s187
      %s190 = sphi 0, %s189
      %s204 = sphi 0, %s190
      %s208 = sphi 0, %s208
      %s210 = sphi 0, %s208
      %s211 = sphi 0, %s210
      %s225 = sphi 0, %s211
      %s229 = sphi 0, %s229
      %s231 = sphi 0, %s229
      %s232 = sphi 0, %s231
      %s246 = sphi 0, %s232
      %s250 = sphi 0, %s250
      %s252 = sphi 0, %s250
      %s253 = sphi 0, %s252
      %s267 = sphi 0, %s253
      %s271 = sphi 0, %s271
      %s273 = sphi 0, %s271
      %s274 = sphi 0, %s273
      %s288 = sphi 0, %s274
      %s292 = sphi 0, %s292
      %s294 = sphi 0, %s292
      %s295 = sphi 0, %s294
      %s309 = sphi 0, %s295
      %s313 = sphi 0, %s313
      %s315 = sphi 0, %s313
      %s316 = sphi 0, %s315
      %s330 = sphi 0, %s316
      %s334 = sphi 0, %s334
      %s336 = sphi 0, %s334
      %s337 = sphi 0, %s336
      %s351 = sphi 0, %s337
      %s355 = sphi 0, %s355
      %s357 = sphi 0, %s355
      %s358 = sphi 0, %s357
      %s372 = sphi 0, %s358
      %s376 = sphi 0, %s376
      %s378 = sphi 0, %s376
      %s379 = sphi 0, %s378
      %s393 = sphi 0, %s379
      %s397 = sphi 0, %s397
      %s399 = sphi 0, %s397
      %s400 = sphi 0, %s399
      %s414 = sphi 0, %s400
      %s418 = sphi 0, %s418
      %s420 = sphi 0, %s418
      %s421 = sphi 0, %s420
      %s435 = sphi 0, %s421
      %s439 = sphi 0, %s439
      %s441 = sphi 0, %s439
      %s442 = sphi 0, %s441
      %s456 = sphi 0, %s442
      %s460 = sphi 0, %s460
      %s462 = sphi 0, %s460
      %s463 = sphi 0, %s462
      %s477 = sphi 0, %s463
      %s481 = sphi 0, %s481
      %s483 = sphi 0, %s481
      %s484 = sphi 0, %s483
      %s498 = sphi 0, %s484
      %s502 = sphi 0, %s502
      %s504 = sphi 0, %s502
      %s505 = sphi 0, %s504
      %s519 = sphi 0, %s505
      %s523 = sphi 0, %s523
      %s525 = sphi 0, %s523
      %s526 = sphi 0, %s525
      %s540 = sphi 0, %s526
      %s544 = sphi 0, %s544
      %s546 = sphi 0, %s544
      %s547 = sphi 0, %s546
      %s561 = sphi 0, %s547
      %s565 = sphi 0, %s565
      %s567 = sphi 0, %s565
      %s568 = sphi 0, %s567
      %s582 = sphi 0, %s568
      %s586 = sphi 0, %s586
      %s588 = sphi 0, %s586
      %s589 = sphi 0, %s588
      %s603 = sphi 0, %s589
      %s607 = sphi 0, %s607
      %s609 = sphi 0, %s607
      %s610 = sphi 0, %s609
      %s624 = sphi 0, %s610
      %s628 = sphi 0, %s628
      %s630 = sphi 0, %s628
      %s631 = sphi 0, %s630
      %s645 = sphi 0, %s631
      %s649 = sphi 0, %s649
      %s651 = sphi 0, %s649
      %s652 = sphi 0, %s651
      %s666 = sphi 0, %s652
      %s670 = sphi 0, %s670
      %s672 = sphi 0, %s670
      %s673 = sphi 0, %s672
      %s687 = sphi 0, %s673
      %s693 = sphi 0, %s695
      %s696 = sphi 0, %s693
      %s697 = sphi 0, %s696
      %s713 = sphi 0, %s697
    $region4: #{ae_forward.1} parent=1 // loop_header_branch
      %72 = sbr.rel (%p70) target = $region8
    $region5: #{ae_forward.1} parent=1 // loop_body
      %s74 = ssub.s32 %s69, 1
      %s75 = ssub.s32 %s69, 2
      %s76 = sadd.s32 %s69, 1
      %s77 = ssub.s32 %s69, %s76
      %p78 = scmp.eq.s32.totalorder %s77, 0
      %s80 = sadd.s32 %s79, 1
      %s81 = scalar_select %p78, %s79, %s80
      %p84 = pneg %p78
      %p85 = scmp.eq.s32.totalorder %s69, 1
      %p86 = por %p84, %p85
      %p87 = scmp.ne.s32.totalorder %s79, %s82
      %p88 = scmp.eq.s32.totalorder %s69, 0
      %p89 = por %p87, %p88
      %p90 = scmp.ne.s32.totalorder %s79, %s82
      %p91 = scmp.eq.s32.totalorder %s74, 1
      %p92 = por %p90, %p91
      %p93 = scmp.ne.s32.totalorder %s82, %s83
      %p94 = scmp.eq.s32.totalorder %s74, 0
      %p95 = por %p93, %p94
      %p96 = scmp.ne.s32.totalorder %s82, %s83
      %p97 = scmp.eq.s32.totalorder %s75, 1
      %p98 = por %p96, %p97
      %p100 = scmp.ne.s32.totalorder %s83, %s99
      %p101 = scmp.eq.s32.totalorder %s75, 0
      %p102 = por %p100, %p101
      %s104 = sadd.s32 %s103, 1
      %p107 = scmp.eq.s32.totalorder %s69, 1
      %p108 = scmp.ne.s32.totalorder %s103, %s105
      %p109 = scmp.eq.s32.totalorder %s69, 0
      %p110 = por %p108, %p109
      %p111 = scmp.ne.s32.totalorder %s103, %s105
      %p112 = scmp.eq.s32.totalorder %s74, 1
      %p113 = por %p111, %p112
      %p114 = scmp.ne.s32.totalorder %s105, %s106
      %p115 = scmp.eq.s32.totalorder %s74, 0
      %p116 = por %p114, %p115
      %p117 = scmp.ne.s32.totalorder %s105, %s106
      %p118 = scmp.eq.s32.totalorder %s75, 1
      %p119 = por %p117, %p118
      %p121 = scmp.ne.s32.totalorder %s106, %s120
      %p122 = scmp.eq.s32.totalorder %s75, 0
      %p123 = por %p121, %p122
      %s125 = sadd.s32 %s124, 1
      %p128 = scmp.eq.s32.totalorder %s69, 1
      %p129 = scmp.ne.s32.totalorder %s124, %s126
      %p130 = scmp.eq.s32.totalorder %s69, 0
      %p131 = por %p129, %p130
      %p132 = scmp.ne.s32.totalorder %s124, %s126
      %p133 = scmp.eq.s32.totalorder %s74, 1
      %p134 = por %p132, %p133
      %p135 = scmp.ne.s32.totalorder %s126, %s127
      %p136 = scmp.eq.s32.totalorder %s74, 0
      %p137 = por %p135, %p136
      %p138 = scmp.ne.s32.totalorder %s126, %s127
      %p139 = scmp.eq.s32.totalorder %s75, 1
      %p140 = por %p138, %p139
      %p142 = scmp.ne.s32.totalorder %s127, %s141
      %p143 = scmp.eq.s32.totalorder %s75, 0
      %p144 = por %p142, %p143
      %s146 = sadd.s32 %s145, 1
      %p149 = scmp.eq.s32.totalorder %s69, 1
      %p150 = scmp.ne.s32.totalorder %s145, %s147
      %p151 = scmp.eq.s32.totalorder %s69, 0
      %p152 = por %p150, %p151
      %p153 = scmp.ne.s32.totalorder %s145, %s147
      %p154 = scmp.eq.s32.totalorder %s74, 1
      %p155 = por %p153, %p154
      %p156 = scmp.ne.s32.totalorder %s147, %s148
      %p157 = scmp.eq.s32.totalorder %s74, 0
      %p158 = por %p156, %p157
      %p159 = scmp.ne.s32.totalorder %s147, %s148
      %p160 = scmp.eq.s32.totalorder %s75, 1
      %p161 = por %p159, %p160
      %p163 = scmp.ne.s32.totalorder %s148, %s162
      %p164 = scmp.eq.s32.totalorder %s75, 0
      %p165 = por %p163, %p164
      %s167 = sadd.s32 %s166, 1
      %p170 = scmp.eq.s32.totalorder %s69, 1
      %p171 = scmp.ne.s32.totalorder %s166, %s168
      %p172 = scmp.eq.s32.totalorder %s69, 0
      %p173 = por %p171, %p172
      %p174 = scmp.ne.s32.totalorder %s166, %s168
      %p175 = scmp.eq.s32.totalorder %s74, 1
      %p176 = por %p174, %p175
      %p177 = scmp.ne.s32.totalorder %s168, %s169
      %p178 = scmp.eq.s32.totalorder %s74, 0
      %p179 = por %p177, %p178
      %p180 = scmp.ne.s32.totalorder %s168, %s169
      %p181 = scmp.eq.s32.totalorder %s75, 1
      %p182 = por %p180, %p181
      %p184 = scmp.ne.s32.totalorder %s169, %s183
      %p185 = scmp.eq.s32.totalorder %s75, 0
      %p186 = por %p184, %p185
      %s188 = sadd.s32 %s187, 1
      %p191 = scmp.eq.s32.totalorder %s69, 1
      %p192 = scmp.ne.s32.totalorder %s187, %s189
      %p193 = scmp.eq.s32.totalorder %s69, 0
      %p194 = por %p192, %p193
      %p195 = scmp.ne.s32.totalorder %s187, %s189
      %p196 = scmp.eq.s32.totalorder %s74, 1
      %p197 = por %p195, %p196
      %p198 = scmp.ne.s32.totalorder %s189, %s190
      %p199 = scmp.eq.s32.totalorder %s74, 0
      %p200 = por %p198, %p199
      %p201 = scmp.ne.s32.totalorder %s189, %s190
      %p202 = scmp.eq.s32.totalorder %s75, 1
      %p203 = por %p201, %p202
      %p205 = scmp.ne.s32.totalorder %s190, %s204
      %p206 = scmp.eq.s32.totalorder %s75, 0
      %p207 = por %p205, %p206
      %s209 = sadd.s32 %s208, 1
      %p212 = scmp.eq.s32.totalorder %s69, 1
      %p213 = scmp.ne.s32.totalorder %s208, %s210
      %p214 = scmp.eq.s32.totalorder %s69, 0
      %p215 = por %p213, %p214
      %p216 = scmp.ne.s32.totalorder %s208, %s210
      %p217 = scmp.eq.s32.totalorder %s74, 1
      %p218 = por %p216, %p217
      %p219 = scmp.ne.s32.totalorder %s210, %s211
      %p220 = scmp.eq.s32.totalorder %s74, 0
      %p221 = por %p219, %p220
      %p222 = scmp.ne.s32.totalorder %s210, %s211
      %p223 = scmp.eq.s32.totalorder %s75, 1
      %p224 = por %p222, %p223
      %p226 = scmp.ne.s32.totalorder %s211, %s225
      %p227 = scmp.eq.s32.totalorder %s75, 0
      %p228 = por %p226, %p227
      %s230 = sadd.s32 %s229, 1
      %p233 = scmp.eq.s32.totalorder %s69, 1
      %p234 = scmp.ne.s32.totalorder %s229, %s231
      %p235 = scmp.eq.s32.totalorder %s69, 0
      %p236 = por %p234, %p235
      %p237 = scmp.ne.s32.totalorder %s229, %s231
      %p238 = scmp.eq.s32.totalorder %s74, 1
      %p239 = por %p237, %p238
      %p240 = scmp.ne.s32.totalorder %s231, %s232
      %p241 = scmp.eq.s32.totalorder %s74, 0
      %p242 = por %p240, %p241
      %p243 = scmp.ne.s32.totalorder %s231, %s232
      %p244 = scmp.eq.s32.totalorder %s75, 1
      %p245 = por %p243, %p244
      %p247 = scmp.ne.s32.totalorder %s232, %s246
      %p248 = scmp.eq.s32.totalorder %s75, 0
      %p249 = por %p247, %p248
      %s251 = sadd.s32 %s250, 1
      %p254 = scmp.eq.s32.totalorder %s69, 1
      %p255 = scmp.ne.s32.totalorder %s250, %s252
      %p256 = scmp.eq.s32.totalorder %s69, 0
      %p257 = por %p255, %p256
      %p258 = scmp.ne.s32.totalorder %s250, %s252
      %p259 = scmp.eq.s32.totalorder %s74, 1
      %p260 = por %p258, %p259
      %p261 = scmp.ne.s32.totalorder %s252, %s253
      %p262 = scmp.eq.s32.totalorder %s74, 0
      %p263 = por %p261, %p262
      %p264 = scmp.ne.s32.totalorder %s252, %s253
      %p265 = scmp.eq.s32.totalorder %s75, 1
      %p266 = por %p264, %p265
      %p268 = scmp.ne.s32.totalorder %s253, %s267
      %p269 = scmp.eq.s32.totalorder %s75, 0
      %p270 = por %p268, %p269
      %s272 = sadd.s32 %s271, 1
      %p275 = scmp.eq.s32.totalorder %s69, 1
      %p276 = scmp.ne.s32.totalorder %s271, %s273
      %p277 = scmp.eq.s32.totalorder %s69, 0
      %p278 = por %p276, %p277
      %p279 = scmp.ne.s32.totalorder %s271, %s273
      %p280 = scmp.eq.s32.totalorder %s74, 1
      %p281 = por %p279, %p280
      %p282 = scmp.ne.s32.totalorder %s273, %s274
      %p283 = scmp.eq.s32.totalorder %s74, 0
      %p284 = por %p282, %p283
      %p285 = scmp.ne.s32.totalorder %s273, %s274
      %p286 = scmp.eq.s32.totalorder %s75, 1
      %p287 = por %p285, %p286
      %p289 = scmp.ne.s32.totalorder %s274, %s288
      %p290 = scmp.eq.s32.totalorder %s75, 0
      %p291 = por %p289, %p290
      %s293 = sadd.s32 %s292, 1
      %p296 = scmp.eq.s32.totalorder %s69, 1
      %p297 = scmp.ne.s32.totalorder %s292, %s294
      %p298 = scmp.eq.s32.totalorder %s69, 0
      %p299 = por %p297, %p298
      %p300 = scmp.ne.s32.totalorder %s292, %s294
      %p301 = scmp.eq.s32.totalorder %s74, 1
      %p302 = por %p300, %p301
      %p303 = scmp.ne.s32.totalorder %s294, %s295
      %p304 = scmp.eq.s32.totalorder %s74, 0
      %p305 = por %p303, %p304
      %p306 = scmp.ne.s32.totalorder %s294, %s295
      %p307 = scmp.eq.s32.totalorder %s75, 1
      %p308 = por %p306, %p307
      %p310 = scmp.ne.s32.totalorder %s295, %s309
      %p311 = scmp.eq.s32.totalorder %s75, 0
      %p312 = por %p310, %p311
      %s314 = sadd.s32 %s313, 1
      %p317 = scmp.eq.s32.totalorder %s69, 1
      %p318 = scmp.ne.s32.totalorder %s313, %s315
      %p319 = scmp.eq.s32.totalorder %s69, 0
      %p320 = por %p318, %p319
      %p321 = scmp.ne.s32.totalorder %s313, %s315
      %p322 = scmp.eq.s32.totalorder %s74, 1
      %p323 = por %p321, %p322
      %p324 = scmp.ne.s32.totalorder %s315, %s316
      %p325 = scmp.eq.s32.totalorder %s74, 0
      %p326 = por %p324, %p325
      %p327 = scmp.ne.s32.totalorder %s315, %s316
      %p328 = scmp.eq.s32.totalorder %s75, 1
      %p329 = por %p327, %p328
      %p331 = scmp.ne.s32.totalorder %s316, %s330
      %p332 = scmp.eq.s32.totalorder %s75, 0
      %p333 = por %p331, %p332
      %s335 = sadd.s32 %s334, 1
      %p338 = scmp.eq.s32.totalorder %s69, 1
      %p339 = scmp.ne.s32.totalorder %s334, %s336
      %p340 = scmp.eq.s32.totalorder %s69, 0
      %p341 = por %p339, %p340
      %p342 = scmp.ne.s32.totalorder %s334, %s336
      %p343 = scmp.eq.s32.totalorder %s74, 1
      %p344 = por %p342, %p343
      %p345 = scmp.ne.s32.totalorder %s336, %s337
      %p346 = scmp.eq.s32.totalorder %s74, 0
      %p347 = por %p345, %p346
      %p348 = scmp.ne.s32.totalorder %s336, %s337
      %p349 = scmp.eq.s32.totalorder %s75, 1
      %p350 = por %p348, %p349
      %p352 = scmp.ne.s32.totalorder %s337, %s351
      %p353 = scmp.eq.s32.totalorder %s75, 0
      %p354 = por %p352, %p353
      %s356 = sadd.s32 %s355, 1
      %p359 = scmp.eq.s32.totalorder %s69, 1
      %p360 = scmp.ne.s32.totalorder %s355, %s357
      %p361 = scmp.eq.s32.totalorder %s69, 0
      %p362 = por %p360, %p361
      %p363 = scmp.ne.s32.totalorder %s355, %s357
      %p364 = scmp.eq.s32.totalorder %s74, 1
      %p365 = por %p363, %p364
      %p366 = scmp.ne.s32.totalorder %s357, %s358
      %p367 = scmp.eq.s32.totalorder %s74, 0
      %p368 = por %p366, %p367
      %p369 = scmp.ne.s32.totalorder %s357, %s358
      %p370 = scmp.eq.s32.totalorder %s75, 1
      %p371 = por %p369, %p370
      %p373 = scmp.ne.s32.totalorder %s358, %s372
      %p374 = scmp.eq.s32.totalorder %s75, 0
      %p375 = por %p373, %p374
      %s377 = sadd.s32 %s376, 1
      %p380 = scmp.eq.s32.totalorder %s69, 1
      %p381 = scmp.ne.s32.totalorder %s376, %s378
      %p382 = scmp.eq.s32.totalorder %s69, 0
      %p383 = por %p381, %p382
      %p384 = scmp.ne.s32.totalorder %s376, %s378
      %p385 = scmp.eq.s32.totalorder %s74, 1
      %p386 = por %p384, %p385
      %p387 = scmp.ne.s32.totalorder %s378, %s379
      %p388 = scmp.eq.s32.totalorder %s74, 0
      %p389 = por %p387, %p388
      %p390 = scmp.ne.s32.totalorder %s378, %s379
      %p391 = scmp.eq.s32.totalorder %s75, 1
      %p392 = por %p390, %p391
      %p394 = scmp.ne.s32.totalorder %s379, %s393
      %p395 = scmp.eq.s32.totalorder %s75, 0
      %p396 = por %p394, %p395
      %s398 = sadd.s32 %s397, 1
      %p401 = scmp.eq.s32.totalorder %s69, 1
      %p402 = scmp.ne.s32.totalorder %s397, %s399
      %p403 = scmp.eq.s32.totalorder %s69, 0
      %p404 = por %p402, %p403
      %p405 = scmp.ne.s32.totalorder %s397, %s399
      %p406 = scmp.eq.s32.totalorder %s74, 1
      %p407 = por %p405, %p406
      %p408 = scmp.ne.s32.totalorder %s399, %s400
      %p409 = scmp.eq.s32.totalorder %s74, 0
      %p410 = por %p408, %p409
      %p411 = scmp.ne.s32.totalorder %s399, %s400
      %p412 = scmp.eq.s32.totalorder %s75, 1
      %p413 = por %p411, %p412
      %p415 = scmp.ne.s32.totalorder %s400, %s414
      %p416 = scmp.eq.s32.totalorder %s75, 0
      %p417 = por %p415, %p416
      %s419 = sadd.s32 %s418, 1
      %p422 = scmp.eq.s32.totalorder %s69, 1
      %p423 = scmp.ne.s32.totalorder %s418, %s420
      %p424 = scmp.eq.s32.totalorder %s69, 0
      %p425 = por %p423, %p424
      %p426 = scmp.ne.s32.totalorder %s418, %s420
      %p427 = scmp.eq.s32.totalorder %s74, 1
      %p428 = por %p426, %p427
      %p429 = scmp.ne.s32.totalorder %s420, %s421
      %p430 = scmp.eq.s32.totalorder %s74, 0
      %p431 = por %p429, %p430
      %p432 = scmp.ne.s32.totalorder %s420, %s421
      %p433 = scmp.eq.s32.totalorder %s75, 1
      %p434 = por %p432, %p433
      %p436 = scmp.ne.s32.totalorder %s421, %s435
      %p437 = scmp.eq.s32.totalorder %s75, 0
      %p438 = por %p436, %p437
      %s440 = sadd.s32 %s439, 1
      %p443 = scmp.eq.s32.totalorder %s69, 1
      %p444 = scmp.ne.s32.totalorder %s439, %s441
      %p445 = scmp.eq.s32.totalorder %s69, 0
      %p446 = por %p444, %p445
      %p447 = scmp.ne.s32.totalorder %s439, %s441
      %p448 = scmp.eq.s32.totalorder %s74, 1
      %p449 = por %p447, %p448
      %p450 = scmp.ne.s32.totalorder %s441, %s442
      %p451 = scmp.eq.s32.totalorder %s74, 0
      %p452 = por %p450, %p451
      %p453 = scmp.ne.s32.totalorder %s441, %s442
      %p454 = scmp.eq.s32.totalorder %s75, 1
      %p455 = por %p453, %p454
      %p457 = scmp.ne.s32.totalorder %s442, %s456
      %p458 = scmp.eq.s32.totalorder %s75, 0
      %p459 = por %p457, %p458
      %s461 = sadd.s32 %s460, 1
      %p464 = scmp.eq.s32.totalorder %s69, 1
      %p465 = scmp.ne.s32.totalorder %s460, %s462
      %p466 = scmp.eq.s32.totalorder %s69, 0
      %p467 = por %p465, %p466
      %p468 = scmp.ne.s32.totalorder %s460, %s462
      %p469 = scmp.eq.s32.totalorder %s74, 1
      %p470 = por %p468, %p469
      %p471 = scmp.ne.s32.totalorder %s462, %s463
      %p472 = scmp.eq.s32.totalorder %s74, 0
      %p473 = por %p471, %p472
      %p474 = scmp.ne.s32.totalorder %s462, %s463
      %p475 = scmp.eq.s32.totalorder %s75, 1
      %p476 = por %p474, %p475
      %p478 = scmp.ne.s32.totalorder %s463, %s477
      %p479 = scmp.eq.s32.totalorder %s75, 0
      %p480 = por %p478, %p479
      %s482 = sadd.s32 %s481, 1
      %p485 = scmp.eq.s32.totalorder %s69, 1
      %p486 = scmp.ne.s32.totalorder %s481, %s483
      %p487 = scmp.eq.s32.totalorder %s69, 0
      %p488 = por %p486, %p487
      %p489 = scmp.ne.s32.totalorder %s481, %s483
      %p490 = scmp.eq.s32.totalorder %s74, 1
      %p491 = por %p489, %p490
      %p492 = scmp.ne.s32.totalorder %s483, %s484
      %p493 = scmp.eq.s32.totalorder %s74, 0
      %p494 = por %p492, %p493
      %p495 = scmp.ne.s32.totalorder %s483, %s484
      %p496 = scmp.eq.s32.totalorder %s75, 1
      %p497 = por %p495, %p496
      %p499 = scmp.ne.s32.totalorder %s484, %s498
      %p500 = scmp.eq.s32.totalorder %s75, 0
      %p501 = por %p499, %p500
      %s503 = sadd.s32 %s502, 1
      %p506 = scmp.eq.s32.totalorder %s69, 1
      %p507 = scmp.ne.s32.totalorder %s502, %s504
      %p508 = scmp.eq.s32.totalorder %s69, 0
      %p509 = por %p507, %p508
      %p510 = scmp.ne.s32.totalorder %s502, %s504
      %p511 = scmp.eq.s32.totalorder %s74, 1
      %p512 = por %p510, %p511
      %p513 = scmp.ne.s32.totalorder %s504, %s505
      %p514 = scmp.eq.s32.totalorder %s74, 0
      %p515 = por %p513, %p514
      %p516 = scmp.ne.s32.totalorder %s504, %s505
      %p517 = scmp.eq.s32.totalorder %s75, 1
      %p518 = por %p516, %p517
      %p520 = scmp.ne.s32.totalorder %s505, %s519
      %p521 = scmp.eq.s32.totalorder %s75, 0
      %p522 = por %p520, %p521
      %s524 = sadd.s32 %s523, 1
      %p527 = scmp.eq.s32.totalorder %s69, 1
      %p528 = scmp.ne.s32.totalorder %s523, %s525
      %p529 = scmp.eq.s32.totalorder %s69, 0
      %p530 = por %p528, %p529
      %p531 = scmp.ne.s32.totalorder %s523, %s525
      %p532 = scmp.eq.s32.totalorder %s74, 1
      %p533 = por %p531, %p532
      %p534 = scmp.ne.s32.totalorder %s525, %s526
      %p535 = scmp.eq.s32.totalorder %s74, 0
      %p536 = por %p534, %p535
      %p537 = scmp.ne.s32.totalorder %s525, %s526
      %p538 = scmp.eq.s32.totalorder %s75, 1
      %p539 = por %p537, %p538
      %p541 = scmp.ne.s32.totalorder %s526, %s540
      %p542 = scmp.eq.s32.totalorder %s75, 0
      %p543 = por %p541, %p542
      %s545 = sadd.s32 %s544, 1
      %p548 = scmp.eq.s32.totalorder %s69, 1
      %p549 = scmp.ne.s32.totalorder %s544, %s546
      %p550 = scmp.eq.s32.totalorder %s69, 0
      %p551 = por %p549, %p550
      %p552 = scmp.ne.s32.totalorder %s544, %s546
      %p553 = scmp.eq.s32.totalorder %s74, 1
      %p554 = por %p552, %p553
      %p555 = scmp.ne.s32.totalorder %s546, %s547
      %p556 = scmp.eq.s32.totalorder %s74, 0
      %p557 = por %p555, %p556
      %p558 = scmp.ne.s32.totalorder %s546, %s547
      %p559 = scmp.eq.s32.totalorder %s75, 1
      %p560 = por %p558, %p559
      %p562 = scmp.ne.s32.totalorder %s547, %s561
      %p563 = scmp.eq.s32.totalorder %s75, 0
      %p564 = por %p562, %p563
      %s566 = sadd.s32 %s565, 1
      %p569 = scmp.eq.s32.totalorder %s69, 1
      %p570 = scmp.ne.s32.totalorder %s565, %s567
      %p571 = scmp.eq.s32.totalorder %s69, 0
      %p572 = por %p570, %p571
      %p573 = scmp.ne.s32.totalorder %s565, %s567
      %p574 = scmp.eq.s32.totalorder %s74, 1
      %p575 = por %p573, %p574
      %p576 = scmp.ne.s32.totalorder %s567, %s568
      %p577 = scmp.eq.s32.totalorder %s74, 0
      %p578 = por %p576, %p577
      %p579 = scmp.ne.s32.totalorder %s567, %s568
      %p580 = scmp.eq.s32.totalorder %s75, 1
      %p581 = por %p579, %p580
      %p583 = scmp.ne.s32.totalorder %s568, %s582
      %p584 = scmp.eq.s32.totalorder %s75, 0
      %p585 = por %p583, %p584
      %s587 = sadd.s32 %s586, 1
      %p590 = scmp.eq.s32.totalorder %s69, 1
      %p591 = scmp.ne.s32.totalorder %s586, %s588
      %p592 = scmp.eq.s32.totalorder %s69, 0
      %p593 = por %p591, %p592
      %p594 = scmp.ne.s32.totalorder %s586, %s588
      %p595 = scmp.eq.s32.totalorder %s74, 1
      %p596 = por %p594, %p595
      %p597 = scmp.ne.s32.totalorder %s588, %s589
      %p598 = scmp.eq.s32.totalorder %s74, 0
      %p599 = por %p597, %p598
      %p600 = scmp.ne.s32.totalorder %s588, %s589
      %p601 = scmp.eq.s32.totalorder %s75, 1
      %p602 = por %p600, %p601
      %p604 = scmp.ne.s32.totalorder %s589, %s603
      %p605 = scmp.eq.s32.totalorder %s75, 0
      %p606 = por %p604, %p605
      %s608 = sadd.s32 %s607, 1
      %p611 = scmp.eq.s32.totalorder %s69, 1
      %p612 = scmp.ne.s32.totalorder %s607, %s609
      %p613 = scmp.eq.s32.totalorder %s69, 0
      %p614 = por %p612, %p613
      %p615 = scmp.ne.s32.totalorder %s607, %s609
      %p616 = scmp.eq.s32.totalorder %s74, 1
      %p617 = por %p615, %p616
      %p618 = scmp.ne.s32.totalorder %s609, %s610
      %p619 = scmp.eq.s32.totalorder %s74, 0
      %p620 = por %p618, %p619
      %p621 = scmp.ne.s32.totalorder %s609, %s610
      %p622 = scmp.eq.s32.totalorder %s75, 1
      %p623 = por %p621, %p622
      %p625 = scmp.ne.s32.totalorder %s610, %s624
      %p626 = scmp.eq.s32.totalorder %s75, 0
      %p627 = por %p625, %p626
      %s629 = sadd.s32 %s628, 1
      %p632 = scmp.eq.s32.totalorder %s69, 1
      %p633 = scmp.ne.s32.totalorder %s628, %s630
      %p634 = scmp.eq.s32.totalorder %s69, 0
      %p635 = por %p633, %p634
      %p636 = scmp.ne.s32.totalorder %s628, %s630
      %p637 = scmp.eq.s32.totalorder %s74, 1
      %p638 = por %p636, %p637
      %p639 = scmp.ne.s32.totalorder %s630, %s631
      %p640 = scmp.eq.s32.totalorder %s74, 0
      %p641 = por %p639, %p640
      %p642 = scmp.ne.s32.totalorder %s630, %s631
      %p643 = scmp.eq.s32.totalorder %s75, 1
      %p644 = por %p642, %p643
      %p646 = scmp.ne.s32.totalorder %s631, %s645
      %p647 = scmp.eq.s32.totalorder %s75, 0
      %p648 = por %p646, %p647
      %s650 = sadd.s32 %s649, 1
      %p653 = scmp.eq.s32.totalorder %s69, 1
      %p654 = scmp.ne.s32.totalorder %s649, %s651
      %p655 = scmp.eq.s32.totalorder %s69, 0
      %p656 = por %p654, %p655
      %p657 = scmp.ne.s32.totalorder %s649, %s651
      %p658 = scmp.eq.s32.totalorder %s74, 1
      %p659 = por %p657, %p658
      %p660 = scmp.ne.s32.totalorder %s651, %s652
      %p661 = scmp.eq.s32.totalorder %s74, 0
      %p662 = por %p660, %p661
      %p663 = scmp.ne.s32.totalorder %s651, %s652
      %p664 = scmp.eq.s32.totalorder %s75, 1
      %p665 = por %p663, %p664
      %p667 = scmp.ne.s32.totalorder %s652, %s666
      %p668 = scmp.eq.s32.totalorder %s75, 0
      %p669 = por %p667, %p668
      %s671 = sadd.s32 %s670, 1
      %p674 = scmp.eq.s32.totalorder %s69, 1
      %p675 = scmp.ne.s32.totalorder %s670, %s672
      %p676 = scmp.eq.s32.totalorder %s69, 0
      %p677 = por %p675, %p676
      %p678 = scmp.ne.s32.totalorder %s670, %s672
      %p679 = scmp.eq.s32.totalorder %s74, 1
      %p680 = por %p678, %p679
      %p681 = scmp.ne.s32.totalorder %s672, %s673
      %p682 = scmp.eq.s32.totalorder %s74, 0
      %p683 = por %p681, %p682
      %p684 = scmp.ne.s32.totalorder %s672, %s673
      %p685 = scmp.eq.s32.totalorder %s75, 1
      %p686 = por %p684, %p685
      %p688 = scmp.ne.s32.totalorder %s673, %s687
      %p689 = scmp.eq.s32.totalorder %s75, 0
      %p690 = por %p688, %p689
      %s691 = ssub.s32 %s69, %s76
      %p692 = scmp.eq.s32.totalorder %s691, 0
      %s694 = sadd.s32 %s693, 1
      %s695 = scalar_select %p692, %s693, %s694
      %p698 = pneg %p692
      %p699 = scmp.eq.s32.totalorder %s69, 1
      %p700 = por %p698, %p699
      %p701 = scmp.ne.s32.totalorder %s693, %s696
      %p702 = scmp.eq.s32.totalorder %s69, 0
      %p703 = por %p701, %p702
      %p704 = scmp.ne.s32.totalorder %s693, %s696
      %p705 = scmp.eq.s32.totalorder %s74, 1
      %p706 = por %p704, %p705
      %p707 = scmp.ne.s32.totalorder %s696, %s697
      %p708 = scmp.eq.s32.totalorder %s74, 0
      %p709 = por %p707, %p708
      %p710 = scmp.ne.s32.totalorder %s696, %s697
      %p711 = scmp.eq.s32.totalorder %s75, 1
      %p712 = por %p710, %p711
      %p714 = scmp.ne.s32.totalorder %s697, %s713
      %p715 = scmp.eq.s32.totalorder %s75, 0
      %p716 = por %p714, %p715
      %p717 = scmp.le.s32.totalorder 1, %s69
      %p718 = scmp.lt.s32.totalorder %s69, 3
      %p719 = pnand %p717, %p718
      %p720 = pneg %p719
      // Predicated region
      $region9: #{ae_forward.1} parent=5 // pred_check
        _
      $region10: #{ae_forward.1} parent=5 // pred_check_branch
        %722 = sbr.rel (%p719) target = $region12
      $region11: #{ae_forward.1} parent=5 // pred_region
        %s723 = ssub.s32 %s69, 1
        // Predicated region
        $region13: #{ae_forward.1} parent=11 // pred_check
          %p724 = pneg %p116
        $region14: #{ae_forward.1} parent=11 // pred_check_branch
          %726 = sbr.rel (%p724) target = $region16
        $region15: #{ae_forward.1} parent=11 // pred_region
          _
        $region16: #{ae_forward.1} parent=11 // pred_fallthru
          _
        // Predicated region
        $region17: #{ae_forward.1} parent=11 // pred_check
          %p727 = pneg %p137
        $region18: #{ae_forward.1} parent=11 // pred_check_branch
          %729 = sbr.rel (%p727) target = $region20
        $region19: #{ae_forward.1} parent=11 // pred_region
          _
        $region20: #{ae_forward.1} parent=11 // pred_fallthru
          _
        // Predicated region
        $region21: #{ae_forward.1} parent=11 // pred_check
          %p730 = pneg %p158
        $region22: #{ae_forward.1} parent=11 // pred_check_branch
          %732 = sbr.rel (%p730) target = $region24
        $region23: #{ae_forward.1} parent=11 // pred_region
          %734 = vsyncadd [#allocation4], 0
          %s735 = sshll.u32 %s7, 4
          %s736 = int_to_ptr.hbm [resolvable:$true] %s735
          %s737 = sshll.u32 [#allocation3], 4
          %s738 = int_to_ptr.vmem [resolvable:$true] %s737
          %743 = dma.hbm_to_vmem [thread:$0]  %s736, 28672, %s738, [#allocation4], 256, 256, 16
        $region24: #{ae_forward.1} parent=11 // pred_fallthru
          _
        // Predicated region
        $region25: #{ae_forward.1} parent=11 // pred_check
          %p744 = pneg %p179
        $region26: #{ae_forward.1} parent=11 // pred_check_branch
          %746 = sbr.rel (%p744) target = $region28
        $region27: #{ae_forward.1} parent=11 // pred_region
          _
        $region28: #{ae_forward.1} parent=11 // pred_fallthru
          _
        // Predicated region
        $region29: #{ae_forward.1} parent=11 // pred_check
          %p747 = pneg %p200
        $region30: #{ae_forward.1} parent=11 // pred_check_branch
          %749 = sbr.rel (%p747) target = $region32
        $region31: #{ae_forward.1} parent=11 // pred_region
          _
        $region32: #{ae_forward.1} parent=11 // pred_fallthru
          _
        // Predicated region
        $region33: #{ae_forward.1} parent=11 // pred_check
          %p750 = pneg %p221
        $region34: #{ae_forward.1} parent=11 // pred_check_branch
          %752 = sbr.rel (%p750) target = $region36
        $region35: #{ae_forward.1} parent=11 // pred_region
          _
        $region36: #{ae_forward.1} parent=11 // pred_fallthru
          _
        // Predicated region
        $region37: #{ae_forward.1} parent=11 // pred_check
          %p753 = pneg %p242
        $region38: #{ae_forward.1} parent=11 // pred_check_branch
          %755 = sbr.rel (%p753) target = $region40
        $region39: #{ae_forward.1} parent=11 // pred_region
          %757 = vsyncadd [#allocation6], 0
          %s758 = sshll.u32 %s15, 4
          %s759 = int_to_ptr.hbm [resolvable:$true] %s758
          %s760 = sshll.u32 [#allocation5], 4
          %s761 = int_to_ptr.vmem [resolvable:$true] %s760
          %766 = dma.hbm_to_vmem [thread:$0]  %s759, 28672, %s761, [#allocation6], 256, 256, 16
        $region40: #{ae_forward.1} parent=11 // pred_fallthru
          _
        // Predicated region
        $region41: #{ae_forward.1} parent=11 // pred_check
          %p767 = pneg %p263
        $region42: #{ae_forward.1} parent=11 // pred_check_branch
          %769 = sbr.rel (%p767) target = $region44
        $region43: #{ae_forward.1} parent=11 // pred_region
          _
        $region44: #{ae_forward.1} parent=11 // pred_fallthru
          _
        // Predicated region
        $region45: #{ae_forward.1} parent=11 // pred_check
          %p770 = pneg %p284
        $region46: #{ae_forward.1} parent=11 // pred_check_branch
          %772 = sbr.rel (%p770) target = $region48
        $region47: #{ae_forward.1} parent=11 // pred_region
          _
        $region48: #{ae_forward.1} parent=11 // pred_fallthru
          _
        // Predicated region
        $region49: #{ae_forward.1} parent=11 // pred_check
          %p773 = pneg %p305
        $region50: #{ae_forward.1} parent=11 // pred_check_branch
          %775 = sbr.rel (%p773) target = $region52
        $region51: #{ae_forward.1} parent=11 // pred_region
          _
        $region52: #{ae_forward.1} parent=11 // pred_fallthru
          _
        // Predicated region
        $region53: #{ae_forward.1} parent=11 // pred_check
          %p776 = pneg %p326
        $region54: #{ae_forward.1} parent=11 // pred_check_branch
          %778 = sbr.rel (%p776) target = $region56
        $region55: #{ae_forward.1} parent=11 // pred_region
          %780 = vsyncadd [#allocation6], 0
          %s781 = sshll.u32 %s23, 4
          %s782 = int_to_ptr.hbm [resolvable:$true] %s781
          %s783 = sshll.u32 [#allocation7], 4
          %s784 = int_to_ptr.vmem [resolvable:$true] %s783
          %789 = dma.hbm_to_vmem [thread:$0]  %s782, 4096, %s784, [#allocation6], 128, 128, 8
        $region56: #{ae_forward.1} parent=11 // pred_fallthru
          _
        // Predicated region
        $region57: #{ae_forward.1} parent=11 // pred_check
          %p790 = pneg %p347
        $region58: #{ae_forward.1} parent=11 // pred_check_branch
          %792 = sbr.rel (%p790) target = $region60
        $region59: #{ae_forward.1} parent=11 // pred_region
          _
        $region60: #{ae_forward.1} parent=11 // pred_fallthru
          _
        // Predicated region
        $region61: #{ae_forward.1} parent=11 // pred_check
          %p793 = pneg %p368
        $region62: #{ae_forward.1} parent=11 // pred_check_branch
          %795 = sbr.rel (%p793) target = $region64
        $region63: #{ae_forward.1} parent=11 // pred_region
          _
        $region64: #{ae_forward.1} parent=11 // pred_fallthru
          _
        // Predicated region
        $region65: #{ae_forward.1} parent=11 // pred_check
          %p796 = pneg %p389
        $region66: #{ae_forward.1} parent=11 // pred_check_branch
          %798 = sbr.rel (%p796) target = $region68
        $region67: #{ae_forward.1} parent=11 // pred_region
          _
        $region68: #{ae_forward.1} parent=11 // pred_fallthru
          _
        // Predicated region
        $region69: #{ae_forward.1} parent=11 // pred_check
          %p799 = pneg %p410
        $region70: #{ae_forward.1} parent=11 // pred_check_branch
          %801 = sbr.rel (%p799) target = $region72
        $region71: #{ae_forward.1} parent=11 // pred_region
          _
        $region72: #{ae_forward.1} parent=11 // pred_fallthru
          _
        // Predicated region
        $region73: #{ae_forward.1} parent=11 // pred_check
          %p802 = pneg %p431
        $region74: #{ae_forward.1} parent=11 // pred_check_branch
          %804 = sbr.rel (%p802) target = $region76
        $region75: #{ae_forward.1} parent=11 // pred_region
          _
        $region76: #{ae_forward.1} parent=11 // pred_fallthru
          _
        // Predicated region
        $region77: #{ae_forward.1} parent=11 // pred_check
          %p805 = pneg %p452
        $region78: #{ae_forward.1} parent=11 // pred_check_branch
          %807 = sbr.rel (%p805) target = $region80
        $region79: #{ae_forward.1} parent=11 // pred_region
          %809 = vsyncadd [#allocation9], 0
          %s810 = sshll.u32 %s35, 4
          %s811 = int_to_ptr.hbm [resolvable:$true] %s810
          %s812 = sshll.u32 [#allocation8], 4
          %s813 = int_to_ptr.vmem [resolvable:$true] %s812
          %818 = dma.hbm_to_vmem [thread:$0]  %s811, 4096, %s813, [#allocation9], 256, 256, 16
        $region80: #{ae_forward.1} parent=11 // pred_fallthru
          _
        // Predicated region
        $region81: #{ae_forward.1} parent=11 // pred_check
          %p819 = pneg %p473
        $region82: #{ae_forward.1} parent=11 // pred_check_branch
          %821 = sbr.rel (%p819) target = $region84
        $region83: #{ae_forward.1} parent=11 // pred_region
          _
        $region84: #{ae_forward.1} parent=11 // pred_fallthru
          _
        // Predicated region
        $region85: #{ae_forward.1} parent=11 // pred_check
          %p822 = pneg %p494
        $region86: #{ae_forward.1} parent=11 // pred_check_branch
          %824 = sbr.rel (%p822) target = $region88
        $region87: #{ae_forward.1} parent=11 // pred_region
          _
        $region88: #{ae_forward.1} parent=11 // pred_fallthru
          _
        // Predicated region
        $region89: #{ae_forward.1} parent=11 // pred_check
          %p825 = pneg %p515
        $region90: #{ae_forward.1} parent=11 // pred_check_branch
          %827 = sbr.rel (%p825) target = $region92
        $region91: #{ae_forward.1} parent=11 // pred_region
          _
        $region92: #{ae_forward.1} parent=11 // pred_fallthru
          _
        // Predicated region
        $region93: #{ae_forward.1} parent=11 // pred_check
          %p828 = pneg %p536
        $region94: #{ae_forward.1} parent=11 // pred_check_branch
          %830 = sbr.rel (%p828) target = $region96
        $region95: #{ae_forward.1} parent=11 // pred_region
          %832 = vsyncadd [#allocation9], 0
          %s833 = sshll.u32 %s43, 4
          %s834 = int_to_ptr.hbm [resolvable:$true] %s833
          %s835 = sshll.u32 [#allocation10], 4
          %s836 = int_to_ptr.vmem [resolvable:$true] %s835
          %841 = dma.hbm_to_vmem [thread:$0]  %s834, 14336, %s836, [#allocation9], 512, 512, 32
        $region96: #{ae_forward.1} parent=11 // pred_fallthru
          _
        // Predicated region
        $region97: #{ae_forward.1} parent=11 // pred_check
          %p842 = pneg %p557
        $region98: #{ae_forward.1} parent=11 // pred_check_branch
          %844 = sbr.rel (%p842) target = $region100
        $region99: #{ae_forward.1} parent=11 // pred_region
          _
        $region100: #{ae_forward.1} parent=11 // pred_fallthru
          _
        // Predicated region
        $region101: #{ae_forward.1} parent=11 // pred_check
          %p845 = pneg %p578
        $region102: #{ae_forward.1} parent=11 // pred_check_branch
          %847 = sbr.rel (%p845) target = $region104
        $region103: #{ae_forward.1} parent=11 // pred_region
          _
        $region104: #{ae_forward.1} parent=11 // pred_fallthru
          _
        // Predicated region
        $region105: #{ae_forward.1} parent=11 // pred_check
          %p848 = pneg %p599
        $region106: #{ae_forward.1} parent=11 // pred_check_branch
          %850 = sbr.rel (%p848) target = $region108
        $region107: #{ae_forward.1} parent=11 // pred_region
          _
        $region108: #{ae_forward.1} parent=11 // pred_fallthru
          _
        // Predicated region
        $region109: #{ae_forward.1} parent=11 // pred_check
          %p851 = pneg %p620
        $region110: #{ae_forward.1} parent=11 // pred_check_branch
          %853 = sbr.rel (%p851) target = $region112
        $region111: #{ae_forward.1} parent=11 // pred_region
          %855 = vsyncadd [#allocation12], 0
          %s856 = sshll.u32 %s51, 4
          %s857 = int_to_ptr.hbm [resolvable:$true] %s856
          %s858 = sshll.u32 [#allocation11], 4
          %s859 = int_to_ptr.vmem [resolvable:$true] %s858
          %864 = dma.hbm_to_vmem [thread:$0]  %s857, 14336, %s859, [#allocation12], 512, 512, 32
        $region112: #{ae_forward.1} parent=11 // pred_fallthru
          _
        // Predicated region
        $region113: #{ae_forward.1} parent=11 // pred_check
          %p865 = pneg %p641
        $region114: #{ae_forward.1} parent=11 // pred_check_branch
          %867 = sbr.rel (%p865) target = $region116
        $region115: #{ae_forward.1} parent=11 // pred_region
          _
        $region116: #{ae_forward.1} parent=11 // pred_fallthru
          _
        // Predicated region
        $region117: #{ae_forward.1} parent=11 // pred_check
          %p868 = pneg %p662
        $region118: #{ae_forward.1} parent=11 // pred_check_branch
          %870 = sbr.rel (%p868) target = $region120
        $region119: #{ae_forward.1} parent=11 // pred_region
          _
        $region120: #{ae_forward.1} parent=11 // pred_fallthru
          _
        // Predicated region
        $region121: #{ae_forward.1} parent=11 // pred_check
          %p871 = pneg %p683
        $region122: #{ae_forward.1} parent=11 // pred_check_branch
          %873 = sbr.rel (%p871) target = $region124
        $region123: #{ae_forward.1} parent=11 // pred_region
          _
        $region124: #{ae_forward.1} parent=11 // pred_fallthru
          _
      $region12: #{ae_forward.1} parent=5 // pred_fallthru
        _
      %p874 = scmp.lt.s32.totalorder %s69, 2
      // Predicated region
      $region125: #{ae_forward.1} parent=5 // pred_check
        %p875 = pneg %p874
      $region126: #{ae_forward.1} parent=5 // pred_check_branch
        %877 = sbr.rel (%p875) target = $region128
      $region127: #{ae_forward.1} parent=5 // pred_region
        // Predicated region
        $region129: #{ae_forward.1} parent=127 // pred_check
          %p878 = pneg %p89
        $region130: #{ae_forward.1} parent=127 // pred_check_branch
          %880 = sbr.rel (%p878) target = $region132
        $region131: #{ae_forward.1} parent=127 // pred_region
          %p881 = scmp.lt.s32.totalorder %s69, 1
          %s882 = scalar_select %p881, %s69, 1
          %s883 = smul.addr %s882, 4
          %s884 = smul.addr %s883, 8
          %s885 = scalar_lea.vmem %s1, %s884
        $region132: #{ae_forward.1} parent=127 // pred_fallthru
          _
      $region128: #{ae_forward.1} parent=5 // pred_fallthru
        _
      %p886 = scmp.le.s32.totalorder 1, %s69
      %p887 = scmp.lt.s32.totalorder %s69, 3
      %p888 = pnand %p886, %p887
      %p889 = pneg %p888
      // Predicated region
      $region133: #{ae_forward.1} parent=5 // pred_check
        _
      $region134: #{ae_forward.1} parent=5 // pred_check_branch
        %891 = sbr.rel (%p888) target = $region136
      $region135: #{ae_forward.1} parent=5 // pred_region
        %s892 = ssub.s32 %s69, 1
        // Predicated region
        $region137: #{ae_forward.1} parent=135 // pred_check
          %p893 = pneg %p158
        $region138: #{ae_forward.1} parent=135 // pred_check_branch
          %895 = sbr.rel (%p893) target = $region140
        $region139: #{ae_forward.1} parent=135 // pred_region
          %897 = dma.done [#allocation4], 28672
        $region140: #{ae_forward.1} parent=135 // pred_fallthru
          _
        // Predicated region
        $region141: #{ae_forward.1} parent=135 // pred_check
          %p898 = pneg %p242
        $region142: #{ae_forward.1} parent=135 // pred_check_branch
          %900 = sbr.rel (%p898) target = $region144
        $region143: #{ae_forward.1} parent=135 // pred_region
          %902 = dma.done [#allocation6], 28672
        $region144: #{ae_forward.1} parent=135 // pred_fallthru
          _
        // Predicated region
        $region145: #{ae_forward.1} parent=135 // pred_check
          %p903 = pneg %p326
        $region146: #{ae_forward.1} parent=135 // pred_check_branch
          %905 = sbr.rel (%p903) target = $region148
        $region147: #{ae_forward.1} parent=135 // pred_region
          %907 = dma.done [#allocation6], 4096
        $region148: #{ae_forward.1} parent=135 // pred_fallthru
          _
        // Predicated region
        $region149: #{ae_forward.1} parent=135 // pred_check
          %p908 = pneg %p452
        $region150: #{ae_forward.1} parent=135 // pred_check_branch
          %910 = sbr.rel (%p908) target = $region152
        $region151: #{ae_forward.1} parent=135 // pred_region
          %912 = dma.done [#allocation9], 4096
        $region152: #{ae_forward.1} parent=135 // pred_fallthru
          _
        // Predicated region
        $region153: #{ae_forward.1} parent=135 // pred_check
          %p913 = pneg %p536
        $region154: #{ae_forward.1} parent=135 // pred_check_branch
          %915 = sbr.rel (%p913) target = $region156
        $region155: #{ae_forward.1} parent=135 // pred_region
          %917 = dma.done [#allocation9], 14336
        $region156: #{ae_forward.1} parent=135 // pred_fallthru
          _
        // Predicated region
        $region157: #{ae_forward.1} parent=135 // pred_check
          %p918 = pneg %p620
        $region158: #{ae_forward.1} parent=135 // pred_check_branch
          %920 = sbr.rel (%p918) target = $region160
        $region159: #{ae_forward.1} parent=135 // pred_region
          %922 = dma.done [#allocation12], 14336
        $region160: #{ae_forward.1} parent=135 // pred_fallthru
          _
        %p923 = scmp.lt.s32.totalorder %s74, 1
        %s924 = scalar_select %p923, %s74, 1
        %s925 = smul.addr %s924, 4
        %s926 = smul.addr %s925, 8
        %s927 = scalar_lea.vmem %s1, %s926
        %p928 = pneg %p95
        %p929 = pneg %p92
        %p930 = pneg %p116
        %p931 = pneg %p113
        %p932 = pneg %p137
        %p933 = pneg %p134
        %p934 = pneg %p158
        %p935 = pneg %p155
        %p936 = pneg %p179
        %p937 = pneg %p176
        %p938 = pneg %p200
        %p939 = pneg %p197
        %p940 = pneg %p221
        %p941 = pneg %p218
        %p942 = pneg %p242
        %p943 = pneg %p239
        %p944 = pneg %p263
        %p945 = pneg %p260
        %p946 = pneg %p284
        %p947 = pneg %p281
        %p948 = pneg %p305
        %p949 = pneg %p302
        %p950 = pneg %p326
        %p951 = pneg %p323
        %p952 = pneg %p347
        %p953 = pneg %p344
        %p954 = pneg %p368
        %p955 = pneg %p365
        %p956 = pneg %p389
        %p957 = pneg %p386
        %p958 = pneg %p410
        %p959 = pneg %p407
        %p960 = pneg %p431
        %p961 = pneg %p428
        %p962 = pneg %p452
        %p963 = pneg %p449
        %p964 = pneg %p473
        %p965 = pneg %p470
        %p966 = pneg %p494
        %p967 = pneg %p491
        %p968 = pneg %p515
        %p969 = pneg %p512
        %p970 = pneg %p536
        %p971 = pneg %p533
        %p972 = pneg %p557
        %p973 = pneg %p554
        %p974 = pneg %p578
        %p975 = pneg %p575
        %p976 = pneg %p599
        %p977 = pneg %p596
        %p978 = pneg %p620
        %p979 = pneg %p617
        %p980 = pneg %p641
        %p981 = pneg %p638
        %p982 = pneg %p662
        %p983 = pneg %p659
        %p984 = pneg %p683
        %p985 = pneg %p680
        %p986 = pneg %p709
        %p987 = pneg %p706
        %p988 = scmp.lt.s32.totalorder %s74, 1
        %s989 = scalar_select %p988, %s74, 1
        %s990 = smul.addr %s989, 4
        %s991 = smul.addr %s990, 8
        %s992 = scalar_lea.vmem %s59, %s991
        %p993 = scmp.lt.s32.totalorder %s74, 1
        %s994 = scalar_select %p993, %s74, 1
        %s995 = smul.addr %s994, 4
        %s996 = smul.addr %s995, 8
        %s997 = scalar_lea.vmem %s1, %s996
        %p998 = scmp.lt.s32.totalorder %s74, 1
        %s999 = scalar_select %p998, %s74, 1
        %s1000 = smul.addr %s999, 4
        %s1001 = smul.addr %s1000, 8
        %s1002 = scalar_lea.vmem %s59, %s1001
        %v1003 = vld [vmem:[%s997] sm:$0xff]
        %v1004 = vld [vmem:[%s997 + $0x8] sm:$0xff]
        %v1005 = vld [vmem:[%s997 + $0x10] sm:$0xff]
        %v1006 = vld [vmem:[%s997 + $0x18] sm:$0x3f]
        %v1007 = vld [vmem:[%s3] sm:$0xff]
        %v1008 = vld [vmem:[%s3 + $0x8] sm:$0xff]
        %v1009 = vld [vmem:[%s3 + $0x10] sm:$0xff]
        %v1010 = vld [vmem:[%s3 + $0x18] sm:$0xff]
        %v1011 = vld [vmem:[%s3 + $0x20] sm:$0xff]
        %v1012 = vld [vmem:[%s3 + $0x28] sm:$0xff]
        %v1013 = vld [vmem:[%s3 + $0x30] sm:$0xff]
        %v1014 = vld [vmem:[%s3 + $0x38] sm:$0xff]
        %v1015 = vld [vmem:[%s3 + $0x40] sm:$0xff]
        %v1016 = vld [vmem:[%s3 + $0x48] sm:$0xff]
        %v1017 = vld [vmem:[%s3 + $0x50] sm:$0xff]
        %v1018 = vld [vmem:[%s3 + $0x58] sm:$0xff]
        %v1019 = vld [vmem:[%s3 + $0x60] sm:$0xf]
        %v1020 = vld [vmem:[%s3 + $0x68] sm:$0xf]
        %v1021 = vld [vmem:[%s3 + $0x70] sm:$0xf]
        %v1022 = vld [vmem:[%s3 + $0x78] sm:$0xf]
        %s1023 = scalar_lea.vmem %s3, 128
        %v1024 = vld [vmem:[%s1023] sm:$0xff]
        %v1025 = vld [vmem:[%s1023 + $0x8] sm:$0xff]
        %v1026 = vld [vmem:[%s1023 + $0x10] sm:$0xff]
        %v1027 = vld [vmem:[%s1023 + $0x18] sm:$0xff]
        %v1028 = vld [vmem:[%s1023 + $0x20] sm:$0xff]
        %v1029 = vld [vmem:[%s1023 + $0x28] sm:$0xff]
        %v1030 = vld [vmem:[%s1023 + $0x30] sm:$0xff]
        %v1031 = vld [vmem:[%s1023 + $0x38] sm:$0xff]
        %v1032 = vld [vmem:[%s1023 + $0x40] sm:$0xff]
        %v1033 = vld [vmem:[%s1023 + $0x48] sm:$0xff]
        %v1034 = vld [vmem:[%s1023 + $0x50] sm:$0xff]
        %v1035 = vld [vmem:[%s1023 + $0x58] sm:$0xff]
        %v1036 = vld [vmem:[%s1023 + $0x60] sm:$0xf]
        %v1037 = vld [vmem:[%s1023 + $0x68] sm:$0xf]
        %v1038 = vld [vmem:[%s1023 + $0x70] sm:$0xf]
        %v1039 = vld [vmem:[%s1023 + $0x78] sm:$0xf]
        %vm1044 = vcmask 1046528
        %v1045 = vrot.slane %v1003, 1
        %v1046 = vrot.slane %v1004, 1
        %v1047 = vsel %vm1044, %v1045, %v1046
        %v1048 = vrot.slane %v1005, 1
        %v1049 = vsel %vm1044, %v1046, %v1048
        %v1050 = vrot.slane %v1006, 1
        %v1051 = vsel %vm1044, %v1048, %v1050
        %vm1052 = vcmask 228352
        %v1053 = vsel %vm1052, %v1047, 0
        %v1055 = vsel %vm1052, %v1049, 0
        %v1057 = vsel %vm1052, %v1051, 0
        %v1059 = vsel %vm1052, %v1050, 0
        %vm1061 = vcmask 1043456
        %v1063 = vsel %vm1061, %v1036, 0
        %v1066 = vsel %vm1061, %v1037, 0
        %v1069 = vsel %vm1061, %v1038, 0
        %v1072 = vsel %vm1061, %v1039, 0
        %1074 = vmatpush.msra.mxu0 0.0
        %1075 = vmatpush.msra.mxu0 0.0
        %1076 = vmatpush.msra.mxu0 0.0
        %1077 = vmatpush.msra.mxu0 0.0
        %1078 = vmatpush.msra.mxu0 0.0
        %1079 = vmatpush.msra.mxu0 0.0
        %1080 = vmatpush.msra.mxu0 0.0
        %1081 = vmatpush.msra.mxu0 0.0
        %1082 = vmatpush.msra.mxu0 0.0
        %1083 = vmatpush.msra.mxu0 0.0
        %1084 = vmatpush.msra.mxu0 0.0
        %1085 = vmatpush.msra.mxu0 0.0
        %1086 = vmatpush.msra.mxu0 %v1063
        %1087 = vmatpush.msra.mxu0 %v1032
        %1088 = vmatpush.msra.mxu0 %v1028
        %1089 = vmatpush.msra.mxu0 %v1024
        %1090 = vmatmul.f32.gmra.mxu0 %v1053
        %v1091 = vpop.f32.mrf.mxu0
        %v1092 = vadd.f32 0.0, %v1091
        %1093 = vmatmul.f32.gmra.mxu0 %v1055
        %v1094 = vpop.f32.mrf.mxu0
        %v1095 = vadd.f32 0.0, %v1094
        %1096 = vmatmul.f32.gmra.mxu0 %v1057
        %v1097 = vpop.f32.mrf.mxu0
        %v1098 = vadd.f32 0.0, %v1097
        %1099 = vmatmul.f32.gmra.mxu0 %v1059
        %v1100 = vpop.f32.mrf.mxu0
        %v1101 = vadd.f32 0.0, %v1100
        %1102 = vdwg.mxu0
        %1103 = vmatpush.msra.mxu0 0.0
        %1104 = vmatpush.msra.mxu0 0.0
        %1105 = vmatpush.msra.mxu0 0.0
        %1106 = vmatpush.msra.mxu0 0.0
        %1107 = vmatpush.msra.mxu0 0.0
        %1108 = vmatpush.msra.mxu0 0.0
        %1109 = vmatpush.msra.mxu0 0.0
        %1110 = vmatpush.msra.mxu0 0.0
        %1111 = vmatpush.msra.mxu0 0.0
        %1112 = vmatpush.msra.mxu0 0.0
        %1113 = vmatpush.msra.mxu0 0.0
        %1114 = vmatpush.msra.mxu0 0.0
        %1115 = vmatpush.msra.mxu0 %v1066
        %1116 = vmatpush.msra.mxu0 %v1033
        %1117 = vmatpush.msra.mxu0 %v1029
        %1118 = vmatpush.msra.mxu0 %v1025
        %1119 = vmatmul.f32.gmra.mxu0 %v1053
        %v1120 = vpop.f32.mrf.mxu0
        %v1121 = vadd.f32 0.0, %v1120
        %1122 = vmatmul.f32.gmra.mxu0 %v1055
        %v1123 = vpop.f32.mrf.mxu0
        %v1124 = vadd.f32 0.0, %v1123
        %1125 = vmatmul.f32.gmra.mxu0 %v1057
        %v1126 = vpop.f32.mrf.mxu0
        %v1127 = vadd.f32 0.0, %v1126
        %1128 = vmatmul.f32.gmra.mxu0 %v1059
        %v1129 = vpop.f32.mrf.mxu0
        %v1130 = vadd.f32 0.0, %v1129
        %1131 = vdwg.mxu0
        %1132 = vmatpush.msra.mxu0 0.0
        %1133 = vmatpush.msra.mxu0 0.0
        %1134 = vmatpush.msra.mxu0 0.0
        %1135 = vmatpush.msra.mxu0 0.0
        %1136 = vmatpush.msra.mxu0 0.0
        %1137 = vmatpush.msra.mxu0 0.0
        %1138 = vmatpush.msra.mxu0 0.0
        %1139 = vmatpush.msra.mxu0 0.0
        %1140 = vmatpush.msra.mxu0 0.0
        %1141 = vmatpush.msra.mxu0 0.0
        %1142 = vmatpush.msra.mxu0 0.0
        %1143 = vmatpush.msra.mxu0 0.0
        %1144 = vmatpush.msra.mxu0 %v1069
        %1145 = vmatpush.msra.mxu0 %v1034
        %1146 = vmatpush.msra.mxu0 %v1030
        %1147 = vmatpush.msra.mxu0 %v1026
        %1148 = vmatmul.f32.gmra.mxu0 %v1053
        %v1149 = vpop.f32.mrf.mxu0
        %v1150 = vadd.f32 0.0, %v1149
        %1151 = vmatmul.f32.gmra.mxu0 %v1055
        %v1152 = vpop.f32.mrf.mxu0
        %v1153 = vadd.f32 0.0, %v1152
        %1154 = vmatmul.f32.gmra.mxu0 %v1057
        %v1155 = vpop.f32.mrf.mxu0
        %v1156 = vadd.f32 0.0, %v1155
        %1157 = vmatmul.f32.gmra.mxu0 %v1059
        %v1158 = vpop.f32.mrf.mxu0
        %v1159 = vadd.f32 0.0, %v1158
        %1160 = vdwg.mxu0
        %1161 = vmatpush.msra.mxu0 0.0
        %1162 = vmatpush.msra.mxu0 0.0
        %1163 = vmatpush.msra.mxu0 0.0
        %1164 = vmatpush.msra.mxu0 0.0
        %1165 = vmatpush.msra.mxu0 0.0
        %1166 = vmatpush.msra.mxu0 0.0
        %1167 = vmatpush.msra.mxu0 0.0
        %1168 = vmatpush.msra.mxu0 0.0
        %1169 = vmatpush.msra.mxu0 0.0
        %1170 = vmatpush.msra.mxu0 0.0
        %1171 = vmatpush.msra.mxu0 0.0
        %1172 = vmatpush.msra.mxu0 0.0
        %1173 = vmatpush.msra.mxu0 %v1072
        %1174 = vmatpush.msra.mxu0 %v1035
        %1175 = vmatpush.msra.mxu0 %v1031
        %1176 = vmatpush.msra.mxu0 %v1027
        %1177 = vmatmul.f32.gmra.mxu0 %v1053
        %v1178 = vpop.f32.mrf.mxu0
        %v1179 = vadd.f32 0.0, %v1178
        %1180 = vmatmul.f32.gmra.mxu0 %v1055
        %v1181 = vpop.f32.mrf.mxu0
        %v1182 = vadd.f32 0.0, %v1181
        %1183 = vmatmul.f32.gmra.mxu0 %v1057
        %v1184 = vpop.f32.mrf.mxu0
        %v1185 = vadd.f32 0.0, %v1184
        %1186 = vmatmul.f32.gmra.mxu0 %v1059
        %v1187 = vpop.f32.mrf.mxu0
        %v1188 = vadd.f32 0.0, %v1187
        %1189 = vdwg.mxu0
        %v1190 = vsel %vm1052, %v1003, 0
        %v1192 = vsel %vm1052, %v1004, 0
        %v1194 = vsel %vm1052, %v1005, 0
        %v1196 = vsel %vm1052, %v1006, 0
        %v1199 = vsel %vm1061, %v1019, 0
        %v1202 = vsel %vm1061, %v1020, 0
        %v1205 = vsel %vm1061, %v1021, 0
        %v1208 = vsel %vm1061, %v1022, 0
        %1210 = vmatpush.msra.mxu0 0.0
        %1211 = vmatpush.msra.mxu0 0.0
        %1212 = vmatpush.msra.mxu0 0.0
        %1213 = vmatpush.msra.mxu0 0.0
        %1214 = vmatpush.msra.mxu0 0.0
        %1215 = vmatpush.msra.mxu0 0.0
        %1216 = vmatpush.msra.mxu0 0.0
        %1217 = vmatpush.msra.mxu0 0.0
        %1218 = vmatpush.msra.mxu0 0.0
        %1219 = vmatpush.msra.mxu0 0.0
        %1220 = vmatpush.msra.mxu0 0.0
        %1221 = vmatpush.msra.mxu0 0.0
        %1222 = vmatpush.msra.mxu0 %v1199
        %1223 = vmatpush.msra.mxu0 %v1015
        %1224 = vmatpush.msra.mxu0 %v1011
        %1225 = vmatpush.msra.mxu0 %v1007
        %1226 = vmatmul.f32.gmra.mxu0 %v1190
        %v1227 = vpop.f32.mrf.mxu0
        %v1228 = vadd.f32 %v1092, %v1227
        %1229 = vmatmul.f32.gmra.mxu0 %v1192
        %v1230 = vpop.f32.mrf.mxu0
        %v1231 = vadd.f32 %v1095, %v1230
        %1232 = vmatmul.f32.gmra.mxu0 %v1194
        %v1233 = vpop.f32.mrf.mxu0
        %v1234 = vadd.f32 %v1098, %v1233
        %1235 = vmatmul.f32.gmra.mxu0 %v1196
        %v1236 = vpop.f32.mrf.mxu0
        %v1237 = vadd.f32 %v1101, %v1236
        %1238 = vdwg.mxu0
        %1239 = vmatpush.msra.mxu0 0.0
        %1240 = vmatpush.msra.mxu0 0.0
        %1241 = vmatpush.msra.mxu0 0.0
        %1242 = vmatpush.msra.mxu0 0.0
        %1243 = vmatpush.msra.mxu0 0.0
        %1244 = vmatpush.msra.mxu0 0.0
        %1245 = vmatpush.msra.mxu0 0.0
        %1246 = vmatpush.msra.mxu0 0.0
        %1247 = vmatpush.msra.mxu0 0.0
        %1248 = vmatpush.msra.mxu0 0.0
        %1249 = vmatpush.msra.mxu0 0.0
        %1250 = vmatpush.msra.mxu0 0.0
        %1251 = vmatpush.msra.mxu0 %v1202
        %1252 = vmatpush.msra.mxu0 %v1016
        %1253 = vmatpush.msra.mxu0 %v1012
        %1254 = vmatpush.msra.mxu0 %v1008
        %1255 = vmatmul.f32.gmra.mxu0 %v1190
        %v1256 = vpop.f32.mrf.mxu0
        %v1257 = vadd.f32 %v1121, %v1256
        %1258 = vmatmul.f32.gmra.mxu0 %v1192
        %v1259 = vpop.f32.mrf.mxu0
        %v1260 = vadd.f32 %v1124, %v1259
        %1261 = vmatmul.f32.gmra.mxu0 %v1194
        %v1262 = vpop.f32.mrf.mxu0
        %v1263 = vadd.f32 %v1127, %v1262
        %1264 = vmatmul.f32.gmra.mxu0 %v1196
        %v1265 = vpop.f32.mrf.mxu0
        %v1266 = vadd.f32 %v1130, %v1265
        %1267 = vdwg.mxu0
        %1268 = vmatpush.msra.mxu0 0.0
        %1269 = vmatpush.msra.mxu0 0.0
        %1270 = vmatpush.msra.mxu0 0.0
        %1271 = vmatpush.msra.mxu0 0.0
        %1272 = vmatpush.msra.mxu0 0.0
        %1273 = vmatpush.msra.mxu0 0.0
        %1274 = vmatpush.msra.mxu0 0.0
        %1275 = vmatpush.msra.mxu0 0.0
        %1276 = vmatpush.msra.mxu0 0.0
        %1277 = vmatpush.msra.mxu0 0.0
        %1278 = vmatpush.msra.mxu0 0.0
        %1279 = vmatpush.msra.mxu0 0.0
        %1280 = vmatpush.msra.mxu0 %v1205
        %1281 = vmatpush.msra.mxu0 %v1017
        %1282 = vmatpush.msra.mxu0 %v1013
        %1283 = vmatpush.msra.mxu0 %v1009
        %1284 = vmatmul.f32.gmra.mxu0 %v1190
        %v1285 = vpop.f32.mrf.mxu0
        %v1286 = vadd.f32 %v1150, %v1285
        %1287 = vmatmul.f32.gmra.mxu0 %v1192
        %v1288 = vpop.f32.mrf.mxu0
        %v1289 = vadd.f32 %v1153, %v1288
        %1290 = vmatmul.f32.gmra.mxu0 %v1194
        %v1291 = vpop.f32.mrf.mxu0
        %v1292 = vadd.f32 %v1156, %v1291
        %1293 = vmatmul.f32.gmra.mxu0 %v1196
        %v1294 = vpop.f32.mrf.mxu0
        %v1295 = vadd.f32 %v1159, %v1294
        %1296 = vdwg.mxu0
        %1297 = vmatpush.msra.mxu0 0.0
        %1298 = vmatpush.msra.mxu0 0.0
        %1299 = vmatpush.msra.mxu0 0.0
        %1300 = vmatpush.msra.mxu0 0.0
        %1301 = vmatpush.msra.mxu0 0.0
        %1302 = vmatpush.msra.mxu0 0.0
        %1303 = vmatpush.msra.mxu0 0.0
        %1304 = vmatpush.msra.mxu0 0.0
        %1305 = vmatpush.msra.mxu0 0.0
        %1306 = vmatpush.msra.mxu0 0.0
        %1307 = vmatpush.msra.mxu0 0.0
        %1308 = vmatpush.msra.mxu0 0.0
        %1309 = vmatpush.msra.mxu0 %v1208
        %1310 = vmatpush.msra.mxu0 %v1018
        %1311 = vmatpush.msra.mxu0 %v1014
        %1312 = vmatpush.msra.mxu0 %v1010
        %1313 = vmatmul.f32.gmra.mxu0 %v1190
        %v1314 = vpop.f32.mrf.mxu0
        %v1315 = vadd.f32 %v1179, %v1314
        %1316 = vmatmul.f32.gmra.mxu0 %v1192
        %v1317 = vpop.f32.mrf.mxu0
        %v1318 = vadd.f32 %v1182, %v1317
        %1319 = vmatmul.f32.gmra.mxu0 %v1194
        %v1320 = vpop.f32.mrf.mxu0
        %v1321 = vadd.f32 %v1185, %v1320
        %1322 = vmatmul.f32.gmra.mxu0 %v1196
        %v1323 = vpop.f32.mrf.mxu0
        %v1324 = vadd.f32 %v1188, %v1323
        %1325 = vdwg.mxu0
        %s1326 = scalar_lea.vmem %s3, 256
        %v1327 = vld [vmem:[%s1326] sm:$0xff]
        %v1328 = vld [vmem:[%s1326 + $0x8] sm:$0xff]
        %v1329 = vld [vmem:[%s1326 + $0x10] sm:$0xff]
        %v1330 = vld [vmem:[%s1326 + $0x18] sm:$0xff]
        %v1331 = vld [vmem:[%s1326 + $0x20] sm:$0xff]
        %v1332 = vld [vmem:[%s1326 + $0x28] sm:$0xff]
        %v1333 = vld [vmem:[%s1326 + $0x30] sm:$0xff]
        %v1334 = vld [vmem:[%s1326 + $0x38] sm:$0xff]
        %v1335 = vld [vmem:[%s1326 + $0x40] sm:$0xff]
        %v1336 = vld [vmem:[%s1326 + $0x48] sm:$0xff]
        %v1337 = vld [vmem:[%s1326 + $0x50] sm:$0xff]
        %v1338 = vld [vmem:[%s1326 + $0x58] sm:$0xff]
        %v1339 = vld [vmem:[%s1326 + $0x60] sm:$0xf]
        %v1340 = vld [vmem:[%s1326 + $0x68] sm:$0xf]
        %v1341 = vld [vmem:[%s1326 + $0x70] sm:$0xf]
        %v1342 = vld [vmem:[%s1326 + $0x78] sm:$0xf]
        %vm1343 = vcmask 1045504
        %v1344 = vrot.slane %v1003, 2
        %v1345 = vrot.slane %v1004, 2
        %v1346 = vsel %vm1343, %v1344, %v1345
        %v1347 = vrot.slane %v1005, 2
        %v1348 = vsel %vm1343, %v1345, %v1347
        %v1349 = vrot.slane %v1006, 2
        %v1350 = vsel %vm1343, %v1347, %v1349
        %v1351 = vsel %vm1052, %v1346, 0
        %v1353 = vsel %vm1052, %v1348, 0
        %v1355 = vsel %vm1052, %v1350, 0
        %v1357 = vsel %vm1052, %v1349, 0
        %v1360 = vsel %vm1061, %v1339, 0
        %v1363 = vsel %vm1061, %v1340, 0
        %v1366 = vsel %vm1061, %v1341, 0
        %v1369 = vsel %vm1061, %v1342, 0
        %1371 = vmatpush.msra.mxu0 0.0
        %1372 = vmatpush.msra.mxu0 0.0
        %1373 = vmatpush.msra.mxu0 0.0
        %1374 = vmatpush.msra.mxu0 0.0
        %1375 = vmatpush.msra.mxu0 0.0
        %1376 = vmatpush.msra.mxu0 0.0
        %1377 = vmatpush.msra.mxu0 0.0
        %1378 = vmatpush.msra.mxu0 0.0
        %1379 = vmatpush.msra.mxu0 0.0
        %1380 = vmatpush.msra.mxu0 0.0
        %1381 = vmatpush.msra.mxu0 0.0
        %1382 = vmatpush.msra.mxu0 0.0
        %1383 = vmatpush.msra.mxu0 %v1360
        %1384 = vmatpush.msra.mxu0 %v1335
        %1385 = vmatpush.msra.mxu0 %v1331
        %1386 = vmatpush.msra.mxu0 %v1327
        %1387 = vmatmul.f32.gmra.mxu0 %v1351
        %v1388 = vpop.f32.mrf.mxu0
        %v1389 = vadd.f32 0.0, %v1388
        %1390 = vmatmul.f32.gmra.mxu0 %v1353
        %v1391 = vpop.f32.mrf.mxu0
        %v1392 = vadd.f32 0.0, %v1391
        %1393 = vmatmul.f32.gmra.mxu0 %v1355
        %v1394 = vpop.f32.mrf.mxu0
        %v1395 = vadd.f32 0.0, %v1394
        %1396 = vmatmul.f32.gmra.mxu0 %v1357
        %v1397 = vpop.f32.mrf.mxu0
        %v1398 = vadd.f32 0.0, %v1397
        %1399 = vdwg.mxu0
        %1400 = vmatpush.msra.mxu0 0.0
        %1401 = vmatpush.msra.mxu0 0.0
        %1402 = vmatpush.msra.mxu0 0.0
        %1403 = vmatpush.msra.mxu0 0.0
        %1404 = vmatpush.msra.mxu0 0.0
        %1405 = vmatpush.msra.mxu0 0.0
        %1406 = vmatpush.msra.mxu0 0.0
        %1407 = vmatpush.msra.mxu0 0.0
        %1408 = vmatpush.msra.mxu0 0.0
        %1409 = vmatpush.msra.mxu0 0.0
        %1410 = vmatpush.msra.mxu0 0.0
        %1411 = vmatpush.msra.mxu0 0.0
        %1412 = vmatpush.msra.mxu0 %v1363
        %1413 = vmatpush.msra.mxu0 %v1336
        %1414 = vmatpush.msra.mxu0 %v1332
        %1415 = vmatpush.msra.mxu0 %v1328
        %1416 = vmatmul.f32.gmra.mxu0 %v1351
        %v1417 = vpop.f32.mrf.mxu0
        %v1418 = vadd.f32 0.0, %v1417
        %1419 = vmatmul.f32.gmra.mxu0 %v1353
        %v1420 = vpop.f32.mrf.mxu0
        %v1421 = vadd.f32 0.0, %v1420
        %1422 = vmatmul.f32.gmra.mxu0 %v1355
        %v1423 = vpop.f32.mrf.mxu0
        %v1424 = vadd.f32 0.0, %v1423
        %1425 = vmatmul.f32.gmra.mxu0 %v1357
        %v1426 = vpop.f32.mrf.mxu0
        %v1427 = vadd.f32 0.0, %v1426
        %1428 = vdwg.mxu0
        %1429 = vmatpush.msra.mxu0 0.0
        %1430 = vmatpush.msra.mxu0 0.0
        %1431 = vmatpush.msra.mxu0 0.0
        %1432 = vmatpush.msra.mxu0 0.0
        %1433 = vmatpush.msra.mxu0 0.0
        %1434 = vmatpush.msra.mxu0 0.0
        %1435 = vmatpush.msra.mxu0 0.0
        %1436 = vmatpush.msra.mxu0 0.0
        %1437 = vmatpush.msra.mxu0 0.0
        %1438 = vmatpush.msra.mxu0 0.0
        %1439 = vmatpush.msra.mxu0 0.0
        %1440 = vmatpush.msra.mxu0 0.0
        %1441 = vmatpush.msra.mxu0 %v1366
        %1442 = vmatpush.msra.mxu0 %v1337
        %1443 = vmatpush.msra.mxu0 %v1333
        %1444 = vmatpush.msra.mxu0 %v1329
        %1445 = vmatmul.f32.gmra.mxu0 %v1351
        %v1446 = vpop.f32.mrf.mxu0
        %v1447 = vadd.f32 0.0, %v1446
        %1448 = vmatmul.f32.gmra.mxu0 %v1353
        %v1449 = vpop.f32.mrf.mxu0
        %v1450 = vadd.f32 0.0, %v1449
        %1451 = vmatmul.f32.gmra.mxu0 %v1355
        %v1452 = vpop.f32.mrf.mxu0
        %v1453 = vadd.f32 0.0, %v1452
        %1454 = vmatmul.f32.gmra.mxu0 %v1357
        %v1455 = vpop.f32.mrf.mxu0
        %v1456 = vadd.f32 0.0, %v1455
        %1457 = vdwg.mxu0
        %1458 = vmatpush.msra.mxu0 0.0
        %1459 = vmatpush.msra.mxu0 0.0
        %1460 = vmatpush.msra.mxu0 0.0
        %1461 = vmatpush.msra.mxu0 0.0
        %1462 = vmatpush.msra.mxu0 0.0
        %1463 = vmatpush.msra.mxu0 0.0
        %1464 = vmatpush.msra.mxu0 0.0
        %1465 = vmatpush.msra.mxu0 0.0
        %1466 = vmatpush.msra.mxu0 0.0
        %1467 = vmatpush.msra.mxu0 0.0
        %1468 = vmatpush.msra.mxu0 0.0
        %1469 = vmatpush.msra.mxu0 0.0
        %1470 = vmatpush.msra.mxu0 %v1369
        %1471 = vmatpush.msra.mxu0 %v1338
        %1472 = vmatpush.msra.mxu0 %v1334
        %1473 = vmatpush.msra.mxu0 %v1330
        %1474 = vmatmul.f32.gmra.mxu0 %v1351
        %v1475 = vpop.f32.mrf.mxu0
        %v1476 = vadd.f32 0.0, %v1475
        %1477 = vmatmul.f32.gmra.mxu0 %v1353
        %v1478 = vpop.f32.mrf.mxu0
        %v1479 = vadd.f32 0.0, %v1478
        %1480 = vmatmul.f32.gmra.mxu0 %v1355
        %v1481 = vpop.f32.mrf.mxu0
        %v1482 = vadd.f32 0.0, %v1481
        %1483 = vmatmul.f32.gmra.mxu0 %v1357
        %v1484 = vpop.f32.mrf.mxu0
        %v1485 = vadd.f32 0.0, %v1484
        %1486 = vdwg.mxu0
        %v1487 = vadd.f32 %v1228, %v1389
        %v1488 = vadd.f32 %v1257, %v1418
        %v1489 = vadd.f32 %v1286, %v1447
        %v1490 = vadd.f32 %v1315, %v1476
        %v1491 = vadd.f32 %v1231, %v1392
        %v1492 = vadd.f32 %v1260, %v1421
        %v1493 = vadd.f32 %v1289, %v1450
        %v1494 = vadd.f32 %v1318, %v1479
        %v1495 = vadd.f32 %v1234, %v1395
        %v1496 = vadd.f32 %v1263, %v1424
        %v1497 = vadd.f32 %v1292, %v1453
        %v1498 = vadd.f32 %v1321, %v1482
        %v1499 = vadd.f32 %v1237, %v1398
        %v1500 = vadd.f32 %v1266, %v1427
        %v1501 = vadd.f32 %v1295, %v1456
        %v1502 = vadd.f32 %v1324, %v1485
        %v1503 = vld [vmem:[%s5] sm:$0xf]
        %v1505 = vperm.slane %v1503, 0
        %v1506 = vperm.slane %v1503, 1
        %v1507 = vperm.slane %v1503, 2
        %v1508 = vperm.slane %v1503, 3
        %v1513 = vadd.f32 %v1487, %v1505
        %v1514 = vadd.f32 %v1488, %v1506
        %v1515 = vadd.f32 %v1489, %v1507
        %v1516 = vadd.f32 %v1490, %v1508
        %v1517 = vadd.f32 %v1491, %v1505
        %v1518 = vadd.f32 %v1492, %v1506
        %v1519 = vadd.f32 %v1493, %v1507
        %v1520 = vadd.f32 %v1494, %v1508
        %v1521 = vadd.f32 %v1495, %v1505
        %v1522 = vadd.f32 %v1496, %v1506
        %v1523 = vadd.f32 %v1497, %v1507
        %v1524 = vadd.f32 %v1498, %v1508
        %v1525 = vadd.f32 %v1499, %v1505
        %v1526 = vadd.f32 %v1500, %v1506
        %v1527 = vadd.f32 %v1501, %v1507
        %v1528 = vadd.f32 %v1502, %v1508
        %v1529 = vmax.f32 %v1513, 0.0
        %v1530 = vmax.f32 %v1514, 0.0
        %v1531 = vmax.f32 %v1515, 0.0
        %v1532 = vmax.f32 %v1516, 0.0
        %v1533 = vmax.f32 %v1517, 0.0
        %v1534 = vmax.f32 %v1518, 0.0
        %v1535 = vmax.f32 %v1519, 0.0
        %v1536 = vmax.f32 %v1520, 0.0
        %v1537 = vmax.f32 %v1521, 0.0
        %v1538 = vmax.f32 %v1522, 0.0
        %v1539 = vmax.f32 %v1523, 0.0
        %v1540 = vmax.f32 %v1524, 0.0
        %v1541 = vmax.f32 %v1525, 0.0
        %v1542 = vmax.f32 %v1526, 0.0
        %v1543 = vmax.f32 %v1527, 0.0
        %v1544 = vmax.f32 %v1528, 0.0
        %v1545 = vld [vmem:[#allocation3] sm:$0xff]
        %v1546 = vld [vmem:[#allocation3 + $0x8] sm:$0xff]
        %v1547 = vld [vmem:[#allocation3 + $0x10] sm:$0xff]
        %v1548 = vld [vmem:[#allocation3 + $0x18] sm:$0xff]
        %v1549 = vld [vmem:[#allocation3 + $0x20] sm:$0xff]
        %v1550 = vld [vmem:[#allocation3 + $0x28] sm:$0xff]
        %v1551 = vld [vmem:[#allocation3 + $0x30] sm:$0xff]
        %v1552 = vld [vmem:[#allocation3 + $0x38] sm:$0xff]
        %v1553 = vld [vmem:[#allocation3 + $0x40] sm:$0xff]
        %v1554 = vld [vmem:[#allocation3 + $0x48] sm:$0xff]
        %v1555 = vld [vmem:[#allocation3 + $0x50] sm:$0xff]
        %v1556 = vld [vmem:[#allocation3 + $0x58] sm:$0xff]
        %v1557 = vld [vmem:[#allocation3 + $0x60] sm:$0xff]
        %v1558 = vld [vmem:[#allocation3 + $0x68] sm:$0xff]
        %v1559 = vld [vmem:[#allocation3 + $0x70] sm:$0xff]
        %v1560 = vld [vmem:[#allocation3 + $0x78] sm:$0xff]
        %v1561 = vld [vmem:[#allocation3 + $0x80] sm:$0xff]
        %v1562 = vld [vmem:[#allocation3 + $0x88] sm:$0xff]
        %v1563 = vld [vmem:[#allocation3 + $0x90] sm:$0xff]
        %v1564 = vld [vmem:[#allocation3 + $0x98] sm:$0xff]
        %v1565 = vld [vmem:[#allocation3 + $0xa0] sm:$0xff]
        %v1566 = vld [vmem:[#allocation3 + $0xa8] sm:$0xff]
        %v1567 = vld [vmem:[#allocation3 + $0xb0] sm:$0xff]
        %v1568 = vld [vmem:[#allocation3 + $0xb8] sm:$0xff]
        %v1569 = vld [vmem:[#allocation3 + $0xc0] sm:$0xff]
        %v1570 = vld [vmem:[#allocation3 + $0xc8] sm:$0xff]
        %v1571 = vld [vmem:[#allocation3 + $0xd0] sm:$0xff]
        %v1572 = vld [vmem:[#allocation3 + $0xd8] sm:$0xff]
        %v1573 = vld [vmem:[#allocation3 + $0xe0] sm:$0xff]
        %v1574 = vld [vmem:[#allocation3 + $0xe8] sm:$0xff]
        %v1575 = vld [vmem:[#allocation3 + $0xf0] sm:$0xff]
        %v1576 = vld [vmem:[#allocation3 + $0xf8] sm:$0xff]
        %v1577 = vld [vmem:[#allocation3 + $0x100] sm:$0xff]
        %v1578 = vld [vmem:[#allocation3 + $0x108] sm:$0xff]
        %v1579 = vld [vmem:[#allocation3 + $0x110] sm:$0xff]
        %v1580 = vld [vmem:[#allocation3 + $0x118] sm:$0xff]
        %v1581 = vld [vmem:[#allocation3 + $0x120] sm:$0xff]
        %v1582 = vld [vmem:[#allocation3 + $0x128] sm:$0xff]
        %v1583 = vld [vmem:[#allocation3 + $0x130] sm:$0xff]
        %v1584 = vld [vmem:[#allocation3 + $0x138] sm:$0xff]
        %v1585 = vld [vmem:[#allocation3 + $0x140] sm:$0xff]
        %v1586 = vld [vmem:[#allocation3 + $0x148] sm:$0xff]
        %v1587 = vld [vmem:[#allocation3 + $0x150] sm:$0xff]
        %v1588 = vld [vmem:[#allocation3 + $0x158] sm:$0xff]
        %v1589 = vld [vmem:[#allocation3 + $0x160] sm:$0xff]
        %v1590 = vld [vmem:[#allocation3 + $0x168] sm:$0xff]
        %v1591 = vld [vmem:[#allocation3 + $0x170] sm:$0xff]
        %v1592 = vld [vmem:[#allocation3 + $0x178] sm:$0xff]
        %v1593 = vld [vmem:[#allocation3 + $0x180] sm:$0xff]
        %v1594 = vld [vmem:[#allocation3 + $0x188] sm:$0xff]
        %v1595 = vld [vmem:[#allocation3 + $0x190] sm:$0xff]
        %v1596 = vld [vmem:[#allocation3 + $0x198] sm:$0xff]
        %v1597 = vld [vmem:[#allocation3 + $0x1a0] sm:$0xff]
        %v1598 = vld [vmem:[#allocation3 + $0x1a8] sm:$0xff]
        %v1599 = vld [vmem:[#allocation3 + $0x1b0] sm:$0xff]
        %v1600 = vld [vmem:[#allocation3 + $0x1b8] sm:$0xff]
        %v1601 = vld [vmem:[#allocation3 + $0x1c0] sm:$0xff]
        %v1602 = vld [vmem:[#allocation3 + $0x1c8] sm:$0xff]
        %v1603 = vld [vmem:[#allocation3 + $0x1d0] sm:$0xff]
        %v1604 = vld [vmem:[#allocation3 + $0x1d8] sm:$0xff]
        %v1605 = vld [vmem:[#allocation3 + $0x1e0] sm:$0xff]
        %v1606 = vld [vmem:[#allocation3 + $0x1e8] sm:$0xff]
        %v1607 = vld [vmem:[#allocation3 + $0x1f0] sm:$0xff]
        %v1608 = vld [vmem:[#allocation3 + $0x1f8] sm:$0xff]
        %v1609 = vld [vmem:[#allocation3 + $0x200] sm:$0xff]
        %v1610 = vld [vmem:[#allocation3 + $0x208] sm:$0xff]
        %v1611 = vld [vmem:[#allocation3 + $0x210] sm:$0xff]
        %v1612 = vld [vmem:[#allocation3 + $0x218] sm:$0xff]
        %v1613 = vld [vmem:[#allocation3 + $0x220] sm:$0xff]
        %v1614 = vld [vmem:[#allocation3 + $0x228] sm:$0xff]
        %v1615 = vld [vmem:[#allocation3 + $0x230] sm:$0xff]
        %v1616 = vld [vmem:[#allocation3 + $0x238] sm:$0xff]
        %v1617 = vld [vmem:[#allocation3 + $0x240] sm:$0xff]
        %v1618 = vld [vmem:[#allocation3 + $0x248] sm:$0xff]
        %v1619 = vld [vmem:[#allocation3 + $0x250] sm:$0xff]
        %v1620 = vld [vmem:[#allocation3 + $0x258] sm:$0xff]
        %v1621 = vld [vmem:[#allocation3 + $0x260] sm:$0xff]
        %v1622 = vld [vmem:[#allocation3 + $0x268] sm:$0xff]
        %v1623 = vld [vmem:[#allocation3 + $0x270] sm:$0xff]
        %v1624 = vld [vmem:[#allocation3 + $0x278] sm:$0xff]
        %v1625 = vld [vmem:[#allocation3 + $0x280] sm:$0xff]
        %v1626 = vld [vmem:[#allocation3 + $0x288] sm:$0xff]
        %v1627 = vld [vmem:[#allocation3 + $0x290] sm:$0xff]
        %v1628 = vld [vmem:[#allocation3 + $0x298] sm:$0xff]
        %v1629 = vld [vmem:[#allocation3 + $0x2a0] sm:$0xff]
        %v1630 = vld [vmem:[#allocation3 + $0x2a8] sm:$0xff]
        %v1631 = vld [vmem:[#allocation3 + $0x2b0] sm:$0xff]
        %v1632 = vld [vmem:[#allocation3 + $0x2b8] sm:$0xff]
        %v1633 = vld [vmem:[#allocation3 + $0x2c0] sm:$0xff]
        %v1634 = vld [vmem:[#allocation3 + $0x2c8] sm:$0xff]
        %v1635 = vld [vmem:[#allocation3 + $0x2d0] sm:$0xff]
        %v1636 = vld [vmem:[#allocation3 + $0x2d8] sm:$0xff]
        %v1637 = vld [vmem:[#allocation3 + $0x2e0] sm:$0xff]
        %v1638 = vld [vmem:[#allocation3 + $0x2e8] sm:$0xff]
        %v1639 = vld [vmem:[#allocation3 + $0x2f0] sm:$0xff]
        %v1640 = vld [vmem:[#allocation3 + $0x2f8] sm:$0xff]
        %v1641 = vld [vmem:[#allocation3 + $0x300] sm:$0xff]
        %v1642 = vld [vmem:[#allocation3 + $0x308] sm:$0xff]
        %v1643 = vld [vmem:[#allocation3 + $0x310] sm:$0xff]
        %v1644 = vld [vmem:[#allocation3 + $0x318] sm:$0xff]
        %v1645 = vld [vmem:[#allocation3 + $0x320] sm:$0xff]
        %v1646 = vld [vmem:[#allocation3 + $0x328] sm:$0xff]
        %v1647 = vld [vmem:[#allocation3 + $0x330] sm:$0xff]
        %v1648 = vld [vmem:[#allocation3 + $0x338] sm:$0xff]
        %v1649 = vld [vmem:[#allocation3 + $0x340] sm:$0xff]
        %v1650 = vld [vmem:[#allocation3 + $0x348] sm:$0xff]
        %v1651 = vld [vmem:[#allocation3 + $0x350] sm:$0xff]
        %v1652 = vld [vmem:[#allocation3 + $0x358] sm:$0xff]
        %v1653 = vld [vmem:[#allocation3 + $0x360] sm:$0xff]
        %v1654 = vld [vmem:[#allocation3 + $0x368] sm:$0xff]
        %v1655 = vld [vmem:[#allocation3 + $0x370] sm:$0xff]
        %v1656 = vld [vmem:[#allocation3 + $0x378] sm:$0xff]
        %vm1657 = vcmask 523264
        %v1659 = vsel %vm1657, %v1532, 0
        %v1662 = vsel %vm1657, %v1536, 0
        %v1665 = vsel %vm1657, %v1540, 0
        %v1668 = vsel %vm1657, %v1544, 0
        %1670 = vmatpush.msra.mxu0 %v1575
        %1671 = vmatpush.msra.mxu0 %v1573
        %1672 = vmatpush.msra.mxu0 %v1571
        %1673 = vmatpush.msra.mxu0 %v1569
        %1674 = vmatpush.msra.mxu0 %v1567
        %1675 = vmatpush.msra.mxu0 %v1565
        %1676 = vmatpush.msra.mxu0 %v1563
        %1677 = vmatpush.msra.mxu0 %v1561
        %1678 = vmatpush.msra.mxu0 %v1559
        %1679 = vmatpush.msra.mxu0 %v1557
        %1680 = vmatpush.msra.mxu0 %v1555
        %1681 = vmatpush.msra.mxu0 %v1553
        %1682 = vmatpush.msra.mxu0 %v1551
        %1683 = vmatpush.msra.mxu0 %v1549
        %1684 = vmatpush.msra.mxu0 %v1547
        %1685 = vmatpush.msra.mxu0 %v1545
        %1686 = vmatmul.f32.gmra.mxu0 %v1529
        %v1687 = vpop.f32.mrf.mxu0
        %v1688 = vadd.f32 0.0, %v1687
        %1689 = vmatmul.f32.gmra.mxu0 %v1533
        %v1690 = vpop.f32.mrf.mxu0
        %v1691 = vadd.f32 0.0, %v1690
        %1692 = vmatmul.f32.gmra.mxu0 %v1537
        %v1693 = vpop.f32.mrf.mxu0
        %v1694 = vadd.f32 0.0, %v1693
        %1695 = vmatmul.f32.gmra.mxu0 %v1541
        %v1696 = vpop.f32.mrf.mxu0
        %v1697 = vadd.f32 0.0, %v1696
        %1698 = vdwg.mxu0
        %1699 = vmatpush.msra.mxu0 %v1607
        %1700 = vmatpush.msra.mxu0 %v1605
        %1701 = vmatpush.msra.mxu0 %v1603
        %1702 = vmatpush.msra.mxu0 %v1601
        %1703 = vmatpush.msra.mxu0 %v1599
        %1704 = vmatpush.msra.mxu0 %v1597
        %1705 = vmatpush.msra.mxu0 %v1595
        %1706 = vmatpush.msra.mxu0 %v1593
        %1707 = vmatpush.msra.mxu0 %v1591
        %1708 = vmatpush.msra.mxu0 %v1589
        %1709 = vmatpush.msra.mxu0 %v1587
        %1710 = vmatpush.msra.mxu0 %v1585
        %1711 = vmatpush.msra.mxu0 %v1583
        %1712 = vmatpush.msra.mxu0 %v1581
        %1713 = vmatpush.msra.mxu0 %v1579
        %1714 = vmatpush.msra.mxu0 %v1577
        %1715 = vmatmul.f32.gmra.mxu0 %v1530
        %v1716 = vpop.f32.mrf.mxu0
        %v1717 = vadd.f32 %v1688, %v1716
        %1718 = vmatmul.f32.gmra.mxu0 %v1534
        %v1719 = vpop.f32.mrf.mxu0
        %v1720 = vadd.f32 %v1691, %v1719
        %1721 = vmatmul.f32.gmra.mxu0 %v1538
        %v1722 = vpop.f32.mrf.mxu0
        %v1723 = vadd.f32 %v1694, %v1722
        %1724 = vmatmul.f32.gmra.mxu0 %v1542
        %v1725 = vpop.f32.mrf.mxu0
        %v1726 = vadd.f32 %v1697, %v1725
        %1727 = vdwg.mxu0
        %1728 = vmatpush.msra.mxu0 %v1639
        %1729 = vmatpush.msra.mxu0 %v1637
        %1730 = vmatpush.msra.mxu0 %v1635
        %1731 = vmatpush.msra.mxu0 %v1633
        %1732 = vmatpush.msra.mxu0 %v1631
        %1733 = vmatpush.msra.mxu0 %v1629
        %1734 = vmatpush.msra.mxu0 %v1627
        %1735 = vmatpush.msra.mxu0 %v1625
        %1736 = vmatpush.msra.mxu0 %v1623
        %1737 = vmatpush.msra.mxu0 %v1621
        %1738 = vmatpush.msra.mxu0 %v1619
        %1739 = vmatpush.msra.mxu0 %v1617
        %1740 = vmatpush.msra.mxu0 %v1615
        %1741 = vmatpush.msra.mxu0 %v1613
        %1742 = vmatpush.msra.mxu0 %v1611
        %1743 = vmatpush.msra.mxu0 %v1609
        %1744 = vmatmul.f32.gmra.mxu0 %v1531
        %v1745 = vpop.f32.mrf.mxu0
        %v1746 = vadd.f32 %v1717, %v1745
        %1747 = vmatmul.f32.gmra.mxu0 %v1535
        %v1748 = vpop.f32.mrf.mxu0
        %v1749 = vadd.f32 %v1720, %v1748
        %1750 = vmatmul.f32.gmra.mxu0 %v1539
        %v1751 = vpop.f32.mrf.mxu0
        %v1752 = vadd.f32 %v1723, %v1751
        %1753 = vmatmul.f32.gmra.mxu0 %v1543
        %v1754 = vpop.f32.mrf.mxu0
        %v1755 = vadd.f32 %v1726, %v1754
        %1756 = vdwg.mxu0
        %1757 = vmatpush.msra.mxu0 0.0
        %1758 = vmatpush.msra.mxu0 0.0
        %1759 = vmatpush.msra.mxu0 0.0
        %1760 = vmatpush.msra.mxu0 0.0
        %1761 = vmatpush.msra.mxu0 0.0
        %1762 = vmatpush.msra.mxu0 0.0
        %1763 = vmatpush.msra.mxu0 0.0
        %1764 = vmatpush.msra.mxu0 0.0
        %1765 = vmatpush.msra.mxu0 %v1655
        %1766 = vmatpush.msra.mxu0 %v1653
        %1767 = vmatpush.msra.mxu0 %v1651
        %1768 = vmatpush.msra.mxu0 %v1649
        %1769 = vmatpush.msra.mxu0 %v1647
        %1770 = vmatpush.msra.mxu0 %v1645
        %1771 = vmatpush.msra.mxu0 %v1643
        %1772 = vmatpush.msra.mxu0 %v1641
        %1773 = vmatmul.f32.gmra.mxu0 %v1659
        %v1774 = vpop.f32.mrf.mxu0
        %v1775 = vadd.f32 %v1746, %v1774
        %1776 = vmatmul.f32.gmra.mxu0 %v1662
        %v1777 = vpop.f32.mrf.mxu0
        %v1778 = vadd.f32 %v1749, %v1777
        %1779 = vmatmul.f32.gmra.mxu0 %v1665
        %v1780 = vpop.f32.mrf.mxu0
        %v1781 = vadd.f32 %v1752, %v1780
        %1782 = vmatmul.f32.gmra.mxu0 %v1668
        %v1783 = vpop.f32.mrf.mxu0
        %v1784 = vadd.f32 %v1755, %v1783
        %1785 = vdwg.mxu0
        %1786 = vmatpush.msra.mxu0 %v1576
        %1787 = vmatpush.msra.mxu0 %v1574
        %1788 = vmatpush.msra.mxu0 %v1572
        %1789 = vmatpush.msra.mxu0 %v1570
        %1790 = vmatpush.msra.mxu0 %v1568
        %1791 = vmatpush.msra.mxu0 %v1566
        %1792 = vmatpush.msra.mxu0 %v1564
        %1793 = vmatpush.msra.mxu0 %v1562
        %1794 = vmatpush.msra.mxu0 %v1560
        %1795 = vmatpush.msra.mxu0 %v1558
        %1796 = vmatpush.msra.mxu0 %v1556
        %1797 = vmatpush.msra.mxu0 %v1554
        %1798 = vmatpush.msra.mxu0 %v1552
        %1799 = vmatpush.msra.mxu0 %v1550
        %1800 = vmatpush.msra.mxu0 %v1548
        %1801 = vmatpush.msra.mxu0 %v1546
        %1802 = vmatmul.f32.gmra.mxu0 %v1529
        %v1803 = vpop.f32.mrf.mxu0
        %v1804 = vadd.f32 0.0, %v1803
        %1805 = vmatmul.f32.gmra.mxu0 %v1533
        %v1806 = vpop.f32.mrf.mxu0
        %v1807 = vadd.f32 0.0, %v1806
        %1808 = vmatmul.f32.gmra.mxu0 %v1537
        %v1809 = vpop.f32.mrf.mxu0
        %v1810 = vadd.f32 0.0, %v1809
        %1811 = vmatmul.f32.gmra.mxu0 %v1541
        %v1812 = vpop.f32.mrf.mxu0
        %v1813 = vadd.f32 0.0, %v1812
        %1814 = vdwg.mxu0
        %1815 = vmatpush.msra.mxu0 %v1608
        %1816 = vmatpush.msra.mxu0 %v1606
        %1817 = vmatpush.msra.mxu0 %v1604
        %1818 = vmatpush.msra.mxu0 %v1602
        %1819 = vmatpush.msra.mxu0 %v1600
        %1820 = vmatpush.msra.mxu0 %v1598
        %1821 = vmatpush.msra.mxu0 %v1596
        %1822 = vmatpush.msra.mxu0 %v1594
        %1823 = vmatpush.msra.mxu0 %v1592
        %1824 = vmatpush.msra.mxu0 %v1590
        %1825 = vmatpush.msra.mxu0 %v1588
        %1826 = vmatpush.msra.mxu0 %v1586
        %1827 = vmatpush.msra.mxu0 %v1584
        %1828 = vmatpush.msra.mxu0 %v1582
        %1829 = vmatpush.msra.mxu0 %v1580
        %1830 = vmatpush.msra.mxu0 %v1578
        %1831 = vmatmul.f32.gmra.mxu0 %v1530
        %v1832 = vpop.f32.mrf.mxu0
        %v1833 = vadd.f32 %v1804, %v1832
        %1834 = vmatmul.f32.gmra.mxu0 %v1534
        %v1835 = vpop.f32.mrf.mxu0
        %v1836 = vadd.f32 %v1807, %v1835
        %1837 = vmatmul.f32.gmra.mxu0 %v1538
        %v1838 = vpop.f32.mrf.mxu0
        %v1839 = vadd.f32 %v1810, %v1838
        %1840 = vmatmul.f32.gmra.mxu0 %v1542
        %v1841 = vpop.f32.mrf.mxu0
        %v1842 = vadd.f32 %v1813, %v1841
        %1843 = vdwg.mxu0
        %1844 = vmatpush.msra.mxu0 %v1640
        %1845 = vmatpush.msra.mxu0 %v1638
        %1846 = vmatpush.msra.mxu0 %v1636
        %1847 = vmatpush.msra.mxu0 %v1634
        %1848 = vmatpush.msra.mxu0 %v1632
        %1849 = vmatpush.msra.mxu0 %v1630
        %1850 = vmatpush.msra.mxu0 %v1628
        %1851 = vmatpush.msra.mxu0 %v1626
        %1852 = vmatpush.msra.mxu0 %v1624
        %1853 = vmatpush.msra.mxu0 %v1622
        %1854 = vmatpush.msra.mxu0 %v1620
        %1855 = vmatpush.msra.mxu0 %v1618
        %1856 = vmatpush.msra.mxu0 %v1616
        %1857 = vmatpush.msra.mxu0 %v1614
        %1858 = vmatpush.msra.mxu0 %v1612
        %1859 = vmatpush.msra.mxu0 %v1610
        %1860 = vmatmul.f32.gmra.mxu0 %v1531
        %v1861 = vpop.f32.mrf.mxu0
        %v1862 = vadd.f32 %v1833, %v1861
        %1863 = vmatmul.f32.gmra.mxu0 %v1535
        %v1864 = vpop.f32.mrf.mxu0
        %v1865 = vadd.f32 %v1836, %v1864
        %1866 = vmatmul.f32.gmra.mxu0 %v1539
        %v1867 = vpop.f32.mrf.mxu0
        %v1868 = vadd.f32 %v1839, %v1867
        %1869 = vmatmul.f32.gmra.mxu0 %v1543
        %v1870 = vpop.f32.mrf.mxu0
        %v1871 = vadd.f32 %v1842, %v1870
        %1872 = vdwg.mxu0
        %1873 = vmatpush.msra.mxu0 0.0
        %1874 = vmatpush.msra.mxu0 0.0
        %1875 = vmatpush.msra.mxu0 0.0
        %1876 = vmatpush.msra.mxu0 0.0
        %1877 = vmatpush.msra.mxu0 0.0
        %1878 = vmatpush.msra.mxu0 0.0
        %1879 = vmatpush.msra.mxu0 0.0
        %1880 = vmatpush.msra.mxu0 0.0
        %1881 = vmatpush.msra.mxu0 %v1656
        %1882 = vmatpush.msra.mxu0 %v1654
        %1883 = vmatpush.msra.mxu0 %v1652
        %1884 = vmatpush.msra.mxu0 %v1650
        %1885 = vmatpush.msra.mxu0 %v1648
        %1886 = vmatpush.msra.mxu0 %v1646
        %1887 = vmatpush.msra.mxu0 %v1644
        %1888 = vmatpush.msra.mxu0 %v1642
        %1889 = vmatmul.f32.gmra.mxu0 %v1659
        %v1890 = vpop.f32.mrf.mxu0
        %v1891 = vadd.f32 %v1862, %v1890
        %1892 = vmatmul.f32.gmra.mxu0 %v1662
        %v1893 = vpop.f32.mrf.mxu0
        %v1894 = vadd.f32 %v1865, %v1893
        %1895 = vmatmul.f32.gmra.mxu0 %v1665
        %v1896 = vpop.f32.mrf.mxu0
        %v1897 = vadd.f32 %v1868, %v1896
        %1898 = vmatmul.f32.gmra.mxu0 %v1668
        %v1899 = vpop.f32.mrf.mxu0
        %v1900 = vadd.f32 %v1871, %v1899
        %1901 = vdwg.mxu0
        %s1902 = scalar_lea.vmem [#allocation3], 896
        %v1903 = vld [vmem:[%s1902] sm:$0xff]
        %v1904 = vld [vmem:[%s1902 + $0x8] sm:$0xff]
        %v1905 = vld [vmem:[%s1902 + $0x10] sm:$0xff]
        %v1906 = vld [vmem:[%s1902 + $0x18] sm:$0xff]
        %v1907 = vld [vmem:[%s1902 + $0x20] sm:$0xff]
        %v1908 = vld [vmem:[%s1902 + $0x28] sm:$0xff]
        %v1909 = vld [vmem:[%s1902 + $0x30] sm:$0xff]
        %v1910 = vld [vmem:[%s1902 + $0x38] sm:$0xff]
        %v1911 = vld [vmem:[%s1902 + $0x40] sm:$0xff]
        %v1912 = vld [vmem:[%s1902 + $0x48] sm:$0xff]
        %v1913 = vld [vmem:[%s1902 + $0x50] sm:$0xff]
        %v1914 = vld [vmem:[%s1902 + $0x58] sm:$0xff]
        %v1915 = vld [vmem:[%s1902 + $0x60] sm:$0xff]
        %v1916 = vld [vmem:[%s1902 + $0x68] sm:$0xff]
        %v1917 = vld [vmem:[%s1902 + $0x70] sm:$0xff]
        %v1918 = vld [vmem:[%s1902 + $0x78] sm:$0xff]
        %v1919 = vld [vmem:[%s1902 + $0x80] sm:$0xff]
        %v1920 = vld [vmem:[%s1902 + $0x88] sm:$0xff]
        %v1921 = vld [vmem:[%s1902 + $0x90] sm:$0xff]
        %v1922 = vld [vmem:[%s1902 + $0x98] sm:$0xff]
        %v1923 = vld [vmem:[%s1902 + $0xa0] sm:$0xff]
        %v1924 = vld [vmem:[%s1902 + $0xa8] sm:$0xff]
        %v1925 = vld [vmem:[%s1902 + $0xb0] sm:$0xff]
        %v1926 = vld [vmem:[%s1902 + $0xb8] sm:$0xff]
        %v1927 = vld [vmem:[%s1902 + $0xc0] sm:$0xff]
        %v1928 = vld [vmem:[%s1902 + $0xc8] sm:$0xff]
        %v1929 = vld [vmem:[%s1902 + $0xd0] sm:$0xff]
        %v1930 = vld [vmem:[%s1902 + $0xd8] sm:$0xff]
        %v1931 = vld [vmem:[%s1902 + $0xe0] sm:$0xff]
        %v1932 = vld [vmem:[%s1902 + $0xe8] sm:$0xff]
        %v1933 = vld [vmem:[%s1902 + $0xf0] sm:$0xff]
        %v1934 = vld [vmem:[%s1902 + $0xf8] sm:$0xff]
        %v1935 = vld [vmem:[%s1902 + $0x100] sm:$0xff]
        %v1936 = vld [vmem:[%s1902 + $0x108] sm:$0xff]
        %v1937 = vld [vmem:[%s1902 + $0x110] sm:$0xff]
        %v1938 = vld [vmem:[%s1902 + $0x118] sm:$0xff]
        %v1939 = vld [vmem:[%s1902 + $0x120] sm:$0xff]
        %v1940 = vld [vmem:[%s1902 + $0x128] sm:$0xff]
        %v1941 = vld [vmem:[%s1902 + $0x130] sm:$0xff]
        %v1942 = vld [vmem:[%s1902 + $0x138] sm:$0xff]
        %v1943 = vld [vmem:[%s1902 + $0x140] sm:$0xff]
        %v1944 = vld [vmem:[%s1902 + $0x148] sm:$0xff]
        %v1945 = vld [vmem:[%s1902 + $0x150] sm:$0xff]
        %v1946 = vld [vmem:[%s1902 + $0x158] sm:$0xff]
        %v1947 = vld [vmem:[%s1902 + $0x160] sm:$0xff]
        %v1948 = vld [vmem:[%s1902 + $0x168] sm:$0xff]
        %v1949 = vld [vmem:[%s1902 + $0x170] sm:$0xff]
        %v1950 = vld [vmem:[%s1902 + $0x178] sm:$0xff]
        %v1951 = vld [vmem:[%s1902 + $0x180] sm:$0xff]
        %v1952 = vld [vmem:[%s1902 + $0x188] sm:$0xff]
        %v1953 = vld [vmem:[%s1902 + $0x190] sm:$0xff]
        %v1954 = vld [vmem:[%s1902 + $0x198] sm:$0xff]
        %v1955 = vld [vmem:[%s1902 + $0x1a0] sm:$0xff]
        %v1956 = vld [vmem:[%s1902 + $0x1a8] sm:$0xff]
        %v1957 = vld [vmem:[%s1902 + $0x1b0] sm:$0xff]
        %v1958 = vld [vmem:[%s1902 + $0x1b8] sm:$0xff]
        %v1959 = vld [vmem:[%s1902 + $0x1c0] sm:$0xff]
        %v1960 = vld [vmem:[%s1902 + $0x1c8] sm:$0xff]
        %v1961 = vld [vmem:[%s1902 + $0x1d0] sm:$0xff]
        %v1962 = vld [vmem:[%s1902 + $0x1d8] sm:$0xff]
        %v1963 = vld [vmem:[%s1902 + $0x1e0] sm:$0xff]
        %v1964 = vld [vmem:[%s1902 + $0x1e8] sm:$0xff]
        %v1965 = vld [vmem:[%s1902 + $0x1f0] sm:$0xff]
        %v1966 = vld [vmem:[%s1902 + $0x1f8] sm:$0xff]
        %v1967 = vld [vmem:[%s1902 + $0x200] sm:$0xff]
        %v1968 = vld [vmem:[%s1902 + $0x208] sm:$0xff]
        %v1969 = vld [vmem:[%s1902 + $0x210] sm:$0xff]
        %v1970 = vld [vmem:[%s1902 + $0x218] sm:$0xff]
        %v1971 = vld [vmem:[%s1902 + $0x220] sm:$0xff]
        %v1972 = vld [vmem:[%s1902 + $0x228] sm:$0xff]
        %v1973 = vld [vmem:[%s1902 + $0x230] sm:$0xff]
        %v1974 = vld [vmem:[%s1902 + $0x238] sm:$0xff]
        %v1975 = vld [vmem:[%s1902 + $0x240] sm:$0xff]
        %v1976 = vld [vmem:[%s1902 + $0x248] sm:$0xff]
        %v1977 = vld [vmem:[%s1902 + $0x250] sm:$0xff]
        %v1978 = vld [vmem:[%s1902 + $0x258] sm:$0xff]
        %v1979 = vld [vmem:[%s1902 + $0x260] sm:$0xff]
        %v1980 = vld [vmem:[%s1902 + $0x268] sm:$0xff]
        %v1981 = vld [vmem:[%s1902 + $0x270] sm:$0xff]
        %v1982 = vld [vmem:[%s1902 + $0x278] sm:$0xff]
        %v1983 = vld [vmem:[%s1902 + $0x280] sm:$0xff]
        %v1984 = vld [vmem:[%s1902 + $0x288] sm:$0xff]
        %v1985 = vld [vmem:[%s1902 + $0x290] sm:$0xff]
        %v1986 = vld [vmem:[%s1902 + $0x298] sm:$0xff]
        %v1987 = vld [vmem:[%s1902 + $0x2a0] sm:$0xff]
        %v1988 = vld [vmem:[%s1902 + $0x2a8] sm:$0xff]
        %v1989 = vld [vmem:[%s1902 + $0x2b0] sm:$0xff]
        %v1990 = vld [vmem:[%s1902 + $0x2b8] sm:$0xff]
        %v1991 = vld [vmem:[%s1902 + $0x2c0] sm:$0xff]
        %v1992 = vld [vmem:[%s1902 + $0x2c8] sm:$0xff]
        %v1993 = vld [vmem:[%s1902 + $0x2d0] sm:$0xff]
        %v1994 = vld [vmem:[%s1902 + $0x2d8] sm:$0xff]
        %v1995 = vld [vmem:[%s1902 + $0x2e0] sm:$0xff]
        %v1996 = vld [vmem:[%s1902 + $0x2e8] sm:$0xff]
        %v1997 = vld [vmem:[%s1902 + $0x2f0] sm:$0xff]
        %v1998 = vld [vmem:[%s1902 + $0x2f8] sm:$0xff]
        %v1999 = vld [vmem:[%s1902 + $0x300] sm:$0xff]
        %v2000 = vld [vmem:[%s1902 + $0x308] sm:$0xff]
        %v2001 = vld [vmem:[%s1902 + $0x310] sm:$0xff]
        %v2002 = vld [vmem:[%s1902 + $0x318] sm:$0xff]
        %v2003 = vld [vmem:[%s1902 + $0x320] sm:$0xff]
        %v2004 = vld [vmem:[%s1902 + $0x328] sm:$0xff]
        %v2005 = vld [vmem:[%s1902 + $0x330] sm:$0xff]
        %v2006 = vld [vmem:[%s1902 + $0x338] sm:$0xff]
        %v2007 = vld [vmem:[%s1902 + $0x340] sm:$0xff]
        %v2008 = vld [vmem:[%s1902 + $0x348] sm:$0xff]
        %v2009 = vld [vmem:[%s1902 + $0x350] sm:$0xff]
        %v2010 = vld [vmem:[%s1902 + $0x358] sm:$0xff]
        %v2011 = vld [vmem:[%s1902 + $0x360] sm:$0xff]
        %v2012 = vld [vmem:[%s1902 + $0x368] sm:$0xff]
        %v2013 = vld [vmem:[%s1902 + $0x370] sm:$0xff]
        %v2014 = vld [vmem:[%s1902 + $0x378] sm:$0xff]
        %2015 = vmatpush.msra.mxu0 %v1933
        %2016 = vmatpush.msra.mxu0 %v1931
        %2017 = vmatpush.msra.mxu0 %v1929
        %2018 = vmatpush.msra.mxu0 %v1927
        %2019 = vmatpush.msra.mxu0 %v1925
        %2020 = vmatpush.msra.mxu0 %v1923
        %2021 = vmatpush.msra.mxu0 %v1921
        %2022 = vmatpush.msra.mxu0 %v1919
        %2023 = vmatpush.msra.mxu0 %v1917
        %2024 = vmatpush.msra.mxu0 %v1915
        %2025 = vmatpush.msra.mxu0 %v1913
        %2026 = vmatpush.msra.mxu0 %v1911
        %2027 = vmatpush.msra.mxu0 %v1909
        %2028 = vmatpush.msra.mxu0 %v1907
        %2029 = vmatpush.msra.mxu0 %v1905
        %2030 = vmatpush.msra.mxu0 %v1903
        %2031 = vmatmul.f32.gmra.mxu0 %v1529
        %v2032 = vpop.f32.mrf.mxu0
        %v2033 = vadd.f32 0.0, %v2032
        %2034 = vmatmul.f32.gmra.mxu0 %v1533
        %v2035 = vpop.f32.mrf.mxu0
        %v2036 = vadd.f32 0.0, %v2035
        %2037 = vmatmul.f32.gmra.mxu0 %v1537
        %v2038 = vpop.f32.mrf.mxu0
        %v2039 = vadd.f32 0.0, %v2038
        %2040 = vmatmul.f32.gmra.mxu0 %v1541
        %v2041 = vpop.f32.mrf.mxu0
        %v2042 = vadd.f32 0.0, %v2041
        %2043 = vdwg.mxu0
        %2044 = vmatpush.msra.mxu0 %v1965
        %2045 = vmatpush.msra.mxu0 %v1963
        %2046 = vmatpush.msra.mxu0 %v1961
        %2047 = vmatpush.msra.mxu0 %v1959
        %2048 = vmatpush.msra.mxu0 %v1957
        %2049 = vmatpush.msra.mxu0 %v1955
        %2050 = vmatpush.msra.mxu0 %v1953
        %2051 = vmatpush.msra.mxu0 %v1951
        %2052 = vmatpush.msra.mxu0 %v1949
        %2053 = vmatpush.msra.mxu0 %v1947
        %2054 = vmatpush.msra.mxu0 %v1945
        %2055 = vmatpush.msra.mxu0 %v1943
        %2056 = vmatpush.msra.mxu0 %v1941
        %2057 = vmatpush.msra.mxu0 %v1939
        %2058 = vmatpush.msra.mxu0 %v1937
        %2059 = vmatpush.msra.mxu0 %v1935
        %2060 = vmatmul.f32.gmra.mxu0 %v1530
        %v2061 = vpop.f32.mrf.mxu0
        %v2062 = vadd.f32 %v2033, %v2061
        %2063 = vmatmul.f32.gmra.mxu0 %v1534
        %v2064 = vpop.f32.mrf.mxu0
        %v2065 = vadd.f32 %v2036, %v2064
        %2066 = vmatmul.f32.gmra.mxu0 %v1538
        %v2067 = vpop.f32.mrf.mxu0
        %v2068 = vadd.f32 %v2039, %v2067
        %2069 = vmatmul.f32.gmra.mxu0 %v1542
        %v2070 = vpop.f32.mrf.mxu0
        %v2071 = vadd.f32 %v2042, %v2070
        %2072 = vdwg.mxu0
        %2073 = vmatpush.msra.mxu0 %v1997
        %2074 = vmatpush.msra.mxu0 %v1995
        %2075 = vmatpush.msra.mxu0 %v1993
        %2076 = vmatpush.msra.mxu0 %v1991
        %2077 = vmatpush.msra.mxu0 %v1989
        %2078 = vmatpush.msra.mxu0 %v1987
        %2079 = vmatpush.msra.mxu0 %v1985
        %2080 = vmatpush.msra.mxu0 %v1983
        %2081 = vmatpush.msra.mxu0 %v1981
        %2082 = vmatpush.msra.mxu0 %v1979
        %2083 = vmatpush.msra.mxu0 %v1977
        %2084 = vmatpush.msra.mxu0 %v1975
        %2085 = vmatpush.msra.mxu0 %v1973
        %2086 = vmatpush.msra.mxu0 %v1971
        %2087 = vmatpush.msra.mxu0 %v1969
        %2088 = vmatpush.msra.mxu0 %v1967
        %2089 = vmatmul.f32.gmra.mxu0 %v1531
        %v2090 = vpop.f32.mrf.mxu0
        %v2091 = vadd.f32 %v2062, %v2090
        %2092 = vmatmul.f32.gmra.mxu0 %v1535
        %v2093 = vpop.f32.mrf.mxu0
        %v2094 = vadd.f32 %v2065, %v2093
        %2095 = vmatmul.f32.gmra.mxu0 %v1539
        %v2096 = vpop.f32.mrf.mxu0
        %v2097 = vadd.f32 %v2068, %v2096
        %2098 = vmatmul.f32.gmra.mxu0 %v1543
        %v2099 = vpop.f32.mrf.mxu0
        %v2100 = vadd.f32 %v2071, %v2099
        %2101 = vdwg.mxu0
        %2102 = vmatpush.msra.mxu0 0.0
        %2103 = vmatpush.msra.mxu0 0.0
        %2104 = vmatpush.msra.mxu0 0.0
        %2105 = vmatpush.msra.mxu0 0.0
        %2106 = vmatpush.msra.mxu0 0.0
        %2107 = vmatpush.msra.mxu0 0.0
        %2108 = vmatpush.msra.mxu0 0.0
        %2109 = vmatpush.msra.mxu0 0.0
        %2110 = vmatpush.msra.mxu0 %v2013
        %2111 = vmatpush.msra.mxu0 %v2011
        %2112 = vmatpush.msra.mxu0 %v2009
        %2113 = vmatpush.msra.mxu0 %v2007
        %2114 = vmatpush.msra.mxu0 %v2005
        %2115 = vmatpush.msra.mxu0 %v2003
        %2116 = vmatpush.msra.mxu0 %v2001
        %2117 = vmatpush.msra.mxu0 %v1999
        %2118 = vmatmul.f32.gmra.mxu0 %v1659
        %v2119 = vpop.f32.mrf.mxu0
        %v2120 = vadd.f32 %v2091, %v2119
        %2121 = vmatmul.f32.gmra.mxu0 %v1662
        %v2122 = vpop.f32.mrf.mxu0
        %v2123 = vadd.f32 %v2094, %v2122
        %2124 = vmatmul.f32.gmra.mxu0 %v1665
        %v2125 = vpop.f32.mrf.mxu0
        %v2126 = vadd.f32 %v2097, %v2125
        %2127 = vmatmul.f32.gmra.mxu0 %v1668
        %v2128 = vpop.f32.mrf.mxu0
        %v2129 = vadd.f32 %v2100, %v2128
        %2130 = vdwg.mxu0
        %2131 = vmatpush.msra.mxu0 %v1934
        %2132 = vmatpush.msra.mxu0 %v1932
        %2133 = vmatpush.msra.mxu0 %v1930
        %2134 = vmatpush.msra.mxu0 %v1928
        %2135 = vmatpush.msra.mxu0 %v1926
        %2136 = vmatpush.msra.mxu0 %v1924
        %2137 = vmatpush.msra.mxu0 %v1922
        %2138 = vmatpush.msra.mxu0 %v1920
        %2139 = vmatpush.msra.mxu0 %v1918
        %2140 = vmatpush.msra.mxu0 %v1916
        %2141 = vmatpush.msra.mxu0 %v1914
        %2142 = vmatpush.msra.mxu0 %v1912
        %2143 = vmatpush.msra.mxu0 %v1910
        %2144 = vmatpush.msra.mxu0 %v1908
        %2145 = vmatpush.msra.mxu0 %v1906
        %2146 = vmatpush.msra.mxu0 %v1904
        %2147 = vmatmul.f32.gmra.mxu0 %v1529
        %v2148 = vpop.f32.mrf.mxu0
        %v2149 = vadd.f32 0.0, %v2148
        %2150 = vmatmul.f32.gmra.mxu0 %v1533
        %v2151 = vpop.f32.mrf.mxu0
        %v2152 = vadd.f32 0.0, %v2151
        %2153 = vmatmul.f32.gmra.mxu0 %v1537
        %v2154 = vpop.f32.mrf.mxu0
        %v2155 = vadd.f32 0.0, %v2154
        %2156 = vmatmul.f32.gmra.mxu0 %v1541
        %v2157 = vpop.f32.mrf.mxu0
        %v2158 = vadd.f32 0.0, %v2157
        %2159 = vdwg.mxu0
        %2160 = vmatpush.msra.mxu0 %v1966
        %2161 = vmatpush.msra.mxu0 %v1964
        %2162 = vmatpush.msra.mxu0 %v1962
        %2163 = vmatpush.msra.mxu0 %v1960
        %2164 = vmatpush.msra.mxu0 %v1958
        %2165 = vmatpush.msra.mxu0 %v1956
        %2166 = vmatpush.msra.mxu0 %v1954
        %2167 = vmatpush.msra.mxu0 %v1952
        %2168 = vmatpush.msra.mxu0 %v1950
        %2169 = vmatpush.msra.mxu0 %v1948
        %2170 = vmatpush.msra.mxu0 %v1946
        %2171 = vmatpush.msra.mxu0 %v1944
        %2172 = vmatpush.msra.mxu0 %v1942
        %2173 = vmatpush.msra.mxu0 %v1940
        %2174 = vmatpush.msra.mxu0 %v1938
        %2175 = vmatpush.msra.mxu0 %v1936
        %2176 = vmatmul.f32.gmra.mxu0 %v1530
        %v2177 = vpop.f32.mrf.mxu0
        %v2178 = vadd.f32 %v2149, %v2177
        %2179 = vmatmul.f32.gmra.mxu0 %v1534
        %v2180 = vpop.f32.mrf.mxu0
        %v2181 = vadd.f32 %v2152, %v2180
        %2182 = vmatmul.f32.gmra.mxu0 %v1538
        %v2183 = vpop.f32.mrf.mxu0
        %v2184 = vadd.f32 %v2155, %v2183
        %2185 = vmatmul.f32.gmra.mxu0 %v1542
        %v2186 = vpop.f32.mrf.mxu0
        %v2187 = vadd.f32 %v2158, %v2186
        %2188 = vdwg.mxu0
        %2189 = vmatpush.msra.mxu0 %v1998
        %2190 = vmatpush.msra.mxu0 %v1996
        %2191 = vmatpush.msra.mxu0 %v1994
        %2192 = vmatpush.msra.mxu0 %v1992
        %2193 = vmatpush.msra.mxu0 %v1990
        %2194 = vmatpush.msra.mxu0 %v1988
        %2195 = vmatpush.msra.mxu0 %v1986
        %2196 = vmatpush.msra.mxu0 %v1984
        %2197 = vmatpush.msra.mxu0 %v1982
        %2198 = vmatpush.msra.mxu0 %v1980
        %2199 = vmatpush.msra.mxu0 %v1978
        %2200 = vmatpush.msra.mxu0 %v1976
        %2201 = vmatpush.msra.mxu0 %v1974
        %2202 = vmatpush.msra.mxu0 %v1972
        %2203 = vmatpush.msra.mxu0 %v1970
        %2204 = vmatpush.msra.mxu0 %v1968
        %2205 = vmatmul.f32.gmra.mxu0 %v1531
        %v2206 = vpop.f32.mrf.mxu0
        %v2207 = vadd.f32 %v2178, %v2206
        %2208 = vmatmul.f32.gmra.mxu0 %v1535
        %v2209 = vpop.f32.mrf.mxu0
        %v2210 = vadd.f32 %v2181, %v2209
        %2211 = vmatmul.f32.gmra.mxu0 %v1539
        %v2212 = vpop.f32.mrf.mxu0
        %v2213 = vadd.f32 %v2184, %v2212
        %2214 = vmatmul.f32.gmra.mxu0 %v1543
        %v2215 = vpop.f32.mrf.mxu0
        %v2216 = vadd.f32 %v2187, %v2215
        %2217 = vdwg.mxu0
        %2218 = vmatpush.msra.mxu0 0.0
        %2219 = vmatpush.msra.mxu0 0.0
        %2220 = vmatpush.msra.mxu0 0.0
        %2221 = vmatpush.msra.mxu0 0.0
        %2222 = vmatpush.msra.mxu0 0.0
        %2223 = vmatpush.msra.mxu0 0.0
        %2224 = vmatpush.msra.mxu0 0.0
        %2225 = vmatpush.msra.mxu0 0.0
        %2226 = vmatpush.msra.mxu0 %v2014
        %2227 = vmatpush.msra.mxu0 %v2012
        %2228 = vmatpush.msra.mxu0 %v2010
        %2229 = vmatpush.msra.mxu0 %v2008
        %2230 = vmatpush.msra.mxu0 %v2006
        %2231 = vmatpush.msra.mxu0 %v2004
        %2232 = vmatpush.msra.mxu0 %v2002
        %2233 = vmatpush.msra.mxu0 %v2000
        %2234 = vmatmul.f32.gmra.mxu0 %v1659
        %v2235 = vpop.f32.mrf.mxu0
        %v2236 = vadd.f32 %v2207, %v2235
        %2237 = vmatmul.f32.gmra.mxu0 %v1662
        %v2238 = vpop.f32.mrf.mxu0
        %v2239 = vadd.f32 %v2210, %v2238
        %2240 = vmatmul.f32.gmra.mxu0 %v1665
        %v2241 = vpop.f32.mrf.mxu0
        %v2242 = vadd.f32 %v2213, %v2241
        %2243 = vmatmul.f32.gmra.mxu0 %v1668
        %v2244 = vpop.f32.mrf.mxu0
        %v2245 = vadd.f32 %v2216, %v2244
        %2246 = vdwg.mxu0
        %v2247 = vmax.f32 %v1775, %v2120
        %v2248 = vmax.f32 %v1891, %v2236
        %v2249 = vmax.f32 %v1778, %v2123
        %v2250 = vmax.f32 %v1894, %v2239
        %v2251 = vmax.f32 %v1781, %v2126
        %v2252 = vmax.f32 %v1897, %v2242
        %v2253 = vmax.f32 %v1784, %v2129
        %v2254 = vmax.f32 %v1900, %v2245
        %v2255 = vld [vmem:[%s9] sm:$0xff]
        %v2256 = vld [vmem:[%s9 + $0x8] sm:$0xff]
        %v2258 = vsel %vm1052, %v2255, 0
        %v2261 = vsel %vm1052, %v2256, 0
        %v2264 = vsel %vm1061, %v2253, 0
        %v2267 = vsel %vm1061, %v2254, 0
        %2269 = vmatpush.msra.mxu0 0.0
        %2270 = vmatpush.msra.mxu0 0.0
        %2271 = vmatpush.msra.mxu0 0.0
        %2272 = vmatpush.msra.mxu0 0.0
        %2273 = vmatpush.msra.mxu0 0.0
        %2274 = vmatpush.msra.mxu0 0.0
        %2275 = vmatpush.msra.mxu0 0.0
        %2276 = vmatpush.msra.mxu0 0.0
        %2277 = vmatpush.msra.mxu0 0.0
        %2278 = vmatpush.msra.mxu0 0.0
        %2279 = vmatpush.msra.mxu0 0.0
        %2280 = vmatpush.msra.mxu0 0.0
        %2281 = vmatpush.msra.mxu0 %v2264
        %2282 = vmatpush.msra.mxu0 %v2251
        %2283 = vmatpush.msra.mxu0 %v2249
        %2284 = vmatpush.msra.mxu0 %v2247
        %2285 = vmatmul.f32.gmra.mxu0 %v2258
        %v2286 = vpop.f32.mrf.mxu0
        %v2287 = vadd.f32 0.0, %v2286
        %2288 = vmatmul.f32.gmra.mxu0 %v2261
        %v2289 = vpop.f32.mrf.mxu0
        %v2290 = vadd.f32 0.0, %v2289
        %2291 = vdwg.mxu0
        %2292 = vmatpush.msra.mxu0 0.0
        %2293 = vmatpush.msra.mxu0 0.0
        %2294 = vmatpush.msra.mxu0 0.0
        %2295 = vmatpush.msra.mxu0 0.0
        %2296 = vmatpush.msra.mxu0 0.0
        %2297 = vmatpush.msra.mxu0 0.0
        %2298 = vmatpush.msra.mxu0 0.0
        %2299 = vmatpush.msra.mxu0 0.0
        %2300 = vmatpush.msra.mxu0 0.0
        %2301 = vmatpush.msra.mxu0 0.0
        %2302 = vmatpush.msra.mxu0 0.0
        %2303 = vmatpush.msra.mxu0 0.0
        %2304 = vmatpush.msra.mxu0 %v2267
        %2305 = vmatpush.msra.mxu0 %v2252
        %2306 = vmatpush.msra.mxu0 %v2250
        %2307 = vmatpush.msra.mxu0 %v2248
        %2308 = vmatmul.f32.gmra.mxu0 %v2258
        %v2309 = vpop.f32.mrf.mxu0
        %v2310 = vadd.f32 0.0, %v2309
        %2311 = vmatmul.f32.gmra.mxu0 %v2261
        %v2312 = vpop.f32.mrf.mxu0
        %v2313 = vadd.f32 0.0, %v2312
        %2314 = vdwg.mxu0
        %s2315 = scalar_lea.vmem %s9, 16
        %v2316 = vld [vmem:[%s2315] sm:$0xff]
        %v2317 = vld [vmem:[%s2315 + $0x8] sm:$0xff]
        %v2319 = vsel %vm1052, %v2316, 0
        %v2322 = vsel %vm1052, %v2317, 0
        %2324 = vmatpush.msra.mxu0 0.0
        %2325 = vmatpush.msra.mxu0 0.0
        %2326 = vmatpush.msra.mxu0 0.0
        %2327 = vmatpush.msra.mxu0 0.0
        %2328 = vmatpush.msra.mxu0 0.0
        %2329 = vmatpush.msra.mxu0 0.0
        %2330 = vmatpush.msra.mxu0 0.0
        %2331 = vmatpush.msra.mxu0 0.0
        %2332 = vmatpush.msra.mxu0 0.0
        %2333 = vmatpush.msra.mxu0 0.0
        %2334 = vmatpush.msra.mxu0 0.0
        %2335 = vmatpush.msra.mxu0 0.0
        %2336 = vmatpush.msra.mxu0 %v2264
        %2337 = vmatpush.msra.mxu0 %v2251
        %2338 = vmatpush.msra.mxu0 %v2249
        %2339 = vmatpush.msra.mxu0 %v2247
        %2340 = vmatmul.f32.gmra.mxu0 %v2319
        %v2341 = vpop.f32.mrf.mxu0
        %v2342 = vadd.f32 0.0, %v2341
        %2343 = vmatmul.f32.gmra.mxu0 %v2322
        %v2344 = vpop.f32.mrf.mxu0
        %v2345 = vadd.f32 0.0, %v2344
        %2346 = vdwg.mxu0
        %2347 = vmatpush.msra.mxu0 0.0
        %2348 = vmatpush.msra.mxu0 0.0
        %2349 = vmatpush.msra.mxu0 0.0
        %2350 = vmatpush.msra.mxu0 0.0
        %2351 = vmatpush.msra.mxu0 0.0
        %2352 = vmatpush.msra.mxu0 0.0
        %2353 = vmatpush.msra.mxu0 0.0
        %2354 = vmatpush.msra.mxu0 0.0
        %2355 = vmatpush.msra.mxu0 0.0
        %2356 = vmatpush.msra.mxu0 0.0
        %2357 = vmatpush.msra.mxu0 0.0
        %2358 = vmatpush.msra.mxu0 0.0
        %2359 = vmatpush.msra.mxu0 %v2267
        %2360 = vmatpush.msra.mxu0 %v2252
        %2361 = vmatpush.msra.mxu0 %v2250
        %2362 = vmatpush.msra.mxu0 %v2248
        %2363 = vmatmul.f32.gmra.mxu0 %v2319
        %v2364 = vpop.f32.mrf.mxu0
        %v2365 = vadd.f32 0.0, %v2364
        %2366 = vmatmul.f32.gmra.mxu0 %v2322
        %v2367 = vpop.f32.mrf.mxu0
        %v2368 = vadd.f32 0.0, %v2367
        %2369 = vdwg.mxu0
        %v2370 = vmax.f32 %v2287, %v2342
        %v2371 = vmax.f32 %v2310, %v2365
        %v2372 = vmax.f32 %v2290, %v2345
        %v2373 = vmax.f32 %v2313, %v2368
        %v2374 = vld [vmem:[%s11] sm:$0xff]
        %v2375 = vld [vmem:[%s11 + $0x8] sm:$0xff]
        %v2376 = vld [vmem:[%s11 + $0x10] sm:$0xff]
        %v2377 = vld [vmem:[%s11 + $0x18] sm:$0xff]
        %v2378 = vld [vmem:[%s11 + $0x20] sm:$0xff]
        %v2379 = vld [vmem:[%s11 + $0x28] sm:$0xff]
        %v2380 = vld [vmem:[%s11 + $0x30] sm:$0xff]
        %v2381 = vld [vmem:[%s11 + $0x38] sm:$0xff]
        %v2382 = vld [vmem:[%s11 + $0x40] sm:$0xff]
        %v2383 = vld [vmem:[%s11 + $0x48] sm:$0xff]
        %v2384 = vld [vmem:[%s11 + $0x50] sm:$0xff]
        %v2385 = vld [vmem:[%s11 + $0x58] sm:$0xff]
        %v2386 = vld [vmem:[%s11 + $0x60] sm:$0xff]
        %v2387 = vld [vmem:[%s11 + $0x68] sm:$0xff]
        %v2388 = vld [vmem:[%s11 + $0x70] sm:$0xff]
        %v2389 = vld [vmem:[%s11 + $0x78] sm:$0xff]
        %v2390 = vld [vmem:[%s11 + $0x80] sm:$0xff]
        %v2391 = vld [vmem:[%s11 + $0x88] sm:$0xff]
        %v2392 = vld [vmem:[%s11 + $0x90] sm:$0xff]
        %v2393 = vld [vmem:[%s11 + $0x98] sm:$0xff]
        %v2394 = vld [vmem:[%s11 + $0xa0] sm:$0xff]
        %v2395 = vld [vmem:[%s11 + $0xa8] sm:$0xff]
        %v2396 = vld [vmem:[%s11 + $0xb0] sm:$0xff]
        %v2397 = vld [vmem:[%s11 + $0xb8] sm:$0xff]
        %v2398 = vld [vmem:[%s11 + $0xc0] sm:$0xff]
        %v2399 = vld [vmem:[%s11 + $0xc8] sm:$0xff]
        %v2400 = vld [vmem:[%s11 + $0xd0] sm:$0xff]
        %v2401 = vld [vmem:[%s11 + $0xd8] sm:$0xff]
        %v2402 = vld [vmem:[%s11 + $0xe0] sm:$0xff]
        %v2403 = vld [vmem:[%s11 + $0xe8] sm:$0xff]
        %v2404 = vld [vmem:[%s11 + $0xf0] sm:$0xff]
        %v2405 = vld [vmem:[%s11 + $0xf8] sm:$0xff]
        %v2406 = vld [vmem:[%s11 + $0x100] sm:$0xff]
        %v2407 = vld [vmem:[%s11 + $0x108] sm:$0xff]
        %v2408 = vld [vmem:[%s11 + $0x110] sm:$0xff]
        %v2409 = vld [vmem:[%s11 + $0x118] sm:$0xff]
        %v2410 = vld [vmem:[%s11 + $0x120] sm:$0xff]
        %v2411 = vld [vmem:[%s11 + $0x128] sm:$0xff]
        %v2412 = vld [vmem:[%s11 + $0x130] sm:$0xff]
        %v2413 = vld [vmem:[%s11 + $0x138] sm:$0xff]
        %v2414 = vld [vmem:[%s11 + $0x140] sm:$0xff]
        %v2415 = vld [vmem:[%s11 + $0x148] sm:$0xff]
        %v2416 = vld [vmem:[%s11 + $0x150] sm:$0xff]
        %v2417 = vld [vmem:[%s11 + $0x158] sm:$0xff]
        %v2418 = vld [vmem:[%s11 + $0x160] sm:$0xff]
        %v2419 = vld [vmem:[%s11 + $0x168] sm:$0xff]
        %v2420 = vld [vmem:[%s11 + $0x170] sm:$0xff]
        %v2421 = vld [vmem:[%s11 + $0x178] sm:$0xff]
        %v2422 = vld [vmem:[%s11 + $0x180] sm:$0xff]
        %v2423 = vld [vmem:[%s11 + $0x188] sm:$0xff]
        %v2424 = vld [vmem:[%s11 + $0x190] sm:$0xff]
        %v2425 = vld [vmem:[%s11 + $0x198] sm:$0xff]
        %v2426 = vld [vmem:[%s11 + $0x1a0] sm:$0xff]
        %v2427 = vld [vmem:[%s11 + $0x1a8] sm:$0xff]
        %v2428 = vld [vmem:[%s11 + $0x1b0] sm:$0xff]
        %v2429 = vld [vmem:[%s11 + $0x1b8] sm:$0xff]
        %v2430 = vld [vmem:[%s11 + $0x1c0] sm:$0xff]
        %v2431 = vld [vmem:[%s11 + $0x1c8] sm:$0xff]
        %v2432 = vld [vmem:[%s11 + $0x1d0] sm:$0xff]
        %v2433 = vld [vmem:[%s11 + $0x1d8] sm:$0xff]
        %v2434 = vld [vmem:[%s11 + $0x1e0] sm:$0xff]
        %v2435 = vld [vmem:[%s11 + $0x1e8] sm:$0xff]
        %v2436 = vld [vmem:[%s11 + $0x1f0] sm:$0xff]
        %v2437 = vld [vmem:[%s11 + $0x1f8] sm:$0xff]
        %v2438 = vld [vmem:[%s11 + $0x200] sm:$0xff]
        %v2439 = vld [vmem:[%s11 + $0x208] sm:$0xff]
        %v2440 = vld [vmem:[%s11 + $0x210] sm:$0xff]
        %v2441 = vld [vmem:[%s11 + $0x218] sm:$0xff]
        %v2442 = vld [vmem:[%s11 + $0x220] sm:$0xff]
        %v2443 = vld [vmem:[%s11 + $0x228] sm:$0xff]
        %v2444 = vld [vmem:[%s11 + $0x230] sm:$0xff]
        %v2445 = vld [vmem:[%s11 + $0x238] sm:$0xff]
        %v2446 = vld [vmem:[%s11 + $0x240] sm:$0xff]
        %v2447 = vld [vmem:[%s11 + $0x248] sm:$0xff]
        %v2448 = vld [vmem:[%s11 + $0x250] sm:$0xff]
        %v2449 = vld [vmem:[%s11 + $0x258] sm:$0xff]
        %v2450 = vld [vmem:[%s11 + $0x260] sm:$0xff]
        %v2451 = vld [vmem:[%s11 + $0x268] sm:$0xff]
        %v2452 = vld [vmem:[%s11 + $0x270] sm:$0xff]
        %v2453 = vld [vmem:[%s11 + $0x278] sm:$0xff]
        %v2454 = vld [vmem:[%s11 + $0x280] sm:$0xff]
        %v2455 = vld [vmem:[%s11 + $0x288] sm:$0xff]
        %v2456 = vld [vmem:[%s11 + $0x290] sm:$0xff]
        %v2457 = vld [vmem:[%s11 + $0x298] sm:$0xff]
        %v2458 = vld [vmem:[%s11 + $0x2a0] sm:$0xff]
        %v2459 = vld [vmem:[%s11 + $0x2a8] sm:$0xff]
        %v2460 = vld [vmem:[%s11 + $0x2b0] sm:$0xff]
        %v2461 = vld [vmem:[%s11 + $0x2b8] sm:$0xff]
        %v2462 = vld [vmem:[%s11 + $0x2c0] sm:$0xff]
        %v2463 = vld [vmem:[%s11 + $0x2c8] sm:$0xff]
        %v2464 = vld [vmem:[%s11 + $0x2d0] sm:$0xff]
        %v2465 = vld [vmem:[%s11 + $0x2d8] sm:$0xff]
        %v2466 = vld [vmem:[%s11 + $0x2e0] sm:$0xff]
        %v2467 = vld [vmem:[%s11 + $0x2e8] sm:$0xff]
        %v2468 = vld [vmem:[%s11 + $0x2f0] sm:$0xff]
        %v2469 = vld [vmem:[%s11 + $0x2f8] sm:$0xff]
        %v2470 = vld [vmem:[%s11 + $0x300] sm:$0xff]
        %v2471 = vld [vmem:[%s11 + $0x308] sm:$0xff]
        %v2472 = vld [vmem:[%s11 + $0x310] sm:$0xff]
        %v2473 = vld [vmem:[%s11 + $0x318] sm:$0xff]
        %v2474 = vld [vmem:[%s11 + $0x320] sm:$0xff]
        %v2475 = vld [vmem:[%s11 + $0x328] sm:$0xff]
        %v2476 = vld [vmem:[%s11 + $0x330] sm:$0xff]
        %v2477 = vld [vmem:[%s11 + $0x338] sm:$0xff]
        %v2478 = vld [vmem:[%s11 + $0x340] sm:$0xff]
        %v2479 = vld [vmem:[%s11 + $0x348] sm:$0xff]
        %v2480 = vld [vmem:[%s11 + $0x350] sm:$0xff]
        %v2481 = vld [vmem:[%s11 + $0x358] sm:$0xff]
        %v2482 = vld [vmem:[%s11 + $0x360] sm:$0xff]
        %v2483 = vld [vmem:[%s11 + $0x368] sm:$0xff]
        %v2484 = vld [vmem:[%s11 + $0x370] sm:$0xff]
        %v2485 = vld [vmem:[%s11 + $0x378] sm:$0xff]
        %s2486 = scalar_lea.vmem %s11, 896
        %v2487 = vld [vmem:[%s2486] sm:$0xff]
        %v2488 = vld [vmem:[%s2486 + $0x8] sm:$0xff]
        %v2489 = vld [vmem:[%s2486 + $0x10] sm:$0xff]
        %v2490 = vld [vmem:[%s2486 + $0x18] sm:$0xff]
        %v2491 = vld [vmem:[%s2486 + $0x20] sm:$0xff]
        %v2492 = vld [vmem:[%s2486 + $0x28] sm:$0xff]
        %v2493 = vld [vmem:[%s2486 + $0x30] sm:$0xff]
        %v2494 = vld [vmem:[%s2486 + $0x38] sm:$0xff]
        %v2495 = vld [vmem:[%s2486 + $0x40] sm:$0xff]
        %v2496 = vld [vmem:[%s2486 + $0x48] sm:$0xff]
        %v2497 = vld [vmem:[%s2486 + $0x50] sm:$0xff]
        %v2498 = vld [vmem:[%s2486 + $0x58] sm:$0xff]
        %v2499 = vld [vmem:[%s2486 + $0x60] sm:$0xff]
        %v2500 = vld [vmem:[%s2486 + $0x68] sm:$0xff]
        %v2501 = vld [vmem:[%s2486 + $0x70] sm:$0xff]
        %v2502 = vld [vmem:[%s2486 + $0x78] sm:$0xff]
        %v2503 = vld [vmem:[%s2486 + $0x80] sm:$0xff]
        %v2504 = vld [vmem:[%s2486 + $0x88] sm:$0xff]
        %v2505 = vld [vmem:[%s2486 + $0x90] sm:$0xff]
        %v2506 = vld [vmem:[%s2486 + $0x98] sm:$0xff]
        %v2507 = vld [vmem:[%s2486 + $0xa0] sm:$0xff]
        %v2508 = vld [vmem:[%s2486 + $0xa8] sm:$0xff]
        %v2509 = vld [vmem:[%s2486 + $0xb0] sm:$0xff]
        %v2510 = vld [vmem:[%s2486 + $0xb8] sm:$0xff]
        %v2511 = vld [vmem:[%s2486 + $0xc0] sm:$0xff]
        %v2512 = vld [vmem:[%s2486 + $0xc8] sm:$0xff]
        %v2513 = vld [vmem:[%s2486 + $0xd0] sm:$0xff]
        %v2514 = vld [vmem:[%s2486 + $0xd8] sm:$0xff]
        %v2515 = vld [vmem:[%s2486 + $0xe0] sm:$0xff]
        %v2516 = vld [vmem:[%s2486 + $0xe8] sm:$0xff]
        %v2517 = vld [vmem:[%s2486 + $0xf0] sm:$0xff]
        %v2518 = vld [vmem:[%s2486 + $0xf8] sm:$0xff]
        %v2519 = vld [vmem:[%s2486 + $0x100] sm:$0xff]
        %v2520 = vld [vmem:[%s2486 + $0x108] sm:$0xff]
        %v2521 = vld [vmem:[%s2486 + $0x110] sm:$0xff]
        %v2522 = vld [vmem:[%s2486 + $0x118] sm:$0xff]
        %v2523 = vld [vmem:[%s2486 + $0x120] sm:$0xff]
        %v2524 = vld [vmem:[%s2486 + $0x128] sm:$0xff]
        %v2525 = vld [vmem:[%s2486 + $0x130] sm:$0xff]
        %v2526 = vld [vmem:[%s2486 + $0x138] sm:$0xff]
        %v2527 = vld [vmem:[%s2486 + $0x140] sm:$0xff]
        %v2528 = vld [vmem:[%s2486 + $0x148] sm:$0xff]
        %v2529 = vld [vmem:[%s2486 + $0x150] sm:$0xff]
        %v2530 = vld [vmem:[%s2486 + $0x158] sm:$0xff]
        %v2531 = vld [vmem:[%s2486 + $0x160] sm:$0xff]
        %v2532 = vld [vmem:[%s2486 + $0x168] sm:$0xff]
        %v2533 = vld [vmem:[%s2486 + $0x170] sm:$0xff]
        %v2534 = vld [vmem:[%s2486 + $0x178] sm:$0xff]
        %v2535 = vld [vmem:[%s2486 + $0x180] sm:$0xff]
        %v2536 = vld [vmem:[%s2486 + $0x188] sm:$0xff]
        %v2537 = vld [vmem:[%s2486 + $0x190] sm:$0xff]
        %v2538 = vld [vmem:[%s2486 + $0x198] sm:$0xff]
        %v2539 = vld [vmem:[%s2486 + $0x1a0] sm:$0xff]
        %v2540 = vld [vmem:[%s2486 + $0x1a8] sm:$0xff]
        %v2541 = vld [vmem:[%s2486 + $0x1b0] sm:$0xff]
        %v2542 = vld [vmem:[%s2486 + $0x1b8] sm:$0xff]
        %v2543 = vld [vmem:[%s2486 + $0x1c0] sm:$0xff]
        %v2544 = vld [vmem:[%s2486 + $0x1c8] sm:$0xff]
        %v2545 = vld [vmem:[%s2486 + $0x1d0] sm:$0xff]
        %v2546 = vld [vmem:[%s2486 + $0x1d8] sm:$0xff]
        %v2547 = vld [vmem:[%s2486 + $0x1e0] sm:$0xff]
        %v2548 = vld [vmem:[%s2486 + $0x1e8] sm:$0xff]
        %v2549 = vld [vmem:[%s2486 + $0x1f0] sm:$0xff]
        %v2550 = vld [vmem:[%s2486 + $0x1f8] sm:$0xff]
        %v2551 = vld [vmem:[%s2486 + $0x200] sm:$0xff]
        %v2552 = vld [vmem:[%s2486 + $0x208] sm:$0xff]
        %v2553 = vld [vmem:[%s2486 + $0x210] sm:$0xff]
        %v2554 = vld [vmem:[%s2486 + $0x218] sm:$0xff]
        %v2555 = vld [vmem:[%s2486 + $0x220] sm:$0xff]
        %v2556 = vld [vmem:[%s2486 + $0x228] sm:$0xff]
        %v2557 = vld [vmem:[%s2486 + $0x230] sm:$0xff]
        %v2558 = vld [vmem:[%s2486 + $0x238] sm:$0xff]
        %v2559 = vld [vmem:[%s2486 + $0x240] sm:$0xff]
        %v2560 = vld [vmem:[%s2486 + $0x248] sm:$0xff]
        %v2561 = vld [vmem:[%s2486 + $0x250] sm:$0xff]
        %v2562 = vld [vmem:[%s2486 + $0x258] sm:$0xff]
        %v2563 = vld [vmem:[%s2486 + $0x260] sm:$0xff]
        %v2564 = vld [vmem:[%s2486 + $0x268] sm:$0xff]
        %v2565 = vld [vmem:[%s2486 + $0x270] sm:$0xff]
        %v2566 = vld [vmem:[%s2486 + $0x278] sm:$0xff]
        %v2567 = vld [vmem:[%s2486 + $0x280] sm:$0xff]
        %v2568 = vld [vmem:[%s2486 + $0x288] sm:$0xff]
        %v2569 = vld [vmem:[%s2486 + $0x290] sm:$0xff]
        %v2570 = vld [vmem:[%s2486 + $0x298] sm:$0xff]
        %v2571 = vld [vmem:[%s2486 + $0x2a0] sm:$0xff]
        %v2572 = vld [vmem:[%s2486 + $0x2a8] sm:$0xff]
        %v2573 = vld [vmem:[%s2486 + $0x2b0] sm:$0xff]
        %v2574 = vld [vmem:[%s2486 + $0x2b8] sm:$0xff]
        %v2575 = vld [vmem:[%s2486 + $0x2c0] sm:$0xff]
        %v2576 = vld [vmem:[%s2486 + $0x2c8] sm:$0xff]
        %v2577 = vld [vmem:[%s2486 + $0x2d0] sm:$0xff]
        %v2578 = vld [vmem:[%s2486 + $0x2d8] sm:$0xff]
        %v2579 = vld [vmem:[%s2486 + $0x2e0] sm:$0xff]
        %v2580 = vld [vmem:[%s2486 + $0x2e8] sm:$0xff]
        %v2581 = vld [vmem:[%s2486 + $0x2f0] sm:$0xff]
        %v2582 = vld [vmem:[%s2486 + $0x2f8] sm:$0xff]
        %v2583 = vld [vmem:[%s2486 + $0x300] sm:$0xff]
        %v2584 = vld [vmem:[%s2486 + $0x308] sm:$0xff]
        %v2585 = vld [vmem:[%s2486 + $0x310] sm:$0xff]
        %v2586 = vld [vmem:[%s2486 + $0x318] sm:$0xff]
        %v2587 = vld [vmem:[%s2486 + $0x320] sm:$0xff]
        %v2588 = vld [vmem:[%s2486 + $0x328] sm:$0xff]
        %v2589 = vld [vmem:[%s2486 + $0x330] sm:$0xff]
        %v2590 = vld [vmem:[%s2486 + $0x338] sm:$0xff]
        %v2591 = vld [vmem:[%s2486 + $0x340] sm:$0xff]
        %v2592 = vld [vmem:[%s2486 + $0x348] sm:$0xff]
        %v2593 = vld [vmem:[%s2486 + $0x350] sm:$0xff]
        %v2594 = vld [vmem:[%s2486 + $0x358] sm:$0xff]
        %v2595 = vld [vmem:[%s2486 + $0x360] sm:$0xff]
        %v2596 = vld [vmem:[%s2486 + $0x368] sm:$0xff]
        %v2597 = vld [vmem:[%s2486 + $0x370] sm:$0xff]
        %v2598 = vld [vmem:[%s2486 + $0x378] sm:$0xff]
        %v2603 = vrot.slane %v2370, 1
        %v2604 = vrot.slane %v2372, 1
        %v2605 = vsel %vm1044, %v2603, %v2604
        %v2606 = vrot.slane %v2371, 1
        %v2607 = vrot.slane %v2373, 1
        %v2608 = vsel %vm1044, %v2606, %v2607
        %vm2611 = vcmask 785408
        %v2612 = vsel %vm2611, %v2608, 0
        %v2614 = vsel %vm2611, %v2607, 0
        %2616 = vmatpush.msra.mxu0 %v2547
        %2617 = vmatpush.msra.mxu0 %v2543
        %2618 = vmatpush.msra.mxu0 %v2539
        %2619 = vmatpush.msra.mxu0 %v2535
        %2620 = vmatpush.msra.mxu0 %v2531
        %2621 = vmatpush.msra.mxu0 %v2527
        %2622 = vmatpush.msra.mxu0 %v2523
        %2623 = vmatpush.msra.mxu0 %v2519
        %2624 = vmatpush.msra.mxu0 %v2515
        %2625 = vmatpush.msra.mxu0 %v2511
        %2626 = vmatpush.msra.mxu0 %v2507
        %2627 = vmatpush.msra.mxu0 %v2503
        %2628 = vmatpush.msra.mxu0 %v2499
        %2629 = vmatpush.msra.mxu0 %v2495
        %2630 = vmatpush.msra.mxu0 %v2491
        %2631 = vmatpush.msra.mxu0 %v2487
        %2632 = vmatmul.f32.gmra.mxu0 %v2605
        %v2633 = vpop.f32.mrf.mxu0
        %v2634 = vadd.f32 0.0, %v2633
        %2635 = vmatmul.f32.gmra.mxu0 %v2604
        %v2636 = vpop.f32.mrf.mxu0
        %v2637 = vadd.f32 0.0, %v2636
        %2638 = vdwg.mxu0
        %2639 = vmatpush.msra.mxu0 0.0
        %2640 = vmatpush.msra.mxu0 0.0
        %2641 = vmatpush.msra.mxu0 0.0
        %2642 = vmatpush.msra.mxu0 0.0
        %2643 = vmatpush.msra.mxu0 %v2595
        %2644 = vmatpush.msra.mxu0 %v2591
        %2645 = vmatpush.msra.mxu0 %v2587
        %2646 = vmatpush.msra.mxu0 %v2583
        %2647 = vmatpush.msra.mxu0 %v2579
        %2648 = vmatpush.msra.mxu0 %v2575
        %2649 = vmatpush.msra.mxu0 %v2571
        %2650 = vmatpush.msra.mxu0 %v2567
        %2651 = vmatpush.msra.mxu0 %v2563
        %2652 = vmatpush.msra.mxu0 %v2559
        %2653 = vmatpush.msra.mxu0 %v2555
        %2654 = vmatpush.msra.mxu0 %v2551
        %2655 = vmatmul.f32.gmra.mxu0 %v2612
        %v2656 = vpop.f32.mrf.mxu0
        %v2657 = vadd.f32 %v2634, %v2656
        %2658 = vmatmul.f32.gmra.mxu0 %v2614
        %v2659 = vpop.f32.mrf.mxu0
        %v2660 = vadd.f32 %v2637, %v2659
        %2661 = vdwg.mxu0
        %2662 = vmatpush.msra.mxu0 %v2548
        %2663 = vmatpush.msra.mxu0 %v2544
        %2664 = vmatpush.msra.mxu0 %v2540
        %2665 = vmatpush.msra.mxu0 %v2536
        %2666 = vmatpush.msra.mxu0 %v2532
        %2667 = vmatpush.msra.mxu0 %v2528
        %2668 = vmatpush.msra.mxu0 %v2524
        %2669 = vmatpush.msra.mxu0 %v2520
        %2670 = vmatpush.msra.mxu0 %v2516
        %2671 = vmatpush.msra.mxu0 %v2512
        %2672 = vmatpush.msra.mxu0 %v2508
        %2673 = vmatpush.msra.mxu0 %v2504
        %2674 = vmatpush.msra.mxu0 %v2500
        %2675 = vmatpush.msra.mxu0 %v2496
        %2676 = vmatpush.msra.mxu0 %v2492
        %2677 = vmatpush.msra.mxu0 %v2488
        %2678 = vmatmul.f32.gmra.mxu0 %v2605
        %v2679 = vpop.f32.mrf.mxu0
        %v2680 = vadd.f32 0.0, %v2679
        %2681 = vmatmul.f32.gmra.mxu0 %v2604
        %v2682 = vpop.f32.mrf.mxu0
        %v2683 = vadd.f32 0.0, %v2682
        %2684 = vdwg.mxu0
        %2685 = vmatpush.msra.mxu0 0.0
        %2686 = vmatpush.msra.mxu0 0.0
        %2687 = vmatpush.msra.mxu0 0.0
        %2688 = vmatpush.msra.mxu0 0.0
        %2689 = vmatpush.msra.mxu0 %v2596
        %2690 = vmatpush.msra.mxu0 %v2592
        %2691 = vmatpush.msra.mxu0 %v2588
        %2692 = vmatpush.msra.mxu0 %v2584
        %2693 = vmatpush.msra.mxu0 %v2580
        %2694 = vmatpush.msra.mxu0 %v2576
        %2695 = vmatpush.msra.mxu0 %v2572
        %2696 = vmatpush.msra.mxu0 %v2568
        %2697 = vmatpush.msra.mxu0 %v2564
        %2698 = vmatpush.msra.mxu0 %v2560
        %2699 = vmatpush.msra.mxu0 %v2556
        %2700 = vmatpush.msra.mxu0 %v2552
        %2701 = vmatmul.f32.gmra.mxu0 %v2612
        %v2702 = vpop.f32.mrf.mxu0
        %v2703 = vadd.f32 %v2680, %v2702
        %2704 = vmatmul.f32.gmra.mxu0 %v2614
        %v2705 = vpop.f32.mrf.mxu0
        %v2706 = vadd.f32 %v2683, %v2705
        %2707 = vdwg.mxu0
        %2708 = vmatpush.msra.mxu0 %v2549
        %2709 = vmatpush.msra.mxu0 %v2545
        %2710 = vmatpush.msra.mxu0 %v2541
        %2711 = vmatpush.msra.mxu0 %v2537
        %2712 = vmatpush.msra.mxu0 %v2533
        %2713 = vmatpush.msra.mxu0 %v2529
        %2714 = vmatpush.msra.mxu0 %v2525
        %2715 = vmatpush.msra.mxu0 %v2521
        %2716 = vmatpush.msra.mxu0 %v2517
        %2717 = vmatpush.msra.mxu0 %v2513
        %2718 = vmatpush.msra.mxu0 %v2509
        %2719 = vmatpush.msra.mxu0 %v2505
        %2720 = vmatpush.msra.mxu0 %v2501
        %2721 = vmatpush.msra.mxu0 %v2497
        %2722 = vmatpush.msra.mxu0 %v2493
        %2723 = vmatpush.msra.mxu0 %v2489
        %2724 = vmatmul.f32.gmra.mxu0 %v2605
        %v2725 = vpop.f32.mrf.mxu0
        %v2726 = vadd.f32 0.0, %v2725
        %2727 = vmatmul.f32.gmra.mxu0 %v2604
        %v2728 = vpop.f32.mrf.mxu0
        %v2729 = vadd.f32 0.0, %v2728
        %2730 = vdwg.mxu0
        %2731 = vmatpush.msra.mxu0 0.0
        %2732 = vmatpush.msra.mxu0 0.0
        %2733 = vmatpush.msra.mxu0 0.0
        %2734 = vmatpush.msra.mxu0 0.0
        %2735 = vmatpush.msra.mxu0 %v2597
        %2736 = vmatpush.msra.mxu0 %v2593
        %2737 = vmatpush.msra.mxu0 %v2589
        %2738 = vmatpush.msra.mxu0 %v2585
        %2739 = vmatpush.msra.mxu0 %v2581
        %2740 = vmatpush.msra.mxu0 %v2577
        %2741 = vmatpush.msra.mxu0 %v2573
        %2742 = vmatpush.msra.mxu0 %v2569
        %2743 = vmatpush.msra.mxu0 %v2565
        %2744 = vmatpush.msra.mxu0 %v2561
        %2745 = vmatpush.msra.mxu0 %v2557
        %2746 = vmatpush.msra.mxu0 %v2553
        %2747 = vmatmul.f32.gmra.mxu0 %v2612
        %v2748 = vpop.f32.mrf.mxu0
        %v2749 = vadd.f32 %v2726, %v2748
        %2750 = vmatmul.f32.gmra.mxu0 %v2614
        %v2751 = vpop.f32.mrf.mxu0
        %v2752 = vadd.f32 %v2729, %v2751
        %2753 = vdwg.mxu0
        %2754 = vmatpush.msra.mxu0 %v2550
        %2755 = vmatpush.msra.mxu0 %v2546
        %2756 = vmatpush.msra.mxu0 %v2542
        %2757 = vmatpush.msra.mxu0 %v2538
        %2758 = vmatpush.msra.mxu0 %v2534
        %2759 = vmatpush.msra.mxu0 %v2530
        %2760 = vmatpush.msra.mxu0 %v2526
        %2761 = vmatpush.msra.mxu0 %v2522
        %2762 = vmatpush.msra.mxu0 %v2518
        %2763 = vmatpush.msra.mxu0 %v2514
        %2764 = vmatpush.msra.mxu0 %v2510
        %2765 = vmatpush.msra.mxu0 %v2506
        %2766 = vmatpush.msra.mxu0 %v2502
        %2767 = vmatpush.msra.mxu0 %v2498
        %2768 = vmatpush.msra.mxu0 %v2494
        %2769 = vmatpush.msra.mxu0 %v2490
        %2770 = vmatmul.f32.gmra.mxu0 %v2605
        %v2771 = vpop.f32.mrf.mxu0
        %v2772 = vadd.f32 0.0, %v2771
        %2773 = vmatmul.f32.gmra.mxu0 %v2604
        %v2774 = vpop.f32.mrf.mxu0
        %v2775 = vadd.f32 0.0, %v2774
        %2776 = vdwg.mxu0
        %2777 = vmatpush.msra.mxu0 0.0
        %2778 = vmatpush.msra.mxu0 0.0
        %2779 = vmatpush.msra.mxu0 0.0
        %2780 = vmatpush.msra.mxu0 0.0
        %2781 = vmatpush.msra.mxu0 %v2598
        %2782 = vmatpush.msra.mxu0 %v2594
        %2783 = vmatpush.msra.mxu0 %v2590
        %2784 = vmatpush.msra.mxu0 %v2586
        %2785 = vmatpush.msra.mxu0 %v2582
        %2786 = vmatpush.msra.mxu0 %v2578
        %2787 = vmatpush.msra.mxu0 %v2574
        %2788 = vmatpush.msra.mxu0 %v2570
        %2789 = vmatpush.msra.mxu0 %v2566
        %2790 = vmatpush.msra.mxu0 %v2562
        %2791 = vmatpush.msra.mxu0 %v2558
        %2792 = vmatpush.msra.mxu0 %v2554
        %2793 = vmatmul.f32.gmra.mxu0 %v2612
        %v2794 = vpop.f32.mrf.mxu0
        %v2795 = vadd.f32 %v2772, %v2794
        %2796 = vmatmul.f32.gmra.mxu0 %v2614
        %v2797 = vpop.f32.mrf.mxu0
        %v2798 = vadd.f32 %v2775, %v2797
        %2799 = vdwg.mxu0
        %v2800 = vsel %vm2611, %v2371, 0
        %v2802 = vsel %vm2611, %v2373, 0
        %2804 = vmatpush.msra.mxu0 %v2434
        %2805 = vmatpush.msra.mxu0 %v2430
        %2806 = vmatpush.msra.mxu0 %v2426
        %2807 = vmatpush.msra.mxu0 %v2422
        %2808 = vmatpush.msra.mxu0 %v2418
        %2809 = vmatpush.msra.mxu0 %v2414
        %2810 = vmatpush.msra.mxu0 %v2410
        %2811 = vmatpush.msra.mxu0 %v2406
        %2812 = vmatpush.msra.mxu0 %v2402
        %2813 = vmatpush.msra.mxu0 %v2398
        %2814 = vmatpush.msra.mxu0 %v2394
        %2815 = vmatpush.msra.mxu0 %v2390
        %2816 = vmatpush.msra.mxu0 %v2386
        %2817 = vmatpush.msra.mxu0 %v2382
        %2818 = vmatpush.msra.mxu0 %v2378
        %2819 = vmatpush.msra.mxu0 %v2374
        %2820 = vmatmul.f32.gmra.mxu0 %v2370
        %v2821 = vpop.f32.mrf.mxu0
        %v2822 = vadd.f32 %v2657, %v2821
        %2823 = vmatmul.f32.gmra.mxu0 %v2372
        %v2824 = vpop.f32.mrf.mxu0
        %v2825 = vadd.f32 %v2660, %v2824
        %2826 = vdwg.mxu0
        %2827 = vmatpush.msra.mxu0 0.0
        %2828 = vmatpush.msra.mxu0 0.0
        %2829 = vmatpush.msra.mxu0 0.0
        %2830 = vmatpush.msra.mxu0 0.0
        %2831 = vmatpush.msra.mxu0 %v2482
        %2832 = vmatpush.msra.mxu0 %v2478
        %2833 = vmatpush.msra.mxu0 %v2474
        %2834 = vmatpush.msra.mxu0 %v2470
        %2835 = vmatpush.msra.mxu0 %v2466
        %2836 = vmatpush.msra.mxu0 %v2462
        %2837 = vmatpush.msra.mxu0 %v2458
        %2838 = vmatpush.msra.mxu0 %v2454
        %2839 = vmatpush.msra.mxu0 %v2450
        %2840 = vmatpush.msra.mxu0 %v2446
        %2841 = vmatpush.msra.mxu0 %v2442
        %2842 = vmatpush.msra.mxu0 %v2438
        %2843 = vmatmul.f32.gmra.mxu0 %v2800
        %v2844 = vpop.f32.mrf.mxu0
        %v2845 = vadd.f32 %v2822, %v2844
        %2846 = vmatmul.f32.gmra.mxu0 %v2802
        %v2847 = vpop.f32.mrf.mxu0
        %v2848 = vadd.f32 %v2825, %v2847
        %2849 = vdwg.mxu0
        %2850 = vmatpush.msra.mxu0 %v2435
        %2851 = vmatpush.msra.mxu0 %v2431
        %2852 = vmatpush.msra.mxu0 %v2427
        %2853 = vmatpush.msra.mxu0 %v2423
        %2854 = vmatpush.msra.mxu0 %v2419
        %2855 = vmatpush.msra.mxu0 %v2415
        %2856 = vmatpush.msra.mxu0 %v2411
        %2857 = vmatpush.msra.mxu0 %v2407
        %2858 = vmatpush.msra.mxu0 %v2403
        %2859 = vmatpush.msra.mxu0 %v2399
        %2860 = vmatpush.msra.mxu0 %v2395
        %2861 = vmatpush.msra.mxu0 %v2391
        %2862 = vmatpush.msra.mxu0 %v2387
        %2863 = vmatpush.msra.mxu0 %v2383
        %2864 = vmatpush.msra.mxu0 %v2379
        %2865 = vmatpush.msra.mxu0 %v2375
        %2866 = vmatmul.f32.gmra.mxu0 %v2370
        %v2867 = vpop.f32.mrf.mxu0
        %v2868 = vadd.f32 %v2703, %v2867
        %2869 = vmatmul.f32.gmra.mxu0 %v2372
        %v2870 = vpop.f32.mrf.mxu0
        %v2871 = vadd.f32 %v2706, %v2870
        %2872 = vdwg.mxu0
        %2873 = vmatpush.msra.mxu0 0.0
        %2874 = vmatpush.msra.mxu0 0.0
        %2875 = vmatpush.msra.mxu0 0.0
        %2876 = vmatpush.msra.mxu0 0.0
        %2877 = vmatpush.msra.mxu0 %v2483
        %2878 = vmatpush.msra.mxu0 %v2479
        %2879 = vmatpush.msra.mxu0 %v2475
        %2880 = vmatpush.msra.mxu0 %v2471
        %2881 = vmatpush.msra.mxu0 %v2467
        %2882 = vmatpush.msra.mxu0 %v2463
        %2883 = vmatpush.msra.mxu0 %v2459
        %2884 = vmatpush.msra.mxu0 %v2455
        %2885 = vmatpush.msra.mxu0 %v2451
        %2886 = vmatpush.msra.mxu0 %v2447
        %2887 = vmatpush.msra.mxu0 %v2443
        %2888 = vmatpush.msra.mxu0 %v2439
        %2889 = vmatmul.f32.gmra.mxu0 %v2800
        %v2890 = vpop.f32.mrf.mxu0
        %v2891 = vadd.f32 %v2868, %v2890
        %2892 = vmatmul.f32.gmra.mxu0 %v2802
        %v2893 = vpop.f32.mrf.mxu0
        %v2894 = vadd.f32 %v2871, %v2893
        %2895 = vdwg.mxu0
        %2896 = vmatpush.msra.mxu0 %v2436
        %2897 = vmatpush.msra.mxu0 %v2432
        %2898 = vmatpush.msra.mxu0 %v2428
        %2899 = vmatpush.msra.mxu0 %v2424
        %2900 = vmatpush.msra.mxu0 %v2420
        %2901 = vmatpush.msra.mxu0 %v2416
        %2902 = vmatpush.msra.mxu0 %v2412
        %2903 = vmatpush.msra.mxu0 %v2408
        %2904 = vmatpush.msra.mxu0 %v2404
        %2905 = vmatpush.msra.mxu0 %v2400
        %2906 = vmatpush.msra.mxu0 %v2396
        %2907 = vmatpush.msra.mxu0 %v2392
        %2908 = vmatpush.msra.mxu0 %v2388
        %2909 = vmatpush.msra.mxu0 %v2384
        %2910 = vmatpush.msra.mxu0 %v2380
        %2911 = vmatpush.msra.mxu0 %v2376
        %2912 = vmatmul.f32.gmra.mxu0 %v2370
        %v2913 = vpop.f32.mrf.mxu0
        %v2914 = vadd.f32 %v2749, %v2913
        %2915 = vmatmul.f32.gmra.mxu0 %v2372
        %v2916 = vpop.f32.mrf.mxu0
        %v2917 = vadd.f32 %v2752, %v2916
        %2918 = vdwg.mxu0
        %2919 = vmatpush.msra.mxu0 0.0
        %2920 = vmatpush.msra.mxu0 0.0
        %2921 = vmatpush.msra.mxu0 0.0
        %2922 = vmatpush.msra.mxu0 0.0
        %2923 = vmatpush.msra.mxu0 %v2484
        %2924 = vmatpush.msra.mxu0 %v2480
        %2925 = vmatpush.msra.mxu0 %v2476
        %2926 = vmatpush.msra.mxu0 %v2472
        %2927 = vmatpush.msra.mxu0 %v2468
        %2928 = vmatpush.msra.mxu0 %v2464
        %2929 = vmatpush.msra.mxu0 %v2460
        %2930 = vmatpush.msra.mxu0 %v2456
        %2931 = vmatpush.msra.mxu0 %v2452
        %2932 = vmatpush.msra.mxu0 %v2448
        %2933 = vmatpush.msra.mxu0 %v2444
        %2934 = vmatpush.msra.mxu0 %v2440
        %2935 = vmatmul.f32.gmra.mxu0 %v2800
        %v2936 = vpop.f32.mrf.mxu0
        %v2937 = vadd.f32 %v2914, %v2936
        %2938 = vmatmul.f32.gmra.mxu0 %v2802
        %v2939 = vpop.f32.mrf.mxu0
        %v2940 = vadd.f32 %v2917, %v2939
        %2941 = vdwg.mxu0
        %2942 = vmatpush.msra.mxu0 %v2437
        %2943 = vmatpush.msra.mxu0 %v2433
        %2944 = vmatpush.msra.mxu0 %v2429
        %2945 = vmatpush.msra.mxu0 %v2425
        %2946 = vmatpush.msra.mxu0 %v2421
        %2947 = vmatpush.msra.mxu0 %v2417
        %2948 = vmatpush.msra.mxu0 %v2413
        %2949 = vmatpush.msra.mxu0 %v2409
        %2950 = vmatpush.msra.mxu0 %v2405
        %2951 = vmatpush.msra.mxu0 %v2401
        %2952 = vmatpush.msra.mxu0 %v2397
        %2953 = vmatpush.msra.mxu0 %v2393
        %2954 = vmatpush.msra.mxu0 %v2389
        %2955 = vmatpush.msra.mxu0 %v2385
        %2956 = vmatpush.msra.mxu0 %v2381
        %2957 = vmatpush.msra.mxu0 %v2377
        %2958 = vmatmul.f32.gmra.mxu0 %v2370
        %v2959 = vpop.f32.mrf.mxu0
        %v2960 = vadd.f32 %v2795, %v2959
        %2961 = vmatmul.f32.gmra.mxu0 %v2372
        %v2962 = vpop.f32.mrf.mxu0
        %v2963 = vadd.f32 %v2798, %v2962
        %2964 = vdwg.mxu0
        %2965 = vmatpush.msra.mxu0 0.0
        %2966 = vmatpush.msra.mxu0 0.0
        %2967 = vmatpush.msra.mxu0 0.0
        %2968 = vmatpush.msra.mxu0 0.0
        %2969 = vmatpush.msra.mxu0 %v2485
        %2970 = vmatpush.msra.mxu0 %v2481
        %2971 = vmatpush.msra.mxu0 %v2477
        %2972 = vmatpush.msra.mxu0 %v2473
        %2973 = vmatpush.msra.mxu0 %v2469
        %2974 = vmatpush.msra.mxu0 %v2465
        %2975 = vmatpush.msra.mxu0 %v2461
        %2976 = vmatpush.msra.mxu0 %v2457
        %2977 = vmatpush.msra.mxu0 %v2453
        %2978 = vmatpush.msra.mxu0 %v2449
        %2979 = vmatpush.msra.mxu0 %v2445
        %2980 = vmatpush.msra.mxu0 %v2441
        %2981 = vmatmul.f32.gmra.mxu0 %v2800
        %v2982 = vpop.f32.mrf.mxu0
        %v2983 = vadd.f32 %v2960, %v2982
        %2984 = vmatmul.f32.gmra.mxu0 %v2802
        %v2985 = vpop.f32.mrf.mxu0
        %v2986 = vadd.f32 %v2963, %v2985
        %2987 = vdwg.mxu0
        %s2988 = scalar_lea.vmem %s11, 1792
        %v2989 = vld [vmem:[%s2988] sm:$0xff]
        %v2990 = vld [vmem:[%s2988 + $0x8] sm:$0xff]
        %v2991 = vld [vmem:[%s2988 + $0x10] sm:$0xff]
        %v2992 = vld [vmem:[%s2988 + $0x18] sm:$0xff]
        %v2993 = vld [vmem:[%s2988 + $0x20] sm:$0xff]
        %v2994 = vld [vmem:[%s2988 + $0x28] sm:$0xff]
        %v2995 = vld [vmem:[%s2988 + $0x30] sm:$0xff]
        %v2996 = vld [vmem:[%s2988 + $0x38] sm:$0xff]
        %v2997 = vld [vmem:[%s2988 + $0x40] sm:$0xff]
        %v2998 = vld [vmem:[%s2988 + $0x48] sm:$0xff]
        %v2999 = vld [vmem:[%s2988 + $0x50] sm:$0xff]
        %v3000 = vld [vmem:[%s2988 + $0x58] sm:$0xff]
        %v3001 = vld [vmem:[%s2988 + $0x60] sm:$0xff]
        %v3002 = vld [vmem:[%s2988 + $0x68] sm:$0xff]
        %v3003 = vld [vmem:[%s2988 + $0x70] sm:$0xff]
        %v3004 = vld [vmem:[%s2988 + $0x78] sm:$0xff]
        %v3005 = vld [vmem:[%s2988 + $0x80] sm:$0xff]
        %v3006 = vld [vmem:[%s2988 + $0x88] sm:$0xff]
        %v3007 = vld [vmem:[%s2988 + $0x90] sm:$0xff]
        %v3008 = vld [vmem:[%s2988 + $0x98] sm:$0xff]
        %v3009 = vld [vmem:[%s2988 + $0xa0] sm:$0xff]
        %v3010 = vld [vmem:[%s2988 + $0xa8] sm:$0xff]
        %v3011 = vld [vmem:[%s2988 + $0xb0] sm:$0xff]
        %v3012 = vld [vmem:[%s2988 + $0xb8] sm:$0xff]
        %v3013 = vld [vmem:[%s2988 + $0xc0] sm:$0xff]
        %v3014 = vld [vmem:[%s2988 + $0xc8] sm:$0xff]
        %v3015 = vld [vmem:[%s2988 + $0xd0] sm:$0xff]
        %v3016 = vld [vmem:[%s2988 + $0xd8] sm:$0xff]
        %v3017 = vld [vmem:[%s2988 + $0xe0] sm:$0xff]
        %v3018 = vld [vmem:[%s2988 + $0xe8] sm:$0xff]
        %v3019 = vld [vmem:[%s2988 + $0xf0] sm:$0xff]
        %v3020 = vld [vmem:[%s2988 + $0xf8] sm:$0xff]
        %v3021 = vld [vmem:[%s2988 + $0x100] sm:$0xff]
        %v3022 = vld [vmem:[%s2988 + $0x108] sm:$0xff]
        %v3023 = vld [vmem:[%s2988 + $0x110] sm:$0xff]
        %v3024 = vld [vmem:[%s2988 + $0x118] sm:$0xff]
        %v3025 = vld [vmem:[%s2988 + $0x120] sm:$0xff]
        %v3026 = vld [vmem:[%s2988 + $0x128] sm:$0xff]
        %v3027 = vld [vmem:[%s2988 + $0x130] sm:$0xff]
        %v3028 = vld [vmem:[%s2988 + $0x138] sm:$0xff]
        %v3029 = vld [vmem:[%s2988 + $0x140] sm:$0xff]
        %v3030 = vld [vmem:[%s2988 + $0x148] sm:$0xff]
        %v3031 = vld [vmem:[%s2988 + $0x150] sm:$0xff]
        %v3032 = vld [vmem:[%s2988 + $0x158] sm:$0xff]
        %v3033 = vld [vmem:[%s2988 + $0x160] sm:$0xff]
        %v3034 = vld [vmem:[%s2988 + $0x168] sm:$0xff]
        %v3035 = vld [vmem:[%s2988 + $0x170] sm:$0xff]
        %v3036 = vld [vmem:[%s2988 + $0x178] sm:$0xff]
        %v3037 = vld [vmem:[%s2988 + $0x180] sm:$0xff]
        %v3038 = vld [vmem:[%s2988 + $0x188] sm:$0xff]
        %v3039 = vld [vmem:[%s2988 + $0x190] sm:$0xff]
        %v3040 = vld [vmem:[%s2988 + $0x198] sm:$0xff]
        %v3041 = vld [vmem:[%s2988 + $0x1a0] sm:$0xff]
        %v3042 = vld [vmem:[%s2988 + $0x1a8] sm:$0xff]
        %v3043 = vld [vmem:[%s2988 + $0x1b0] sm:$0xff]
        %v3044 = vld [vmem:[%s2988 + $0x1b8] sm:$0xff]
        %v3045 = vld [vmem:[%s2988 + $0x1c0] sm:$0xff]
        %v3046 = vld [vmem:[%s2988 + $0x1c8] sm:$0xff]
        %v3047 = vld [vmem:[%s2988 + $0x1d0] sm:$0xff]
        %v3048 = vld [vmem:[%s2988 + $0x1d8] sm:$0xff]
        %v3049 = vld [vmem:[%s2988 + $0x1e0] sm:$0xff]
        %v3050 = vld [vmem:[%s2988 + $0x1e8] sm:$0xff]
        %v3051 = vld [vmem:[%s2988 + $0x1f0] sm:$0xff]
        %v3052 = vld [vmem:[%s2988 + $0x1f8] sm:$0xff]
        %v3053 = vld [vmem:[%s2988 + $0x200] sm:$0xff]
        %v3054 = vld [vmem:[%s2988 + $0x208] sm:$0xff]
        %v3055 = vld [vmem:[%s2988 + $0x210] sm:$0xff]
        %v3056 = vld [vmem:[%s2988 + $0x218] sm:$0xff]
        %v3057 = vld [vmem:[%s2988 + $0x220] sm:$0xff]
        %v3058 = vld [vmem:[%s2988 + $0x228] sm:$0xff]
        %v3059 = vld [vmem:[%s2988 + $0x230] sm:$0xff]
        %v3060 = vld [vmem:[%s2988 + $0x238] sm:$0xff]
        %v3061 = vld [vmem:[%s2988 + $0x240] sm:$0xff]
        %v3062 = vld [vmem:[%s2988 + $0x248] sm:$0xff]
        %v3063 = vld [vmem:[%s2988 + $0x250] sm:$0xff]
        %v3064 = vld [vmem:[%s2988 + $0x258] sm:$0xff]
        %v3065 = vld [vmem:[%s2988 + $0x260] sm:$0xff]
        %v3066 = vld [vmem:[%s2988 + $0x268] sm:$0xff]
        %v3067 = vld [vmem:[%s2988 + $0x270] sm:$0xff]
        %v3068 = vld [vmem:[%s2988 + $0x278] sm:$0xff]
        %v3069 = vld [vmem:[%s2988 + $0x280] sm:$0xff]
        %v3070 = vld [vmem:[%s2988 + $0x288] sm:$0xff]
        %v3071 = vld [vmem:[%s2988 + $0x290] sm:$0xff]
        %v3072 = vld [vmem:[%s2988 + $0x298] sm:$0xff]
        %v3073 = vld [vmem:[%s2988 + $0x2a0] sm:$0xff]
        %v3074 = vld [vmem:[%s2988 + $0x2a8] sm:$0xff]
        %v3075 = vld [vmem:[%s2988 + $0x2b0] sm:$0xff]
        %v3076 = vld [vmem:[%s2988 + $0x2b8] sm:$0xff]
        %v3077 = vld [vmem:[%s2988 + $0x2c0] sm:$0xff]
        %v3078 = vld [vmem:[%s2988 + $0x2c8] sm:$0xff]
        %v3079 = vld [vmem:[%s2988 + $0x2d0] sm:$0xff]
        %v3080 = vld [vmem:[%s2988 + $0x2d8] sm:$0xff]
        %v3081 = vld [vmem:[%s2988 + $0x2e0] sm:$0xff]
        %v3082 = vld [vmem:[%s2988 + $0x2e8] sm:$0xff]
        %v3083 = vld [vmem:[%s2988 + $0x2f0] sm:$0xff]
        %v3084 = vld [vmem:[%s2988 + $0x2f8] sm:$0xff]
        %v3085 = vld [vmem:[%s2988 + $0x300] sm:$0xff]
        %v3086 = vld [vmem:[%s2988 + $0x308] sm:$0xff]
        %v3087 = vld [vmem:[%s2988 + $0x310] sm:$0xff]
        %v3088 = vld [vmem:[%s2988 + $0x318] sm:$0xff]
        %v3089 = vld [vmem:[%s2988 + $0x320] sm:$0xff]
        %v3090 = vld [vmem:[%s2988 + $0x328] sm:$0xff]
        %v3091 = vld [vmem:[%s2988 + $0x330] sm:$0xff]
        %v3092 = vld [vmem:[%s2988 + $0x338] sm:$0xff]
        %v3093 = vld [vmem:[%s2988 + $0x340] sm:$0xff]
        %v3094 = vld [vmem:[%s2988 + $0x348] sm:$0xff]
        %v3095 = vld [vmem:[%s2988 + $0x350] sm:$0xff]
        %v3096 = vld [vmem:[%s2988 + $0x358] sm:$0xff]
        %v3097 = vld [vmem:[%s2988 + $0x360] sm:$0xff]
        %v3098 = vld [vmem:[%s2988 + $0x368] sm:$0xff]
        %v3099 = vld [vmem:[%s2988 + $0x370] sm:$0xff]
        %v3100 = vld [vmem:[%s2988 + $0x378] sm:$0xff]
        %v3101 = vrot.slane %v2370, 2
        %v3102 = vrot.slane %v2372, 2
        %v3103 = vsel %vm1343, %v3101, %v3102
        %v3104 = vrot.slane %v2371, 2
        %v3105 = vrot.slane %v2373, 2
        %v3106 = vsel %vm1343, %v3104, %v3105
        %v3109 = vsel %vm2611, %v3106, 0
        %v3111 = vsel %vm2611, %v3105, 0
        %3113 = vmatpush.msra.mxu0 %v3049
        %3114 = vmatpush.msra.mxu0 %v3045
        %3115 = vmatpush.msra.mxu0 %v3041
        %3116 = vmatpush.msra.mxu0 %v3037
        %3117 = vmatpush.msra.mxu0 %v3033
        %3118 = vmatpush.msra.mxu0 %v3029
        %3119 = vmatpush.msra.mxu0 %v3025
        %3120 = vmatpush.msra.mxu0 %v3021
        %3121 = vmatpush.msra.mxu0 %v3017
        %3122 = vmatpush.msra.mxu0 %v3013
        %3123 = vmatpush.msra.mxu0 %v3009
        %3124 = vmatpush.msra.mxu0 %v3005
        %3125 = vmatpush.msra.mxu0 %v3001
        %3126 = vmatpush.msra.mxu0 %v2997
        %3127 = vmatpush.msra.mxu0 %v2993
        %3128 = vmatpush.msra.mxu0 %v2989
        %3129 = vmatmul.f32.gmra.mxu0 %v3103
        %v3130 = vpop.f32.mrf.mxu0
        %v3131 = vadd.f32 0.0, %v3130
        %3132 = vmatmul.f32.gmra.mxu0 %v3102
        %v3133 = vpop.f32.mrf.mxu0
        %v3134 = vadd.f32 0.0, %v3133
        %3135 = vdwg.mxu0
        %3136 = vmatpush.msra.mxu0 0.0
        %3137 = vmatpush.msra.mxu0 0.0
        %3138 = vmatpush.msra.mxu0 0.0
        %3139 = vmatpush.msra.mxu0 0.0
        %3140 = vmatpush.msra.mxu0 %v3097
        %3141 = vmatpush.msra.mxu0 %v3093
        %3142 = vmatpush.msra.mxu0 %v3089
        %3143 = vmatpush.msra.mxu0 %v3085
        %3144 = vmatpush.msra.mxu0 %v3081
        %3145 = vmatpush.msra.mxu0 %v3077
        %3146 = vmatpush.msra.mxu0 %v3073
        %3147 = vmatpush.msra.mxu0 %v3069
        %3148 = vmatpush.msra.mxu0 %v3065
        %3149 = vmatpush.msra.mxu0 %v3061
        %3150 = vmatpush.msra.mxu0 %v3057
        %3151 = vmatpush.msra.mxu0 %v3053
        %3152 = vmatmul.f32.gmra.mxu0 %v3109
        %v3153 = vpop.f32.mrf.mxu0
        %v3154 = vadd.f32 %v3131, %v3153
        %3155 = vmatmul.f32.gmra.mxu0 %v3111
        %v3156 = vpop.f32.mrf.mxu0
        %v3157 = vadd.f32 %v3134, %v3156
        %3158 = vdwg.mxu0
        %3159 = vmatpush.msra.mxu0 %v3050
        %3160 = vmatpush.msra.mxu0 %v3046
        %3161 = vmatpush.msra.mxu0 %v3042
        %3162 = vmatpush.msra.mxu0 %v3038
        %3163 = vmatpush.msra.mxu0 %v3034
        %3164 = vmatpush.msra.mxu0 %v3030
        %3165 = vmatpush.msra.mxu0 %v3026
        %3166 = vmatpush.msra.mxu0 %v3022
        %3167 = vmatpush.msra.mxu0 %v3018
        %3168 = vmatpush.msra.mxu0 %v3014
        %3169 = vmatpush.msra.mxu0 %v3010
        %3170 = vmatpush.msra.mxu0 %v3006
        %3171 = vmatpush.msra.mxu0 %v3002
        %3172 = vmatpush.msra.mxu0 %v2998
        %3173 = vmatpush.msra.mxu0 %v2994
        %3174 = vmatpush.msra.mxu0 %v2990
        %3175 = vmatmul.f32.gmra.mxu0 %v3103
        %v3176 = vpop.f32.mrf.mxu0
        %v3177 = vadd.f32 0.0, %v3176
        %3178 = vmatmul.f32.gmra.mxu0 %v3102
        %v3179 = vpop.f32.mrf.mxu0
        %v3180 = vadd.f32 0.0, %v3179
        %3181 = vdwg.mxu0
        %3182 = vmatpush.msra.mxu0 0.0
        %3183 = vmatpush.msra.mxu0 0.0
        %3184 = vmatpush.msra.mxu0 0.0
        %3185 = vmatpush.msra.mxu0 0.0
        %3186 = vmatpush.msra.mxu0 %v3098
        %3187 = vmatpush.msra.mxu0 %v3094
        %3188 = vmatpush.msra.mxu0 %v3090
        %3189 = vmatpush.msra.mxu0 %v3086
        %3190 = vmatpush.msra.mxu0 %v3082
        %3191 = vmatpush.msra.mxu0 %v3078
        %3192 = vmatpush.msra.mxu0 %v3074
        %3193 = vmatpush.msra.mxu0 %v3070
        %3194 = vmatpush.msra.mxu0 %v3066
        %3195 = vmatpush.msra.mxu0 %v3062
        %3196 = vmatpush.msra.mxu0 %v3058
        %3197 = vmatpush.msra.mxu0 %v3054
        %3198 = vmatmul.f32.gmra.mxu0 %v3109
        %v3199 = vpop.f32.mrf.mxu0
        %v3200 = vadd.f32 %v3177, %v3199
        %3201 = vmatmul.f32.gmra.mxu0 %v3111
        %v3202 = vpop.f32.mrf.mxu0
        %v3203 = vadd.f32 %v3180, %v3202
        %3204 = vdwg.mxu0
        %3205 = vmatpush.msra.mxu0 %v3051
        %3206 = vmatpush.msra.mxu0 %v3047
        %3207 = vmatpush.msra.mxu0 %v3043
        %3208 = vmatpush.msra.mxu0 %v3039
        %3209 = vmatpush.msra.mxu0 %v3035
        %3210 = vmatpush.msra.mxu0 %v3031
        %3211 = vmatpush.msra.mxu0 %v3027
        %3212 = vmatpush.msra.mxu0 %v3023
        %3213 = vmatpush.msra.mxu0 %v3019
        %3214 = vmatpush.msra.mxu0 %v3015
        %3215 = vmatpush.msra.mxu0 %v3011
        %3216 = vmatpush.msra.mxu0 %v3007
        %3217 = vmatpush.msra.mxu0 %v3003
        %3218 = vmatpush.msra.mxu0 %v2999
        %3219 = vmatpush.msra.mxu0 %v2995
        %3220 = vmatpush.msra.mxu0 %v2991
        %3221 = vmatmul.f32.gmra.mxu0 %v3103
        %v3222 = vpop.f32.mrf.mxu0
        %v3223 = vadd.f32 0.0, %v3222
        %3224 = vmatmul.f32.gmra.mxu0 %v3102
        %v3225 = vpop.f32.mrf.mxu0
        %v3226 = vadd.f32 0.0, %v3225
        %3227 = vdwg.mxu0
        %3228 = vmatpush.msra.mxu0 0.0
        %3229 = vmatpush.msra.mxu0 0.0
        %3230 = vmatpush.msra.mxu0 0.0
        %3231 = vmatpush.msra.mxu0 0.0
        %3232 = vmatpush.msra.mxu0 %v3099
        %3233 = vmatpush.msra.mxu0 %v3095
        %3234 = vmatpush.msra.mxu0 %v3091
        %3235 = vmatpush.msra.mxu0 %v3087
        %3236 = vmatpush.msra.mxu0 %v3083
        %3237 = vmatpush.msra.mxu0 %v3079
        %3238 = vmatpush.msra.mxu0 %v3075
        %3239 = vmatpush.msra.mxu0 %v3071
        %3240 = vmatpush.msra.mxu0 %v3067
        %3241 = vmatpush.msra.mxu0 %v3063
        %3242 = vmatpush.msra.mxu0 %v3059
        %3243 = vmatpush.msra.mxu0 %v3055
        %3244 = vmatmul.f32.gmra.mxu0 %v3109
        %v3245 = vpop.f32.mrf.mxu0
        %v3246 = vadd.f32 %v3223, %v3245
        %3247 = vmatmul.f32.gmra.mxu0 %v3111
        %v3248 = vpop.f32.mrf.mxu0
        %v3249 = vadd.f32 %v3226, %v3248
        %3250 = vdwg.mxu0
        %3251 = vmatpush.msra.mxu0 %v3052
        %3252 = vmatpush.msra.mxu0 %v3048
        %3253 = vmatpush.msra.mxu0 %v3044
        %3254 = vmatpush.msra.mxu0 %v3040
        %3255 = vmatpush.msra.mxu0 %v3036
        %3256 = vmatpush.msra.mxu0 %v3032
        %3257 = vmatpush.msra.mxu0 %v3028
        %3258 = vmatpush.msra.mxu0 %v3024
        %3259 = vmatpush.msra.mxu0 %v3020
        %3260 = vmatpush.msra.mxu0 %v3016
        %3261 = vmatpush.msra.mxu0 %v3012
        %3262 = vmatpush.msra.mxu0 %v3008
        %3263 = vmatpush.msra.mxu0 %v3004
        %3264 = vmatpush.msra.mxu0 %v3000
        %3265 = vmatpush.msra.mxu0 %v2996
        %3266 = vmatpush.msra.mxu0 %v2992
        %3267 = vmatmul.f32.gmra.mxu0 %v3103
        %v3268 = vpop.f32.mrf.mxu0
        %v3269 = vadd.f32 0.0, %v3268
        %3270 = vmatmul.f32.gmra.mxu0 %v3102
        %v3271 = vpop.f32.mrf.mxu0
        %v3272 = vadd.f32 0.0, %v3271
        %3273 = vdwg.mxu0
        %3274 = vmatpush.msra.mxu0 0.0
        %3275 = vmatpush.msra.mxu0 0.0
        %3276 = vmatpush.msra.mxu0 0.0
        %3277 = vmatpush.msra.mxu0 0.0
        %3278 = vmatpush.msra.mxu0 %v3100
        %3279 = vmatpush.msra.mxu0 %v3096
        %3280 = vmatpush.msra.mxu0 %v3092
        %3281 = vmatpush.msra.mxu0 %v3088
        %3282 = vmatpush.msra.mxu0 %v3084
        %3283 = vmatpush.msra.mxu0 %v3080
        %3284 = vmatpush.msra.mxu0 %v3076
        %3285 = vmatpush.msra.mxu0 %v3072
        %3286 = vmatpush.msra.mxu0 %v3068
        %3287 = vmatpush.msra.mxu0 %v3064
        %3288 = vmatpush.msra.mxu0 %v3060
        %3289 = vmatpush.msra.mxu0 %v3056
        %3290 = vmatmul.f32.gmra.mxu0 %v3109
        %v3291 = vpop.f32.mrf.mxu0
        %v3292 = vadd.f32 %v3269, %v3291
        %3293 = vmatmul.f32.gmra.mxu0 %v3111
        %v3294 = vpop.f32.mrf.mxu0
        %v3295 = vadd.f32 %v3272, %v3294
        %3296 = vdwg.mxu0
        %v3297 = vadd.f32 %v2845, %v3154
        %v3298 = vadd.f32 %v2891, %v3200
        %v3299 = vadd.f32 %v2937, %v3246
        %v3300 = vadd.f32 %v2983, %v3292
        %v3301 = vadd.f32 %v2848, %v3157
        %v3302 = vadd.f32 %v2894, %v3203
        %v3303 = vadd.f32 %v2940, %v3249
        %v3304 = vadd.f32 %v2986, %v3295
        %v3305 = vld [vmem:[%s13] sm:$0xf]
        %v3307 = vperm.slane %v3305, 0
        %v3308 = vperm.slane %v3305, 1
        %v3309 = vperm.slane %v3305, 2
        %v3310 = vperm.slane %v3305, 3
        %v3315 = vadd.f32 %v3297, %v3307
        %v3316 = vadd.f32 %v3298, %v3308
        %v3317 = vadd.f32 %v3299, %v3309
        %v3318 = vadd.f32 %v3300, %v3310
        %v3319 = vadd.f32 %v3301, %v3307
        %v3320 = vadd.f32 %v3302, %v3308
        %v3321 = vadd.f32 %v3303, %v3309
        %v3322 = vadd.f32 %v3304, %v3310
        %v3323 = vmax.f32 %v3315, 0.0
        %v3324 = vmax.f32 %v3316, 0.0
        %v3325 = vmax.f32 %v3317, 0.0
        %v3326 = vmax.f32 %v3318, 0.0
        %v3327 = vmax.f32 %v3319, 0.0
        %v3328 = vmax.f32 %v3320, 0.0
        %v3329 = vmax.f32 %v3321, 0.0
        %v3330 = vmax.f32 %v3322, 0.0
        %v3331 = vld [vmem:[#allocation5] sm:$0xff]
        %v3332 = vld [vmem:[#allocation5 + $0x8] sm:$0xff]
        %v3333 = vld [vmem:[#allocation5 + $0x10] sm:$0xff]
        %v3334 = vld [vmem:[#allocation5 + $0x18] sm:$0xff]
        %v3335 = vld [vmem:[#allocation5 + $0x20] sm:$0xff]
        %v3336 = vld [vmem:[#allocation5 + $0x28] sm:$0xff]
        %v3337 = vld [vmem:[#allocation5 + $0x30] sm:$0xff]
        %v3338 = vld [vmem:[#allocation5 + $0x38] sm:$0xff]
        %v3339 = vld [vmem:[#allocation5 + $0x40] sm:$0xff]
        %v3340 = vld [vmem:[#allocation5 + $0x48] sm:$0xff]
        %v3341 = vld [vmem:[#allocation5 + $0x50] sm:$0xff]
        %v3342 = vld [vmem:[#allocation5 + $0x58] sm:$0xff]
        %v3343 = vld [vmem:[#allocation5 + $0x60] sm:$0xff]
        %v3344 = vld [vmem:[#allocation5 + $0x68] sm:$0xff]
        %v3345 = vld [vmem:[#allocation5 + $0x70] sm:$0xff]
        %v3346 = vld [vmem:[#allocation5 + $0x78] sm:$0xff]
        %v3347 = vld [vmem:[#allocation5 + $0x80] sm:$0xff]
        %v3348 = vld [vmem:[#allocation5 + $0x88] sm:$0xff]
        %v3349 = vld [vmem:[#allocation5 + $0x90] sm:$0xff]
        %v3350 = vld [vmem:[#allocation5 + $0x98] sm:$0xff]
        %v3351 = vld [vmem:[#allocation5 + $0xa0] sm:$0xff]
        %v3352 = vld [vmem:[#allocation5 + $0xa8] sm:$0xff]
        %v3353 = vld [vmem:[#allocation5 + $0xb0] sm:$0xff]
        %v3354 = vld [vmem:[#allocation5 + $0xb8] sm:$0xff]
        %v3355 = vld [vmem:[#allocation5 + $0xc0] sm:$0xff]
        %v3356 = vld [vmem:[#allocation5 + $0xc8] sm:$0xff]
        %v3357 = vld [vmem:[#allocation5 + $0xd0] sm:$0xff]
        %v3358 = vld [vmem:[#allocation5 + $0xd8] sm:$0xff]
        %v3359 = vld [vmem:[#allocation5 + $0xe0] sm:$0xff]
        %v3360 = vld [vmem:[#allocation5 + $0xe8] sm:$0xff]
        %v3361 = vld [vmem:[#allocation5 + $0xf0] sm:$0xff]
        %v3362 = vld [vmem:[#allocation5 + $0xf8] sm:$0xff]
        %v3363 = vld [vmem:[#allocation5 + $0x100] sm:$0xff]
        %v3364 = vld [vmem:[#allocation5 + $0x108] sm:$0xff]
        %v3365 = vld [vmem:[#allocation5 + $0x110] sm:$0xff]
        %v3366 = vld [vmem:[#allocation5 + $0x118] sm:$0xff]
        %v3367 = vld [vmem:[#allocation5 + $0x120] sm:$0xff]
        %v3368 = vld [vmem:[#allocation5 + $0x128] sm:$0xff]
        %v3369 = vld [vmem:[#allocation5 + $0x130] sm:$0xff]
        %v3370 = vld [vmem:[#allocation5 + $0x138] sm:$0xff]
        %v3371 = vld [vmem:[#allocation5 + $0x140] sm:$0xff]
        %v3372 = vld [vmem:[#allocation5 + $0x148] sm:$0xff]
        %v3373 = vld [vmem:[#allocation5 + $0x150] sm:$0xff]
        %v3374 = vld [vmem:[#allocation5 + $0x158] sm:$0xff]
        %v3375 = vld [vmem:[#allocation5 + $0x160] sm:$0xff]
        %v3376 = vld [vmem:[#allocation5 + $0x168] sm:$0xff]
        %v3377 = vld [vmem:[#allocation5 + $0x170] sm:$0xff]
        %v3378 = vld [vmem:[#allocation5 + $0x178] sm:$0xff]
        %v3379 = vld [vmem:[#allocation5 + $0x180] sm:$0xff]
        %v3380 = vld [vmem:[#allocation5 + $0x188] sm:$0xff]
        %v3381 = vld [vmem:[#allocation5 + $0x190] sm:$0xff]
        %v3382 = vld [vmem:[#allocation5 + $0x198] sm:$0xff]
        %v3383 = vld [vmem:[#allocation5 + $0x1a0] sm:$0xff]
        %v3384 = vld [vmem:[#allocation5 + $0x1a8] sm:$0xff]
        %v3385 = vld [vmem:[#allocation5 + $0x1b0] sm:$0xff]
        %v3386 = vld [vmem:[#allocation5 + $0x1b8] sm:$0xff]
        %v3387 = vld [vmem:[#allocation5 + $0x1c0] sm:$0xff]
        %v3388 = vld [vmem:[#allocation5 + $0x1c8] sm:$0xff]
        %v3389 = vld [vmem:[#allocation5 + $0x1d0] sm:$0xff]
        %v3390 = vld [vmem:[#allocation5 + $0x1d8] sm:$0xff]
        %v3391 = vld [vmem:[#allocation5 + $0x1e0] sm:$0xff]
        %v3392 = vld [vmem:[#allocation5 + $0x1e8] sm:$0xff]
        %v3393 = vld [vmem:[#allocation5 + $0x1f0] sm:$0xff]
        %v3394 = vld [vmem:[#allocation5 + $0x1f8] sm:$0xff]
        %v3395 = vld [vmem:[#allocation5 + $0x200] sm:$0xff]
        %v3396 = vld [vmem:[#allocation5 + $0x208] sm:$0xff]
        %v3397 = vld [vmem:[#allocation5 + $0x210] sm:$0xff]
        %v3398 = vld [vmem:[#allocation5 + $0x218] sm:$0xff]
        %v3399 = vld [vmem:[#allocation5 + $0x220] sm:$0xff]
        %v3400 = vld [vmem:[#allocation5 + $0x228] sm:$0xff]
        %v3401 = vld [vmem:[#allocation5 + $0x230] sm:$0xff]
        %v3402 = vld [vmem:[#allocation5 + $0x238] sm:$0xff]
        %v3403 = vld [vmem:[#allocation5 + $0x240] sm:$0xff]
        %v3404 = vld [vmem:[#allocation5 + $0x248] sm:$0xff]
        %v3405 = vld [vmem:[#allocation5 + $0x250] sm:$0xff]
        %v3406 = vld [vmem:[#allocation5 + $0x258] sm:$0xff]
        %v3407 = vld [vmem:[#allocation5 + $0x260] sm:$0xff]
        %v3408 = vld [vmem:[#allocation5 + $0x268] sm:$0xff]
        %v3409 = vld [vmem:[#allocation5 + $0x270] sm:$0xff]
        %v3410 = vld [vmem:[#allocation5 + $0x278] sm:$0xff]
        %v3411 = vld [vmem:[#allocation5 + $0x280] sm:$0xff]
        %v3412 = vld [vmem:[#allocation5 + $0x288] sm:$0xff]
        %v3413 = vld [vmem:[#allocation5 + $0x290] sm:$0xff]
        %v3414 = vld [vmem:[#allocation5 + $0x298] sm:$0xff]
        %v3415 = vld [vmem:[#allocation5 + $0x2a0] sm:$0xff]
        %v3416 = vld [vmem:[#allocation5 + $0x2a8] sm:$0xff]
        %v3417 = vld [vmem:[#allocation5 + $0x2b0] sm:$0xff]
        %v3418 = vld [vmem:[#allocation5 + $0x2b8] sm:$0xff]
        %v3419 = vld [vmem:[#allocation5 + $0x2c0] sm:$0xff]
        %v3420 = vld [vmem:[#allocation5 + $0x2c8] sm:$0xff]
        %v3421 = vld [vmem:[#allocation5 + $0x2d0] sm:$0xff]
        %v3422 = vld [vmem:[#allocation5 + $0x2d8] sm:$0xff]
        %v3423 = vld [vmem:[#allocation5 + $0x2e0] sm:$0xff]
        %v3424 = vld [vmem:[#allocation5 + $0x2e8] sm:$0xff]
        %v3425 = vld [vmem:[#allocation5 + $0x2f0] sm:$0xff]
        %v3426 = vld [vmem:[#allocation5 + $0x2f8] sm:$0xff]
        %v3427 = vld [vmem:[#allocation5 + $0x300] sm:$0xff]
        %v3428 = vld [vmem:[#allocation5 + $0x308] sm:$0xff]
        %v3429 = vld [vmem:[#allocation5 + $0x310] sm:$0xff]
        %v3430 = vld [vmem:[#allocation5 + $0x318] sm:$0xff]
        %v3431 = vld [vmem:[#allocation5 + $0x320] sm:$0xff]
        %v3432 = vld [vmem:[#allocation5 + $0x328] sm:$0xff]
        %v3433 = vld [vmem:[#allocation5 + $0x330] sm:$0xff]
        %v3434 = vld [vmem:[#allocation5 + $0x338] sm:$0xff]
        %v3435 = vld [vmem:[#allocation5 + $0x340] sm:$0xff]
        %v3436 = vld [vmem:[#allocation5 + $0x348] sm:$0xff]
        %v3437 = vld [vmem:[#allocation5 + $0x350] sm:$0xff]
        %v3438 = vld [vmem:[#allocation5 + $0x358] sm:$0xff]
        %v3439 = vld [vmem:[#allocation5 + $0x360] sm:$0xff]
        %v3440 = vld [vmem:[#allocation5 + $0x368] sm:$0xff]
        %v3441 = vld [vmem:[#allocation5 + $0x370] sm:$0xff]
        %v3442 = vld [vmem:[#allocation5 + $0x378] sm:$0xff]
        %v3444 = vsel %vm1657, %v3326, 0
        %v3447 = vsel %vm1657, %v3330, 0
        %3449 = vmatpush.msra.mxu0 %v3361
        %3450 = vmatpush.msra.mxu0 %v3359
        %3451 = vmatpush.msra.mxu0 %v3357
        %3452 = vmatpush.msra.mxu0 %v3355
        %3453 = vmatpush.msra.mxu0 %v3353
        %3454 = vmatpush.msra.mxu0 %v3351
        %3455 = vmatpush.msra.mxu0 %v3349
        %3456 = vmatpush.msra.mxu0 %v3347
        %3457 = vmatpush.msra.mxu0 %v3345
        %3458 = vmatpush.msra.mxu0 %v3343
        %3459 = vmatpush.msra.mxu0 %v3341
        %3460 = vmatpush.msra.mxu0 %v3339
        %3461 = vmatpush.msra.mxu0 %v3337
        %3462 = vmatpush.msra.mxu0 %v3335
        %3463 = vmatpush.msra.mxu0 %v3333
        %3464 = vmatpush.msra.mxu0 %v3331
        %3465 = vmatmul.f32.gmra.mxu0 %v3323
        %v3466 = vpop.f32.mrf.mxu0
        %v3467 = vadd.f32 0.0, %v3466
        %3468 = vmatmul.f32.gmra.mxu0 %v3327
        %v3469 = vpop.f32.mrf.mxu0
        %v3470 = vadd.f32 0.0, %v3469
        %3471 = vdwg.mxu0
        %3472 = vmatpush.msra.mxu0 %v3393
        %3473 = vmatpush.msra.mxu0 %v3391
        %3474 = vmatpush.msra.mxu0 %v3389
        %3475 = vmatpush.msra.mxu0 %v3387
        %3476 = vmatpush.msra.mxu0 %v3385
        %3477 = vmatpush.msra.mxu0 %v3383
        %3478 = vmatpush.msra.mxu0 %v3381
        %3479 = vmatpush.msra.mxu0 %v3379
        %3480 = vmatpush.msra.mxu0 %v3377
        %3481 = vmatpush.msra.mxu0 %v3375
        %3482 = vmatpush.msra.mxu0 %v3373
        %3483 = vmatpush.msra.mxu0 %v3371
        %3484 = vmatpush.msra.mxu0 %v3369
        %3485 = vmatpush.msra.mxu0 %v3367
        %3486 = vmatpush.msra.mxu0 %v3365
        %3487 = vmatpush.msra.mxu0 %v3363
        %3488 = vmatmul.f32.gmra.mxu0 %v3324
        %v3489 = vpop.f32.mrf.mxu0
        %v3490 = vadd.f32 %v3467, %v3489
        %3491 = vmatmul.f32.gmra.mxu0 %v3328
        %v3492 = vpop.f32.mrf.mxu0
        %v3493 = vadd.f32 %v3470, %v3492
        %3494 = vdwg.mxu0
        %3495 = vmatpush.msra.mxu0 %v3425
        %3496 = vmatpush.msra.mxu0 %v3423
        %3497 = vmatpush.msra.mxu0 %v3421
        %3498 = vmatpush.msra.mxu0 %v3419
        %3499 = vmatpush.msra.mxu0 %v3417
        %3500 = vmatpush.msra.mxu0 %v3415
        %3501 = vmatpush.msra.mxu0 %v3413
        %3502 = vmatpush.msra.mxu0 %v3411
        %3503 = vmatpush.msra.mxu0 %v3409
        %3504 = vmatpush.msra.mxu0 %v3407
        %3505 = vmatpush.msra.mxu0 %v3405
        %3506 = vmatpush.msra.mxu0 %v3403
        %3507 = vmatpush.msra.mxu0 %v3401
        %3508 = vmatpush.msra.mxu0 %v3399
        %3509 = vmatpush.msra.mxu0 %v3397
        %3510 = vmatpush.msra.mxu0 %v3395
        %3511 = vmatmul.f32.gmra.mxu0 %v3325
        %v3512 = vpop.f32.mrf.mxu0
        %v3513 = vadd.f32 %v3490, %v3512
        %3514 = vmatmul.f32.gmra.mxu0 %v3329
        %v3515 = vpop.f32.mrf.mxu0
        %v3516 = vadd.f32 %v3493, %v3515
        %3517 = vdwg.mxu0
        %3518 = vmatpush.msra.mxu0 0.0
        %3519 = vmatpush.msra.mxu0 0.0
        %3520 = vmatpush.msra.mxu0 0.0
        %3521 = vmatpush.msra.mxu0 0.0
        %3522 = vmatpush.msra.mxu0 0.0
        %3523 = vmatpush.msra.mxu0 0.0
        %3524 = vmatpush.msra.mxu0 0.0
        %3525 = vmatpush.msra.mxu0 0.0
        %3526 = vmatpush.msra.mxu0 %v3441
        %3527 = vmatpush.msra.mxu0 %v3439
        %3528 = vmatpush.msra.mxu0 %v3437
        %3529 = vmatpush.msra.mxu0 %v3435
        %3530 = vmatpush.msra.mxu0 %v3433
        %3531 = vmatpush.msra.mxu0 %v3431
        %3532 = vmatpush.msra.mxu0 %v3429
        %3533 = vmatpush.msra.mxu0 %v3427
        %3534 = vmatmul.f32.gmra.mxu0 %v3444
        %v3535 = vpop.f32.mrf.mxu0
        %v3536 = vadd.f32 %v3513, %v3535
        %3537 = vmatmul.f32.gmra.mxu0 %v3447
        %v3538 = vpop.f32.mrf.mxu0
        %v3539 = vadd.f32 %v3516, %v3538
        %3540 = vdwg.mxu0
        %3541 = vmatpush.msra.mxu0 %v3362
        %3542 = vmatpush.msra.mxu0 %v3360
        %3543 = vmatpush.msra.mxu0 %v3358
        %3544 = vmatpush.msra.mxu0 %v3356
        %3545 = vmatpush.msra.mxu0 %v3354
        %3546 = vmatpush.msra.mxu0 %v3352
        %3547 = vmatpush.msra.mxu0 %v3350
        %3548 = vmatpush.msra.mxu0 %v3348
        %3549 = vmatpush.msra.mxu0 %v3346
        %3550 = vmatpush.msra.mxu0 %v3344
        %3551 = vmatpush.msra.mxu0 %v3342
        %3552 = vmatpush.msra.mxu0 %v3340
        %3553 = vmatpush.msra.mxu0 %v3338
        %3554 = vmatpush.msra.mxu0 %v3336
        %3555 = vmatpush.msra.mxu0 %v3334
        %3556 = vmatpush.msra.mxu0 %v3332
        %3557 = vmatmul.f32.gmra.mxu0 %v3323
        %v3558 = vpop.f32.mrf.mxu0
        %v3559 = vadd.f32 0.0, %v3558
        %3560 = vmatmul.f32.gmra.mxu0 %v3327
        %v3561 = vpop.f32.mrf.mxu0
        %v3562 = vadd.f32 0.0, %v3561
        %3563 = vdwg.mxu0
        %3564 = vmatpush.msra.mxu0 %v3394
        %3565 = vmatpush.msra.mxu0 %v3392
        %3566 = vmatpush.msra.mxu0 %v3390
        %3567 = vmatpush.msra.mxu0 %v3388
        %3568 = vmatpush.msra.mxu0 %v3386
        %3569 = vmatpush.msra.mxu0 %v3384
        %3570 = vmatpush.msra.mxu0 %v3382
        %3571 = vmatpush.msra.mxu0 %v3380
        %3572 = vmatpush.msra.mxu0 %v3378
        %3573 = vmatpush.msra.mxu0 %v3376
        %3574 = vmatpush.msra.mxu0 %v3374
        %3575 = vmatpush.msra.mxu0 %v3372
        %3576 = vmatpush.msra.mxu0 %v3370
        %3577 = vmatpush.msra.mxu0 %v3368
        %3578 = vmatpush.msra.mxu0 %v3366
        %3579 = vmatpush.msra.mxu0 %v3364
        %3580 = vmatmul.f32.gmra.mxu0 %v3324
        %v3581 = vpop.f32.mrf.mxu0
        %v3582 = vadd.f32 %v3559, %v3581
        %3583 = vmatmul.f32.gmra.mxu0 %v3328
        %v3584 = vpop.f32.mrf.mxu0
        %v3585 = vadd.f32 %v3562, %v3584
        %3586 = vdwg.mxu0
        %3587 = vmatpush.msra.mxu0 %v3426
        %3588 = vmatpush.msra.mxu0 %v3424
        %3589 = vmatpush.msra.mxu0 %v3422
        %3590 = vmatpush.msra.mxu0 %v3420
        %3591 = vmatpush.msra.mxu0 %v3418
        %3592 = vmatpush.msra.mxu0 %v3416
        %3593 = vmatpush.msra.mxu0 %v3414
        %3594 = vmatpush.msra.mxu0 %v3412
        %3595 = vmatpush.msra.mxu0 %v3410
        %3596 = vmatpush.msra.mxu0 %v3408
        %3597 = vmatpush.msra.mxu0 %v3406
        %3598 = vmatpush.msra.mxu0 %v3404
        %3599 = vmatpush.msra.mxu0 %v3402
        %3600 = vmatpush.msra.mxu0 %v3400
        %3601 = vmatpush.msra.mxu0 %v3398
        %3602 = vmatpush.msra.mxu0 %v3396
        %3603 = vmatmul.f32.gmra.mxu0 %v3325
        %v3604 = vpop.f32.mrf.mxu0
        %v3605 = vadd.f32 %v3582, %v3604
        %3606 = vmatmul.f32.gmra.mxu0 %v3329
        %v3607 = vpop.f32.mrf.mxu0
        %v3608 = vadd.f32 %v3585, %v3607
        %3609 = vdwg.mxu0
        %3610 = vmatpush.msra.mxu0 0.0
        %3611 = vmatpush.msra.mxu0 0.0
        %3612 = vmatpush.msra.mxu0 0.0
        %3613 = vmatpush.msra.mxu0 0.0
        %3614 = vmatpush.msra.mxu0 0.0
        %3615 = vmatpush.msra.mxu0 0.0
        %3616 = vmatpush.msra.mxu0 0.0
        %3617 = vmatpush.msra.mxu0 0.0
        %3618 = vmatpush.msra.mxu0 %v3442
        %3619 = vmatpush.msra.mxu0 %v3440
        %3620 = vmatpush.msra.mxu0 %v3438
        %3621 = vmatpush.msra.mxu0 %v3436
        %3622 = vmatpush.msra.mxu0 %v3434
        %3623 = vmatpush.msra.mxu0 %v3432
        %3624 = vmatpush.msra.mxu0 %v3430
        %3625 = vmatpush.msra.mxu0 %v3428
        %3626 = vmatmul.f32.gmra.mxu0 %v3444
        %v3627 = vpop.f32.mrf.mxu0
        %v3628 = vadd.f32 %v3605, %v3627
        %3629 = vmatmul.f32.gmra.mxu0 %v3447
        %v3630 = vpop.f32.mrf.mxu0
        %v3631 = vadd.f32 %v3608, %v3630
        %3632 = vdwg.mxu0
        %s3633 = scalar_lea.vmem [#allocation5], 896
        %v3634 = vld [vmem:[%s3633] sm:$0xff]
        %v3635 = vld [vmem:[%s3633 + $0x8] sm:$0xff]
        %v3636 = vld [vmem:[%s3633 + $0x10] sm:$0xff]
        %v3637 = vld [vmem:[%s3633 + $0x18] sm:$0xff]
        %v3638 = vld [vmem:[%s3633 + $0x20] sm:$0xff]
        %v3639 = vld [vmem:[%s3633 + $0x28] sm:$0xff]
        %v3640 = vld [vmem:[%s3633 + $0x30] sm:$0xff]
        %v3641 = vld [vmem:[%s3633 + $0x38] sm:$0xff]
        %v3642 = vld [vmem:[%s3633 + $0x40] sm:$0xff]
        %v3643 = vld [vmem:[%s3633 + $0x48] sm:$0xff]
        %v3644 = vld [vmem:[%s3633 + $0x50] sm:$0xff]
        %v3645 = vld [vmem:[%s3633 + $0x58] sm:$0xff]
        %v3646 = vld [vmem:[%s3633 + $0x60] sm:$0xff]
        %v3647 = vld [vmem:[%s3633 + $0x68] sm:$0xff]
        %v3648 = vld [vmem:[%s3633 + $0x70] sm:$0xff]
        %v3649 = vld [vmem:[%s3633 + $0x78] sm:$0xff]
        %v3650 = vld [vmem:[%s3633 + $0x80] sm:$0xff]
        %v3651 = vld [vmem:[%s3633 + $0x88] sm:$0xff]
        %v3652 = vld [vmem:[%s3633 + $0x90] sm:$0xff]
        %v3653 = vld [vmem:[%s3633 + $0x98] sm:$0xff]
        %v3654 = vld [vmem:[%s3633 + $0xa0] sm:$0xff]
        %v3655 = vld [vmem:[%s3633 + $0xa8] sm:$0xff]
        %v3656 = vld [vmem:[%s3633 + $0xb0] sm:$0xff]
        %v3657 = vld [vmem:[%s3633 + $0xb8] sm:$0xff]
        %v3658 = vld [vmem:[%s3633 + $0xc0] sm:$0xff]
        %v3659 = vld [vmem:[%s3633 + $0xc8] sm:$0xff]
        %v3660 = vld [vmem:[%s3633 + $0xd0] sm:$0xff]
        %v3661 = vld [vmem:[%s3633 + $0xd8] sm:$0xff]
        %v3662 = vld [vmem:[%s3633 + $0xe0] sm:$0xff]
        %v3663 = vld [vmem:[%s3633 + $0xe8] sm:$0xff]
        %v3664 = vld [vmem:[%s3633 + $0xf0] sm:$0xff]
        %v3665 = vld [vmem:[%s3633 + $0xf8] sm:$0xff]
        %v3666 = vld [vmem:[%s3633 + $0x100] sm:$0xff]
        %v3667 = vld [vmem:[%s3633 + $0x108] sm:$0xff]
        %v3668 = vld [vmem:[%s3633 + $0x110] sm:$0xff]
        %v3669 = vld [vmem:[%s3633 + $0x118] sm:$0xff]
        %v3670 = vld [vmem:[%s3633 + $0x120] sm:$0xff]
        %v3671 = vld [vmem:[%s3633 + $0x128] sm:$0xff]
        %v3672 = vld [vmem:[%s3633 + $0x130] sm:$0xff]
        %v3673 = vld [vmem:[%s3633 + $0x138] sm:$0xff]
        %v3674 = vld [vmem:[%s3633 + $0x140] sm:$0xff]
        %v3675 = vld [vmem:[%s3633 + $0x148] sm:$0xff]
        %v3676 = vld [vmem:[%s3633 + $0x150] sm:$0xff]
        %v3677 = vld [vmem:[%s3633 + $0x158] sm:$0xff]
        %v3678 = vld [vmem:[%s3633 + $0x160] sm:$0xff]
        %v3679 = vld [vmem:[%s3633 + $0x168] sm:$0xff]
        %v3680 = vld [vmem:[%s3633 + $0x170] sm:$0xff]
        %v3681 = vld [vmem:[%s3633 + $0x178] sm:$0xff]
        %v3682 = vld [vmem:[%s3633 + $0x180] sm:$0xff]
        %v3683 = vld [vmem:[%s3633 + $0x188] sm:$0xff]
        %v3684 = vld [vmem:[%s3633 + $0x190] sm:$0xff]
        %v3685 = vld [vmem:[%s3633 + $0x198] sm:$0xff]
        %v3686 = vld [vmem:[%s3633 + $0x1a0] sm:$0xff]
        %v3687 = vld [vmem:[%s3633 + $0x1a8] sm:$0xff]
        %v3688 = vld [vmem:[%s3633 + $0x1b0] sm:$0xff]
        %v3689 = vld [vmem:[%s3633 + $0x1b8] sm:$0xff]
        %v3690 = vld [vmem:[%s3633 + $0x1c0] sm:$0xff]
        %v3691 = vld [vmem:[%s3633 + $0x1c8] sm:$0xff]
        %v3692 = vld [vmem:[%s3633 + $0x1d0] sm:$0xff]
        %v3693 = vld [vmem:[%s3633 + $0x1d8] sm:$0xff]
        %v3694 = vld [vmem:[%s3633 + $0x1e0] sm:$0xff]
        %v3695 = vld [vmem:[%s3633 + $0x1e8] sm:$0xff]
        %v3696 = vld [vmem:[%s3633 + $0x1f0] sm:$0xff]
        %v3697 = vld [vmem:[%s3633 + $0x1f8] sm:$0xff]
        %v3698 = vld [vmem:[%s3633 + $0x200] sm:$0xff]
        %v3699 = vld [vmem:[%s3633 + $0x208] sm:$0xff]
        %v3700 = vld [vmem:[%s3633 + $0x210] sm:$0xff]
        %v3701 = vld [vmem:[%s3633 + $0x218] sm:$0xff]
        %v3702 = vld [vmem:[%s3633 + $0x220] sm:$0xff]
        %v3703 = vld [vmem:[%s3633 + $0x228] sm:$0xff]
        %v3704 = vld [vmem:[%s3633 + $0x230] sm:$0xff]
        %v3705 = vld [vmem:[%s3633 + $0x238] sm:$0xff]
        %v3706 = vld [vmem:[%s3633 + $0x240] sm:$0xff]
        %v3707 = vld [vmem:[%s3633 + $0x248] sm:$0xff]
        %v3708 = vld [vmem:[%s3633 + $0x250] sm:$0xff]
        %v3709 = vld [vmem:[%s3633 + $0x258] sm:$0xff]
        %v3710 = vld [vmem:[%s3633 + $0x260] sm:$0xff]
        %v3711 = vld [vmem:[%s3633 + $0x268] sm:$0xff]
        %v3712 = vld [vmem:[%s3633 + $0x270] sm:$0xff]
        %v3713 = vld [vmem:[%s3633 + $0x278] sm:$0xff]
        %v3714 = vld [vmem:[%s3633 + $0x280] sm:$0xff]
        %v3715 = vld [vmem:[%s3633 + $0x288] sm:$0xff]
        %v3716 = vld [vmem:[%s3633 + $0x290] sm:$0xff]
        %v3717 = vld [vmem:[%s3633 + $0x298] sm:$0xff]
        %v3718 = vld [vmem:[%s3633 + $0x2a0] sm:$0xff]
        %v3719 = vld [vmem:[%s3633 + $0x2a8] sm:$0xff]
        %v3720 = vld [vmem:[%s3633 + $0x2b0] sm:$0xff]
        %v3721 = vld [vmem:[%s3633 + $0x2b8] sm:$0xff]
        %v3722 = vld [vmem:[%s3633 + $0x2c0] sm:$0xff]
        %v3723 = vld [vmem:[%s3633 + $0x2c8] sm:$0xff]
        %v3724 = vld [vmem:[%s3633 + $0x2d0] sm:$0xff]
        %v3725 = vld [vmem:[%s3633 + $0x2d8] sm:$0xff]
        %v3726 = vld [vmem:[%s3633 + $0x2e0] sm:$0xff]
        %v3727 = vld [vmem:[%s3633 + $0x2e8] sm:$0xff]
        %v3728 = vld [vmem:[%s3633 + $0x2f0] sm:$0xff]
        %v3729 = vld [vmem:[%s3633 + $0x2f8] sm:$0xff]
        %v3730 = vld [vmem:[%s3633 + $0x300] sm:$0xff]
        %v3731 = vld [vmem:[%s3633 + $0x308] sm:$0xff]
        %v3732 = vld [vmem:[%s3633 + $0x310] sm:$0xff]
        %v3733 = vld [vmem:[%s3633 + $0x318] sm:$0xff]
        %v3734 = vld [vmem:[%s3633 + $0x320] sm:$0xff]
        %v3735 = vld [vmem:[%s3633 + $0x328] sm:$0xff]
        %v3736 = vld [vmem:[%s3633 + $0x330] sm:$0xff]
        %v3737 = vld [vmem:[%s3633 + $0x338] sm:$0xff]
        %v3738 = vld [vmem:[%s3633 + $0x340] sm:$0xff]
        %v3739 = vld [vmem:[%s3633 + $0x348] sm:$0xff]
        %v3740 = vld [vmem:[%s3633 + $0x350] sm:$0xff]
        %v3741 = vld [vmem:[%s3633 + $0x358] sm:$0xff]
        %v3742 = vld [vmem:[%s3633 + $0x360] sm:$0xff]
        %v3743 = vld [vmem:[%s3633 + $0x368] sm:$0xff]
        %v3744 = vld [vmem:[%s3633 + $0x370] sm:$0xff]
        %v3745 = vld [vmem:[%s3633 + $0x378] sm:$0xff]
        %3746 = vmatpush.msra.mxu0 %v3664
        %3747 = vmatpush.msra.mxu0 %v3662
        %3748 = vmatpush.msra.mxu0 %v3660
        %3749 = vmatpush.msra.mxu0 %v3658
        %3750 = vmatpush.msra.mxu0 %v3656
        %3751 = vmatpush.msra.mxu0 %v3654
        %3752 = vmatpush.msra.mxu0 %v3652
        %3753 = vmatpush.msra.mxu0 %v3650
        %3754 = vmatpush.msra.mxu0 %v3648
        %3755 = vmatpush.msra.mxu0 %v3646
        %3756 = vmatpush.msra.mxu0 %v3644
        %3757 = vmatpush.msra.mxu0 %v3642
        %3758 = vmatpush.msra.mxu0 %v3640
        %3759 = vmatpush.msra.mxu0 %v3638
        %3760 = vmatpush.msra.mxu0 %v3636
        %3761 = vmatpush.msra.mxu0 %v3634
        %3762 = vmatmul.f32.gmra.mxu0 %v3323
        %v3763 = vpop.f32.mrf.mxu0
        %v3764 = vadd.f32 0.0, %v3763
        %3765 = vmatmul.f32.gmra.mxu0 %v3327
        %v3766 = vpop.f32.mrf.mxu0
        %v3767 = vadd.f32 0.0, %v3766
        %3768 = vdwg.mxu0
        %3769 = vmatpush.msra.mxu0 %v3696
        %3770 = vmatpush.msra.mxu0 %v3694
        %3771 = vmatpush.msra.mxu0 %v3692
        %3772 = vmatpush.msra.mxu0 %v3690
        %3773 = vmatpush.msra.mxu0 %v3688
        %3774 = vmatpush.msra.mxu0 %v3686
        %3775 = vmatpush.msra.mxu0 %v3684
        %3776 = vmatpush.msra.mxu0 %v3682
        %3777 = vmatpush.msra.mxu0 %v3680
        %3778 = vmatpush.msra.mxu0 %v3678
        %3779 = vmatpush.msra.mxu0 %v3676
        %3780 = vmatpush.msra.mxu0 %v3674
        %3781 = vmatpush.msra.mxu0 %v3672
        %3782 = vmatpush.msra.mxu0 %v3670
        %3783 = vmatpush.msra.mxu0 %v3668
        %3784 = vmatpush.msra.mxu0 %v3666
        %3785 = vmatmul.f32.gmra.mxu0 %v3324
        %v3786 = vpop.f32.mrf.mxu0
        %v3787 = vadd.f32 %v3764, %v3786
        %3788 = vmatmul.f32.gmra.mxu0 %v3328
        %v3789 = vpop.f32.mrf.mxu0
        %v3790 = vadd.f32 %v3767, %v3789
        %3791 = vdwg.mxu0
        %3792 = vmatpush.msra.mxu0 %v3728
        %3793 = vmatpush.msra.mxu0 %v3726
        %3794 = vmatpush.msra.mxu0 %v3724
        %3795 = vmatpush.msra.mxu0 %v3722
        %3796 = vmatpush.msra.mxu0 %v3720
        %3797 = vmatpush.msra.mxu0 %v3718
        %3798 = vmatpush.msra.mxu0 %v3716
        %3799 = vmatpush.msra.mxu0 %v3714
        %3800 = vmatpush.msra.mxu0 %v3712
        %3801 = vmatpush.msra.mxu0 %v3710
        %3802 = vmatpush.msra.mxu0 %v3708
        %3803 = vmatpush.msra.mxu0 %v3706
        %3804 = vmatpush.msra.mxu0 %v3704
        %3805 = vmatpush.msra.mxu0 %v3702
        %3806 = vmatpush.msra.mxu0 %v3700
        %3807 = vmatpush.msra.mxu0 %v3698
        %3808 = vmatmul.f32.gmra.mxu0 %v3325
        %v3809 = vpop.f32.mrf.mxu0
        %v3810 = vadd.f32 %v3787, %v3809
        %3811 = vmatmul.f32.gmra.mxu0 %v3329
        %v3812 = vpop.f32.mrf.mxu0
        %v3813 = vadd.f32 %v3790, %v3812
        %3814 = vdwg.mxu0
        %3815 = vmatpush.msra.mxu0 0.0
        %3816 = vmatpush.msra.mxu0 0.0
        %3817 = vmatpush.msra.mxu0 0.0
        %3818 = vmatpush.msra.mxu0 0.0
        %3819 = vmatpush.msra.mxu0 0.0
        %3820 = vmatpush.msra.mxu0 0.0
        %3821 = vmatpush.msra.mxu0 0.0
        %3822 = vmatpush.msra.mxu0 0.0
        %3823 = vmatpush.msra.mxu0 %v3744
        %3824 = vmatpush.msra.mxu0 %v3742
        %3825 = vmatpush.msra.mxu0 %v3740
        %3826 = vmatpush.msra.mxu0 %v3738
        %3827 = vmatpush.msra.mxu0 %v3736
        %3828 = vmatpush.msra.mxu0 %v3734
        %3829 = vmatpush.msra.mxu0 %v3732
        %3830 = vmatpush.msra.mxu0 %v3730
        %3831 = vmatmul.f32.gmra.mxu0 %v3444
        %v3832 = vpop.f32.mrf.mxu0
        %v3833 = vadd.f32 %v3810, %v3832
        %3834 = vmatmul.f32.gmra.mxu0 %v3447
        %v3835 = vpop.f32.mrf.mxu0
        %v3836 = vadd.f32 %v3813, %v3835
        %3837 = vdwg.mxu0
        %3838 = vmatpush.msra.mxu0 %v3665
        %3839 = vmatpush.msra.mxu0 %v3663
        %3840 = vmatpush.msra.mxu0 %v3661
        %3841 = vmatpush.msra.mxu0 %v3659
        %3842 = vmatpush.msra.mxu0 %v3657
        %3843 = vmatpush.msra.mxu0 %v3655
        %3844 = vmatpush.msra.mxu0 %v3653
        %3845 = vmatpush.msra.mxu0 %v3651
        %3846 = vmatpush.msra.mxu0 %v3649
        %3847 = vmatpush.msra.mxu0 %v3647
        %3848 = vmatpush.msra.mxu0 %v3645
        %3849 = vmatpush.msra.mxu0 %v3643
        %3850 = vmatpush.msra.mxu0 %v3641
        %3851 = vmatpush.msra.mxu0 %v3639
        %3852 = vmatpush.msra.mxu0 %v3637
        %3853 = vmatpush.msra.mxu0 %v3635
        %3854 = vmatmul.f32.gmra.mxu0 %v3323
        %v3855 = vpop.f32.mrf.mxu0
        %v3856 = vadd.f32 0.0, %v3855
        %3857 = vmatmul.f32.gmra.mxu0 %v3327
        %v3858 = vpop.f32.mrf.mxu0
        %v3859 = vadd.f32 0.0, %v3858
        %3860 = vdwg.mxu0
        %3861 = vmatpush.msra.mxu0 %v3697
        %3862 = vmatpush.msra.mxu0 %v3695
        %3863 = vmatpush.msra.mxu0 %v3693
        %3864 = vmatpush.msra.mxu0 %v3691
        %3865 = vmatpush.msra.mxu0 %v3689
        %3866 = vmatpush.msra.mxu0 %v3687
        %3867 = vmatpush.msra.mxu0 %v3685
        %3868 = vmatpush.msra.mxu0 %v3683
        %3869 = vmatpush.msra.mxu0 %v3681
        %3870 = vmatpush.msra.mxu0 %v3679
        %3871 = vmatpush.msra.mxu0 %v3677
        %3872 = vmatpush.msra.mxu0 %v3675
        %3873 = vmatpush.msra.mxu0 %v3673
        %3874 = vmatpush.msra.mxu0 %v3671
        %3875 = vmatpush.msra.mxu0 %v3669
        %3876 = vmatpush.msra.mxu0 %v3667
        %3877 = vmatmul.f32.gmra.mxu0 %v3324
        %v3878 = vpop.f32.mrf.mxu0
        %v3879 = vadd.f32 %v3856, %v3878
        %3880 = vmatmul.f32.gmra.mxu0 %v3328
        %v3881 = vpop.f32.mrf.mxu0
        %v3882 = vadd.f32 %v3859, %v3881
        %3883 = vdwg.mxu0
        %3884 = vmatpush.msra.mxu0 %v3729
        %3885 = vmatpush.msra.mxu0 %v3727
        %3886 = vmatpush.msra.mxu0 %v3725
        %3887 = vmatpush.msra.mxu0 %v3723
        %3888 = vmatpush.msra.mxu0 %v3721
        %3889 = vmatpush.msra.mxu0 %v3719
        %3890 = vmatpush.msra.mxu0 %v3717
        %3891 = vmatpush.msra.mxu0 %v3715
        %3892 = vmatpush.msra.mxu0 %v3713
        %3893 = vmatpush.msra.mxu0 %v3711
        %3894 = vmatpush.msra.mxu0 %v3709
        %3895 = vmatpush.msra.mxu0 %v3707
        %3896 = vmatpush.msra.mxu0 %v3705
        %3897 = vmatpush.msra.mxu0 %v3703
        %3898 = vmatpush.msra.mxu0 %v3701
        %3899 = vmatpush.msra.mxu0 %v3699
        %3900 = vmatmul.f32.gmra.mxu0 %v3325
        %v3901 = vpop.f32.mrf.mxu0
        %v3902 = vadd.f32 %v3879, %v3901
        %3903 = vmatmul.f32.gmra.mxu0 %v3329
        %v3904 = vpop.f32.mrf.mxu0
        %v3905 = vadd.f32 %v3882, %v3904
        %3906 = vdwg.mxu0
        %3907 = vmatpush.msra.mxu0 0.0
        %3908 = vmatpush.msra.mxu0 0.0
        %3909 = vmatpush.msra.mxu0 0.0
        %3910 = vmatpush.msra.mxu0 0.0
        %3911 = vmatpush.msra.mxu0 0.0
        %3912 = vmatpush.msra.mxu0 0.0
        %3913 = vmatpush.msra.mxu0 0.0
        %3914 = vmatpush.msra.mxu0 0.0
        %3915 = vmatpush.msra.mxu0 %v3745
        %3916 = vmatpush.msra.mxu0 %v3743
        %3917 = vmatpush.msra.mxu0 %v3741
        %3918 = vmatpush.msra.mxu0 %v3739
        %3919 = vmatpush.msra.mxu0 %v3737
        %3920 = vmatpush.msra.mxu0 %v3735
        %3921 = vmatpush.msra.mxu0 %v3733
        %3922 = vmatpush.msra.mxu0 %v3731
        %3923 = vmatmul.f32.gmra.mxu0 %v3444
        %v3924 = vpop.f32.mrf.mxu0
        %v3925 = vadd.f32 %v3902, %v3924
        %3926 = vmatmul.f32.gmra.mxu0 %v3447
        %v3927 = vpop.f32.mrf.mxu0
        %v3928 = vadd.f32 %v3905, %v3927
        %3929 = vdwg.mxu0
        %v3930 = vmax.f32 %v3536, %v3833
        %v3931 = vmax.f32 %v3628, %v3925
        %v3932 = vmax.f32 %v3539, %v3836
        %v3933 = vmax.f32 %v3631, %v3928
        %v3934 = vld [vmem:[%s17] sm:$0x7f]
        %vm3935 = vcmask 113664
        %v3937 = vsel %vm3935, %v3934, 0
        %v3940 = vsel %vm1343, %v3932, 0
        %v3943 = vsel %vm1343, %v3933, 0
        %3945 = vmatpush.msra.mxu0 0.0
        %3946 = vmatpush.msra.mxu0 0.0
        %3947 = vmatpush.msra.mxu0 0.0
        %3948 = vmatpush.msra.mxu0 0.0
        %3949 = vmatpush.msra.mxu0 0.0
        %3950 = vmatpush.msra.mxu0 0.0
        %3951 = vmatpush.msra.mxu0 0.0
        %3952 = vmatpush.msra.mxu0 0.0
        %3953 = vmatpush.msra.mxu0 0.0
        %3954 = vmatpush.msra.mxu0 0.0
        %3955 = vmatpush.msra.mxu0 0.0
        %3956 = vmatpush.msra.mxu0 0.0
        %3957 = vmatpush.msra.mxu0 0.0
        %3958 = vmatpush.msra.mxu0 0.0
        %3959 = vmatpush.msra.mxu0 %v3940
        %3960 = vmatpush.msra.mxu0 %v3930
        %3961 = vmatmul.f32.gmra.mxu0 %v3937
        %v3962 = vpop.f32.mrf.mxu0
        %v3963 = vadd.f32 0.0, %v3962
        %3964 = vdwg.mxu0
        %3965 = vmatpush.msra.mxu0 0.0
        %3966 = vmatpush.msra.mxu0 0.0
        %3967 = vmatpush.msra.mxu0 0.0
        %3968 = vmatpush.msra.mxu0 0.0
        %3969 = vmatpush.msra.mxu0 0.0
        %3970 = vmatpush.msra.mxu0 0.0
        %3971 = vmatpush.msra.mxu0 0.0
        %3972 = vmatpush.msra.mxu0 0.0
        %3973 = vmatpush.msra.mxu0 0.0
        %3974 = vmatpush.msra.mxu0 0.0
        %3975 = vmatpush.msra.mxu0 0.0
        %3976 = vmatpush.msra.mxu0 0.0
        %3977 = vmatpush.msra.mxu0 0.0
        %3978 = vmatpush.msra.mxu0 0.0
        %3979 = vmatpush.msra.mxu0 %v3943
        %3980 = vmatpush.msra.mxu0 %v3931
        %3981 = vmatmul.f32.gmra.mxu0 %v3937
        %v3982 = vpop.f32.mrf.mxu0
        %v3983 = vadd.f32 0.0, %v3982
        %3984 = vdwg.mxu0
        %s3985 = scalar_lea.vmem %s17, 8
        %v3986 = vld [vmem:[%s3985] sm:$0x7f]
        %v3988 = vsel %vm3935, %v3986, 0
        %3990 = vmatpush.msra.mxu0 0.0
        %3991 = vmatpush.msra.mxu0 0.0
        %3992 = vmatpush.msra.mxu0 0.0
        %3993 = vmatpush.msra.mxu0 0.0
        %3994 = vmatpush.msra.mxu0 0.0
        %3995 = vmatpush.msra.mxu0 0.0
        %3996 = vmatpush.msra.mxu0 0.0
        %3997 = vmatpush.msra.mxu0 0.0
        %3998 = vmatpush.msra.mxu0 0.0
        %3999 = vmatpush.msra.mxu0 0.0
        %4000 = vmatpush.msra.mxu0 0.0
        %4001 = vmatpush.msra.mxu0 0.0
        %4002 = vmatpush.msra.mxu0 0.0
        %4003 = vmatpush.msra.mxu0 0.0
        %4004 = vmatpush.msra.mxu0 %v3940
        %4005 = vmatpush.msra.mxu0 %v3930
        %4006 = vmatmul.f32.gmra.mxu0 %v3988
        %v4007 = vpop.f32.mrf.mxu0
        %v4008 = vadd.f32 0.0, %v4007
        %4009 = vdwg.mxu0
        %4010 = vmatpush.msra.mxu0 0.0
        %4011 = vmatpush.msra.mxu0 0.0
        %4012 = vmatpush.msra.mxu0 0.0
        %4013 = vmatpush.msra.mxu0 0.0
        %4014 = vmatpush.msra.mxu0 0.0
        %4015 = vmatpush.msra.mxu0 0.0
        %4016 = vmatpush.msra.mxu0 0.0
        %4017 = vmatpush.msra.mxu0 0.0
        %4018 = vmatpush.msra.mxu0 0.0
        %4019 = vmatpush.msra.mxu0 0.0
        %4020 = vmatpush.msra.mxu0 0.0
        %4021 = vmatpush.msra.mxu0 0.0
        %4022 = vmatpush.msra.mxu0 0.0
        %4023 = vmatpush.msra.mxu0 0.0
        %4024 = vmatpush.msra.mxu0 %v3943
        %4025 = vmatpush.msra.mxu0 %v3931
        %4026 = vmatmul.f32.gmra.mxu0 %v3988
        %v4027 = vpop.f32.mrf.mxu0
        %v4028 = vadd.f32 0.0, %v4027
        %4029 = vdwg.mxu0
        %v4030 = vmax.f32 %v3963, %v4008
        %v4031 = vmax.f32 %v3983, %v4028
        %v4032 = vld [vmem:[%s21] sm:$0x3]
        %v4033 = vld [vmem:[%s19] sm:$0xff]
        %v4034 = vld [vmem:[%s19 + $0x8] sm:$0xff]
        %v4035 = vld [vmem:[%s19 + $0x10] sm:$0xff]
        %v4036 = vld [vmem:[%s19 + $0x18] sm:$0xff]
        %v4037 = vld [vmem:[%s19 + $0x20] sm:$0xff]
        %v4038 = vld [vmem:[%s19 + $0x28] sm:$0xff]
        %v4039 = vld [vmem:[%s19 + $0x30] sm:$0xff]
        %v4040 = vld [vmem:[%s19 + $0x38] sm:$0xff]
        %v4041 = vld [vmem:[%s19 + $0x40] sm:$0xff]
        %v4042 = vld [vmem:[%s19 + $0x48] sm:$0xff]
        %v4043 = vld [vmem:[%s19 + $0x50] sm:$0xff]
        %v4044 = vld [vmem:[%s19 + $0x58] sm:$0xff]
        %v4045 = vld [vmem:[%s19 + $0x60] sm:$0xff]
        %v4046 = vld [vmem:[%s19 + $0x68] sm:$0xff]
        %v4047 = vld [vmem:[%s19 + $0x70] sm:$0xff]
        %v4048 = vld [vmem:[%s19 + $0x78] sm:$0xff]
        %v4049 = vld [vmem:[%s19 + $0x80] sm:$0xff]
        %v4050 = vld [vmem:[%s19 + $0x88] sm:$0xff]
        %v4051 = vld [vmem:[%s19 + $0x90] sm:$0xff]
        %v4052 = vld [vmem:[%s19 + $0x98] sm:$0xff]
        %v4053 = vld [vmem:[%s19 + $0xa0] sm:$0xff]
        %v4054 = vld [vmem:[%s19 + $0xa8] sm:$0xff]
        %v4055 = vld [vmem:[%s19 + $0xb0] sm:$0xff]
        %v4056 = vld [vmem:[%s19 + $0xb8] sm:$0xff]
        %v4057 = vld [vmem:[%s19 + $0xc0] sm:$0xff]
        %v4058 = vld [vmem:[%s19 + $0xc8] sm:$0xff]
        %v4059 = vld [vmem:[%s19 + $0xd0] sm:$0xff]
        %v4060 = vld [vmem:[%s19 + $0xd8] sm:$0xff]
        %v4061 = vld [vmem:[%s19 + $0xe0] sm:$0xff]
        %v4062 = vld [vmem:[%s19 + $0xe8] sm:$0xff]
        %v4063 = vld [vmem:[%s19 + $0xf0] sm:$0xff]
        %v4064 = vld [vmem:[%s19 + $0xf8] sm:$0xff]
        %v4065 = vld [vmem:[%s19 + $0x100] sm:$0xff]
        %v4066 = vld [vmem:[%s19 + $0x108] sm:$0xff]
        %v4067 = vld [vmem:[%s19 + $0x110] sm:$0xff]
        %v4068 = vld [vmem:[%s19 + $0x118] sm:$0xff]
        %v4069 = vld [vmem:[%s19 + $0x120] sm:$0xff]
        %v4070 = vld [vmem:[%s19 + $0x128] sm:$0xff]
        %v4071 = vld [vmem:[%s19 + $0x130] sm:$0xff]
        %v4072 = vld [vmem:[%s19 + $0x138] sm:$0xff]
        %v4073 = vld [vmem:[%s19 + $0x140] sm:$0xff]
        %v4074 = vld [vmem:[%s19 + $0x148] sm:$0xff]
        %v4075 = vld [vmem:[%s19 + $0x150] sm:$0xff]
        %v4076 = vld [vmem:[%s19 + $0x158] sm:$0xff]
        %v4077 = vld [vmem:[%s19 + $0x160] sm:$0xff]
        %v4078 = vld [vmem:[%s19 + $0x168] sm:$0xff]
        %v4079 = vld [vmem:[%s19 + $0x170] sm:$0xff]
        %v4080 = vld [vmem:[%s19 + $0x178] sm:$0xff]
        %v4081 = vld [vmem:[%s19 + $0x180] sm:$0xff]
        %v4082 = vld [vmem:[%s19 + $0x188] sm:$0xff]
        %v4083 = vld [vmem:[%s19 + $0x190] sm:$0xff]
        %v4084 = vld [vmem:[%s19 + $0x198] sm:$0xff]
        %v4085 = vld [vmem:[%s19 + $0x1a0] sm:$0xff]
        %v4086 = vld [vmem:[%s19 + $0x1a8] sm:$0xff]
        %v4087 = vld [vmem:[%s19 + $0x1b0] sm:$0xff]
        %v4088 = vld [vmem:[%s19 + $0x1b8] sm:$0xff]
        %v4090 = vsel %vm2611, %v4031, 0
        %4092 = vmatpush.msra.mxu0 %v4063
        %4093 = vmatpush.msra.mxu0 %v4061
        %4094 = vmatpush.msra.mxu0 %v4059
        %4095 = vmatpush.msra.mxu0 %v4057
        %4096 = vmatpush.msra.mxu0 %v4055
        %4097 = vmatpush.msra.mxu0 %v4053
        %4098 = vmatpush.msra.mxu0 %v4051
        %4099 = vmatpush.msra.mxu0 %v4049
        %4100 = vmatpush.msra.mxu0 %v4047
        %4101 = vmatpush.msra.mxu0 %v4045
        %4102 = vmatpush.msra.mxu0 %v4043
        %4103 = vmatpush.msra.mxu0 %v4041
        %4104 = vmatpush.msra.mxu0 %v4039
        %4105 = vmatpush.msra.mxu0 %v4037
        %4106 = vmatpush.msra.mxu0 %v4035
        %4107 = vmatpush.msra.mxu0 %v4033
        %4108 = vmatmul.f32.gmra.mxu0 %v4030
        %v4109 = vpop.f32.mrf.mxu0
        %v4110 = vadd.f32 0.0, %v4109
        %4111 = vdwg.mxu0
        %4112 = vmatpush.msra.mxu0 0.0
        %4113 = vmatpush.msra.mxu0 0.0
        %4114 = vmatpush.msra.mxu0 0.0
        %4115 = vmatpush.msra.mxu0 0.0
        %4116 = vmatpush.msra.mxu0 %v4087
        %4117 = vmatpush.msra.mxu0 %v4085
        %4118 = vmatpush.msra.mxu0 %v4083
        %4119 = vmatpush.msra.mxu0 %v4081
        %4120 = vmatpush.msra.mxu0 %v4079
        %4121 = vmatpush.msra.mxu0 %v4077
        %4122 = vmatpush.msra.mxu0 %v4075
        %4123 = vmatpush.msra.mxu0 %v4073
        %4124 = vmatpush.msra.mxu0 %v4071
        %4125 = vmatpush.msra.mxu0 %v4069
        %4126 = vmatpush.msra.mxu0 %v4067
        %4127 = vmatpush.msra.mxu0 %v4065
        %4128 = vmatmul.f32.gmra.mxu0 %v4090
        %v4129 = vpop.f32.mrf.mxu0
        %v4130 = vadd.f32 %v4110, %v4129
        %4131 = vdwg.mxu0
        %4132 = vmatpush.msra.mxu0 %v4064
        %4133 = vmatpush.msra.mxu0 %v4062
        %4134 = vmatpush.msra.mxu0 %v4060
        %4135 = vmatpush.msra.mxu0 %v4058
        %4136 = vmatpush.msra.mxu0 %v4056
        %4137 = vmatpush.msra.mxu0 %v4054
        %4138 = vmatpush.msra.mxu0 %v4052
        %4139 = vmatpush.msra.mxu0 %v4050
        %4140 = vmatpush.msra.mxu0 %v4048
        %4141 = vmatpush.msra.mxu0 %v4046
        %4142 = vmatpush.msra.mxu0 %v4044
        %4143 = vmatpush.msra.mxu0 %v4042
        %4144 = vmatpush.msra.mxu0 %v4040
        %4145 = vmatpush.msra.mxu0 %v4038
        %4146 = vmatpush.msra.mxu0 %v4036
        %4147 = vmatpush.msra.mxu0 %v4034
        %4148 = vmatmul.f32.gmra.mxu0 %v4030
        %v4149 = vpop.f32.mrf.mxu0
        %v4150 = vadd.f32 0.0, %v4149
        %4151 = vdwg.mxu0
        %4152 = vmatpush.msra.mxu0 0.0
        %4153 = vmatpush.msra.mxu0 0.0
        %4154 = vmatpush.msra.mxu0 0.0
        %4155 = vmatpush.msra.mxu0 0.0
        %4156 = vmatpush.msra.mxu0 %v4088
        %4157 = vmatpush.msra.mxu0 %v4086
        %4158 = vmatpush.msra.mxu0 %v4084
        %4159 = vmatpush.msra.mxu0 %v4082
        %4160 = vmatpush.msra.mxu0 %v4080
        %4161 = vmatpush.msra.mxu0 %v4078
        %4162 = vmatpush.msra.mxu0 %v4076
        %4163 = vmatpush.msra.mxu0 %v4074
        %4164 = vmatpush.msra.mxu0 %v4072
        %4165 = vmatpush.msra.mxu0 %v4070
        %4166 = vmatpush.msra.mxu0 %v4068
        %4167 = vmatpush.msra.mxu0 %v4066
        %4168 = vmatmul.f32.gmra.mxu0 %v4090
        %v4169 = vpop.f32.mrf.mxu0
        %v4170 = vadd.f32 %v4150, %v4169
        %4171 = vdwg.mxu0
        %v4174 = vrot.slane %v4170, 7
        %vm4175 = vcmask 1040384
        %v4176 = vsel %vm4175, %v4130, %v4174
        %v4178 = vadd.f32 %v4032, %v4176
        %s4179 = scalar_lea.vmem %s19, 448
        %v4180 = vld [vmem:[%s4179] sm:$0xff]
        %v4181 = vld [vmem:[%s4179 + $0x8] sm:$0xff]
        %v4182 = vld [vmem:[%s4179 + $0x10] sm:$0xff]
        %v4183 = vld [vmem:[%s4179 + $0x18] sm:$0xff]
        %v4184 = vld [vmem:[%s4179 + $0x20] sm:$0xff]
        %v4185 = vld [vmem:[%s4179 + $0x28] sm:$0xff]
        %v4186 = vld [vmem:[%s4179 + $0x30] sm:$0xff]
        %v4187 = vld [vmem:[%s4179 + $0x38] sm:$0xff]
        %v4188 = vld [vmem:[%s4179 + $0x40] sm:$0xff]
        %v4189 = vld [vmem:[%s4179 + $0x48] sm:$0xff]
        %v4190 = vld [vmem:[%s4179 + $0x50] sm:$0xff]
        %v4191 = vld [vmem:[%s4179 + $0x58] sm:$0xff]
        %v4192 = vld [vmem:[%s4179 + $0x60] sm:$0xff]
        %v4193 = vld [vmem:[%s4179 + $0x68] sm:$0xff]
        %v4194 = vld [vmem:[%s4179 + $0x70] sm:$0xff]
        %v4195 = vld [vmem:[%s4179 + $0x78] sm:$0xff]
        %v4196 = vld [vmem:[%s4179 + $0x80] sm:$0xff]
        %v4197 = vld [vmem:[%s4179 + $0x88] sm:$0xff]
        %v4198 = vld [vmem:[%s4179 + $0x90] sm:$0xff]
        %v4199 = vld [vmem:[%s4179 + $0x98] sm:$0xff]
        %v4200 = vld [vmem:[%s4179 + $0xa0] sm:$0xff]
        %v4201 = vld [vmem:[%s4179 + $0xa8] sm:$0xff]
        %v4202 = vld [vmem:[%s4179 + $0xb0] sm:$0xff]
        %v4203 = vld [vmem:[%s4179 + $0xb8] sm:$0xff]
        %v4204 = vld [vmem:[%s4179 + $0xc0] sm:$0xff]
        %v4205 = vld [vmem:[%s4179 + $0xc8] sm:$0xff]
        %v4206 = vld [vmem:[%s4179 + $0xd0] sm:$0xff]
        %v4207 = vld [vmem:[%s4179 + $0xd8] sm:$0xff]
        %v4208 = vld [vmem:[%s4179 + $0xe0] sm:$0xff]
        %v4209 = vld [vmem:[%s4179 + $0xe8] sm:$0xff]
        %v4210 = vld [vmem:[%s4179 + $0xf0] sm:$0xff]
        %v4211 = vld [vmem:[%s4179 + $0xf8] sm:$0xff]
        %v4212 = vld [vmem:[%s4179 + $0x100] sm:$0xff]
        %v4213 = vld [vmem:[%s4179 + $0x108] sm:$0xff]
        %v4214 = vld [vmem:[%s4179 + $0x110] sm:$0xff]
        %v4215 = vld [vmem:[%s4179 + $0x118] sm:$0xff]
        %v4216 = vld [vmem:[%s4179 + $0x120] sm:$0xff]
        %v4217 = vld [vmem:[%s4179 + $0x128] sm:$0xff]
        %v4218 = vld [vmem:[%s4179 + $0x130] sm:$0xff]
        %v4219 = vld [vmem:[%s4179 + $0x138] sm:$0xff]
        %v4220 = vld [vmem:[%s4179 + $0x140] sm:$0xff]
        %v4221 = vld [vmem:[%s4179 + $0x148] sm:$0xff]
        %v4222 = vld [vmem:[%s4179 + $0x150] sm:$0xff]
        %v4223 = vld [vmem:[%s4179 + $0x158] sm:$0xff]
        %v4224 = vld [vmem:[%s4179 + $0x160] sm:$0xff]
        %v4225 = vld [vmem:[%s4179 + $0x168] sm:$0xff]
        %v4226 = vld [vmem:[%s4179 + $0x170] sm:$0xff]
        %v4227 = vld [vmem:[%s4179 + $0x178] sm:$0xff]
        %v4228 = vld [vmem:[%s4179 + $0x180] sm:$0xff]
        %v4229 = vld [vmem:[%s4179 + $0x188] sm:$0xff]
        %v4230 = vld [vmem:[%s4179 + $0x190] sm:$0xff]
        %v4231 = vld [vmem:[%s4179 + $0x198] sm:$0xff]
        %v4232 = vld [vmem:[%s4179 + $0x1a0] sm:$0xff]
        %v4233 = vld [vmem:[%s4179 + $0x1a8] sm:$0xff]
        %v4234 = vld [vmem:[%s4179 + $0x1b0] sm:$0xff]
        %v4235 = vld [vmem:[%s4179 + $0x1b8] sm:$0xff]
        %v4237 = vrot.slane %v4030, 1
        %v4238 = vrot.slane %v4031, 1
        %v4240 = vsel %vm2611, %v4238, 0
        %4242 = vmatpush.msra.mxu0 %v4210
        %4243 = vmatpush.msra.mxu0 %v4208
        %4244 = vmatpush.msra.mxu0 %v4206
        %4245 = vmatpush.msra.mxu0 %v4204
        %4246 = vmatpush.msra.mxu0 %v4202
        %4247 = vmatpush.msra.mxu0 %v4200
        %4248 = vmatpush.msra.mxu0 %v4198
        %4249 = vmatpush.msra.mxu0 %v4196
        %4250 = vmatpush.msra.mxu0 %v4194
        %4251 = vmatpush.msra.mxu0 %v4192
        %4252 = vmatpush.msra.mxu0 %v4190
        %4253 = vmatpush.msra.mxu0 %v4188
        %4254 = vmatpush.msra.mxu0 %v4186
        %4255 = vmatpush.msra.mxu0 %v4184
        %4256 = vmatpush.msra.mxu0 %v4182
        %4257 = vmatpush.msra.mxu0 %v4180
        %4258 = vmatmul.f32.gmra.mxu0 %v4237
        %v4259 = vpop.f32.mrf.mxu0
        %v4260 = vadd.f32 0.0, %v4259
        %4261 = vdwg.mxu0
        %4262 = vmatpush.msra.mxu0 0.0
        %4263 = vmatpush.msra.mxu0 0.0
        %4264 = vmatpush.msra.mxu0 0.0
        %4265 = vmatpush.msra.mxu0 0.0
        %4266 = vmatpush.msra.mxu0 %v4234
        %4267 = vmatpush.msra.mxu0 %v4232
        %4268 = vmatpush.msra.mxu0 %v4230
        %4269 = vmatpush.msra.mxu0 %v4228
        %4270 = vmatpush.msra.mxu0 %v4226
        %4271 = vmatpush.msra.mxu0 %v4224
        %4272 = vmatpush.msra.mxu0 %v4222
        %4273 = vmatpush.msra.mxu0 %v4220
        %4274 = vmatpush.msra.mxu0 %v4218
        %4275 = vmatpush.msra.mxu0 %v4216
        %4276 = vmatpush.msra.mxu0 %v4214
        %4277 = vmatpush.msra.mxu0 %v4212
        %4278 = vmatmul.f32.gmra.mxu0 %v4240
        %v4279 = vpop.f32.mrf.mxu0
        %v4280 = vadd.f32 %v4260, %v4279
        %4281 = vdwg.mxu0
        %4282 = vmatpush.msra.mxu0 %v4211
        %4283 = vmatpush.msra.mxu0 %v4209
        %4284 = vmatpush.msra.mxu0 %v4207
        %4285 = vmatpush.msra.mxu0 %v4205
        %4286 = vmatpush.msra.mxu0 %v4203
        %4287 = vmatpush.msra.mxu0 %v4201
        %4288 = vmatpush.msra.mxu0 %v4199
        %4289 = vmatpush.msra.mxu0 %v4197
        %4290 = vmatpush.msra.mxu0 %v4195
        %4291 = vmatpush.msra.mxu0 %v4193
        %4292 = vmatpush.msra.mxu0 %v4191
        %4293 = vmatpush.msra.mxu0 %v4189
        %4294 = vmatpush.msra.mxu0 %v4187
        %4295 = vmatpush.msra.mxu0 %v4185
        %4296 = vmatpush.msra.mxu0 %v4183
        %4297 = vmatpush.msra.mxu0 %v4181
        %4298 = vmatmul.f32.gmra.mxu0 %v4237
        %v4299 = vpop.f32.mrf.mxu0
        %v4300 = vadd.f32 0.0, %v4299
        %4301 = vdwg.mxu0
        %4302 = vmatpush.msra.mxu0 0.0
        %4303 = vmatpush.msra.mxu0 0.0
        %4304 = vmatpush.msra.mxu0 0.0
        %4305 = vmatpush.msra.mxu0 0.0
        %4306 = vmatpush.msra.mxu0 %v4235
        %4307 = vmatpush.msra.mxu0 %v4233
        %4308 = vmatpush.msra.mxu0 %v4231
        %4309 = vmatpush.msra.mxu0 %v4229
        %4310 = vmatpush.msra.mxu0 %v4227
        %4311 = vmatpush.msra.mxu0 %v4225
        %4312 = vmatpush.msra.mxu0 %v4223
        %4313 = vmatpush.msra.mxu0 %v4221
        %4314 = vmatpush.msra.mxu0 %v4219
        %4315 = vmatpush.msra.mxu0 %v4217
        %4316 = vmatpush.msra.mxu0 %v4215
        %4317 = vmatpush.msra.mxu0 %v4213
        %4318 = vmatmul.f32.gmra.mxu0 %v4240
        %v4319 = vpop.f32.mrf.mxu0
        %v4320 = vadd.f32 %v4300, %v4319
        %4321 = vdwg.mxu0
        %v4324 = vrot.slane %v4320, 7
        %v4325 = vsel %vm4175, %v4280, %v4324
        %v4327 = vadd.f32 %v4178, %v4325
        %s4328 = scalar_lea.vmem %s19, 896
        %v4329 = vld [vmem:[%s4328] sm:$0xff]
        %v4330 = vld [vmem:[%s4328 + $0x8] sm:$0xff]
        %v4331 = vld [vmem:[%s4328 + $0x10] sm:$0xff]
        %v4332 = vld [vmem:[%s4328 + $0x18] sm:$0xff]
        %v4333 = vld [vmem:[%s4328 + $0x20] sm:$0xff]
        %v4334 = vld [vmem:[%s4328 + $0x28] sm:$0xff]
        %v4335 = vld [vmem:[%s4328 + $0x30] sm:$0xff]
        %v4336 = vld [vmem:[%s4328 + $0x38] sm:$0xff]
        %v4337 = vld [vmem:[%s4328 + $0x40] sm:$0xff]
        %v4338 = vld [vmem:[%s4328 + $0x48] sm:$0xff]
        %v4339 = vld [vmem:[%s4328 + $0x50] sm:$0xff]
        %v4340 = vld [vmem:[%s4328 + $0x58] sm:$0xff]
        %v4341 = vld [vmem:[%s4328 + $0x60] sm:$0xff]
        %v4342 = vld [vmem:[%s4328 + $0x68] sm:$0xff]
        %v4343 = vld [vmem:[%s4328 + $0x70] sm:$0xff]
        %v4344 = vld [vmem:[%s4328 + $0x78] sm:$0xff]
        %v4345 = vld [vmem:[%s4328 + $0x80] sm:$0xff]
        %v4346 = vld [vmem:[%s4328 + $0x88] sm:$0xff]
        %v4347 = vld [vmem:[%s4328 + $0x90] sm:$0xff]
        %v4348 = vld [vmem:[%s4328 + $0x98] sm:$0xff]
        %v4349 = vld [vmem:[%s4328 + $0xa0] sm:$0xff]
        %v4350 = vld [vmem:[%s4328 + $0xa8] sm:$0xff]
        %v4351 = vld [vmem:[%s4328 + $0xb0] sm:$0xff]
        %v4352 = vld [vmem:[%s4328 + $0xb8] sm:$0xff]
        %v4353 = vld [vmem:[%s4328 + $0xc0] sm:$0xff]
        %v4354 = vld [vmem:[%s4328 + $0xc8] sm:$0xff]
        %v4355 = vld [vmem:[%s4328 + $0xd0] sm:$0xff]
        %v4356 = vld [vmem:[%s4328 + $0xd8] sm:$0xff]
        %v4357 = vld [vmem:[%s4328 + $0xe0] sm:$0xff]
        %v4358 = vld [vmem:[%s4328 + $0xe8] sm:$0xff]
        %v4359 = vld [vmem:[%s4328 + $0xf0] sm:$0xff]
        %v4360 = vld [vmem:[%s4328 + $0xf8] sm:$0xff]
        %v4361 = vld [vmem:[%s4328 + $0x100] sm:$0xff]
        %v4362 = vld [vmem:[%s4328 + $0x108] sm:$0xff]
        %v4363 = vld [vmem:[%s4328 + $0x110] sm:$0xff]
        %v4364 = vld [vmem:[%s4328 + $0x118] sm:$0xff]
        %v4365 = vld [vmem:[%s4328 + $0x120] sm:$0xff]
        %v4366 = vld [vmem:[%s4328 + $0x128] sm:$0xff]
        %v4367 = vld [vmem:[%s4328 + $0x130] sm:$0xff]
        %v4368 = vld [vmem:[%s4328 + $0x138] sm:$0xff]
        %v4369 = vld [vmem:[%s4328 + $0x140] sm:$0xff]
        %v4370 = vld [vmem:[%s4328 + $0x148] sm:$0xff]
        %v4371 = vld [vmem:[%s4328 + $0x150] sm:$0xff]
        %v4372 = vld [vmem:[%s4328 + $0x158] sm:$0xff]
        %v4373 = vld [vmem:[%s4328 + $0x160] sm:$0xff]
        %v4374 = vld [vmem:[%s4328 + $0x168] sm:$0xff]
        %v4375 = vld [vmem:[%s4328 + $0x170] sm:$0xff]
        %v4376 = vld [vmem:[%s4328 + $0x178] sm:$0xff]
        %v4377 = vld [vmem:[%s4328 + $0x180] sm:$0xff]
        %v4378 = vld [vmem:[%s4328 + $0x188] sm:$0xff]
        %v4379 = vld [vmem:[%s4328 + $0x190] sm:$0xff]
        %v4380 = vld [vmem:[%s4328 + $0x198] sm:$0xff]
        %v4381 = vld [vmem:[%s4328 + $0x1a0] sm:$0xff]
        %v4382 = vld [vmem:[%s4328 + $0x1a8] sm:$0xff]
        %v4383 = vld [vmem:[%s4328 + $0x1b0] sm:$0xff]
        %v4384 = vld [vmem:[%s4328 + $0x1b8] sm:$0xff]
        %v4385 = vrot.slane %v4030, 2
        %v4386 = vrot.slane %v4031, 2
        %v4388 = vsel %vm2611, %v4386, 0
        %4390 = vmatpush.msra.mxu0 %v4359
        %4391 = vmatpush.msra.mxu0 %v4357
        %4392 = vmatpush.msra.mxu0 %v4355
        %4393 = vmatpush.msra.mxu0 %v4353
        %4394 = vmatpush.msra.mxu0 %v4351
        %4395 = vmatpush.msra.mxu0 %v4349
        %4396 = vmatpush.msra.mxu0 %v4347
        %4397 = vmatpush.msra.mxu0 %v4345
        %4398 = vmatpush.msra.mxu0 %v4343
        %4399 = vmatpush.msra.mxu0 %v4341
        %4400 = vmatpush.msra.mxu0 %v4339
        %4401 = vmatpush.msra.mxu0 %v4337
        %4402 = vmatpush.msra.mxu0 %v4335
        %4403 = vmatpush.msra.mxu0 %v4333
        %4404 = vmatpush.msra.mxu0 %v4331
        %4405 = vmatpush.msra.mxu0 %v4329
        %4406 = vmatmul.f32.gmra.mxu0 %v4385
        %v4407 = vpop.f32.mrf.mxu0
        %v4408 = vadd.f32 0.0, %v4407
        %4409 = vdwg.mxu0
        %4410 = vmatpush.msra.mxu0 0.0
        %4411 = vmatpush.msra.mxu0 0.0
        %4412 = vmatpush.msra.mxu0 0.0
        %4413 = vmatpush.msra.mxu0 0.0
        %4414 = vmatpush.msra.mxu0 %v4383
        %4415 = vmatpush.msra.mxu0 %v4381
        %4416 = vmatpush.msra.mxu0 %v4379
        %4417 = vmatpush.msra.mxu0 %v4377
        %4418 = vmatpush.msra.mxu0 %v4375
        %4419 = vmatpush.msra.mxu0 %v4373
        %4420 = vmatpush.msra.mxu0 %v4371
        %4421 = vmatpush.msra.mxu0 %v4369
        %4422 = vmatpush.msra.mxu0 %v4367
        %4423 = vmatpush.msra.mxu0 %v4365
        %4424 = vmatpush.msra.mxu0 %v4363
        %4425 = vmatpush.msra.mxu0 %v4361
        %4426 = vmatmul.f32.gmra.mxu0 %v4388
        %v4427 = vpop.f32.mrf.mxu0
        %v4428 = vadd.f32 %v4408, %v4427
        %4429 = vdwg.mxu0
        %4430 = vmatpush.msra.mxu0 %v4360
        %4431 = vmatpush.msra.mxu0 %v4358
        %4432 = vmatpush.msra.mxu0 %v4356
        %4433 = vmatpush.msra.mxu0 %v4354
        %4434 = vmatpush.msra.mxu0 %v4352
        %4435 = vmatpush.msra.mxu0 %v4350
        %4436 = vmatpush.msra.mxu0 %v4348
        %4437 = vmatpush.msra.mxu0 %v4346
        %4438 = vmatpush.msra.mxu0 %v4344
        %4439 = vmatpush.msra.mxu0 %v4342
        %4440 = vmatpush.msra.mxu0 %v4340
        %4441 = vmatpush.msra.mxu0 %v4338
        %4442 = vmatpush.msra.mxu0 %v4336
        %4443 = vmatpush.msra.mxu0 %v4334
        %4444 = vmatpush.msra.mxu0 %v4332
        %4445 = vmatpush.msra.mxu0 %v4330
        %4446 = vmatmul.f32.gmra.mxu0 %v4385
        %v4447 = vpop.f32.mrf.mxu0
        %v4448 = vadd.f32 0.0, %v4447
        %4449 = vdwg.mxu0
        %4450 = vmatpush.msra.mxu0 0.0
        %4451 = vmatpush.msra.mxu0 0.0
        %4452 = vmatpush.msra.mxu0 0.0
        %4453 = vmatpush.msra.mxu0 0.0
        %4454 = vmatpush.msra.mxu0 %v4384
        %4455 = vmatpush.msra.mxu0 %v4382
        %4456 = vmatpush.msra.mxu0 %v4380
        %4457 = vmatpush.msra.mxu0 %v4378
        %4458 = vmatpush.msra.mxu0 %v4376
        %4459 = vmatpush.msra.mxu0 %v4374
        %4460 = vmatpush.msra.mxu0 %v4372
        %4461 = vmatpush.msra.mxu0 %v4370
        %4462 = vmatpush.msra.mxu0 %v4368
        %4463 = vmatpush.msra.mxu0 %v4366
        %4464 = vmatpush.msra.mxu0 %v4364
        %4465 = vmatpush.msra.mxu0 %v4362
        %4466 = vmatmul.f32.gmra.mxu0 %v4388
        %v4467 = vpop.f32.mrf.mxu0
        %v4468 = vadd.f32 %v4448, %v4467
        %4469 = vdwg.mxu0
        %v4472 = vrot.slane %v4468, 7
        %v4473 = vsel %vm4175, %v4428, %v4472
        %v4475 = vadd.f32 %v4327, %v4473
        %s4476 = scalar_lea.vmem %s19, 1344
        %v4477 = vld [vmem:[%s4476] sm:$0xff]
        %v4478 = vld [vmem:[%s4476 + $0x8] sm:$0xff]
        %v4479 = vld [vmem:[%s4476 + $0x10] sm:$0xff]
        %v4480 = vld [vmem:[%s4476 + $0x18] sm:$0xff]
        %v4481 = vld [vmem:[%s4476 + $0x20] sm:$0xff]
        %v4482 = vld [vmem:[%s4476 + $0x28] sm:$0xff]
        %v4483 = vld [vmem:[%s4476 + $0x30] sm:$0xff]
        %v4484 = vld [vmem:[%s4476 + $0x38] sm:$0xff]
        %v4485 = vld [vmem:[%s4476 + $0x40] sm:$0xff]
        %v4486 = vld [vmem:[%s4476 + $0x48] sm:$0xff]
        %v4487 = vld [vmem:[%s4476 + $0x50] sm:$0xff]
        %v4488 = vld [vmem:[%s4476 + $0x58] sm:$0xff]
        %v4489 = vld [vmem:[%s4476 + $0x60] sm:$0xff]
        %v4490 = vld [vmem:[%s4476 + $0x68] sm:$0xff]
        %v4491 = vld [vmem:[%s4476 + $0x70] sm:$0xff]
        %v4492 = vld [vmem:[%s4476 + $0x78] sm:$0xff]
        %v4493 = vld [vmem:[%s4476 + $0x80] sm:$0xff]
        %v4494 = vld [vmem:[%s4476 + $0x88] sm:$0xff]
        %v4495 = vld [vmem:[%s4476 + $0x90] sm:$0xff]
        %v4496 = vld [vmem:[%s4476 + $0x98] sm:$0xff]
        %v4497 = vld [vmem:[%s4476 + $0xa0] sm:$0xff]
        %v4498 = vld [vmem:[%s4476 + $0xa8] sm:$0xff]
        %v4499 = vld [vmem:[%s4476 + $0xb0] sm:$0xff]
        %v4500 = vld [vmem:[%s4476 + $0xb8] sm:$0xff]
        %v4501 = vld [vmem:[%s4476 + $0xc0] sm:$0xff]
        %v4502 = vld [vmem:[%s4476 + $0xc8] sm:$0xff]
        %v4503 = vld [vmem:[%s4476 + $0xd0] sm:$0xff]
        %v4504 = vld [vmem:[%s4476 + $0xd8] sm:$0xff]
        %v4505 = vld [vmem:[%s4476 + $0xe0] sm:$0xff]
        %v4506 = vld [vmem:[%s4476 + $0xe8] sm:$0xff]
        %v4507 = vld [vmem:[%s4476 + $0xf0] sm:$0xff]
        %v4508 = vld [vmem:[%s4476 + $0xf8] sm:$0xff]
        %v4509 = vld [vmem:[%s4476 + $0x100] sm:$0xff]
        %v4510 = vld [vmem:[%s4476 + $0x108] sm:$0xff]
        %v4511 = vld [vmem:[%s4476 + $0x110] sm:$0xff]
        %v4512 = vld [vmem:[%s4476 + $0x118] sm:$0xff]
        %v4513 = vld [vmem:[%s4476 + $0x120] sm:$0xff]
        %v4514 = vld [vmem:[%s4476 + $0x128] sm:$0xff]
        %v4515 = vld [vmem:[%s4476 + $0x130] sm:$0xff]
        %v4516 = vld [vmem:[%s4476 + $0x138] sm:$0xff]
        %v4517 = vld [vmem:[%s4476 + $0x140] sm:$0xff]
        %v4518 = vld [vmem:[%s4476 + $0x148] sm:$0xff]
        %v4519 = vld [vmem:[%s4476 + $0x150] sm:$0xff]
        %v4520 = vld [vmem:[%s4476 + $0x158] sm:$0xff]
        %v4521 = vld [vmem:[%s4476 + $0x160] sm:$0xff]
        %v4522 = vld [vmem:[%s4476 + $0x168] sm:$0xff]
        %v4523 = vld [vmem:[%s4476 + $0x170] sm:$0xff]
        %v4524 = vld [vmem:[%s4476 + $0x178] sm:$0xff]
        %v4525 = vld [vmem:[%s4476 + $0x180] sm:$0xff]
        %v4526 = vld [vmem:[%s4476 + $0x188] sm:$0xff]
        %v4527 = vld [vmem:[%s4476 + $0x190] sm:$0xff]
        %v4528 = vld [vmem:[%s4476 + $0x198] sm:$0xff]
        %v4529 = vld [vmem:[%s4476 + $0x1a0] sm:$0xff]
        %v4530 = vld [vmem:[%s4476 + $0x1a8] sm:$0xff]
        %v4531 = vld [vmem:[%s4476 + $0x1b0] sm:$0xff]
        %v4532 = vld [vmem:[%s4476 + $0x1b8] sm:$0xff]
        %v4533 = vrot.slane %v4030, 3
        %v4534 = vrot.slane %v4031, 3
        %v4536 = vsel %vm2611, %v4534, 0
        %4538 = vmatpush.msra.mxu0 %v4507
        %4539 = vmatpush.msra.mxu0 %v4505
        %4540 = vmatpush.msra.mxu0 %v4503
        %4541 = vmatpush.msra.mxu0 %v4501
        %4542 = vmatpush.msra.mxu0 %v4499
        %4543 = vmatpush.msra.mxu0 %v4497
        %4544 = vmatpush.msra.mxu0 %v4495
        %4545 = vmatpush.msra.mxu0 %v4493
        %4546 = vmatpush.msra.mxu0 %v4491
        %4547 = vmatpush.msra.mxu0 %v4489
        %4548 = vmatpush.msra.mxu0 %v4487
        %4549 = vmatpush.msra.mxu0 %v4485
        %4550 = vmatpush.msra.mxu0 %v4483
        %4551 = vmatpush.msra.mxu0 %v4481
        %4552 = vmatpush.msra.mxu0 %v4479
        %4553 = vmatpush.msra.mxu0 %v4477
        %4554 = vmatmul.f32.gmra.mxu0 %v4533
        %v4555 = vpop.f32.mrf.mxu0
        %v4556 = vadd.f32 0.0, %v4555
        %4557 = vdwg.mxu0
        %4558 = vmatpush.msra.mxu0 0.0
        %4559 = vmatpush.msra.mxu0 0.0
        %4560 = vmatpush.msra.mxu0 0.0
        %4561 = vmatpush.msra.mxu0 0.0
        %4562 = vmatpush.msra.mxu0 %v4531
        %4563 = vmatpush.msra.mxu0 %v4529
        %4564 = vmatpush.msra.mxu0 %v4527
        %4565 = vmatpush.msra.mxu0 %v4525
        %4566 = vmatpush.msra.mxu0 %v4523
        %4567 = vmatpush.msra.mxu0 %v4521
        %4568 = vmatpush.msra.mxu0 %v4519
        %4569 = vmatpush.msra.mxu0 %v4517
        %4570 = vmatpush.msra.mxu0 %v4515
        %4571 = vmatpush.msra.mxu0 %v4513
        %4572 = vmatpush.msra.mxu0 %v4511
        %4573 = vmatpush.msra.mxu0 %v4509
        %4574 = vmatmul.f32.gmra.mxu0 %v4536
        %v4575 = vpop.f32.mrf.mxu0
        %v4576 = vadd.f32 %v4556, %v4575
        %4577 = vdwg.mxu0
        %4578 = vmatpush.msra.mxu0 %v4508
        %4579 = vmatpush.msra.mxu0 %v4506
        %4580 = vmatpush.msra.mxu0 %v4504
        %4581 = vmatpush.msra.mxu0 %v4502
        %4582 = vmatpush.msra.mxu0 %v4500
        %4583 = vmatpush.msra.mxu0 %v4498
        %4584 = vmatpush.msra.mxu0 %v4496
        %4585 = vmatpush.msra.mxu0 %v4494
        %4586 = vmatpush.msra.mxu0 %v4492
        %4587 = vmatpush.msra.mxu0 %v4490
        %4588 = vmatpush.msra.mxu0 %v4488
        %4589 = vmatpush.msra.mxu0 %v4486
        %4590 = vmatpush.msra.mxu0 %v4484
        %4591 = vmatpush.msra.mxu0 %v4482
        %4592 = vmatpush.msra.mxu0 %v4480
        %4593 = vmatpush.msra.mxu0 %v4478
        %4594 = vmatmul.f32.gmra.mxu0 %v4533
        %v4595 = vpop.f32.mrf.mxu0
        %v4596 = vadd.f32 0.0, %v4595
        %4597 = vdwg.mxu0
        %4598 = vmatpush.msra.mxu0 0.0
        %4599 = vmatpush.msra.mxu0 0.0
        %4600 = vmatpush.msra.mxu0 0.0
        %4601 = vmatpush.msra.mxu0 0.0
        %4602 = vmatpush.msra.mxu0 %v4532
        %4603 = vmatpush.msra.mxu0 %v4530
        %4604 = vmatpush.msra.mxu0 %v4528
        %4605 = vmatpush.msra.mxu0 %v4526
        %4606 = vmatpush.msra.mxu0 %v4524
        %4607 = vmatpush.msra.mxu0 %v4522
        %4608 = vmatpush.msra.mxu0 %v4520
        %4609 = vmatpush.msra.mxu0 %v4518
        %4610 = vmatpush.msra.mxu0 %v4516
        %4611 = vmatpush.msra.mxu0 %v4514
        %4612 = vmatpush.msra.mxu0 %v4512
        %4613 = vmatpush.msra.mxu0 %v4510
        %4614 = vmatmul.f32.gmra.mxu0 %v4536
        %v4615 = vpop.f32.mrf.mxu0
        %v4616 = vadd.f32 %v4596, %v4615
        %4617 = vdwg.mxu0
        %v4620 = vrot.slane %v4616, 7
        %v4621 = vsel %vm4175, %v4576, %v4620
        %v4623 = vadd.f32 %v4475, %v4621
        %s4624 = scalar_lea.vmem %s19, 1792
        %v4625 = vld [vmem:[%s4624] sm:$0xff]
        %v4626 = vld [vmem:[%s4624 + $0x8] sm:$0xff]
        %v4627 = vld [vmem:[%s4624 + $0x10] sm:$0xff]
        %v4628 = vld [vmem:[%s4624 + $0x18] sm:$0xff]
        %v4629 = vld [vmem:[%s4624 + $0x20] sm:$0xff]
        %v4630 = vld [vmem:[%s4624 + $0x28] sm:$0xff]
        %v4631 = vld [vmem:[%s4624 + $0x30] sm:$0xff]
        %v4632 = vld [vmem:[%s4624 + $0x38] sm:$0xff]
        %v4633 = vld [vmem:[%s4624 + $0x40] sm:$0xff]
        %v4634 = vld [vmem:[%s4624 + $0x48] sm:$0xff]
        %v4635 = vld [vmem:[%s4624 + $0x50] sm:$0xff]
        %v4636 = vld [vmem:[%s4624 + $0x58] sm:$0xff]
        %v4637 = vld [vmem:[%s4624 + $0x60] sm:$0xff]
        %v4638 = vld [vmem:[%s4624 + $0x68] sm:$0xff]
        %v4639 = vld [vmem:[%s4624 + $0x70] sm:$0xff]
        %v4640 = vld [vmem:[%s4624 + $0x78] sm:$0xff]
        %v4641 = vld [vmem:[%s4624 + $0x80] sm:$0xff]
        %v4642 = vld [vmem:[%s4624 + $0x88] sm:$0xff]
        %v4643 = vld [vmem:[%s4624 + $0x90] sm:$0xff]
        %v4644 = vld [vmem:[%s4624 + $0x98] sm:$0xff]
        %v4645 = vld [vmem:[%s4624 + $0xa0] sm:$0xff]
        %v4646 = vld [vmem:[%s4624 + $0xa8] sm:$0xff]
        %v4647 = vld [vmem:[%s4624 + $0xb0] sm:$0xff]
        %v4648 = vld [vmem:[%s4624 + $0xb8] sm:$0xff]
        %v4649 = vld [vmem:[%s4624 + $0xc0] sm:$0xff]
        %v4650 = vld [vmem:[%s4624 + $0xc8] sm:$0xff]
        %v4651 = vld [vmem:[%s4624 + $0xd0] sm:$0xff]
        %v4652 = vld [vmem:[%s4624 + $0xd8] sm:$0xff]
        %v4653 = vld [vmem:[%s4624 + $0xe0] sm:$0xff]
        %v4654 = vld [vmem:[%s4624 + $0xe8] sm:$0xff]
        %v4655 = vld [vmem:[%s4624 + $0xf0] sm:$0xff]
        %v4656 = vld [vmem:[%s4624 + $0xf8] sm:$0xff]
        %v4657 = vld [vmem:[%s4624 + $0x100] sm:$0xff]
        %v4658 = vld [vmem:[%s4624 + $0x108] sm:$0xff]
        %v4659 = vld [vmem:[%s4624 + $0x110] sm:$0xff]
        %v4660 = vld [vmem:[%s4624 + $0x118] sm:$0xff]
        %v4661 = vld [vmem:[%s4624 + $0x120] sm:$0xff]
        %v4662 = vld [vmem:[%s4624 + $0x128] sm:$0xff]
        %v4663 = vld [vmem:[%s4624 + $0x130] sm:$0xff]
        %v4664 = vld [vmem:[%s4624 + $0x138] sm:$0xff]
        %v4665 = vld [vmem:[%s4624 + $0x140] sm:$0xff]
        %v4666 = vld [vmem:[%s4624 + $0x148] sm:$0xff]
        %v4667 = vld [vmem:[%s4624 + $0x150] sm:$0xff]
        %v4668 = vld [vmem:[%s4624 + $0x158] sm:$0xff]
        %v4669 = vld [vmem:[%s4624 + $0x160] sm:$0xff]
        %v4670 = vld [vmem:[%s4624 + $0x168] sm:$0xff]
        %v4671 = vld [vmem:[%s4624 + $0x170] sm:$0xff]
        %v4672 = vld [vmem:[%s4624 + $0x178] sm:$0xff]
        %v4673 = vld [vmem:[%s4624 + $0x180] sm:$0xff]
        %v4674 = vld [vmem:[%s4624 + $0x188] sm:$0xff]
        %v4675 = vld [vmem:[%s4624 + $0x190] sm:$0xff]
        %v4676 = vld [vmem:[%s4624 + $0x198] sm:$0xff]
        %v4677 = vld [vmem:[%s4624 + $0x1a0] sm:$0xff]
        %v4678 = vld [vmem:[%s4624 + $0x1a8] sm:$0xff]
        %v4679 = vld [vmem:[%s4624 + $0x1b0] sm:$0xff]
        %v4680 = vld [vmem:[%s4624 + $0x1b8] sm:$0xff]
        %v4681 = vrot.slane %v4030, 4
        %v4682 = vrot.slane %v4031, 4
        %v4684 = vsel %vm2611, %v4682, 0
        %4686 = vmatpush.msra.mxu0 %v4655
        %4687 = vmatpush.msra.mxu0 %v4653
        %4688 = vmatpush.msra.mxu0 %v4651
        %4689 = vmatpush.msra.mxu0 %v4649
        %4690 = vmatpush.msra.mxu0 %v4647
        %4691 = vmatpush.msra.mxu0 %v4645
        %4692 = vmatpush.msra.mxu0 %v4643
        %4693 = vmatpush.msra.mxu0 %v4641
        %4694 = vmatpush.msra.mxu0 %v4639
        %4695 = vmatpush.msra.mxu0 %v4637
        %4696 = vmatpush.msra.mxu0 %v4635
        %4697 = vmatpush.msra.mxu0 %v4633
        %4698 = vmatpush.msra.mxu0 %v4631
        %4699 = vmatpush.msra.mxu0 %v4629
        %4700 = vmatpush.msra.mxu0 %v4627
        %4701 = vmatpush.msra.mxu0 %v4625
        %4702 = vmatmul.f32.gmra.mxu0 %v4681
        %v4703 = vpop.f32.mrf.mxu0
        %v4704 = vadd.f32 0.0, %v4703
        %4705 = vdwg.mxu0
        %4706 = vmatpush.msra.mxu0 0.0
        %4707 = vmatpush.msra.mxu0 0.0
        %4708 = vmatpush.msra.mxu0 0.0
        %4709 = vmatpush.msra.mxu0 0.0
        %4710 = vmatpush.msra.mxu0 %v4679
        %4711 = vmatpush.msra.mxu0 %v4677
        %4712 = vmatpush.msra.mxu0 %v4675
        %4713 = vmatpush.msra.mxu0 %v4673
        %4714 = vmatpush.msra.mxu0 %v4671
        %4715 = vmatpush.msra.mxu0 %v4669
        %4716 = vmatpush.msra.mxu0 %v4667
        %4717 = vmatpush.msra.mxu0 %v4665
        %4718 = vmatpush.msra.mxu0 %v4663
        %4719 = vmatpush.msra.mxu0 %v4661
        %4720 = vmatpush.msra.mxu0 %v4659
        %4721 = vmatpush.msra.mxu0 %v4657
        %4722 = vmatmul.f32.gmra.mxu0 %v4684
        %v4723 = vpop.f32.mrf.mxu0
        %v4724 = vadd.f32 %v4704, %v4723
        %4725 = vdwg.mxu0
        %4726 = vmatpush.msra.mxu0 %v4656
        %4727 = vmatpush.msra.mxu0 %v4654
        %4728 = vmatpush.msra.mxu0 %v4652
        %4729 = vmatpush.msra.mxu0 %v4650
        %4730 = vmatpush.msra.mxu0 %v4648
        %4731 = vmatpush.msra.mxu0 %v4646
        %4732 = vmatpush.msra.mxu0 %v4644
        %4733 = vmatpush.msra.mxu0 %v4642
        %4734 = vmatpush.msra.mxu0 %v4640
        %4735 = vmatpush.msra.mxu0 %v4638
        %4736 = vmatpush.msra.mxu0 %v4636
        %4737 = vmatpush.msra.mxu0 %v4634
        %4738 = vmatpush.msra.mxu0 %v4632
        %4739 = vmatpush.msra.mxu0 %v4630
        %4740 = vmatpush.msra.mxu0 %v4628
        %4741 = vmatpush.msra.mxu0 %v4626
        %4742 = vmatmul.f32.gmra.mxu0 %v4681
        %v4743 = vpop.f32.mrf.mxu0
        %v4744 = vadd.f32 0.0, %v4743
        %4745 = vdwg.mxu0
        %4746 = vmatpush.msra.mxu0 0.0
        %4747 = vmatpush.msra.mxu0 0.0
        %4748 = vmatpush.msra.mxu0 0.0
        %4749 = vmatpush.msra.mxu0 0.0
        %4750 = vmatpush.msra.mxu0 %v4680
        %4751 = vmatpush.msra.mxu0 %v4678
        %4752 = vmatpush.msra.mxu0 %v4676
        %4753 = vmatpush.msra.mxu0 %v4674
        %4754 = vmatpush.msra.mxu0 %v4672
        %4755 = vmatpush.msra.mxu0 %v4670
        %4756 = vmatpush.msra.mxu0 %v4668
        %4757 = vmatpush.msra.mxu0 %v4666
        %4758 = vmatpush.msra.mxu0 %v4664
        %4759 = vmatpush.msra.mxu0 %v4662
        %4760 = vmatpush.msra.mxu0 %v4660
        %4761 = vmatpush.msra.mxu0 %v4658
        %4762 = vmatmul.f32.gmra.mxu0 %v4684
        %v4763 = vpop.f32.mrf.mxu0
        %v4764 = vadd.f32 %v4744, %v4763
        %4765 = vdwg.mxu0
        %v4768 = vrot.slane %v4764, 7
        %v4769 = vsel %vm4175, %v4724, %v4768
        %v4771 = vadd.f32 %v4623, %v4769
        %s4772 = scalar_lea.vmem %s19, 2240
        %v4773 = vld [vmem:[%s4772] sm:$0xff]
        %v4774 = vld [vmem:[%s4772 + $0x8] sm:$0xff]
        %v4775 = vld [vmem:[%s4772 + $0x10] sm:$0xff]
        %v4776 = vld [vmem:[%s4772 + $0x18] sm:$0xff]
        %v4777 = vld [vmem:[%s4772 + $0x20] sm:$0xff]
        %v4778 = vld [vmem:[%s4772 + $0x28] sm:$0xff]
        %v4779 = vld [vmem:[%s4772 + $0x30] sm:$0xff]
        %v4780 = vld [vmem:[%s4772 + $0x38] sm:$0xff]
        %v4781 = vld [vmem:[%s4772 + $0x40] sm:$0xff]
        %v4782 = vld [vmem:[%s4772 + $0x48] sm:$0xff]
        %v4783 = vld [vmem:[%s4772 + $0x50] sm:$0xff]
        %v4784 = vld [vmem:[%s4772 + $0x58] sm:$0xff]
        %v4785 = vld [vmem:[%s4772 + $0x60] sm:$0xff]
        %v4786 = vld [vmem:[%s4772 + $0x68] sm:$0xff]
        %v4787 = vld [vmem:[%s4772 + $0x70] sm:$0xff]
        %v4788 = vld [vmem:[%s4772 + $0x78] sm:$0xff]
        %v4789 = vld [vmem:[%s4772 + $0x80] sm:$0xff]
        %v4790 = vld [vmem:[%s4772 + $0x88] sm:$0xff]
        %v4791 = vld [vmem:[%s4772 + $0x90] sm:$0xff]
        %v4792 = vld [vmem:[%s4772 + $0x98] sm:$0xff]
        %v4793 = vld [vmem:[%s4772 + $0xa0] sm:$0xff]
        %v4794 = vld [vmem:[%s4772 + $0xa8] sm:$0xff]
        %v4795 = vld [vmem:[%s4772 + $0xb0] sm:$0xff]
        %v4796 = vld [vmem:[%s4772 + $0xb8] sm:$0xff]
        %v4797 = vld [vmem:[%s4772 + $0xc0] sm:$0xff]
        %v4798 = vld [vmem:[%s4772 + $0xc8] sm:$0xff]
        %v4799 = vld [vmem:[%s4772 + $0xd0] sm:$0xff]
        %v4800 = vld [vmem:[%s4772 + $0xd8] sm:$0xff]
        %v4801 = vld [vmem:[%s4772 + $0xe0] sm:$0xff]
        %v4802 = vld [vmem:[%s4772 + $0xe8] sm:$0xff]
        %v4803 = vld [vmem:[%s4772 + $0xf0] sm:$0xff]
        %v4804 = vld [vmem:[%s4772 + $0xf8] sm:$0xff]
        %v4805 = vld [vmem:[%s4772 + $0x100] sm:$0xff]
        %v4806 = vld [vmem:[%s4772 + $0x108] sm:$0xff]
        %v4807 = vld [vmem:[%s4772 + $0x110] sm:$0xff]
        %v4808 = vld [vmem:[%s4772 + $0x118] sm:$0xff]
        %v4809 = vld [vmem:[%s4772 + $0x120] sm:$0xff]
        %v4810 = vld [vmem:[%s4772 + $0x128] sm:$0xff]
        %v4811 = vld [vmem:[%s4772 + $0x130] sm:$0xff]
        %v4812 = vld [vmem:[%s4772 + $0x138] sm:$0xff]
        %v4813 = vld [vmem:[%s4772 + $0x140] sm:$0xff]
        %v4814 = vld [vmem:[%s4772 + $0x148] sm:$0xff]
        %v4815 = vld [vmem:[%s4772 + $0x150] sm:$0xff]
        %v4816 = vld [vmem:[%s4772 + $0x158] sm:$0xff]
        %v4817 = vld [vmem:[%s4772 + $0x160] sm:$0xff]
        %v4818 = vld [vmem:[%s4772 + $0x168] sm:$0xff]
        %v4819 = vld [vmem:[%s4772 + $0x170] sm:$0xff]
        %v4820 = vld [vmem:[%s4772 + $0x178] sm:$0xff]
        %v4821 = vld [vmem:[%s4772 + $0x180] sm:$0xff]
        %v4822 = vld [vmem:[%s4772 + $0x188] sm:$0xff]
        %v4823 = vld [vmem:[%s4772 + $0x190] sm:$0xff]
        %v4824 = vld [vmem:[%s4772 + $0x198] sm:$0xff]
        %v4825 = vld [vmem:[%s4772 + $0x1a0] sm:$0xff]
        %v4826 = vld [vmem:[%s4772 + $0x1a8] sm:$0xff]
        %v4827 = vld [vmem:[%s4772 + $0x1b0] sm:$0xff]
        %v4828 = vld [vmem:[%s4772 + $0x1b8] sm:$0xff]
        %v4829 = vrot.slane %v4030, 5
        %v4830 = vrot.slane %v4031, 5
        %v4832 = vsel %vm2611, %v4830, 0
        %4834 = vmatpush.msra.mxu0 %v4803
        %4835 = vmatpush.msra.mxu0 %v4801
        %4836 = vmatpush.msra.mxu0 %v4799
        %4837 = vmatpush.msra.mxu0 %v4797
        %4838 = vmatpush.msra.mxu0 %v4795
        %4839 = vmatpush.msra.mxu0 %v4793
        %4840 = vmatpush.msra.mxu0 %v4791
        %4841 = vmatpush.msra.mxu0 %v4789
        %4842 = vmatpush.msra.mxu0 %v4787
        %4843 = vmatpush.msra.mxu0 %v4785
        %4844 = vmatpush.msra.mxu0 %v4783
        %4845 = vmatpush.msra.mxu0 %v4781
        %4846 = vmatpush.msra.mxu0 %v4779
        %4847 = vmatpush.msra.mxu0 %v4777
        %4848 = vmatpush.msra.mxu0 %v4775
        %4849 = vmatpush.msra.mxu0 %v4773
        %4850 = vmatmul.f32.gmra.mxu0 %v4829
        %v4851 = vpop.f32.mrf.mxu0
        %v4852 = vadd.f32 0.0, %v4851
        %4853 = vdwg.mxu0
        %4854 = vmatpush.msra.mxu0 0.0
        %4855 = vmatpush.msra.mxu0 0.0
        %4856 = vmatpush.msra.mxu0 0.0
        %4857 = vmatpush.msra.mxu0 0.0
        %4858 = vmatpush.msra.mxu0 %v4827
        %4859 = vmatpush.msra.mxu0 %v4825
        %4860 = vmatpush.msra.mxu0 %v4823
        %4861 = vmatpush.msra.mxu0 %v4821
        %4862 = vmatpush.msra.mxu0 %v4819
        %4863 = vmatpush.msra.mxu0 %v4817
        %4864 = vmatpush.msra.mxu0 %v4815
        %4865 = vmatpush.msra.mxu0 %v4813
        %4866 = vmatpush.msra.mxu0 %v4811
        %4867 = vmatpush.msra.mxu0 %v4809
        %4868 = vmatpush.msra.mxu0 %v4807
        %4869 = vmatpush.msra.mxu0 %v4805
        %4870 = vmatmul.f32.gmra.mxu0 %v4832
        %v4871 = vpop.f32.mrf.mxu0
        %v4872 = vadd.f32 %v4852, %v4871
        %4873 = vdwg.mxu0
        %4874 = vmatpush.msra.mxu0 %v4804
        %4875 = vmatpush.msra.mxu0 %v4802
        %4876 = vmatpush.msra.mxu0 %v4800
        %4877 = vmatpush.msra.mxu0 %v4798
        %4878 = vmatpush.msra.mxu0 %v4796
        %4879 = vmatpush.msra.mxu0 %v4794
        %4880 = vmatpush.msra.mxu0 %v4792
        %4881 = vmatpush.msra.mxu0 %v4790
        %4882 = vmatpush.msra.mxu0 %v4788
        %4883 = vmatpush.msra.mxu0 %v4786
        %4884 = vmatpush.msra.mxu0 %v4784
        %4885 = vmatpush.msra.mxu0 %v4782
        %4886 = vmatpush.msra.mxu0 %v4780
        %4887 = vmatpush.msra.mxu0 %v4778
        %4888 = vmatpush.msra.mxu0 %v4776
        %4889 = vmatpush.msra.mxu0 %v4774
        %4890 = vmatmul.f32.gmra.mxu0 %v4829
        %v4891 = vpop.f32.mrf.mxu0
        %v4892 = vadd.f32 0.0, %v4891
        %4893 = vdwg.mxu0
        %4894 = vmatpush.msra.mxu0 0.0
        %4895 = vmatpush.msra.mxu0 0.0
        %4896 = vmatpush.msra.mxu0 0.0
        %4897 = vmatpush.msra.mxu0 0.0
        %4898 = vmatpush.msra.mxu0 %v4828
        %4899 = vmatpush.msra.mxu0 %v4826
        %4900 = vmatpush.msra.mxu0 %v4824
        %4901 = vmatpush.msra.mxu0 %v4822
        %4902 = vmatpush.msra.mxu0 %v4820
        %4903 = vmatpush.msra.mxu0 %v4818
        %4904 = vmatpush.msra.mxu0 %v4816
        %4905 = vmatpush.msra.mxu0 %v4814
        %4906 = vmatpush.msra.mxu0 %v4812
        %4907 = vmatpush.msra.mxu0 %v4810
        %4908 = vmatpush.msra.mxu0 %v4808
        %4909 = vmatpush.msra.mxu0 %v4806
        %4910 = vmatmul.f32.gmra.mxu0 %v4832
        %v4911 = vpop.f32.mrf.mxu0
        %v4912 = vadd.f32 %v4892, %v4911
        %4913 = vdwg.mxu0
        %v4916 = vrot.slane %v4912, 7
        %v4917 = vsel %vm4175, %v4872, %v4916
        %v4919 = vadd.f32 %v4771, %v4917
        %s4920 = scalar_lea.vmem %s19, 2688
        %v4921 = vld [vmem:[%s4920] sm:$0xff]
        %v4922 = vld [vmem:[%s4920 + $0x8] sm:$0xff]
        %v4923 = vld [vmem:[%s4920 + $0x10] sm:$0xff]
        %v4924 = vld [vmem:[%s4920 + $0x18] sm:$0xff]
        %v4925 = vld [vmem:[%s4920 + $0x20] sm:$0xff]
        %v4926 = vld [vmem:[%s4920 + $0x28] sm:$0xff]
        %v4927 = vld [vmem:[%s4920 + $0x30] sm:$0xff]
        %v4928 = vld [vmem:[%s4920 + $0x38] sm:$0xff]
        %v4929 = vld [vmem:[%s4920 + $0x40] sm:$0xff]
        %v4930 = vld [vmem:[%s4920 + $0x48] sm:$0xff]
        %v4931 = vld [vmem:[%s4920 + $0x50] sm:$0xff]
        %v4932 = vld [vmem:[%s4920 + $0x58] sm:$0xff]
        %v4933 = vld [vmem:[%s4920 + $0x60] sm:$0xff]
        %v4934 = vld [vmem:[%s4920 + $0x68] sm:$0xff]
        %v4935 = vld [vmem:[%s4920 + $0x70] sm:$0xff]
        %v4936 = vld [vmem:[%s4920 + $0x78] sm:$0xff]
        %v4937 = vld [vmem:[%s4920 + $0x80] sm:$0xff]
        %v4938 = vld [vmem:[%s4920 + $0x88] sm:$0xff]
        %v4939 = vld [vmem:[%s4920 + $0x90] sm:$0xff]
        %v4940 = vld [vmem:[%s4920 + $0x98] sm:$0xff]
        %v4941 = vld [vmem:[%s4920 + $0xa0] sm:$0xff]
        %v4942 = vld [vmem:[%s4920 + $0xa8] sm:$0xff]
        %v4943 = vld [vmem:[%s4920 + $0xb0] sm:$0xff]
        %v4944 = vld [vmem:[%s4920 + $0xb8] sm:$0xff]
        %v4945 = vld [vmem:[%s4920 + $0xc0] sm:$0xff]
        %v4946 = vld [vmem:[%s4920 + $0xc8] sm:$0xff]
        %v4947 = vld [vmem:[%s4920 + $0xd0] sm:$0xff]
        %v4948 = vld [vmem:[%s4920 + $0xd8] sm:$0xff]
        %v4949 = vld [vmem:[%s4920 + $0xe0] sm:$0xff]
        %v4950 = vld [vmem:[%s4920 + $0xe8] sm:$0xff]
        %v4951 = vld [vmem:[%s4920 + $0xf0] sm:$0xff]
        %v4952 = vld [vmem:[%s4920 + $0xf8] sm:$0xff]
        %v4953 = vld [vmem:[%s4920 + $0x100] sm:$0xff]
        %v4954 = vld [vmem:[%s4920 + $0x108] sm:$0xff]
        %v4955 = vld [vmem:[%s4920 + $0x110] sm:$0xff]
        %v4956 = vld [vmem:[%s4920 + $0x118] sm:$0xff]
        %v4957 = vld [vmem:[%s4920 + $0x120] sm:$0xff]
        %v4958 = vld [vmem:[%s4920 + $0x128] sm:$0xff]
        %v4959 = vld [vmem:[%s4920 + $0x130] sm:$0xff]
        %v4960 = vld [vmem:[%s4920 + $0x138] sm:$0xff]
        %v4961 = vld [vmem:[%s4920 + $0x140] sm:$0xff]
        %v4962 = vld [vmem:[%s4920 + $0x148] sm:$0xff]
        %v4963 = vld [vmem:[%s4920 + $0x150] sm:$0xff]
        %v4964 = vld [vmem:[%s4920 + $0x158] sm:$0xff]
        %v4965 = vld [vmem:[%s4920 + $0x160] sm:$0xff]
        %v4966 = vld [vmem:[%s4920 + $0x168] sm:$0xff]
        %v4967 = vld [vmem:[%s4920 + $0x170] sm:$0xff]
        %v4968 = vld [vmem:[%s4920 + $0x178] sm:$0xff]
        %v4969 = vld [vmem:[%s4920 + $0x180] sm:$0xff]
        %v4970 = vld [vmem:[%s4920 + $0x188] sm:$0xff]
        %v4971 = vld [vmem:[%s4920 + $0x190] sm:$0xff]
        %v4972 = vld [vmem:[%s4920 + $0x198] sm:$0xff]
        %v4973 = vld [vmem:[%s4920 + $0x1a0] sm:$0xff]
        %v4974 = vld [vmem:[%s4920 + $0x1a8] sm:$0xff]
        %v4975 = vld [vmem:[%s4920 + $0x1b0] sm:$0xff]
        %v4976 = vld [vmem:[%s4920 + $0x1b8] sm:$0xff]
        %v4977 = vrot.slane %v4030, 6
        %v4978 = vrot.slane %v4031, 6
        %v4980 = vsel %vm2611, %v4978, 0
        %4982 = vmatpush.msra.mxu0 %v4951
        %4983 = vmatpush.msra.mxu0 %v4949
        %4984 = vmatpush.msra.mxu0 %v4947
        %4985 = vmatpush.msra.mxu0 %v4945
        %4986 = vmatpush.msra.mxu0 %v4943
        %4987 = vmatpush.msra.mxu0 %v4941
        %4988 = vmatpush.msra.mxu0 %v4939
        %4989 = vmatpush.msra.mxu0 %v4937
        %4990 = vmatpush.msra.mxu0 %v4935
        %4991 = vmatpush.msra.mxu0 %v4933
        %4992 = vmatpush.msra.mxu0 %v4931
        %4993 = vmatpush.msra.mxu0 %v4929
        %4994 = vmatpush.msra.mxu0 %v4927
        %4995 = vmatpush.msra.mxu0 %v4925
        %4996 = vmatpush.msra.mxu0 %v4923
        %4997 = vmatpush.msra.mxu0 %v4921
        %4998 = vmatmul.f32.gmra.mxu0 %v4977
        %v4999 = vpop.f32.mrf.mxu0
        %v5000 = vadd.f32 0.0, %v4999
        %5001 = vdwg.mxu0
        %5002 = vmatpush.msra.mxu0 0.0
        %5003 = vmatpush.msra.mxu0 0.0
        %5004 = vmatpush.msra.mxu0 0.0
        %5005 = vmatpush.msra.mxu0 0.0
        %5006 = vmatpush.msra.mxu0 %v4975
        %5007 = vmatpush.msra.mxu0 %v4973
        %5008 = vmatpush.msra.mxu0 %v4971
        %5009 = vmatpush.msra.mxu0 %v4969
        %5010 = vmatpush.msra.mxu0 %v4967
        %5011 = vmatpush.msra.mxu0 %v4965
        %5012 = vmatpush.msra.mxu0 %v4963
        %5013 = vmatpush.msra.mxu0 %v4961
        %5014 = vmatpush.msra.mxu0 %v4959
        %5015 = vmatpush.msra.mxu0 %v4957
        %5016 = vmatpush.msra.mxu0 %v4955
        %5017 = vmatpush.msra.mxu0 %v4953
        %5018 = vmatmul.f32.gmra.mxu0 %v4980
        %v5019 = vpop.f32.mrf.mxu0
        %v5020 = vadd.f32 %v5000, %v5019
        %5021 = vdwg.mxu0
        %5022 = vmatpush.msra.mxu0 %v4952
        %5023 = vmatpush.msra.mxu0 %v4950
        %5024 = vmatpush.msra.mxu0 %v4948
        %5025 = vmatpush.msra.mxu0 %v4946
        %5026 = vmatpush.msra.mxu0 %v4944
        %5027 = vmatpush.msra.mxu0 %v4942
        %5028 = vmatpush.msra.mxu0 %v4940
        %5029 = vmatpush.msra.mxu0 %v4938
        %5030 = vmatpush.msra.mxu0 %v4936
        %5031 = vmatpush.msra.mxu0 %v4934
        %5032 = vmatpush.msra.mxu0 %v4932
        %5033 = vmatpush.msra.mxu0 %v4930
        %5034 = vmatpush.msra.mxu0 %v4928
        %5035 = vmatpush.msra.mxu0 %v4926
        %5036 = vmatpush.msra.mxu0 %v4924
        %5037 = vmatpush.msra.mxu0 %v4922
        %5038 = vmatmul.f32.gmra.mxu0 %v4977
        %v5039 = vpop.f32.mrf.mxu0
        %v5040 = vadd.f32 0.0, %v5039
        %5041 = vdwg.mxu0
        %5042 = vmatpush.msra.mxu0 0.0
        %5043 = vmatpush.msra.mxu0 0.0
        %5044 = vmatpush.msra.mxu0 0.0
        %5045 = vmatpush.msra.mxu0 0.0
        %5046 = vmatpush.msra.mxu0 %v4976
        %5047 = vmatpush.msra.mxu0 %v4974
        %5048 = vmatpush.msra.mxu0 %v4972
        %5049 = vmatpush.msra.mxu0 %v4970
        %5050 = vmatpush.msra.mxu0 %v4968
        %5051 = vmatpush.msra.mxu0 %v4966
        %5052 = vmatpush.msra.mxu0 %v4964
        %5053 = vmatpush.msra.mxu0 %v4962
        %5054 = vmatpush.msra.mxu0 %v4960
        %5055 = vmatpush.msra.mxu0 %v4958
        %5056 = vmatpush.msra.mxu0 %v4956
        %5057 = vmatpush.msra.mxu0 %v4954
        %5058 = vmatmul.f32.gmra.mxu0 %v4980
        %v5059 = vpop.f32.mrf.mxu0
        %v5060 = vadd.f32 %v5040, %v5059
        %5061 = vdwg.mxu0
        %v5064 = vrot.slane %v5060, 7
        %v5065 = vsel %vm4175, %v5020, %v5064
        %v5067 = vadd.f32 %v4919, %v5065
        %v5068 = vmax.f32 %v5067, 0.0
        %v5069 = vld [vmem:[#allocation7] sm:$0xff]
        %v5070 = vld [vmem:[#allocation7 + $0x8] sm:$0xff]
        %v5071 = vld [vmem:[#allocation7 + $0x10] sm:$0xff]
        %v5072 = vld [vmem:[#allocation7 + $0x18] sm:$0xff]
        %v5073 = vld [vmem:[#allocation7 + $0x20] sm:$0xff]
        %v5074 = vld [vmem:[#allocation7 + $0x28] sm:$0xff]
        %v5075 = vld [vmem:[#allocation7 + $0x30] sm:$0xff]
        %v5076 = vld [vmem:[#allocation7 + $0x38] sm:$0xff]
        %v5077 = vld [vmem:[#allocation7 + $0x40] sm:$0xff]
        %v5078 = vld [vmem:[#allocation7 + $0x48] sm:$0xff]
        %v5079 = vld [vmem:[#allocation7 + $0x50] sm:$0xff]
        %v5080 = vld [vmem:[#allocation7 + $0x58] sm:$0xff]
        %v5081 = vld [vmem:[#allocation7 + $0x60] sm:$0xff]
        %v5082 = vld [vmem:[#allocation7 + $0x68] sm:$0xff]
        %v5083 = vld [vmem:[#allocation7 + $0x70] sm:$0xff]
        %v5084 = vld [vmem:[#allocation7 + $0x78] sm:$0xff]
        %v5085 = vld [vmem:[#allocation7 + $0x80] sm:$0xff]
        %v5086 = vld [vmem:[#allocation7 + $0x88] sm:$0xff]
        %v5087 = vld [vmem:[#allocation7 + $0x90] sm:$0xff]
        %v5088 = vld [vmem:[#allocation7 + $0x98] sm:$0xff]
        %v5089 = vld [vmem:[#allocation7 + $0xa0] sm:$0xff]
        %v5090 = vld [vmem:[#allocation7 + $0xa8] sm:$0xff]
        %v5091 = vld [vmem:[#allocation7 + $0xb0] sm:$0xff]
        %v5092 = vld [vmem:[#allocation7 + $0xb8] sm:$0xff]
        %v5093 = vld [vmem:[#allocation7 + $0xc0] sm:$0xff]
        %v5094 = vld [vmem:[#allocation7 + $0xc8] sm:$0xff]
        %v5095 = vld [vmem:[#allocation7 + $0xd0] sm:$0xff]
        %v5096 = vld [vmem:[#allocation7 + $0xd8] sm:$0xff]
        %v5097 = vld [vmem:[#allocation7 + $0xe0] sm:$0xff]
        %v5098 = vld [vmem:[#allocation7 + $0xe8] sm:$0xff]
        %v5099 = vld [vmem:[#allocation7 + $0xf0] sm:$0xff]
        %v5100 = vld [vmem:[#allocation7 + $0xf8] sm:$0xff]
        %v5101 = vld [vmem:[%s25] sm:$0x1]
        %v5103 = vperm.slane %v5068, 0
        %v5104 = vperm.slane %v5068, 1
        %5107 = vmatpush.msra.mxu0 %v5084
        %5108 = vmatpush.msra.mxu0 %v5083
        %5109 = vmatpush.msra.mxu0 %v5082
        %5110 = vmatpush.msra.mxu0 %v5081
        %5111 = vmatpush.msra.mxu0 %v5080
        %5112 = vmatpush.msra.mxu0 %v5079
        %5113 = vmatpush.msra.mxu0 %v5078
        %5114 = vmatpush.msra.mxu0 %v5077
        %5115 = vmatpush.msra.mxu0 %v5076
        %5116 = vmatpush.msra.mxu0 %v5075
        %5117 = vmatpush.msra.mxu0 %v5074
        %5118 = vmatpush.msra.mxu0 %v5073
        %5119 = vmatpush.msra.mxu0 %v5072
        %5120 = vmatpush.msra.mxu0 %v5071
        %5121 = vmatpush.msra.mxu0 %v5070
        %5122 = vmatpush.msra.mxu0 %v5069
        %5123 = vmatmul.f32.gmra.mxu0 %v5103
        %v5124 = vpop.f32.mrf.mxu0
        %v5125 = vadd.f32 %v5101, %v5124
        %5126 = vdwg.mxu0
        %5127 = vmatpush.msra.mxu0 %v5100
        %5128 = vmatpush.msra.mxu0 %v5099
        %5129 = vmatpush.msra.mxu0 %v5098
        %5130 = vmatpush.msra.mxu0 %v5097
        %5131 = vmatpush.msra.mxu0 %v5096
        %5132 = vmatpush.msra.mxu0 %v5095
        %5133 = vmatpush.msra.mxu0 %v5094
        %5134 = vmatpush.msra.mxu0 %v5093
        %5135 = vmatpush.msra.mxu0 %v5092
        %5136 = vmatpush.msra.mxu0 %v5091
        %5137 = vmatpush.msra.mxu0 %v5090
        %5138 = vmatpush.msra.mxu0 %v5089
        %5139 = vmatpush.msra.mxu0 %v5088
        %5140 = vmatpush.msra.mxu0 %v5087
        %5141 = vmatpush.msra.mxu0 %v5086
        %5142 = vmatpush.msra.mxu0 %v5085
        %5143 = vmatmul.f32.gmra.mxu0 %v5104
        %v5144 = vpop.f32.mrf.mxu0
        %v5145 = vadd.f32 %v5125, %v5144
        %5146 = vdwg.mxu0
        %v5147 = vmax.f32 %v5145, 0.0
        %v5148 = vld [vmem:[%s27] sm:$0xff]
        %v5149 = vld [vmem:[%s27 + $0x8] sm:$0xff]
        %v5150 = vld [vmem:[%s27 + $0x10] sm:$0xff]
        %v5151 = vld [vmem:[%s27 + $0x18] sm:$0xff]
        %v5152 = vld [vmem:[%s27 + $0x20] sm:$0xff]
        %v5153 = vld [vmem:[%s27 + $0x28] sm:$0xff]
        %v5154 = vld [vmem:[%s27 + $0x30] sm:$0xff]
        %v5155 = vld [vmem:[%s27 + $0x38] sm:$0xff]
        %v5156 = vld [vmem:[%s27 + $0x40] sm:$0xff]
        %v5157 = vld [vmem:[%s27 + $0x48] sm:$0xff]
        %v5158 = vld [vmem:[%s27 + $0x50] sm:$0xff]
        %v5159 = vld [vmem:[%s27 + $0x58] sm:$0xff]
        %v5160 = vld [vmem:[%s27 + $0x60] sm:$0xff]
        %v5161 = vld [vmem:[%s27 + $0x68] sm:$0xff]
        %v5162 = vld [vmem:[%s27 + $0x70] sm:$0xff]
        %v5163 = vld [vmem:[%s27 + $0x78] sm:$0xff]
        %v5164 = vld [vmem:[%s29] sm:$0x1]
        %5165 = vmatpush.msra.mxu0 %v5163
        %5166 = vmatpush.msra.mxu0 %v5162
        %5167 = vmatpush.msra.mxu0 %v5161
        %5168 = vmatpush.msra.mxu0 %v5160
        %5169 = vmatpush.msra.mxu0 %v5159
        %5170 = vmatpush.msra.mxu0 %v5158
        %5171 = vmatpush.msra.mxu0 %v5157
        %5172 = vmatpush.msra.mxu0 %v5156
        %5173 = vmatpush.msra.mxu0 %v5155
        %5174 = vmatpush.msra.mxu0 %v5154
        %5175 = vmatpush.msra.mxu0 %v5153
        %5176 = vmatpush.msra.mxu0 %v5152
        %5177 = vmatpush.msra.mxu0 %v5151
        %5178 = vmatpush.msra.mxu0 %v5150
        %5179 = vmatpush.msra.mxu0 %v5149
        %5180 = vmatpush.msra.mxu0 %v5148
        %5181 = vmatmul.f32.gmra.mxu0 %v5147
        %v5182 = vpop.f32.mrf.mxu0
        %v5183 = vadd.f32 %v5164, %v5182
        %5184 = vdwg.mxu0
        %v5185 = vld [vmem:[%s31] sm:$0xff]
        %v5186 = vld [vmem:[%s31 + $0x8] sm:$0x3]
        %v5187 = vld [vmem:[%s33] sm:$0x1]
        %vm5188 = vcmask 80896
        %v5190 = vsel %vm5188, %v5183, 0
        %vm5192 = vcmask 1041408
        %v5194 = vsel %vm5192, %v5186, 0
        %5196 = vmatpush.msra.mxu0 0.0
        %5197 = vmatpush.msra.mxu0 0.0
        %5198 = vmatpush.msra.mxu0 0.0
        %5199 = vmatpush.msra.mxu0 0.0
        %5200 = vmatpush.msra.mxu0 0.0
        %5201 = vmatpush.msra.mxu0 0.0
        %5202 = vmatpush.msra.mxu0 0.0
        %5203 = vmatpush.msra.mxu0 0.0
        %5204 = vmatpush.msra.mxu0 0.0
        %5205 = vmatpush.msra.mxu0 0.0
        %5206 = vmatpush.msra.mxu0 0.0
        %5207 = vmatpush.msra.mxu0 0.0
        %5208 = vmatpush.msra.mxu0 0.0
        %5209 = vmatpush.msra.mxu0 0.0
        %5210 = vmatpush.msra.mxu0 %v5194
        %5211 = vmatpush.msra.mxu0 %v5185
        %5212 = vmatmul.f32.gmra.mxu0 %v5190
        %v5213 = vpop.f32.mrf.mxu0
        %v5214 = vadd.f32 %v5187, %v5213
        %5215 = vdwg.mxu0
        %v5216 = vmax.f32 %v5214, 0.0
        %v5217 = vld [vmem:[#allocation8] sm:$0xff]
        %v5218 = vld [vmem:[#allocation8 + $0x8] sm:$0xff]
        %v5219 = vld [vmem:[#allocation8 + $0x10] sm:$0xff]
        %v5220 = vld [vmem:[#allocation8 + $0x18] sm:$0xff]
        %v5221 = vld [vmem:[#allocation8 + $0x20] sm:$0xff]
        %v5222 = vld [vmem:[#allocation8 + $0x28] sm:$0xff]
        %v5223 = vld [vmem:[#allocation8 + $0x30] sm:$0xff]
        %v5224 = vld [vmem:[#allocation8 + $0x38] sm:$0xff]
        %v5225 = vld [vmem:[#allocation8 + $0x40] sm:$0xff]
        %v5226 = vld [vmem:[#allocation8 + $0x48] sm:$0xff]
        %v5227 = vld [vmem:[#allocation8 + $0x50] sm:$0xff]
        %v5228 = vld [vmem:[#allocation8 + $0x58] sm:$0xff]
        %v5229 = vld [vmem:[#allocation8 + $0x60] sm:$0xff]
        %v5230 = vld [vmem:[#allocation8 + $0x68] sm:$0xff]
        %v5231 = vld [vmem:[#allocation8 + $0x70] sm:$0xff]
        %v5232 = vld [vmem:[#allocation8 + $0x78] sm:$0xff]
        %v5233 = vld [vmem:[#allocation8 + $0x80] sm:$0xff]
        %v5234 = vld [vmem:[#allocation8 + $0x88] sm:$0xff]
        %v5235 = vld [vmem:[#allocation8 + $0x90] sm:$0xff]
        %v5236 = vld [vmem:[#allocation8 + $0x98] sm:$0xff]
        %v5237 = vld [vmem:[#allocation8 + $0xa0] sm:$0xff]
        %v5238 = vld [vmem:[#allocation8 + $0xa8] sm:$0xff]
        %v5239 = vld [vmem:[#allocation8 + $0xb0] sm:$0xff]
        %v5240 = vld [vmem:[#allocation8 + $0xb8] sm:$0xff]
        %v5241 = vld [vmem:[#allocation8 + $0xc0] sm:$0xff]
        %v5242 = vld [vmem:[#allocation8 + $0xc8] sm:$0xff]
        %v5243 = vld [vmem:[#allocation8 + $0xd0] sm:$0xff]
        %v5244 = vld [vmem:[#allocation8 + $0xd8] sm:$0xff]
        %v5245 = vld [vmem:[#allocation8 + $0xe0] sm:$0xff]
        %v5246 = vld [vmem:[#allocation8 + $0xe8] sm:$0xff]
        %v5247 = vld [vmem:[#allocation8 + $0xf0] sm:$0xff]
        %v5248 = vld [vmem:[#allocation8 + $0xf8] sm:$0xff]
        %v5249 = vld [vmem:[%s37] sm:$0x3]
        %v5251 = vperm.slane %v5249, 0
        %v5252 = vperm.slane %v5249, 1
        %5255 = vmatpush.msra.mxu0 %v5247
        %5256 = vmatpush.msra.mxu0 %v5245
        %5257 = vmatpush.msra.mxu0 %v5243
        %5258 = vmatpush.msra.mxu0 %v5241
        %5259 = vmatpush.msra.mxu0 %v5239
        %5260 = vmatpush.msra.mxu0 %v5237
        %5261 = vmatpush.msra.mxu0 %v5235
        %5262 = vmatpush.msra.mxu0 %v5233
        %5263 = vmatpush.msra.mxu0 %v5231
        %5264 = vmatpush.msra.mxu0 %v5229
        %5265 = vmatpush.msra.mxu0 %v5227
        %5266 = vmatpush.msra.mxu0 %v5225
        %5267 = vmatpush.msra.mxu0 %v5223
        %5268 = vmatpush.msra.mxu0 %v5221
        %5269 = vmatpush.msra.mxu0 %v5219
        %5270 = vmatpush.msra.mxu0 %v5217
        %5271 = vmatmul.f32.gmra.mxu0 %v5216
        %v5272 = vpop.f32.mrf.mxu0
        %v5273 = vadd.f32 %v5251, %v5272
        %5274 = vdwg.mxu0
        %5275 = vmatpush.msra.mxu0 %v5248
        %5276 = vmatpush.msra.mxu0 %v5246
        %5277 = vmatpush.msra.mxu0 %v5244
        %5278 = vmatpush.msra.mxu0 %v5242
        %5279 = vmatpush.msra.mxu0 %v5240
        %5280 = vmatpush.msra.mxu0 %v5238
        %5281 = vmatpush.msra.mxu0 %v5236
        %5282 = vmatpush.msra.mxu0 %v5234
        %5283 = vmatpush.msra.mxu0 %v5232
        %5284 = vmatpush.msra.mxu0 %v5230
        %5285 = vmatpush.msra.mxu0 %v5228
        %5286 = vmatpush.msra.mxu0 %v5226
        %5287 = vmatpush.msra.mxu0 %v5224
        %5288 = vmatpush.msra.mxu0 %v5222
        %5289 = vmatpush.msra.mxu0 %v5220
        %5290 = vmatpush.msra.mxu0 %v5218
        %5291 = vmatmul.f32.gmra.mxu0 %v5216
        %v5292 = vpop.f32.mrf.mxu0
        %v5293 = vadd.f32 %v5252, %v5292
        %5294 = vdwg.mxu0
        %v5295 = vmax.f32 %v5273, 0.0
        %v5296 = vmax.f32 %v5293, 0.0
        %v5297 = vld [vmem:[%s41] sm:$0x7f]
        %v5298 = vld [vmem:[%s41 + $0x8] sm:$0x7f]
        %v5299 = vld [vmem:[%s39] sm:$0xff]
        %v5300 = vld [vmem:[%s39 + $0x8] sm:$0xff]
        %v5301 = vld [vmem:[%s39 + $0x10] sm:$0xff]
        %v5302 = vld [vmem:[%s39 + $0x18] sm:$0xff]
        %v5303 = vld [vmem:[%s39 + $0x20] sm:$0xff]
        %v5304 = vld [vmem:[%s39 + $0x28] sm:$0xff]
        %v5305 = vld [vmem:[%s39 + $0x30] sm:$0xff]
        %v5306 = vld [vmem:[%s39 + $0x38] sm:$0xff]
        %v5307 = vld [vmem:[%s39 + $0x40] sm:$0xff]
        %v5308 = vld [vmem:[%s39 + $0x48] sm:$0xff]
        %v5309 = vld [vmem:[%s39 + $0x50] sm:$0xff]
        %v5310 = vld [vmem:[%s39 + $0x58] sm:$0xff]
        %v5311 = vld [vmem:[%s39 + $0x60] sm:$0xff]
        %v5312 = vld [vmem:[%s39 + $0x68] sm:$0xff]
        %v5313 = vld [vmem:[%s39 + $0x70] sm:$0xff]
        %v5314 = vld [vmem:[%s39 + $0x78] sm:$0xff]
        %v5315 = vld [vmem:[%s39 + $0x80] sm:$0xff]
        %v5316 = vld [vmem:[%s39 + $0x88] sm:$0xff]
        %v5317 = vld [vmem:[%s39 + $0x90] sm:$0xff]
        %v5318 = vld [vmem:[%s39 + $0x98] sm:$0xff]
        %v5319 = vld [vmem:[%s39 + $0xa0] sm:$0xff]
        %v5320 = vld [vmem:[%s39 + $0xa8] sm:$0xff]
        %v5321 = vld [vmem:[%s39 + $0xb0] sm:$0xff]
        %v5322 = vld [vmem:[%s39 + $0xb8] sm:$0xff]
        %v5323 = vld [vmem:[%s39 + $0xc0] sm:$0xff]
        %v5324 = vld [vmem:[%s39 + $0xc8] sm:$0xff]
        %v5325 = vld [vmem:[%s39 + $0xd0] sm:$0xff]
        %v5326 = vld [vmem:[%s39 + $0xd8] sm:$0xff]
        %v5327 = vld [vmem:[%s39 + $0xe0] sm:$0xff]
        %v5328 = vld [vmem:[%s39 + $0xe8] sm:$0xff]
        %v5329 = vld [vmem:[%s39 + $0xf0] sm:$0xff]
        %v5330 = vld [vmem:[%s39 + $0xf8] sm:$0xff]
        %v5331 = vld [vmem:[%s39 + $0x100] sm:$0xff]
        %v5332 = vld [vmem:[%s39 + $0x108] sm:$0xff]
        %v5333 = vld [vmem:[%s39 + $0x110] sm:$0xff]
        %v5334 = vld [vmem:[%s39 + $0x118] sm:$0xff]
        %v5335 = vld [vmem:[%s39 + $0x120] sm:$0xff]
        %v5336 = vld [vmem:[%s39 + $0x128] sm:$0xff]
        %v5337 = vld [vmem:[%s39 + $0x130] sm:$0xff]
        %v5338 = vld [vmem:[%s39 + $0x138] sm:$0xff]
        %v5339 = vld [vmem:[%s39 + $0x140] sm:$0xff]
        %v5340 = vld [vmem:[%s39 + $0x148] sm:$0xff]
        %v5341 = vld [vmem:[%s39 + $0x150] sm:$0xff]
        %v5342 = vld [vmem:[%s39 + $0x158] sm:$0xff]
        %v5343 = vld [vmem:[%s39 + $0x160] sm:$0xff]
        %v5344 = vld [vmem:[%s39 + $0x168] sm:$0xff]
        %v5345 = vld [vmem:[%s39 + $0x170] sm:$0xff]
        %v5346 = vld [vmem:[%s39 + $0x178] sm:$0xff]
        %v5347 = vld [vmem:[%s39 + $0x180] sm:$0xff]
        %v5348 = vld [vmem:[%s39 + $0x188] sm:$0xff]
        %v5349 = vld [vmem:[%s39 + $0x190] sm:$0xff]
        %v5350 = vld [vmem:[%s39 + $0x198] sm:$0xff]
        %v5351 = vld [vmem:[%s39 + $0x1a0] sm:$0xff]
        %v5352 = vld [vmem:[%s39 + $0x1a8] sm:$0xff]
        %v5353 = vld [vmem:[%s39 + $0x1b0] sm:$0xff]
        %v5354 = vld [vmem:[%s39 + $0x1b8] sm:$0xff]
        %v5355 = vld [vmem:[%s39 + $0x1c0] sm:$0xff]
        %v5356 = vld [vmem:[%s39 + $0x1c8] sm:$0xff]
        %v5357 = vld [vmem:[%s39 + $0x1d0] sm:$0xff]
        %v5358 = vld [vmem:[%s39 + $0x1d8] sm:$0xff]
        %v5359 = vld [vmem:[%s39 + $0x1e0] sm:$0xff]
        %v5360 = vld [vmem:[%s39 + $0x1e8] sm:$0xff]
        %v5361 = vld [vmem:[%s39 + $0x1f0] sm:$0xff]
        %v5362 = vld [vmem:[%s39 + $0x1f8] sm:$0xff]
        %5363 = vmatpush.msra.mxu0 %v5329
        %5364 = vmatpush.msra.mxu0 %v5327
        %5365 = vmatpush.msra.mxu0 %v5325
        %5366 = vmatpush.msra.mxu0 %v5323
        %5367 = vmatpush.msra.mxu0 %v5321
        %5368 = vmatpush.msra.mxu0 %v5319
        %5369 = vmatpush.msra.mxu0 %v5317
        %5370 = vmatpush.msra.mxu0 %v5315
        %5371 = vmatpush.msra.mxu0 %v5313
        %5372 = vmatpush.msra.mxu0 %v5311
        %5373 = vmatpush.msra.mxu0 %v5309
        %5374 = vmatpush.msra.mxu0 %v5307
        %5375 = vmatpush.msra.mxu0 %v5305
        %5376 = vmatpush.msra.mxu0 %v5303
        %5377 = vmatpush.msra.mxu0 %v5301
        %5378 = vmatpush.msra.mxu0 %v5299
        %5379 = vmatmul.f32.gmra.mxu0 %v5295
        %v5380 = vpop.f32.mrf.mxu0
        %v5381 = vadd.f32 %v5297, %v5380
        %5382 = vdwg.mxu0
        %5383 = vmatpush.msra.mxu0 %v5361
        %5384 = vmatpush.msra.mxu0 %v5359
        %5385 = vmatpush.msra.mxu0 %v5357
        %5386 = vmatpush.msra.mxu0 %v5355
        %5387 = vmatpush.msra.mxu0 %v5353
        %5388 = vmatpush.msra.mxu0 %v5351
        %5389 = vmatpush.msra.mxu0 %v5349
        %5390 = vmatpush.msra.mxu0 %v5347
        %5391 = vmatpush.msra.mxu0 %v5345
        %5392 = vmatpush.msra.mxu0 %v5343
        %5393 = vmatpush.msra.mxu0 %v5341
        %5394 = vmatpush.msra.mxu0 %v5339
        %5395 = vmatpush.msra.mxu0 %v5337
        %5396 = vmatpush.msra.mxu0 %v5335
        %5397 = vmatpush.msra.mxu0 %v5333
        %5398 = vmatpush.msra.mxu0 %v5331
        %5399 = vmatmul.f32.gmra.mxu0 %v5296
        %v5400 = vpop.f32.mrf.mxu0
        %v5401 = vadd.f32 %v5381, %v5400
        %5402 = vdwg.mxu0
        %5403 = vmatpush.msra.mxu0 %v5330
        %5404 = vmatpush.msra.mxu0 %v5328
        %5405 = vmatpush.msra.mxu0 %v5326
        %5406 = vmatpush.msra.mxu0 %v5324
        %5407 = vmatpush.msra.mxu0 %v5322
        %5408 = vmatpush.msra.mxu0 %v5320
        %5409 = vmatpush.msra.mxu0 %v5318
        %5410 = vmatpush.msra.mxu0 %v5316
        %5411 = vmatpush.msra.mxu0 %v5314
        %5412 = vmatpush.msra.mxu0 %v5312
        %5413 = vmatpush.msra.mxu0 %v5310
        %5414 = vmatpush.msra.mxu0 %v5308
        %5415 = vmatpush.msra.mxu0 %v5306
        %5416 = vmatpush.msra.mxu0 %v5304
        %5417 = vmatpush.msra.mxu0 %v5302
        %5418 = vmatpush.msra.mxu0 %v5300
        %5419 = vmatmul.f32.gmra.mxu0 %v5295
        %v5420 = vpop.f32.mrf.mxu0
        %v5421 = vadd.f32 %v5298, %v5420
        %5422 = vdwg.mxu0
        %5423 = vmatpush.msra.mxu0 %v5362
        %5424 = vmatpush.msra.mxu0 %v5360
        %5425 = vmatpush.msra.mxu0 %v5358
        %5426 = vmatpush.msra.mxu0 %v5356
        %5427 = vmatpush.msra.mxu0 %v5354
        %5428 = vmatpush.msra.mxu0 %v5352
        %5429 = vmatpush.msra.mxu0 %v5350
        %5430 = vmatpush.msra.mxu0 %v5348
        %5431 = vmatpush.msra.mxu0 %v5346
        %5432 = vmatpush.msra.mxu0 %v5344
        %5433 = vmatpush.msra.mxu0 %v5342
        %5434 = vmatpush.msra.mxu0 %v5340
        %5435 = vmatpush.msra.mxu0 %v5338
        %5436 = vmatpush.msra.mxu0 %v5336
        %5437 = vmatpush.msra.mxu0 %v5334
        %5438 = vmatpush.msra.mxu0 %v5332
        %5439 = vmatmul.f32.gmra.mxu0 %v5296
        %v5440 = vpop.f32.mrf.mxu0
        %v5441 = vadd.f32 %v5421, %v5440
        %5442 = vdwg.mxu0
        %v5443 = vmax.f32 %v5401, 0.0
        %v5444 = vmax.f32 %v5441, 0.0
        %v5447 = vrot.slane %v5444, 7
        %v5448 = vsel %vm4175, %v5443, %v5447
        %v5450 = vlaneseq
        %vm5451 = vcmp.ge.s32.totalorder %v5450, 0
        %vm5452 = vcmp.lt.s32.totalorder %v5450, 224
        %vm5453 = vmand %vm5451, %vm5452
        %5454 = vst.msk [vmem:[#allocation2] ss:$8 sm:$0x3] %vm5453, %v5448
        %5455 = vst.msk [vmem:[#allocation2] ss:$8 sm:$0x0] %vm5453, %v5448
        %s5456 = scalar_lea.vmem %s39, 512
        %v5457 = vld [vmem:[%s5456] sm:$0xff]
        %v5458 = vld [vmem:[%s5456 + $0x8] sm:$0xff]
        %v5459 = vld [vmem:[%s5456 + $0x10] sm:$0xff]
        %v5460 = vld [vmem:[%s5456 + $0x18] sm:$0xff]
        %v5461 = vld [vmem:[%s5456 + $0x20] sm:$0xff]
        %v5462 = vld [vmem:[%s5456 + $0x28] sm:$0xff]
        %v5463 = vld [vmem:[%s5456 + $0x30] sm:$0xff]
        %v5464 = vld [vmem:[%s5456 + $0x38] sm:$0xff]
        %v5465 = vld [vmem:[%s5456 + $0x40] sm:$0xff]
        %v5466 = vld [vmem:[%s5456 + $0x48] sm:$0xff]
        %v5467 = vld [vmem:[%s5456 + $0x50] sm:$0xff]
        %v5468 = vld [vmem:[%s5456 + $0x58] sm:$0xff]
        %v5469 = vld [vmem:[%s5456 + $0x60] sm:$0xff]
        %v5470 = vld [vmem:[%s5456 + $0x68] sm:$0xff]
        %v5471 = vld [vmem:[%s5456 + $0x70] sm:$0xff]
        %v5472 = vld [vmem:[%s5456 + $0x78] sm:$0xff]
        %v5473 = vld [vmem:[%s5456 + $0x80] sm:$0xff]
        %v5474 = vld [vmem:[%s5456 + $0x88] sm:$0xff]
        %v5475 = vld [vmem:[%s5456 + $0x90] sm:$0xff]
        %v5476 = vld [vmem:[%s5456 + $0x98] sm:$0xff]
        %v5477 = vld [vmem:[%s5456 + $0xa0] sm:$0xff]
        %v5478 = vld [vmem:[%s5456 + $0xa8] sm:$0xff]
        %v5479 = vld [vmem:[%s5456 + $0xb0] sm:$0xff]
        %v5480 = vld [vmem:[%s5456 + $0xb8] sm:$0xff]
        %v5481 = vld [vmem:[%s5456 + $0xc0] sm:$0xff]
        %v5482 = vld [vmem:[%s5456 + $0xc8] sm:$0xff]
        %v5483 = vld [vmem:[%s5456 + $0xd0] sm:$0xff]
        %v5484 = vld [vmem:[%s5456 + $0xd8] sm:$0xff]
        %v5485 = vld [vmem:[%s5456 + $0xe0] sm:$0xff]
        %v5486 = vld [vmem:[%s5456 + $0xe8] sm:$0xff]
        %v5487 = vld [vmem:[%s5456 + $0xf0] sm:$0xff]
        %v5488 = vld [vmem:[%s5456 + $0xf8] sm:$0xff]
        %v5489 = vld [vmem:[%s5456 + $0x100] sm:$0xff]
        %v5490 = vld [vmem:[%s5456 + $0x108] sm:$0xff]
        %v5491 = vld [vmem:[%s5456 + $0x110] sm:$0xff]
        %v5492 = vld [vmem:[%s5456 + $0x118] sm:$0xff]
        %v5493 = vld [vmem:[%s5456 + $0x120] sm:$0xff]
        %v5494 = vld [vmem:[%s5456 + $0x128] sm:$0xff]
        %v5495 = vld [vmem:[%s5456 + $0x130] sm:$0xff]
        %v5496 = vld [vmem:[%s5456 + $0x138] sm:$0xff]
        %v5497 = vld [vmem:[%s5456 + $0x140] sm:$0xff]
        %v5498 = vld [vmem:[%s5456 + $0x148] sm:$0xff]
        %v5499 = vld [vmem:[%s5456 + $0x150] sm:$0xff]
        %v5500 = vld [vmem:[%s5456 + $0x158] sm:$0xff]
        %v5501 = vld [vmem:[%s5456 + $0x160] sm:$0xff]
        %v5502 = vld [vmem:[%s5456 + $0x168] sm:$0xff]
        %v5503 = vld [vmem:[%s5456 + $0x170] sm:$0xff]
        %v5504 = vld [vmem:[%s5456 + $0x178] sm:$0xff]
        %v5505 = vld [vmem:[%s5456 + $0x180] sm:$0xff]
        %v5506 = vld [vmem:[%s5456 + $0x188] sm:$0xff]
        %v5507 = vld [vmem:[%s5456 + $0x190] sm:$0xff]
        %v5508 = vld [vmem:[%s5456 + $0x198] sm:$0xff]
        %v5509 = vld [vmem:[%s5456 + $0x1a0] sm:$0xff]
        %v5510 = vld [vmem:[%s5456 + $0x1a8] sm:$0xff]
        %v5511 = vld [vmem:[%s5456 + $0x1b0] sm:$0xff]
        %v5512 = vld [vmem:[%s5456 + $0x1b8] sm:$0xff]
        %v5513 = vld [vmem:[%s5456 + $0x1c0] sm:$0xff]
        %v5514 = vld [vmem:[%s5456 + $0x1c8] sm:$0xff]
        %v5515 = vld [vmem:[%s5456 + $0x1d0] sm:$0xff]
        %v5516 = vld [vmem:[%s5456 + $0x1d8] sm:$0xff]
        %v5517 = vld [vmem:[%s5456 + $0x1e0] sm:$0xff]
        %v5518 = vld [vmem:[%s5456 + $0x1e8] sm:$0xff]
        %v5519 = vld [vmem:[%s5456 + $0x1f0] sm:$0xff]
        %v5520 = vld [vmem:[%s5456 + $0x1f8] sm:$0xff]
        %v5523 = vrot.slane %v5297, 1
        %v5524 = vrot.slane %v5298, 1
        %5527 = vmatpush.msra.mxu0 %v5487
        %5528 = vmatpush.msra.mxu0 %v5485
        %5529 = vmatpush.msra.mxu0 %v5483
        %5530 = vmatpush.msra.mxu0 %v5481
        %5531 = vmatpush.msra.mxu0 %v5479
        %5532 = vmatpush.msra.mxu0 %v5477
        %5533 = vmatpush.msra.mxu0 %v5475
        %5534 = vmatpush.msra.mxu0 %v5473
        %5535 = vmatpush.msra.mxu0 %v5471
        %5536 = vmatpush.msra.mxu0 %v5469
        %5537 = vmatpush.msra.mxu0 %v5467
        %5538 = vmatpush.msra.mxu0 %v5465
        %5539 = vmatpush.msra.mxu0 %v5463
        %5540 = vmatpush.msra.mxu0 %v5461
        %5541 = vmatpush.msra.mxu0 %v5459
        %5542 = vmatpush.msra.mxu0 %v5457
        %5543 = vmatmul.f32.gmra.mxu0 %v5295
        %v5544 = vpop.f32.mrf.mxu0
        %v5545 = vadd.f32 %v5523, %v5544
        %5546 = vdwg.mxu0
        %5547 = vmatpush.msra.mxu0 %v5519
        %5548 = vmatpush.msra.mxu0 %v5517
        %5549 = vmatpush.msra.mxu0 %v5515
        %5550 = vmatpush.msra.mxu0 %v5513
        %5551 = vmatpush.msra.mxu0 %v5511
        %5552 = vmatpush.msra.mxu0 %v5509
        %5553 = vmatpush.msra.mxu0 %v5507
        %5554 = vmatpush.msra.mxu0 %v5505
        %5555 = vmatpush.msra.mxu0 %v5503
        %5556 = vmatpush.msra.mxu0 %v5501
        %5557 = vmatpush.msra.mxu0 %v5499
        %5558 = vmatpush.msra.mxu0 %v5497
        %5559 = vmatpush.msra.mxu0 %v5495
        %5560 = vmatpush.msra.mxu0 %v5493
        %5561 = vmatpush.msra.mxu0 %v5491
        %5562 = vmatpush.msra.mxu0 %v5489
        %5563 = vmatmul.f32.gmra.mxu0 %v5296
        %v5564 = vpop.f32.mrf.mxu0
        %v5565 = vadd.f32 %v5545, %v5564
        %5566 = vdwg.mxu0
        %5567 = vmatpush.msra.mxu0 %v5488
        %5568 = vmatpush.msra.mxu0 %v5486
        %5569 = vmatpush.msra.mxu0 %v5484
        %5570 = vmatpush.msra.mxu0 %v5482
        %5571 = vmatpush.msra.mxu0 %v5480
        %5572 = vmatpush.msra.mxu0 %v5478
        %5573 = vmatpush.msra.mxu0 %v5476
        %5574 = vmatpush.msra.mxu0 %v5474
        %5575 = vmatpush.msra.mxu0 %v5472
        %5576 = vmatpush.msra.mxu0 %v5470
        %5577 = vmatpush.msra.mxu0 %v5468
        %5578 = vmatpush.msra.mxu0 %v5466
        %5579 = vmatpush.msra.mxu0 %v5464
        %5580 = vmatpush.msra.mxu0 %v5462
        %5581 = vmatpush.msra.mxu0 %v5460
        %5582 = vmatpush.msra.mxu0 %v5458
        %5583 = vmatmul.f32.gmra.mxu0 %v5295
        %v5584 = vpop.f32.mrf.mxu0
        %v5585 = vadd.f32 %v5524, %v5584
        %5586 = vdwg.mxu0
        %5587 = vmatpush.msra.mxu0 %v5520
        %5588 = vmatpush.msra.mxu0 %v5518
        %5589 = vmatpush.msra.mxu0 %v5516
        %5590 = vmatpush.msra.mxu0 %v5514
        %5591 = vmatpush.msra.mxu0 %v5512
        %5592 = vmatpush.msra.mxu0 %v5510
        %5593 = vmatpush.msra.mxu0 %v5508
        %5594 = vmatpush.msra.mxu0 %v5506
        %5595 = vmatpush.msra.mxu0 %v5504
        %5596 = vmatpush.msra.mxu0 %v5502
        %5597 = vmatpush.msra.mxu0 %v5500
        %5598 = vmatpush.msra.mxu0 %v5498
        %5599 = vmatpush.msra.mxu0 %v5496
        %5600 = vmatpush.msra.mxu0 %v5494
        %5601 = vmatpush.msra.mxu0 %v5492
        %5602 = vmatpush.msra.mxu0 %v5490
        %5603 = vmatmul.f32.gmra.mxu0 %v5296
        %v5604 = vpop.f32.mrf.mxu0
        %v5605 = vadd.f32 %v5585, %v5604
        %5606 = vdwg.mxu0
        %v5607 = vmax.f32 %v5565, 0.0
        %v5608 = vmax.f32 %v5605, 0.0
        %v5611 = vrot.slane %v5608, 7
        %v5612 = vsel %vm4175, %v5607, %v5611
        %s5614 = scalar_lea.vmem [#allocation2], 1
        %5615 = vst.msk [vmem:[%s5614] ss:$8 sm:$0x3] %vm5453, %v5612
        %5616 = vst.msk [vmem:[%s5614] ss:$8 sm:$0x0] %vm5453, %v5612
        %s5617 = scalar_lea.vmem %s39, 1024
        %v5618 = vld [vmem:[%s5617] sm:$0xff]
        %v5619 = vld [vmem:[%s5617 + $0x8] sm:$0xff]
        %v5620 = vld [vmem:[%s5617 + $0x10] sm:$0xff]
        %v5621 = vld [vmem:[%s5617 + $0x18] sm:$0xff]
        %v5622 = vld [vmem:[%s5617 + $0x20] sm:$0xff]
        %v5623 = vld [vmem:[%s5617 + $0x28] sm:$0xff]
        %v5624 = vld [vmem:[%s5617 + $0x30] sm:$0xff]
        %v5625 = vld [vmem:[%s5617 + $0x38] sm:$0xff]
        %v5626 = vld [vmem:[%s5617 + $0x40] sm:$0xff]
        %v5627 = vld [vmem:[%s5617 + $0x48] sm:$0xff]
        %v5628 = vld [vmem:[%s5617 + $0x50] sm:$0xff]
        %v5629 = vld [vmem:[%s5617 + $0x58] sm:$0xff]
        %v5630 = vld [vmem:[%s5617 + $0x60] sm:$0xff]
        %v5631 = vld [vmem:[%s5617 + $0x68] sm:$0xff]
        %v5632 = vld [vmem:[%s5617 + $0x70] sm:$0xff]
        %v5633 = vld [vmem:[%s5617 + $0x78] sm:$0xff]
        %v5634 = vld [vmem:[%s5617 + $0x80] sm:$0xff]
        %v5635 = vld [vmem:[%s5617 + $0x88] sm:$0xff]
        %v5636 = vld [vmem:[%s5617 + $0x90] sm:$0xff]
        %v5637 = vld [vmem:[%s5617 + $0x98] sm:$0xff]
        %v5638 = vld [vmem:[%s5617 + $0xa0] sm:$0xff]
        %v5639 = vld [vmem:[%s5617 + $0xa8] sm:$0xff]
        %v5640 = vld [vmem:[%s5617 + $0xb0] sm:$0xff]
        %v5641 = vld [vmem:[%s5617 + $0xb8] sm:$0xff]
        %v5642 = vld [vmem:[%s5617 + $0xc0] sm:$0xff]
        %v5643 = vld [vmem:[%s5617 + $0xc8] sm:$0xff]
        %v5644 = vld [vmem:[%s5617 + $0xd0] sm:$0xff]
        %v5645 = vld [vmem:[%s5617 + $0xd8] sm:$0xff]
        %v5646 = vld [vmem:[%s5617 + $0xe0] sm:$0xff]
        %v5647 = vld [vmem:[%s5617 + $0xe8] sm:$0xff]
        %v5648 = vld [vmem:[%s5617 + $0xf0] sm:$0xff]
        %v5649 = vld [vmem:[%s5617 + $0xf8] sm:$0xff]
        %v5650 = vld [vmem:[%s5617 + $0x100] sm:$0xff]
        %v5651 = vld [vmem:[%s5617 + $0x108] sm:$0xff]
        %v5652 = vld [vmem:[%s5617 + $0x110] sm:$0xff]
        %v5653 = vld [vmem:[%s5617 + $0x118] sm:$0xff]
        %v5654 = vld [vmem:[%s5617 + $0x120] sm:$0xff]
        %v5655 = vld [vmem:[%s5617 + $0x128] sm:$0xff]
        %v5656 = vld [vmem:[%s5617 + $0x130] sm:$0xff]
        %v5657 = vld [vmem:[%s5617 + $0x138] sm:$0xff]
        %v5658 = vld [vmem:[%s5617 + $0x140] sm:$0xff]
        %v5659 = vld [vmem:[%s5617 + $0x148] sm:$0xff]
        %v5660 = vld [vmem:[%s5617 + $0x150] sm:$0xff]
        %v5661 = vld [vmem:[%s5617 + $0x158] sm:$0xff]
        %v5662 = vld [vmem:[%s5617 + $0x160] sm:$0xff]
        %v5663 = vld [vmem:[%s5617 + $0x168] sm:$0xff]
        %v5664 = vld [vmem:[%s5617 + $0x170] sm:$0xff]
        %v5665 = vld [vmem:[%s5617 + $0x178] sm:$0xff]
        %v5666 = vld [vmem:[%s5617 + $0x180] sm:$0xff]
        %v5667 = vld [vmem:[%s5617 + $0x188] sm:$0xff]
        %v5668 = vld [vmem:[%s5617 + $0x190] sm:$0xff]
        %v5669 = vld [vmem:[%s5617 + $0x198] sm:$0xff]
        %v5670 = vld [vmem:[%s5617 + $0x1a0] sm:$0xff]
        %v5671 = vld [vmem:[%s5617 + $0x1a8] sm:$0xff]
        %v5672 = vld [vmem:[%s5617 + $0x1b0] sm:$0xff]
        %v5673 = vld [vmem:[%s5617 + $0x1b8] sm:$0xff]
        %v5674 = vld [vmem:[%s5617 + $0x1c0] sm:$0xff]
        %v5675 = vld [vmem:[%s5617 + $0x1c8] sm:$0xff]
        %v5676 = vld [vmem:[%s5617 + $0x1d0] sm:$0xff]
        %v5677 = vld [vmem:[%s5617 + $0x1d8] sm:$0xff]
        %v5678 = vld [vmem:[%s5617 + $0x1e0] sm:$0xff]
        %v5679 = vld [vmem:[%s5617 + $0x1e8] sm:$0xff]
        %v5680 = vld [vmem:[%s5617 + $0x1f0] sm:$0xff]
        %v5681 = vld [vmem:[%s5617 + $0x1f8] sm:$0xff]
        %v5682 = vrot.slane %v5297, 2
        %v5683 = vrot.slane %v5298, 2
        %5686 = vmatpush.msra.mxu0 %v5648
        %5687 = vmatpush.msra.mxu0 %v5646
        %5688 = vmatpush.msra.mxu0 %v5644
        %5689 = vmatpush.msra.mxu0 %v5642
        %5690 = vmatpush.msra.mxu0 %v5640
        %5691 = vmatpush.msra.mxu0 %v5638
        %5692 = vmatpush.msra.mxu0 %v5636
        %5693 = vmatpush.msra.mxu0 %v5634
        %5694 = vmatpush.msra.mxu0 %v5632
        %5695 = vmatpush.msra.mxu0 %v5630
        %5696 = vmatpush.msra.mxu0 %v5628
        %5697 = vmatpush.msra.mxu0 %v5626
        %5698 = vmatpush.msra.mxu0 %v5624
        %5699 = vmatpush.msra.mxu0 %v5622
        %5700 = vmatpush.msra.mxu0 %v5620
        %5701 = vmatpush.msra.mxu0 %v5618
        %5702 = vmatmul.f32.gmra.mxu0 %v5295
        %v5703 = vpop.f32.mrf.mxu0
        %v5704 = vadd.f32 %v5682, %v5703
        %5705 = vdwg.mxu0
        %5706 = vmatpush.msra.mxu0 %v5680
        %5707 = vmatpush.msra.mxu0 %v5678
        %5708 = vmatpush.msra.mxu0 %v5676
        %5709 = vmatpush.msra.mxu0 %v5674
        %5710 = vmatpush.msra.mxu0 %v5672
        %5711 = vmatpush.msra.mxu0 %v5670
        %5712 = vmatpush.msra.mxu0 %v5668
        %5713 = vmatpush.msra.mxu0 %v5666
        %5714 = vmatpush.msra.mxu0 %v5664
        %5715 = vmatpush.msra.mxu0 %v5662
        %5716 = vmatpush.msra.mxu0 %v5660
        %5717 = vmatpush.msra.mxu0 %v5658
        %5718 = vmatpush.msra.mxu0 %v5656
        %5719 = vmatpush.msra.mxu0 %v5654
        %5720 = vmatpush.msra.mxu0 %v5652
        %5721 = vmatpush.msra.mxu0 %v5650
        %5722 = vmatmul.f32.gmra.mxu0 %v5296
        %v5723 = vpop.f32.mrf.mxu0
        %v5724 = vadd.f32 %v5704, %v5723
        %5725 = vdwg.mxu0
        %5726 = vmatpush.msra.mxu0 %v5649
        %5727 = vmatpush.msra.mxu0 %v5647
        %5728 = vmatpush.msra.mxu0 %v5645
        %5729 = vmatpush.msra.mxu0 %v5643
        %5730 = vmatpush.msra.mxu0 %v5641
        %5731 = vmatpush.msra.mxu0 %v5639
        %5732 = vmatpush.msra.mxu0 %v5637
        %5733 = vmatpush.msra.mxu0 %v5635
        %5734 = vmatpush.msra.mxu0 %v5633
        %5735 = vmatpush.msra.mxu0 %v5631
        %5736 = vmatpush.msra.mxu0 %v5629
        %5737 = vmatpush.msra.mxu0 %v5627
        %5738 = vmatpush.msra.mxu0 %v5625
        %5739 = vmatpush.msra.mxu0 %v5623
        %5740 = vmatpush.msra.mxu0 %v5621
        %5741 = vmatpush.msra.mxu0 %v5619
        %5742 = vmatmul.f32.gmra.mxu0 %v5295
        %v5743 = vpop.f32.mrf.mxu0
        %v5744 = vadd.f32 %v5683, %v5743
        %5745 = vdwg.mxu0
        %5746 = vmatpush.msra.mxu0 %v5681
        %5747 = vmatpush.msra.mxu0 %v5679
        %5748 = vmatpush.msra.mxu0 %v5677
        %5749 = vmatpush.msra.mxu0 %v5675
        %5750 = vmatpush.msra.mxu0 %v5673
        %5751 = vmatpush.msra.mxu0 %v5671
        %5752 = vmatpush.msra.mxu0 %v5669
        %5753 = vmatpush.msra.mxu0 %v5667
        %5754 = vmatpush.msra.mxu0 %v5665
        %5755 = vmatpush.msra.mxu0 %v5663
        %5756 = vmatpush.msra.mxu0 %v5661
        %5757 = vmatpush.msra.mxu0 %v5659
        %5758 = vmatpush.msra.mxu0 %v5657
        %5759 = vmatpush.msra.mxu0 %v5655
        %5760 = vmatpush.msra.mxu0 %v5653
        %5761 = vmatpush.msra.mxu0 %v5651
        %5762 = vmatmul.f32.gmra.mxu0 %v5296
        %v5763 = vpop.f32.mrf.mxu0
        %v5764 = vadd.f32 %v5744, %v5763
        %5765 = vdwg.mxu0
        %v5766 = vmax.f32 %v5724, 0.0
        %v5767 = vmax.f32 %v5764, 0.0
        %v5770 = vrot.slane %v5767, 7
        %v5771 = vsel %vm4175, %v5766, %v5770
        %s5773 = scalar_lea.vmem [#allocation2], 2
        %5774 = vst.msk [vmem:[%s5773] ss:$8 sm:$0x3] %vm5453, %v5771
        %5775 = vst.msk [vmem:[%s5773] ss:$8 sm:$0x0] %vm5453, %v5771
        %s5776 = scalar_lea.vmem %s39, 1536
        %v5777 = vld [vmem:[%s5776] sm:$0xff]
        %v5778 = vld [vmem:[%s5776 + $0x8] sm:$0xff]
        %v5779 = vld [vmem:[%s5776 + $0x10] sm:$0xff]
        %v5780 = vld [vmem:[%s5776 + $0x18] sm:$0xff]
        %v5781 = vld [vmem:[%s5776 + $0x20] sm:$0xff]
        %v5782 = vld [vmem:[%s5776 + $0x28] sm:$0xff]
        %v5783 = vld [vmem:[%s5776 + $0x30] sm:$0xff]
        %v5784 = vld [vmem:[%s5776 + $0x38] sm:$0xff]
        %v5785 = vld [vmem:[%s5776 + $0x40] sm:$0xff]
        %v5786 = vld [vmem:[%s5776 + $0x48] sm:$0xff]
        %v5787 = vld [vmem:[%s5776 + $0x50] sm:$0xff]
        %v5788 = vld [vmem:[%s5776 + $0x58] sm:$0xff]
        %v5789 = vld [vmem:[%s5776 + $0x60] sm:$0xff]
        %v5790 = vld [vmem:[%s5776 + $0x68] sm:$0xff]
        %v5791 = vld [vmem:[%s5776 + $0x70] sm:$0xff]
        %v5792 = vld [vmem:[%s5776 + $0x78] sm:$0xff]
        %v5793 = vld [vmem:[%s5776 + $0x80] sm:$0xff]
        %v5794 = vld [vmem:[%s5776 + $0x88] sm:$0xff]
        %v5795 = vld [vmem:[%s5776 + $0x90] sm:$0xff]
        %v5796 = vld [vmem:[%s5776 + $0x98] sm:$0xff]
        %v5797 = vld [vmem:[%s5776 + $0xa0] sm:$0xff]
        %v5798 = vld [vmem:[%s5776 + $0xa8] sm:$0xff]
        %v5799 = vld [vmem:[%s5776 + $0xb0] sm:$0xff]
        %v5800 = vld [vmem:[%s5776 + $0xb8] sm:$0xff]
        %v5801 = vld [vmem:[%s5776 + $0xc0] sm:$0xff]
        %v5802 = vld [vmem:[%s5776 + $0xc8] sm:$0xff]
        %v5803 = vld [vmem:[%s5776 + $0xd0] sm:$0xff]
        %v5804 = vld [vmem:[%s5776 + $0xd8] sm:$0xff]
        %v5805 = vld [vmem:[%s5776 + $0xe0] sm:$0xff]
        %v5806 = vld [vmem:[%s5776 + $0xe8] sm:$0xff]
        %v5807 = vld [vmem:[%s5776 + $0xf0] sm:$0xff]
        %v5808 = vld [vmem:[%s5776 + $0xf8] sm:$0xff]
        %v5809 = vld [vmem:[%s5776 + $0x100] sm:$0xff]
        %v5810 = vld [vmem:[%s5776 + $0x108] sm:$0xff]
        %v5811 = vld [vmem:[%s5776 + $0x110] sm:$0xff]
        %v5812 = vld [vmem:[%s5776 + $0x118] sm:$0xff]
        %v5813 = vld [vmem:[%s5776 + $0x120] sm:$0xff]
        %v5814 = vld [vmem:[%s5776 + $0x128] sm:$0xff]
        %v5815 = vld [vmem:[%s5776 + $0x130] sm:$0xff]
        %v5816 = vld [vmem:[%s5776 + $0x138] sm:$0xff]
        %v5817 = vld [vmem:[%s5776 + $0x140] sm:$0xff]
        %v5818 = vld [vmem:[%s5776 + $0x148] sm:$0xff]
        %v5819 = vld [vmem:[%s5776 + $0x150] sm:$0xff]
        %v5820 = vld [vmem:[%s5776 + $0x158] sm:$0xff]
        %v5821 = vld [vmem:[%s5776 + $0x160] sm:$0xff]
        %v5822 = vld [vmem:[%s5776 + $0x168] sm:$0xff]
        %v5823 = vld [vmem:[%s5776 + $0x170] sm:$0xff]
        %v5824 = vld [vmem:[%s5776 + $0x178] sm:$0xff]
        %v5825 = vld [vmem:[%s5776 + $0x180] sm:$0xff]
        %v5826 = vld [vmem:[%s5776 + $0x188] sm:$0xff]
        %v5827 = vld [vmem:[%s5776 + $0x190] sm:$0xff]
        %v5828 = vld [vmem:[%s5776 + $0x198] sm:$0xff]
        %v5829 = vld [vmem:[%s5776 + $0x1a0] sm:$0xff]
        %v5830 = vld [vmem:[%s5776 + $0x1a8] sm:$0xff]
        %v5831 = vld [vmem:[%s5776 + $0x1b0] sm:$0xff]
        %v5832 = vld [vmem:[%s5776 + $0x1b8] sm:$0xff]
        %v5833 = vld [vmem:[%s5776 + $0x1c0] sm:$0xff]
        %v5834 = vld [vmem:[%s5776 + $0x1c8] sm:$0xff]
        %v5835 = vld [vmem:[%s5776 + $0x1d0] sm:$0xff]
        %v5836 = vld [vmem:[%s5776 + $0x1d8] sm:$0xff]
        %v5837 = vld [vmem:[%s5776 + $0x1e0] sm:$0xff]
        %v5838 = vld [vmem:[%s5776 + $0x1e8] sm:$0xff]
        %v5839 = vld [vmem:[%s5776 + $0x1f0] sm:$0xff]
        %v5840 = vld [vmem:[%s5776 + $0x1f8] sm:$0xff]
        %v5841 = vrot.slane %v5297, 3
        %v5842 = vrot.slane %v5298, 3
        %5845 = vmatpush.msra.mxu0 %v5807
        %5846 = vmatpush.msra.mxu0 %v5805
        %5847 = vmatpush.msra.mxu0 %v5803
        %5848 = vmatpush.msra.mxu0 %v5801
        %5849 = vmatpush.msra.mxu0 %v5799
        %5850 = vmatpush.msra.mxu0 %v5797
        %5851 = vmatpush.msra.mxu0 %v5795
        %5852 = vmatpush.msra.mxu0 %v5793
        %5853 = vmatpush.msra.mxu0 %v5791
        %5854 = vmatpush.msra.mxu0 %v5789
        %5855 = vmatpush.msra.mxu0 %v5787
        %5856 = vmatpush.msra.mxu0 %v5785
        %5857 = vmatpush.msra.mxu0 %v5783
        %5858 = vmatpush.msra.mxu0 %v5781
        %5859 = vmatpush.msra.mxu0 %v5779
        %5860 = vmatpush.msra.mxu0 %v5777
        %5861 = vmatmul.f32.gmra.mxu0 %v5295
        %v5862 = vpop.f32.mrf.mxu0
        %v5863 = vadd.f32 %v5841, %v5862
        %5864 = vdwg.mxu0
        %5865 = vmatpush.msra.mxu0 %v5839
        %5866 = vmatpush.msra.mxu0 %v5837
        %5867 = vmatpush.msra.mxu0 %v5835
        %5868 = vmatpush.msra.mxu0 %v5833
        %5869 = vmatpush.msra.mxu0 %v5831
        %5870 = vmatpush.msra.mxu0 %v5829
        %5871 = vmatpush.msra.mxu0 %v5827
        %5872 = vmatpush.msra.mxu0 %v5825
        %5873 = vmatpush.msra.mxu0 %v5823
        %5874 = vmatpush.msra.mxu0 %v5821
        %5875 = vmatpush.msra.mxu0 %v5819
        %5876 = vmatpush.msra.mxu0 %v5817
        %5877 = vmatpush.msra.mxu0 %v5815
        %5878 = vmatpush.msra.mxu0 %v5813
        %5879 = vmatpush.msra.mxu0 %v5811
        %5880 = vmatpush.msra.mxu0 %v5809
        %5881 = vmatmul.f32.gmra.mxu0 %v5296
        %v5882 = vpop.f32.mrf.mxu0
        %v5883 = vadd.f32 %v5863, %v5882
        %5884 = vdwg.mxu0
        %5885 = vmatpush.msra.mxu0 %v5808
        %5886 = vmatpush.msra.mxu0 %v5806
        %5887 = vmatpush.msra.mxu0 %v5804
        %5888 = vmatpush.msra.mxu0 %v5802
        %5889 = vmatpush.msra.mxu0 %v5800
        %5890 = vmatpush.msra.mxu0 %v5798
        %5891 = vmatpush.msra.mxu0 %v5796
        %5892 = vmatpush.msra.mxu0 %v5794
        %5893 = vmatpush.msra.mxu0 %v5792
        %5894 = vmatpush.msra.mxu0 %v5790
        %5895 = vmatpush.msra.mxu0 %v5788
        %5896 = vmatpush.msra.mxu0 %v5786
        %5897 = vmatpush.msra.mxu0 %v5784
        %5898 = vmatpush.msra.mxu0 %v5782
        %5899 = vmatpush.msra.mxu0 %v5780
        %5900 = vmatpush.msra.mxu0 %v5778
        %5901 = vmatmul.f32.gmra.mxu0 %v5295
        %v5902 = vpop.f32.mrf.mxu0
        %v5903 = vadd.f32 %v5842, %v5902
        %5904 = vdwg.mxu0
        %5905 = vmatpush.msra.mxu0 %v5840
        %5906 = vmatpush.msra.mxu0 %v5838
        %5907 = vmatpush.msra.mxu0 %v5836
        %5908 = vmatpush.msra.mxu0 %v5834
        %5909 = vmatpush.msra.mxu0 %v5832
        %5910 = vmatpush.msra.mxu0 %v5830
        %5911 = vmatpush.msra.mxu0 %v5828
        %5912 = vmatpush.msra.mxu0 %v5826
        %5913 = vmatpush.msra.mxu0 %v5824
        %5914 = vmatpush.msra.mxu0 %v5822
        %5915 = vmatpush.msra.mxu0 %v5820
        %5916 = vmatpush.msra.mxu0 %v5818
        %5917 = vmatpush.msra.mxu0 %v5816
        %5918 = vmatpush.msra.mxu0 %v5814
        %5919 = vmatpush.msra.mxu0 %v5812
        %5920 = vmatpush.msra.mxu0 %v5810
        %5921 = vmatmul.f32.gmra.mxu0 %v5296
        %v5922 = vpop.f32.mrf.mxu0
        %v5923 = vadd.f32 %v5903, %v5922
        %5924 = vdwg.mxu0
        %v5925 = vmax.f32 %v5883, 0.0
        %v5926 = vmax.f32 %v5923, 0.0
        %v5929 = vrot.slane %v5926, 7
        %v5930 = vsel %vm4175, %v5925, %v5929
        %s5932 = scalar_lea.vmem [#allocation2], 3
        %5933 = vst.msk [vmem:[%s5932] ss:$8 sm:$0x3] %vm5453, %v5930
        %5934 = vst.msk [vmem:[%s5932] ss:$8 sm:$0x0] %vm5453, %v5930
        %s5935 = scalar_lea.vmem %s39, 2048
        %v5936 = vld [vmem:[%s5935] sm:$0xff]
        %v5937 = vld [vmem:[%s5935 + $0x8] sm:$0xff]
        %v5938 = vld [vmem:[%s5935 + $0x10] sm:$0xff]
        %v5939 = vld [vmem:[%s5935 + $0x18] sm:$0xff]
        %v5940 = vld [vmem:[%s5935 + $0x20] sm:$0xff]
        %v5941 = vld [vmem:[%s5935 + $0x28] sm:$0xff]
        %v5942 = vld [vmem:[%s5935 + $0x30] sm:$0xff]
        %v5943 = vld [vmem:[%s5935 + $0x38] sm:$0xff]
        %v5944 = vld [vmem:[%s5935 + $0x40] sm:$0xff]
        %v5945 = vld [vmem:[%s5935 + $0x48] sm:$0xff]
        %v5946 = vld [vmem:[%s5935 + $0x50] sm:$0xff]
        %v5947 = vld [vmem:[%s5935 + $0x58] sm:$0xff]
        %v5948 = vld [vmem:[%s5935 + $0x60] sm:$0xff]
        %v5949 = vld [vmem:[%s5935 + $0x68] sm:$0xff]
        %v5950 = vld [vmem:[%s5935 + $0x70] sm:$0xff]
        %v5951 = vld [vmem:[%s5935 + $0x78] sm:$0xff]
        %v5952 = vld [vmem:[%s5935 + $0x80] sm:$0xff]
        %v5953 = vld [vmem:[%s5935 + $0x88] sm:$0xff]
        %v5954 = vld [vmem:[%s5935 + $0x90] sm:$0xff]
        %v5955 = vld [vmem:[%s5935 + $0x98] sm:$0xff]
        %v5956 = vld [vmem:[%s5935 + $0xa0] sm:$0xff]
        %v5957 = vld [vmem:[%s5935 + $0xa8] sm:$0xff]
        %v5958 = vld [vmem:[%s5935 + $0xb0] sm:$0xff]
        %v5959 = vld [vmem:[%s5935 + $0xb8] sm:$0xff]
        %v5960 = vld [vmem:[%s5935 + $0xc0] sm:$0xff]
        %v5961 = vld [vmem:[%s5935 + $0xc8] sm:$0xff]
        %v5962 = vld [vmem:[%s5935 + $0xd0] sm:$0xff]
        %v5963 = vld [vmem:[%s5935 + $0xd8] sm:$0xff]
        %v5964 = vld [vmem:[%s5935 + $0xe0] sm:$0xff]
        %v5965 = vld [vmem:[%s5935 + $0xe8] sm:$0xff]
        %v5966 = vld [vmem:[%s5935 + $0xf0] sm:$0xff]
        %v5967 = vld [vmem:[%s5935 + $0xf8] sm:$0xff]
        %v5968 = vld [vmem:[%s5935 + $0x100] sm:$0xff]
        %v5969 = vld [vmem:[%s5935 + $0x108] sm:$0xff]
        %v5970 = vld [vmem:[%s5935 + $0x110] sm:$0xff]
        %v5971 = vld [vmem:[%s5935 + $0x118] sm:$0xff]
        %v5972 = vld [vmem:[%s5935 + $0x120] sm:$0xff]
        %v5973 = vld [vmem:[%s5935 + $0x128] sm:$0xff]
        %v5974 = vld [vmem:[%s5935 + $0x130] sm:$0xff]
        %v5975 = vld [vmem:[%s5935 + $0x138] sm:$0xff]
        %v5976 = vld [vmem:[%s5935 + $0x140] sm:$0xff]
        %v5977 = vld [vmem:[%s5935 + $0x148] sm:$0xff]
        %v5978 = vld [vmem:[%s5935 + $0x150] sm:$0xff]
        %v5979 = vld [vmem:[%s5935 + $0x158] sm:$0xff]
        %v5980 = vld [vmem:[%s5935 + $0x160] sm:$0xff]
        %v5981 = vld [vmem:[%s5935 + $0x168] sm:$0xff]
        %v5982 = vld [vmem:[%s5935 + $0x170] sm:$0xff]
        %v5983 = vld [vmem:[%s5935 + $0x178] sm:$0xff]
        %v5984 = vld [vmem:[%s5935 + $0x180] sm:$0xff]
        %v5985 = vld [vmem:[%s5935 + $0x188] sm:$0xff]
        %v5986 = vld [vmem:[%s5935 + $0x190] sm:$0xff]
        %v5987 = vld [vmem:[%s5935 + $0x198] sm:$0xff]
        %v5988 = vld [vmem:[%s5935 + $0x1a0] sm:$0xff]
        %v5989 = vld [vmem:[%s5935 + $0x1a8] sm:$0xff]
        %v5990 = vld [vmem:[%s5935 + $0x1b0] sm:$0xff]
        %v5991 = vld [vmem:[%s5935 + $0x1b8] sm:$0xff]
        %v5992 = vld [vmem:[%s5935 + $0x1c0] sm:$0xff]
        %v5993 = vld [vmem:[%s5935 + $0x1c8] sm:$0xff]
        %v5994 = vld [vmem:[%s5935 + $0x1d0] sm:$0xff]
        %v5995 = vld [vmem:[%s5935 + $0x1d8] sm:$0xff]
        %v5996 = vld [vmem:[%s5935 + $0x1e0] sm:$0xff]
        %v5997 = vld [vmem:[%s5935 + $0x1e8] sm:$0xff]
        %v5998 = vld [vmem:[%s5935 + $0x1f0] sm:$0xff]
        %v5999 = vld [vmem:[%s5935 + $0x1f8] sm:$0xff]
        %v6000 = vrot.slane %v5297, 4
        %v6001 = vrot.slane %v5298, 4
        %6004 = vmatpush.msra.mxu0 %v5966
        %6005 = vmatpush.msra.mxu0 %v5964
        %6006 = vmatpush.msra.mxu0 %v5962
        %6007 = vmatpush.msra.mxu0 %v5960
        %6008 = vmatpush.msra.mxu0 %v5958
        %6009 = vmatpush.msra.mxu0 %v5956
        %6010 = vmatpush.msra.mxu0 %v5954
        %6011 = vmatpush.msra.mxu0 %v5952
        %6012 = vmatpush.msra.mxu0 %v5950
        %6013 = vmatpush.msra.mxu0 %v5948
        %6014 = vmatpush.msra.mxu0 %v5946
        %6015 = vmatpush.msra.mxu0 %v5944
        %6016 = vmatpush.msra.mxu0 %v5942
        %6017 = vmatpush.msra.mxu0 %v5940
        %6018 = vmatpush.msra.mxu0 %v5938
        %6019 = vmatpush.msra.mxu0 %v5936
        %6020 = vmatmul.f32.gmra.mxu0 %v5295
        %v6021 = vpop.f32.mrf.mxu0
        %v6022 = vadd.f32 %v6000, %v6021
        %6023 = vdwg.mxu0
        %6024 = vmatpush.msra.mxu0 %v5998
        %6025 = vmatpush.msra.mxu0 %v5996
        %6026 = vmatpush.msra.mxu0 %v5994
        %6027 = vmatpush.msra.mxu0 %v5992
        %6028 = vmatpush.msra.mxu0 %v5990
        %6029 = vmatpush.msra.mxu0 %v5988
        %6030 = vmatpush.msra.mxu0 %v5986
        %6031 = vmatpush.msra.mxu0 %v5984
        %6032 = vmatpush.msra.mxu0 %v5982
        %6033 = vmatpush.msra.mxu0 %v5980
        %6034 = vmatpush.msra.mxu0 %v5978
        %6035 = vmatpush.msra.mxu0 %v5976
        %6036 = vmatpush.msra.mxu0 %v5974
        %6037 = vmatpush.msra.mxu0 %v5972
        %6038 = vmatpush.msra.mxu0 %v5970
        %6039 = vmatpush.msra.mxu0 %v5968
        %6040 = vmatmul.f32.gmra.mxu0 %v5296
        %v6041 = vpop.f32.mrf.mxu0
        %v6042 = vadd.f32 %v6022, %v6041
        %6043 = vdwg.mxu0
        %6044 = vmatpush.msra.mxu0 %v5967
        %6045 = vmatpush.msra.mxu0 %v5965
        %6046 = vmatpush.msra.mxu0 %v5963
        %6047 = vmatpush.msra.mxu0 %v5961
        %6048 = vmatpush.msra.mxu0 %v5959
        %6049 = vmatpush.msra.mxu0 %v5957
        %6050 = vmatpush.msra.mxu0 %v5955
        %6051 = vmatpush.msra.mxu0 %v5953
        %6052 = vmatpush.msra.mxu0 %v5951
        %6053 = vmatpush.msra.mxu0 %v5949
        %6054 = vmatpush.msra.mxu0 %v5947
        %6055 = vmatpush.msra.mxu0 %v5945
        %6056 = vmatpush.msra.mxu0 %v5943
        %6057 = vmatpush.msra.mxu0 %v5941
        %6058 = vmatpush.msra.mxu0 %v5939
        %6059 = vmatpush.msra.mxu0 %v5937
        %6060 = vmatmul.f32.gmra.mxu0 %v5295
        %v6061 = vpop.f32.mrf.mxu0
        %v6062 = vadd.f32 %v6001, %v6061
        %6063 = vdwg.mxu0
        %6064 = vmatpush.msra.mxu0 %v5999
        %6065 = vmatpush.msra.mxu0 %v5997
        %6066 = vmatpush.msra.mxu0 %v5995
        %6067 = vmatpush.msra.mxu0 %v5993
        %6068 = vmatpush.msra.mxu0 %v5991
        %6069 = vmatpush.msra.mxu0 %v5989
        %6070 = vmatpush.msra.mxu0 %v5987
        %6071 = vmatpush.msra.mxu0 %v5985
        %6072 = vmatpush.msra.mxu0 %v5983
        %6073 = vmatpush.msra.mxu0 %v5981
        %6074 = vmatpush.msra.mxu0 %v5979
        %6075 = vmatpush.msra.mxu0 %v5977
        %6076 = vmatpush.msra.mxu0 %v5975
        %6077 = vmatpush.msra.mxu0 %v5973
        %6078 = vmatpush.msra.mxu0 %v5971
        %6079 = vmatpush.msra.mxu0 %v5969
        %6080 = vmatmul.f32.gmra.mxu0 %v5296
        %v6081 = vpop.f32.mrf.mxu0
        %v6082 = vadd.f32 %v6062, %v6081
        %6083 = vdwg.mxu0
        %v6084 = vmax.f32 %v6042, 0.0
        %v6085 = vmax.f32 %v6082, 0.0
        %v6088 = vrot.slane %v6085, 7
        %v6089 = vsel %vm4175, %v6084, %v6088
        %s6091 = scalar_lea.vmem [#allocation2], 4
        %6092 = vst.msk [vmem:[%s6091] ss:$8 sm:$0x3] %vm5453, %v6089
        %6093 = vst.msk [vmem:[%s6091] ss:$8 sm:$0x0] %vm5453, %v6089
        %s6094 = scalar_lea.vmem %s39, 2560
        %v6095 = vld [vmem:[%s6094] sm:$0xff]
        %v6096 = vld [vmem:[%s6094 + $0x8] sm:$0xff]
        %v6097 = vld [vmem:[%s6094 + $0x10] sm:$0xff]
        %v6098 = vld [vmem:[%s6094 + $0x18] sm:$0xff]
        %v6099 = vld [vmem:[%s6094 + $0x20] sm:$0xff]
        %v6100 = vld [vmem:[%s6094 + $0x28] sm:$0xff]
        %v6101 = vld [vmem:[%s6094 + $0x30] sm:$0xff]
        %v6102 = vld [vmem:[%s6094 + $0x38] sm:$0xff]
        %v6103 = vld [vmem:[%s6094 + $0x40] sm:$0xff]
        %v6104 = vld [vmem:[%s6094 + $0x48] sm:$0xff]
        %v6105 = vld [vmem:[%s6094 + $0x50] sm:$0xff]
        %v6106 = vld [vmem:[%s6094 + $0x58] sm:$0xff]
        %v6107 = vld [vmem:[%s6094 + $0x60] sm:$0xff]
        %v6108 = vld [vmem:[%s6094 + $0x68] sm:$0xff]
        %v6109 = vld [vmem:[%s6094 + $0x70] sm:$0xff]
        %v6110 = vld [vmem:[%s6094 + $0x78] sm:$0xff]
        %v6111 = vld [vmem:[%s6094 + $0x80] sm:$0xff]
        %v6112 = vld [vmem:[%s6094 + $0x88] sm:$0xff]
        %v6113 = vld [vmem:[%s6094 + $0x90] sm:$0xff]
        %v6114 = vld [vmem:[%s6094 + $0x98] sm:$0xff]
        %v6115 = vld [vmem:[%s6094 + $0xa0] sm:$0xff]
        %v6116 = vld [vmem:[%s6094 + $0xa8] sm:$0xff]
        %v6117 = vld [vmem:[%s6094 + $0xb0] sm:$0xff]
        %v6118 = vld [vmem:[%s6094 + $0xb8] sm:$0xff]
        %v6119 = vld [vmem:[%s6094 + $0xc0] sm:$0xff]
        %v6120 = vld [vmem:[%s6094 + $0xc8] sm:$0xff]
        %v6121 = vld [vmem:[%s6094 + $0xd0] sm:$0xff]
        %v6122 = vld [vmem:[%s6094 + $0xd8] sm:$0xff]
        %v6123 = vld [vmem:[%s6094 + $0xe0] sm:$0xff]
        %v6124 = vld [vmem:[%s6094 + $0xe8] sm:$0xff]
        %v6125 = vld [vmem:[%s6094 + $0xf0] sm:$0xff]
        %v6126 = vld [vmem:[%s6094 + $0xf8] sm:$0xff]
        %v6127 = vld [vmem:[%s6094 + $0x100] sm:$0xff]
        %v6128 = vld [vmem:[%s6094 + $0x108] sm:$0xff]
        %v6129 = vld [vmem:[%s6094 + $0x110] sm:$0xff]
        %v6130 = vld [vmem:[%s6094 + $0x118] sm:$0xff]
        %v6131 = vld [vmem:[%s6094 + $0x120] sm:$0xff]
        %v6132 = vld [vmem:[%s6094 + $0x128] sm:$0xff]
        %v6133 = vld [vmem:[%s6094 + $0x130] sm:$0xff]
        %v6134 = vld [vmem:[%s6094 + $0x138] sm:$0xff]
        %v6135 = vld [vmem:[%s6094 + $0x140] sm:$0xff]
        %v6136 = vld [vmem:[%s6094 + $0x148] sm:$0xff]
        %v6137 = vld [vmem:[%s6094 + $0x150] sm:$0xff]
        %v6138 = vld [vmem:[%s6094 + $0x158] sm:$0xff]
        %v6139 = vld [vmem:[%s6094 + $0x160] sm:$0xff]
        %v6140 = vld [vmem:[%s6094 + $0x168] sm:$0xff]
        %v6141 = vld [vmem:[%s6094 + $0x170] sm:$0xff]
        %v6142 = vld [vmem:[%s6094 + $0x178] sm:$0xff]
        %v6143 = vld [vmem:[%s6094 + $0x180] sm:$0xff]
        %v6144 = vld [vmem:[%s6094 + $0x188] sm:$0xff]
        %v6145 = vld [vmem:[%s6094 + $0x190] sm:$0xff]
        %v6146 = vld [vmem:[%s6094 + $0x198] sm:$0xff]
        %v6147 = vld [vmem:[%s6094 + $0x1a0] sm:$0xff]
        %v6148 = vld [vmem:[%s6094 + $0x1a8] sm:$0xff]
        %v6149 = vld [vmem:[%s6094 + $0x1b0] sm:$0xff]
        %v6150 = vld [vmem:[%s6094 + $0x1b8] sm:$0xff]
        %v6151 = vld [vmem:[%s6094 + $0x1c0] sm:$0xff]
        %v6152 = vld [vmem:[%s6094 + $0x1c8] sm:$0xff]
        %v6153 = vld [vmem:[%s6094 + $0x1d0] sm:$0xff]
        %v6154 = vld [vmem:[%s6094 + $0x1d8] sm:$0xff]
        %v6155 = vld [vmem:[%s6094 + $0x1e0] sm:$0xff]
        %v6156 = vld [vmem:[%s6094 + $0x1e8] sm:$0xff]
        %v6157 = vld [vmem:[%s6094 + $0x1f0] sm:$0xff]
        %v6158 = vld [vmem:[%s6094 + $0x1f8] sm:$0xff]
        %v6159 = vrot.slane %v5297, 5
        %v6160 = vrot.slane %v5298, 5
        %6163 = vmatpush.msra.mxu0 %v6125
        %6164 = vmatpush.msra.mxu0 %v6123
        %6165 = vmatpush.msra.mxu0 %v6121
        %6166 = vmatpush.msra.mxu0 %v6119
        %6167 = vmatpush.msra.mxu0 %v6117
        %6168 = vmatpush.msra.mxu0 %v6115
        %6169 = vmatpush.msra.mxu0 %v6113
        %6170 = vmatpush.msra.mxu0 %v6111
        %6171 = vmatpush.msra.mxu0 %v6109
        %6172 = vmatpush.msra.mxu0 %v6107
        %6173 = vmatpush.msra.mxu0 %v6105
        %6174 = vmatpush.msra.mxu0 %v6103
        %6175 = vmatpush.msra.mxu0 %v6101
        %6176 = vmatpush.msra.mxu0 %v6099
        %6177 = vmatpush.msra.mxu0 %v6097
        %6178 = vmatpush.msra.mxu0 %v6095
        %6179 = vmatmul.f32.gmra.mxu0 %v5295
        %v6180 = vpop.f32.mrf.mxu0
        %v6181 = vadd.f32 %v6159, %v6180
        %6182 = vdwg.mxu0
        %6183 = vmatpush.msra.mxu0 %v6157
        %6184 = vmatpush.msra.mxu0 %v6155
        %6185 = vmatpush.msra.mxu0 %v6153
        %6186 = vmatpush.msra.mxu0 %v6151
        %6187 = vmatpush.msra.mxu0 %v6149
        %6188 = vmatpush.msra.mxu0 %v6147
        %6189 = vmatpush.msra.mxu0 %v6145
        %6190 = vmatpush.msra.mxu0 %v6143
        %6191 = vmatpush.msra.mxu0 %v6141
        %6192 = vmatpush.msra.mxu0 %v6139
        %6193 = vmatpush.msra.mxu0 %v6137
        %6194 = vmatpush.msra.mxu0 %v6135
        %6195 = vmatpush.msra.mxu0 %v6133
        %6196 = vmatpush.msra.mxu0 %v6131
        %6197 = vmatpush.msra.mxu0 %v6129
        %6198 = vmatpush.msra.mxu0 %v6127
        %6199 = vmatmul.f32.gmra.mxu0 %v5296
        %v6200 = vpop.f32.mrf.mxu0
        %v6201 = vadd.f32 %v6181, %v6200
        %6202 = vdwg.mxu0
        %6203 = vmatpush.msra.mxu0 %v6126
        %6204 = vmatpush.msra.mxu0 %v6124
        %6205 = vmatpush.msra.mxu0 %v6122
        %6206 = vmatpush.msra.mxu0 %v6120
        %6207 = vmatpush.msra.mxu0 %v6118
        %6208 = vmatpush.msra.mxu0 %v6116
        %6209 = vmatpush.msra.mxu0 %v6114
        %6210 = vmatpush.msra.mxu0 %v6112
        %6211 = vmatpush.msra.mxu0 %v6110
        %6212 = vmatpush.msra.mxu0 %v6108
        %6213 = vmatpush.msra.mxu0 %v6106
        %6214 = vmatpush.msra.mxu0 %v6104
        %6215 = vmatpush.msra.mxu0 %v6102
        %6216 = vmatpush.msra.mxu0 %v6100
        %6217 = vmatpush.msra.mxu0 %v6098
        %6218 = vmatpush.msra.mxu0 %v6096
        %6219 = vmatmul.f32.gmra.mxu0 %v5295
        %v6220 = vpop.f32.mrf.mxu0
        %v6221 = vadd.f32 %v6160, %v6220
        %6222 = vdwg.mxu0
        %6223 = vmatpush.msra.mxu0 %v6158
        %6224 = vmatpush.msra.mxu0 %v6156
        %6225 = vmatpush.msra.mxu0 %v6154
        %6226 = vmatpush.msra.mxu0 %v6152
        %6227 = vmatpush.msra.mxu0 %v6150
        %6228 = vmatpush.msra.mxu0 %v6148
        %6229 = vmatpush.msra.mxu0 %v6146
        %6230 = vmatpush.msra.mxu0 %v6144
        %6231 = vmatpush.msra.mxu0 %v6142
        %6232 = vmatpush.msra.mxu0 %v6140
        %6233 = vmatpush.msra.mxu0 %v6138
        %6234 = vmatpush.msra.mxu0 %v6136
        %6235 = vmatpush.msra.mxu0 %v6134
        %6236 = vmatpush.msra.mxu0 %v6132
        %6237 = vmatpush.msra.mxu0 %v6130
        %6238 = vmatpush.msra.mxu0 %v6128
        %6239 = vmatmul.f32.gmra.mxu0 %v5296
        %v6240 = vpop.f32.mrf.mxu0
        %v6241 = vadd.f32 %v6221, %v6240
        %6242 = vdwg.mxu0
        %v6243 = vmax.f32 %v6201, 0.0
        %v6244 = vmax.f32 %v6241, 0.0
        %v6247 = vrot.slane %v6244, 7
        %v6248 = vsel %vm4175, %v6243, %v6247
        %s6250 = scalar_lea.vmem [#allocation2], 5
        %6251 = vst.msk [vmem:[%s6250] ss:$8 sm:$0x3] %vm5453, %v6248
        %6252 = vst.msk [vmem:[%s6250] ss:$8 sm:$0x0] %vm5453, %v6248
        %s6253 = scalar_lea.vmem %s39, 3072
        %v6254 = vld [vmem:[%s6253] sm:$0xff]
        %v6255 = vld [vmem:[%s6253 + $0x8] sm:$0xff]
        %v6256 = vld [vmem:[%s6253 + $0x10] sm:$0xff]
        %v6257 = vld [vmem:[%s6253 + $0x18] sm:$0xff]
        %v6258 = vld [vmem:[%s6253 + $0x20] sm:$0xff]
        %v6259 = vld [vmem:[%s6253 + $0x28] sm:$0xff]
        %v6260 = vld [vmem:[%s6253 + $0x30] sm:$0xff]
        %v6261 = vld [vmem:[%s6253 + $0x38] sm:$0xff]
        %v6262 = vld [vmem:[%s6253 + $0x40] sm:$0xff]
        %v6263 = vld [vmem:[%s6253 + $0x48] sm:$0xff]
        %v6264 = vld [vmem:[%s6253 + $0x50] sm:$0xff]
        %v6265 = vld [vmem:[%s6253 + $0x58] sm:$0xff]
        %v6266 = vld [vmem:[%s6253 + $0x60] sm:$0xff]
        %v6267 = vld [vmem:[%s6253 + $0x68] sm:$0xff]
        %v6268 = vld [vmem:[%s6253 + $0x70] sm:$0xff]
        %v6269 = vld [vmem:[%s6253 + $0x78] sm:$0xff]
        %v6270 = vld [vmem:[%s6253 + $0x80] sm:$0xff]
        %v6271 = vld [vmem:[%s6253 + $0x88] sm:$0xff]
        %v6272 = vld [vmem:[%s6253 + $0x90] sm:$0xff]
        %v6273 = vld [vmem:[%s6253 + $0x98] sm:$0xff]
        %v6274 = vld [vmem:[%s6253 + $0xa0] sm:$0xff]
        %v6275 = vld [vmem:[%s6253 + $0xa8] sm:$0xff]
        %v6276 = vld [vmem:[%s6253 + $0xb0] sm:$0xff]
        %v6277 = vld [vmem:[%s6253 + $0xb8] sm:$0xff]
        %v6278 = vld [vmem:[%s6253 + $0xc0] sm:$0xff]
        %v6279 = vld [vmem:[%s6253 + $0xc8] sm:$0xff]
        %v6280 = vld [vmem:[%s6253 + $0xd0] sm:$0xff]
        %v6281 = vld [vmem:[%s6253 + $0xd8] sm:$0xff]
        %v6282 = vld [vmem:[%s6253 + $0xe0] sm:$0xff]
        %v6283 = vld [vmem:[%s6253 + $0xe8] sm:$0xff]
        %v6284 = vld [vmem:[%s6253 + $0xf0] sm:$0xff]
        %v6285 = vld [vmem:[%s6253 + $0xf8] sm:$0xff]
        %v6286 = vld [vmem:[%s6253 + $0x100] sm:$0xff]
        %v6287 = vld [vmem:[%s6253 + $0x108] sm:$0xff]
        %v6288 = vld [vmem:[%s6253 + $0x110] sm:$0xff]
        %v6289 = vld [vmem:[%s6253 + $0x118] sm:$0xff]
        %v6290 = vld [vmem:[%s6253 + $0x120] sm:$0xff]
        %v6291 = vld [vmem:[%s6253 + $0x128] sm:$0xff]
        %v6292 = vld [vmem:[%s6253 + $0x130] sm:$0xff]
        %v6293 = vld [vmem:[%s6253 + $0x138] sm:$0xff]
        %v6294 = vld [vmem:[%s6253 + $0x140] sm:$0xff]
        %v6295 = vld [vmem:[%s6253 + $0x148] sm:$0xff]
        %v6296 = vld [vmem:[%s6253 + $0x150] sm:$0xff]
        %v6297 = vld [vmem:[%s6253 + $0x158] sm:$0xff]
        %v6298 = vld [vmem:[%s6253 + $0x160] sm:$0xff]
        %v6299 = vld [vmem:[%s6253 + $0x168] sm:$0xff]
        %v6300 = vld [vmem:[%s6253 + $0x170] sm:$0xff]
        %v6301 = vld [vmem:[%s6253 + $0x178] sm:$0xff]
        %v6302 = vld [vmem:[%s6253 + $0x180] sm:$0xff]
        %v6303 = vld [vmem:[%s6253 + $0x188] sm:$0xff]
        %v6304 = vld [vmem:[%s6253 + $0x190] sm:$0xff]
        %v6305 = vld [vmem:[%s6253 + $0x198] sm:$0xff]
        %v6306 = vld [vmem:[%s6253 + $0x1a0] sm:$0xff]
        %v6307 = vld [vmem:[%s6253 + $0x1a8] sm:$0xff]
        %v6308 = vld [vmem:[%s6253 + $0x1b0] sm:$0xff]
        %v6309 = vld [vmem:[%s6253 + $0x1b8] sm:$0xff]
        %v6310 = vld [vmem:[%s6253 + $0x1c0] sm:$0xff]
        %v6311 = vld [vmem:[%s6253 + $0x1c8] sm:$0xff]
        %v6312 = vld [vmem:[%s6253 + $0x1d0] sm:$0xff]
        %v6313 = vld [vmem:[%s6253 + $0x1d8] sm:$0xff]
        %v6314 = vld [vmem:[%s6253 + $0x1e0] sm:$0xff]
        %v6315 = vld [vmem:[%s6253 + $0x1e8] sm:$0xff]
        %v6316 = vld [vmem:[%s6253 + $0x1f0] sm:$0xff]
        %v6317 = vld [vmem:[%s6253 + $0x1f8] sm:$0xff]
        %v6318 = vrot.slane %v5297, 6
        %v6319 = vrot.slane %v5298, 6
        %6322 = vmatpush.msra.mxu0 %v6284
        %6323 = vmatpush.msra.mxu0 %v6282
        %6324 = vmatpush.msra.mxu0 %v6280
        %6325 = vmatpush.msra.mxu0 %v6278
        %6326 = vmatpush.msra.mxu0 %v6276
        %6327 = vmatpush.msra.mxu0 %v6274
        %6328 = vmatpush.msra.mxu0 %v6272
        %6329 = vmatpush.msra.mxu0 %v6270
        %6330 = vmatpush.msra.mxu0 %v6268
        %6331 = vmatpush.msra.mxu0 %v6266
        %6332 = vmatpush.msra.mxu0 %v6264
        %6333 = vmatpush.msra.mxu0 %v6262
        %6334 = vmatpush.msra.mxu0 %v6260
        %6335 = vmatpush.msra.mxu0 %v6258
        %6336 = vmatpush.msra.mxu0 %v6256
        %6337 = vmatpush.msra.mxu0 %v6254
        %6338 = vmatmul.f32.gmra.mxu0 %v5295
        %v6339 = vpop.f32.mrf.mxu0
        %v6340 = vadd.f32 %v6318, %v6339
        %6341 = vdwg.mxu0
        %6342 = vmatpush.msra.mxu0 %v6316
        %6343 = vmatpush.msra.mxu0 %v6314
        %6344 = vmatpush.msra.mxu0 %v6312
        %6345 = vmatpush.msra.mxu0 %v6310
        %6346 = vmatpush.msra.mxu0 %v6308
        %6347 = vmatpush.msra.mxu0 %v6306
        %6348 = vmatpush.msra.mxu0 %v6304
        %6349 = vmatpush.msra.mxu0 %v6302
        %6350 = vmatpush.msra.mxu0 %v6300
        %6351 = vmatpush.msra.mxu0 %v6298
        %6352 = vmatpush.msra.mxu0 %v6296
        %6353 = vmatpush.msra.mxu0 %v6294
        %6354 = vmatpush.msra.mxu0 %v6292
        %6355 = vmatpush.msra.mxu0 %v6290
        %6356 = vmatpush.msra.mxu0 %v6288
        %6357 = vmatpush.msra.mxu0 %v6286
        %6358 = vmatmul.f32.gmra.mxu0 %v5296
        %v6359 = vpop.f32.mrf.mxu0
        %v6360 = vadd.f32 %v6340, %v6359
        %6361 = vdwg.mxu0
        %6362 = vmatpush.msra.mxu0 %v6285
        %6363 = vmatpush.msra.mxu0 %v6283
        %6364 = vmatpush.msra.mxu0 %v6281
        %6365 = vmatpush.msra.mxu0 %v6279
        %6366 = vmatpush.msra.mxu0 %v6277
        %6367 = vmatpush.msra.mxu0 %v6275
        %6368 = vmatpush.msra.mxu0 %v6273
        %6369 = vmatpush.msra.mxu0 %v6271
        %6370 = vmatpush.msra.mxu0 %v6269
        %6371 = vmatpush.msra.mxu0 %v6267
        %6372 = vmatpush.msra.mxu0 %v6265
        %6373 = vmatpush.msra.mxu0 %v6263
        %6374 = vmatpush.msra.mxu0 %v6261
        %6375 = vmatpush.msra.mxu0 %v6259
        %6376 = vmatpush.msra.mxu0 %v6257
        %6377 = vmatpush.msra.mxu0 %v6255
        %6378 = vmatmul.f32.gmra.mxu0 %v5295
        %v6379 = vpop.f32.mrf.mxu0
        %v6380 = vadd.f32 %v6319, %v6379
        %6381 = vdwg.mxu0
        %6382 = vmatpush.msra.mxu0 %v6317
        %6383 = vmatpush.msra.mxu0 %v6315
        %6384 = vmatpush.msra.mxu0 %v6313
        %6385 = vmatpush.msra.mxu0 %v6311
        %6386 = vmatpush.msra.mxu0 %v6309
        %6387 = vmatpush.msra.mxu0 %v6307
        %6388 = vmatpush.msra.mxu0 %v6305
        %6389 = vmatpush.msra.mxu0 %v6303
        %6390 = vmatpush.msra.mxu0 %v6301
        %6391 = vmatpush.msra.mxu0 %v6299
        %6392 = vmatpush.msra.mxu0 %v6297
        %6393 = vmatpush.msra.mxu0 %v6295
        %6394 = vmatpush.msra.mxu0 %v6293
        %6395 = vmatpush.msra.mxu0 %v6291
        %6396 = vmatpush.msra.mxu0 %v6289
        %6397 = vmatpush.msra.mxu0 %v6287
        %6398 = vmatmul.f32.gmra.mxu0 %v5296
        %v6399 = vpop.f32.mrf.mxu0
        %v6400 = vadd.f32 %v6380, %v6399
        %6401 = vdwg.mxu0
        %v6402 = vmax.f32 %v6360, 0.0
        %v6403 = vmax.f32 %v6400, 0.0
        %v6406 = vrot.slane %v6403, 7
        %v6407 = vsel %vm4175, %v6402, %v6406
        %s6409 = scalar_lea.vmem [#allocation2], 6
        %6410 = vst.msk [vmem:[%s6409] ss:$8 sm:$0x3] %vm5453, %v6407
        %6411 = vst.msk [vmem:[%s6409] ss:$8 sm:$0x0] %vm5453, %v6407
        %v6412 = vld [vmem:[#allocation2] sm:$0x7f]
        %v6413 = vld [vmem:[#allocation2 + $0x8] sm:$0x7f]
        %v6414 = vld [vmem:[%s45] sm:$0xff]
        %v6415 = vld [vmem:[%s45 + $0x8] sm:$0xff]
        %v6416 = vld [vmem:[#allocation10] sm:$0xff]
        %v6417 = vld [vmem:[#allocation10 + $0x8] sm:$0xff]
        %v6418 = vld [vmem:[#allocation10 + $0x10] sm:$0xff]
        %v6419 = vld [vmem:[#allocation10 + $0x18] sm:$0xff]
        %v6420 = vld [vmem:[#allocation10 + $0x20] sm:$0xff]
        %v6421 = vld [vmem:[#allocation10 + $0x28] sm:$0xff]
        %v6422 = vld [vmem:[#allocation10 + $0x30] sm:$0xff]
        %v6423 = vld [vmem:[#allocation10 + $0x38] sm:$0xff]
        %v6424 = vld [vmem:[#allocation10 + $0x40] sm:$0xff]
        %v6425 = vld [vmem:[#allocation10 + $0x48] sm:$0xff]
        %v6426 = vld [vmem:[#allocation10 + $0x50] sm:$0xff]
        %v6427 = vld [vmem:[#allocation10 + $0x58] sm:$0xff]
        %v6428 = vld [vmem:[#allocation10 + $0x60] sm:$0xff]
        %v6429 = vld [vmem:[#allocation10 + $0x68] sm:$0xff]
        %v6430 = vld [vmem:[#allocation10 + $0x70] sm:$0xff]
        %v6431 = vld [vmem:[#allocation10 + $0x78] sm:$0xff]
        %v6432 = vld [vmem:[#allocation10 + $0x80] sm:$0xff]
        %v6433 = vld [vmem:[#allocation10 + $0x88] sm:$0xff]
        %v6434 = vld [vmem:[#allocation10 + $0x90] sm:$0xff]
        %v6435 = vld [vmem:[#allocation10 + $0x98] sm:$0xff]
        %v6436 = vld [vmem:[#allocation10 + $0xa0] sm:$0xff]
        %v6437 = vld [vmem:[#allocation10 + $0xa8] sm:$0xff]
        %v6438 = vld [vmem:[#allocation10 + $0xb0] sm:$0xff]
        %v6439 = vld [vmem:[#allocation10 + $0xb8] sm:$0xff]
        %v6440 = vld [vmem:[#allocation10 + $0xc0] sm:$0xff]
        %v6441 = vld [vmem:[#allocation10 + $0xc8] sm:$0xff]
        %v6442 = vld [vmem:[#allocation10 + $0xd0] sm:$0xff]
        %v6443 = vld [vmem:[#allocation10 + $0xd8] sm:$0xff]
        %v6444 = vld [vmem:[#allocation10 + $0xe0] sm:$0xff]
        %v6445 = vld [vmem:[#allocation10 + $0xe8] sm:$0xff]
        %v6446 = vld [vmem:[#allocation10 + $0xf0] sm:$0xff]
        %v6447 = vld [vmem:[#allocation10 + $0xf8] sm:$0xff]
        %v6448 = vld [vmem:[#allocation10 + $0x100] sm:$0xff]
        %v6449 = vld [vmem:[#allocation10 + $0x108] sm:$0xff]
        %v6450 = vld [vmem:[#allocation10 + $0x110] sm:$0xff]
        %v6451 = vld [vmem:[#allocation10 + $0x118] sm:$0xff]
        %v6452 = vld [vmem:[#allocation10 + $0x120] sm:$0xff]
        %v6453 = vld [vmem:[#allocation10 + $0x128] sm:$0xff]
        %v6454 = vld [vmem:[#allocation10 + $0x130] sm:$0xff]
        %v6455 = vld [vmem:[#allocation10 + $0x138] sm:$0xff]
        %v6456 = vld [vmem:[#allocation10 + $0x140] sm:$0xff]
        %v6457 = vld [vmem:[#allocation10 + $0x148] sm:$0xff]
        %v6458 = vld [vmem:[#allocation10 + $0x150] sm:$0xff]
        %v6459 = vld [vmem:[#allocation10 + $0x158] sm:$0xff]
        %v6460 = vld [vmem:[#allocation10 + $0x160] sm:$0xff]
        %v6461 = vld [vmem:[#allocation10 + $0x168] sm:$0xff]
        %v6462 = vld [vmem:[#allocation10 + $0x170] sm:$0xff]
        %v6463 = vld [vmem:[#allocation10 + $0x178] sm:$0xff]
        %v6464 = vld [vmem:[#allocation10 + $0x180] sm:$0xff]
        %v6465 = vld [vmem:[#allocation10 + $0x188] sm:$0xff]
        %v6466 = vld [vmem:[#allocation10 + $0x190] sm:$0xff]
        %v6467 = vld [vmem:[#allocation10 + $0x198] sm:$0xff]
        %v6468 = vld [vmem:[#allocation10 + $0x1a0] sm:$0xff]
        %v6469 = vld [vmem:[#allocation10 + $0x1a8] sm:$0xff]
        %v6470 = vld [vmem:[#allocation10 + $0x1b0] sm:$0xff]
        %v6471 = vld [vmem:[#allocation10 + $0x1b8] sm:$0xff]
        %v6472 = vld [vmem:[#allocation10 + $0x1c0] sm:$0xff]
        %v6473 = vld [vmem:[#allocation10 + $0x1c8] sm:$0xff]
        %v6474 = vld [vmem:[#allocation10 + $0x1d0] sm:$0xff]
        %v6475 = vld [vmem:[#allocation10 + $0x1d8] sm:$0xff]
        %v6476 = vld [vmem:[#allocation10 + $0x1e0] sm:$0xff]
        %v6477 = vld [vmem:[#allocation10 + $0x1e8] sm:$0xff]
        %v6478 = vld [vmem:[#allocation10 + $0x1f0] sm:$0xff]
        %v6479 = vld [vmem:[#allocation10 + $0x1f8] sm:$0xff]
        %v6480 = vld [vmem:[#allocation10 + $0x200] sm:$0xff]
        %v6481 = vld [vmem:[#allocation10 + $0x208] sm:$0xff]
        %v6482 = vld [vmem:[#allocation10 + $0x210] sm:$0xff]
        %v6483 = vld [vmem:[#allocation10 + $0x218] sm:$0xff]
        %v6484 = vld [vmem:[#allocation10 + $0x220] sm:$0xff]
        %v6485 = vld [vmem:[#allocation10 + $0x228] sm:$0xff]
        %v6486 = vld [vmem:[#allocation10 + $0x230] sm:$0xff]
        %v6487 = vld [vmem:[#allocation10 + $0x238] sm:$0xff]
        %v6488 = vld [vmem:[#allocation10 + $0x240] sm:$0xff]
        %v6489 = vld [vmem:[#allocation10 + $0x248] sm:$0xff]
        %v6490 = vld [vmem:[#allocation10 + $0x250] sm:$0xff]
        %v6491 = vld [vmem:[#allocation10 + $0x258] sm:$0xff]
        %v6492 = vld [vmem:[#allocation10 + $0x260] sm:$0xff]
        %v6493 = vld [vmem:[#allocation10 + $0x268] sm:$0xff]
        %v6494 = vld [vmem:[#allocation10 + $0x270] sm:$0xff]
        %v6495 = vld [vmem:[#allocation10 + $0x278] sm:$0xff]
        %v6496 = vld [vmem:[#allocation10 + $0x280] sm:$0xff]
        %v6497 = vld [vmem:[#allocation10 + $0x288] sm:$0xff]
        %v6498 = vld [vmem:[#allocation10 + $0x290] sm:$0xff]
        %v6499 = vld [vmem:[#allocation10 + $0x298] sm:$0xff]
        %v6500 = vld [vmem:[#allocation10 + $0x2a0] sm:$0xff]
        %v6501 = vld [vmem:[#allocation10 + $0x2a8] sm:$0xff]
        %v6502 = vld [vmem:[#allocation10 + $0x2b0] sm:$0xff]
        %v6503 = vld [vmem:[#allocation10 + $0x2b8] sm:$0xff]
        %v6504 = vld [vmem:[#allocation10 + $0x2c0] sm:$0xff]
        %v6505 = vld [vmem:[#allocation10 + $0x2c8] sm:$0xff]
        %v6506 = vld [vmem:[#allocation10 + $0x2d0] sm:$0xff]
        %v6507 = vld [vmem:[#allocation10 + $0x2d8] sm:$0xff]
        %v6508 = vld [vmem:[#allocation10 + $0x2e0] sm:$0xff]
        %v6509 = vld [vmem:[#allocation10 + $0x2e8] sm:$0xff]
        %v6510 = vld [vmem:[#allocation10 + $0x2f0] sm:$0xff]
        %v6511 = vld [vmem:[#allocation10 + $0x2f8] sm:$0xff]
        %v6512 = vld [vmem:[#allocation10 + $0x300] sm:$0xff]
        %v6513 = vld [vmem:[#allocation10 + $0x308] sm:$0xff]
        %v6514 = vld [vmem:[#allocation10 + $0x310] sm:$0xff]
        %v6515 = vld [vmem:[#allocation10 + $0x318] sm:$0xff]
        %v6516 = vld [vmem:[#allocation10 + $0x320] sm:$0xff]
        %v6517 = vld [vmem:[#allocation10 + $0x328] sm:$0xff]
        %v6518 = vld [vmem:[#allocation10 + $0x330] sm:$0xff]
        %v6519 = vld [vmem:[#allocation10 + $0x338] sm:$0xff]
        %v6520 = vld [vmem:[#allocation10 + $0x340] sm:$0xff]
        %v6521 = vld [vmem:[#allocation10 + $0x348] sm:$0xff]
        %v6522 = vld [vmem:[#allocation10 + $0x350] sm:$0xff]
        %v6523 = vld [vmem:[#allocation10 + $0x358] sm:$0xff]
        %v6524 = vld [vmem:[#allocation10 + $0x360] sm:$0xff]
        %v6525 = vld [vmem:[#allocation10 + $0x368] sm:$0xff]
        %v6526 = vld [vmem:[#allocation10 + $0x370] sm:$0xff]
        %v6527 = vld [vmem:[#allocation10 + $0x378] sm:$0xff]
        %v6529 = vsel %vm2611, %v6413, 0
        %6531 = vmatpush.msra.mxu0 %v6476
        %6532 = vmatpush.msra.mxu0 %v6472
        %6533 = vmatpush.msra.mxu0 %v6468
        %6534 = vmatpush.msra.mxu0 %v6464
        %6535 = vmatpush.msra.mxu0 %v6460
        %6536 = vmatpush.msra.mxu0 %v6456
        %6537 = vmatpush.msra.mxu0 %v6452
        %6538 = vmatpush.msra.mxu0 %v6448
        %6539 = vmatpush.msra.mxu0 %v6444
        %6540 = vmatpush.msra.mxu0 %v6440
        %6541 = vmatpush.msra.mxu0 %v6436
        %6542 = vmatpush.msra.mxu0 %v6432
        %6543 = vmatpush.msra.mxu0 %v6428
        %6544 = vmatpush.msra.mxu0 %v6424
        %6545 = vmatpush.msra.mxu0 %v6420
        %6546 = vmatpush.msra.mxu0 %v6416
        %6547 = vmatmul.f32.gmra.mxu0 %v6412
        %v6548 = vpop.f32.mrf.mxu0
        %v6549 = vadd.f32 0.0, %v6548
        %6550 = vdwg.mxu0
        %6551 = vmatpush.msra.mxu0 0.0
        %6552 = vmatpush.msra.mxu0 0.0
        %6553 = vmatpush.msra.mxu0 0.0
        %6554 = vmatpush.msra.mxu0 0.0
        %6555 = vmatpush.msra.mxu0 %v6524
        %6556 = vmatpush.msra.mxu0 %v6520
        %6557 = vmatpush.msra.mxu0 %v6516
        %6558 = vmatpush.msra.mxu0 %v6512
        %6559 = vmatpush.msra.mxu0 %v6508
        %6560 = vmatpush.msra.mxu0 %v6504
        %6561 = vmatpush.msra.mxu0 %v6500
        %6562 = vmatpush.msra.mxu0 %v6496
        %6563 = vmatpush.msra.mxu0 %v6492
        %6564 = vmatpush.msra.mxu0 %v6488
        %6565 = vmatpush.msra.mxu0 %v6484
        %6566 = vmatpush.msra.mxu0 %v6480
        %6567 = vmatmul.f32.gmra.mxu0 %v6529
        %v6568 = vpop.f32.mrf.mxu0
        %v6569 = vadd.f32 %v6549, %v6568
        %6570 = vdwg.mxu0
        %6571 = vmatpush.msra.mxu0 %v6477
        %6572 = vmatpush.msra.mxu0 %v6473
        %6573 = vmatpush.msra.mxu0 %v6469
        %6574 = vmatpush.msra.mxu0 %v6465
        %6575 = vmatpush.msra.mxu0 %v6461
        %6576 = vmatpush.msra.mxu0 %v6457
        %6577 = vmatpush.msra.mxu0 %v6453
        %6578 = vmatpush.msra.mxu0 %v6449
        %6579 = vmatpush.msra.mxu0 %v6445
        %6580 = vmatpush.msra.mxu0 %v6441
        %6581 = vmatpush.msra.mxu0 %v6437
        %6582 = vmatpush.msra.mxu0 %v6433
        %6583 = vmatpush.msra.mxu0 %v6429
        %6584 = vmatpush.msra.mxu0 %v6425
        %6585 = vmatpush.msra.mxu0 %v6421
        %6586 = vmatpush.msra.mxu0 %v6417
        %6587 = vmatmul.f32.gmra.mxu0 %v6412
        %v6588 = vpop.f32.mrf.mxu0
        %v6589 = vadd.f32 0.0, %v6588
        %6590 = vdwg.mxu0
        %6591 = vmatpush.msra.mxu0 0.0
        %6592 = vmatpush.msra.mxu0 0.0
        %6593 = vmatpush.msra.mxu0 0.0
        %6594 = vmatpush.msra.mxu0 0.0
        %6595 = vmatpush.msra.mxu0 %v6525
        %6596 = vmatpush.msra.mxu0 %v6521
        %6597 = vmatpush.msra.mxu0 %v6517
        %6598 = vmatpush.msra.mxu0 %v6513
        %6599 = vmatpush.msra.mxu0 %v6509
        %6600 = vmatpush.msra.mxu0 %v6505
        %6601 = vmatpush.msra.mxu0 %v6501
        %6602 = vmatpush.msra.mxu0 %v6497
        %6603 = vmatpush.msra.mxu0 %v6493
        %6604 = vmatpush.msra.mxu0 %v6489
        %6605 = vmatpush.msra.mxu0 %v6485
        %6606 = vmatpush.msra.mxu0 %v6481
        %6607 = vmatmul.f32.gmra.mxu0 %v6529
        %v6608 = vpop.f32.mrf.mxu0
        %v6609 = vadd.f32 %v6589, %v6608
        %6610 = vdwg.mxu0
        %6611 = vmatpush.msra.mxu0 %v6478
        %6612 = vmatpush.msra.mxu0 %v6474
        %6613 = vmatpush.msra.mxu0 %v6470
        %6614 = vmatpush.msra.mxu0 %v6466
        %6615 = vmatpush.msra.mxu0 %v6462
        %6616 = vmatpush.msra.mxu0 %v6458
        %6617 = vmatpush.msra.mxu0 %v6454
        %6618 = vmatpush.msra.mxu0 %v6450
        %6619 = vmatpush.msra.mxu0 %v6446
        %6620 = vmatpush.msra.mxu0 %v6442
        %6621 = vmatpush.msra.mxu0 %v6438
        %6622 = vmatpush.msra.mxu0 %v6434
        %6623 = vmatpush.msra.mxu0 %v6430
        %6624 = vmatpush.msra.mxu0 %v6426
        %6625 = vmatpush.msra.mxu0 %v6422
        %6626 = vmatpush.msra.mxu0 %v6418
        %6627 = vmatmul.f32.gmra.mxu0 %v6412
        %v6628 = vpop.f32.mrf.mxu0
        %v6629 = vadd.f32 0.0, %v6628
        %6630 = vdwg.mxu0
        %6631 = vmatpush.msra.mxu0 0.0
        %6632 = vmatpush.msra.mxu0 0.0
        %6633 = vmatpush.msra.mxu0 0.0
        %6634 = vmatpush.msra.mxu0 0.0
        %6635 = vmatpush.msra.mxu0 %v6526
        %6636 = vmatpush.msra.mxu0 %v6522
        %6637 = vmatpush.msra.mxu0 %v6518
        %6638 = vmatpush.msra.mxu0 %v6514
        %6639 = vmatpush.msra.mxu0 %v6510
        %6640 = vmatpush.msra.mxu0 %v6506
        %6641 = vmatpush.msra.mxu0 %v6502
        %6642 = vmatpush.msra.mxu0 %v6498
        %6643 = vmatpush.msra.mxu0 %v6494
        %6644 = vmatpush.msra.mxu0 %v6490
        %6645 = vmatpush.msra.mxu0 %v6486
        %6646 = vmatpush.msra.mxu0 %v6482
        %6647 = vmatmul.f32.gmra.mxu0 %v6529
        %v6648 = vpop.f32.mrf.mxu0
        %v6649 = vadd.f32 %v6629, %v6648
        %6650 = vdwg.mxu0
        %6651 = vmatpush.msra.mxu0 %v6479
        %6652 = vmatpush.msra.mxu0 %v6475
        %6653 = vmatpush.msra.mxu0 %v6471
        %6654 = vmatpush.msra.mxu0 %v6467
        %6655 = vmatpush.msra.mxu0 %v6463
        %6656 = vmatpush.msra.mxu0 %v6459
        %6657 = vmatpush.msra.mxu0 %v6455
        %6658 = vmatpush.msra.mxu0 %v6451
        %6659 = vmatpush.msra.mxu0 %v6447
        %6660 = vmatpush.msra.mxu0 %v6443
        %6661 = vmatpush.msra.mxu0 %v6439
        %6662 = vmatpush.msra.mxu0 %v6435
        %6663 = vmatpush.msra.mxu0 %v6431
        %6664 = vmatpush.msra.mxu0 %v6427
        %6665 = vmatpush.msra.mxu0 %v6423
        %6666 = vmatpush.msra.mxu0 %v6419
        %6667 = vmatmul.f32.gmra.mxu0 %v6412
        %v6668 = vpop.f32.mrf.mxu0
        %v6669 = vadd.f32 0.0, %v6668
        %6670 = vdwg.mxu0
        %6671 = vmatpush.msra.mxu0 0.0
        %6672 = vmatpush.msra.mxu0 0.0
        %6673 = vmatpush.msra.mxu0 0.0
        %6674 = vmatpush.msra.mxu0 0.0
        %6675 = vmatpush.msra.mxu0 %v6527
        %6676 = vmatpush.msra.mxu0 %v6523
        %6677 = vmatpush.msra.mxu0 %v6519
        %6678 = vmatpush.msra.mxu0 %v6515
        %6679 = vmatpush.msra.mxu0 %v6511
        %6680 = vmatpush.msra.mxu0 %v6507
        %6681 = vmatpush.msra.mxu0 %v6503
        %6682 = vmatpush.msra.mxu0 %v6499
        %6683 = vmatpush.msra.mxu0 %v6495
        %6684 = vmatpush.msra.mxu0 %v6491
        %6685 = vmatpush.msra.mxu0 %v6487
        %6686 = vmatpush.msra.mxu0 %v6483
        %6687 = vmatmul.f32.gmra.mxu0 %v6529
        %v6688 = vpop.f32.mrf.mxu0
        %v6689 = vadd.f32 %v6669, %v6688
        %6690 = vdwg.mxu0
        %vm6691 = vcmask 56320
        %v6693 = vsel %vm6691, %v6414, 0
        %v6696 = vsel %vm6691, %v6415, 0
        %v6699 = vsel %vm1044, %v6569, 0
        %v6702 = vsel %vm1044, %v6609, 0
        %v6705 = vsel %vm1044, %v6649, 0
        %v6708 = vsel %vm1044, %v6689, 0
        %6710 = vmatpush.msra.mxu0 0.0
        %6711 = vmatpush.msra.mxu0 0.0
        %6712 = vmatpush.msra.mxu0 0.0
        %6713 = vmatpush.msra.mxu0 0.0
        %6714 = vmatpush.msra.mxu0 0.0
        %6715 = vmatpush.msra.mxu0 0.0
        %6716 = vmatpush.msra.mxu0 0.0
        %6717 = vmatpush.msra.mxu0 0.0
        %6718 = vmatpush.msra.mxu0 0.0
        %6719 = vmatpush.msra.mxu0 0.0
        %6720 = vmatpush.msra.mxu0 0.0
        %6721 = vmatpush.msra.mxu0 0.0
        %6722 = vmatpush.msra.mxu0 0.0
        %6723 = vmatpush.msra.mxu0 0.0
        %6724 = vmatpush.msra.mxu0 0.0
        %6725 = vmatpush.msra.mxu0 %v6699
        %6726 = vmatmul.f32.gmra.mxu0 %v6693
        %v6727 = vpop.f32.mrf.mxu0
        %v6728 = vadd.f32 0.0, %v6727
        %6729 = vmatmul.f32.gmra.mxu0 %v6696
        %v6730 = vpop.f32.mrf.mxu0
        %v6731 = vadd.f32 0.0, %v6730
        %6732 = vdwg.mxu0
        %6733 = vmatpush.msra.mxu0 0.0
        %6734 = vmatpush.msra.mxu0 0.0
        %6735 = vmatpush.msra.mxu0 0.0
        %6736 = vmatpush.msra.mxu0 0.0
        %6737 = vmatpush.msra.mxu0 0.0
        %6738 = vmatpush.msra.mxu0 0.0
        %6739 = vmatpush.msra.mxu0 0.0
        %6740 = vmatpush.msra.mxu0 0.0
        %6741 = vmatpush.msra.mxu0 0.0
        %6742 = vmatpush.msra.mxu0 0.0
        %6743 = vmatpush.msra.mxu0 0.0
        %6744 = vmatpush.msra.mxu0 0.0
        %6745 = vmatpush.msra.mxu0 0.0
        %6746 = vmatpush.msra.mxu0 0.0
        %6747 = vmatpush.msra.mxu0 0.0
        %6748 = vmatpush.msra.mxu0 %v6702
        %6749 = vmatmul.f32.gmra.mxu0 %v6693
        %v6750 = vpop.f32.mrf.mxu0
        %v6751 = vadd.f32 0.0, %v6750
        %6752 = vmatmul.f32.gmra.mxu0 %v6696
        %v6753 = vpop.f32.mrf.mxu0
        %v6754 = vadd.f32 0.0, %v6753
        %6755 = vdwg.mxu0
        %6756 = vmatpush.msra.mxu0 0.0
        %6757 = vmatpush.msra.mxu0 0.0
        %6758 = vmatpush.msra.mxu0 0.0
        %6759 = vmatpush.msra.mxu0 0.0
        %6760 = vmatpush.msra.mxu0 0.0
        %6761 = vmatpush.msra.mxu0 0.0
        %6762 = vmatpush.msra.mxu0 0.0
        %6763 = vmatpush.msra.mxu0 0.0
        %6764 = vmatpush.msra.mxu0 0.0
        %6765 = vmatpush.msra.mxu0 0.0
        %6766 = vmatpush.msra.mxu0 0.0
        %6767 = vmatpush.msra.mxu0 0.0
        %6768 = vmatpush.msra.mxu0 0.0
        %6769 = vmatpush.msra.mxu0 0.0
        %6770 = vmatpush.msra.mxu0 0.0
        %6771 = vmatpush.msra.mxu0 %v6705
        %6772 = vmatmul.f32.gmra.mxu0 %v6693
        %v6773 = vpop.f32.mrf.mxu0
        %v6774 = vadd.f32 0.0, %v6773
        %6775 = vmatmul.f32.gmra.mxu0 %v6696
        %v6776 = vpop.f32.mrf.mxu0
        %v6777 = vadd.f32 0.0, %v6776
        %6778 = vdwg.mxu0
        %6779 = vmatpush.msra.mxu0 0.0
        %6780 = vmatpush.msra.mxu0 0.0
        %6781 = vmatpush.msra.mxu0 0.0
        %6782 = vmatpush.msra.mxu0 0.0
        %6783 = vmatpush.msra.mxu0 0.0
        %6784 = vmatpush.msra.mxu0 0.0
        %6785 = vmatpush.msra.mxu0 0.0
        %6786 = vmatpush.msra.mxu0 0.0
        %6787 = vmatpush.msra.mxu0 0.0
        %6788 = vmatpush.msra.mxu0 0.0
        %6789 = vmatpush.msra.mxu0 0.0
        %6790 = vmatpush.msra.mxu0 0.0
        %6791 = vmatpush.msra.mxu0 0.0
        %6792 = vmatpush.msra.mxu0 0.0
        %6793 = vmatpush.msra.mxu0 0.0
        %6794 = vmatpush.msra.mxu0 %v6708
        %6795 = vmatmul.f32.gmra.mxu0 %v6693
        %v6796 = vpop.f32.mrf.mxu0
        %v6797 = vadd.f32 0.0, %v6796
        %6798 = vmatmul.f32.gmra.mxu0 %v6696
        %v6799 = vpop.f32.mrf.mxu0
        %v6800 = vadd.f32 0.0, %v6799
        %6801 = vdwg.mxu0
        %v6802 = vld [vmem:[%s47] sm:$0xff]
        %v6803 = vld [vmem:[%s47 + $0x8] sm:$0xff]
        %v6804 = vld [vmem:[%s47 + $0x10] sm:$0xff]
        %v6805 = vld [vmem:[%s47 + $0x18] sm:$0xff]
        %v6806 = vld [vmem:[%s47 + $0x20] sm:$0xff]
        %v6807 = vld [vmem:[%s47 + $0x28] sm:$0xff]
        %v6808 = vld [vmem:[%s47 + $0x30] sm:$0xff]
        %v6809 = vld [vmem:[%s47 + $0x38] sm:$0xff]
        %v6810 = vld [vmem:[%s47 + $0x40] sm:$0xff]
        %v6811 = vld [vmem:[%s47 + $0x48] sm:$0xff]
        %v6812 = vld [vmem:[%s47 + $0x50] sm:$0xff]
        %v6813 = vld [vmem:[%s47 + $0x58] sm:$0xff]
        %v6814 = vld [vmem:[%s47 + $0x60] sm:$0xff]
        %v6815 = vld [vmem:[%s47 + $0x68] sm:$0xff]
        %v6816 = vld [vmem:[%s47 + $0x70] sm:$0xff]
        %v6817 = vld [vmem:[%s47 + $0x78] sm:$0xff]
        %v6818 = vld [vmem:[%s47 + $0x80] sm:$0xff]
        %v6819 = vld [vmem:[%s47 + $0x88] sm:$0xff]
        %v6820 = vld [vmem:[%s47 + $0x90] sm:$0xff]
        %v6821 = vld [vmem:[%s47 + $0x98] sm:$0xff]
        %v6822 = vld [vmem:[%s47 + $0xa0] sm:$0xff]
        %v6823 = vld [vmem:[%s47 + $0xa8] sm:$0xff]
        %v6824 = vld [vmem:[%s47 + $0xb0] sm:$0xff]
        %v6825 = vld [vmem:[%s47 + $0xb8] sm:$0xff]
        %v6826 = vld [vmem:[%s47 + $0xc0] sm:$0xff]
        %v6827 = vld [vmem:[%s47 + $0xc8] sm:$0xff]
        %v6828 = vld [vmem:[%s47 + $0xd0] sm:$0xff]
        %v6829 = vld [vmem:[%s47 + $0xd8] sm:$0xff]
        %v6830 = vld [vmem:[%s47 + $0xe0] sm:$0xff]
        %v6831 = vld [vmem:[%s47 + $0xe8] sm:$0xff]
        %v6832 = vld [vmem:[%s47 + $0xf0] sm:$0xff]
        %v6833 = vld [vmem:[%s47 + $0xf8] sm:$0xff]
        %v6834 = vld [vmem:[%s47 + $0x100] sm:$0xff]
        %v6835 = vld [vmem:[%s47 + $0x108] sm:$0xff]
        %v6836 = vld [vmem:[%s47 + $0x110] sm:$0xff]
        %v6837 = vld [vmem:[%s47 + $0x118] sm:$0xff]
        %v6838 = vld [vmem:[%s47 + $0x120] sm:$0xff]
        %v6839 = vld [vmem:[%s47 + $0x128] sm:$0xff]
        %v6840 = vld [vmem:[%s47 + $0x130] sm:$0xff]
        %v6841 = vld [vmem:[%s47 + $0x138] sm:$0xff]
        %v6842 = vld [vmem:[%s47 + $0x140] sm:$0xff]
        %v6843 = vld [vmem:[%s47 + $0x148] sm:$0xff]
        %v6844 = vld [vmem:[%s47 + $0x150] sm:$0xff]
        %v6845 = vld [vmem:[%s47 + $0x158] sm:$0xff]
        %v6846 = vld [vmem:[%s47 + $0x160] sm:$0xff]
        %v6847 = vld [vmem:[%s47 + $0x168] sm:$0xff]
        %v6848 = vld [vmem:[%s47 + $0x170] sm:$0xff]
        %v6849 = vld [vmem:[%s47 + $0x178] sm:$0xff]
        %v6850 = vld [vmem:[%s47 + $0x180] sm:$0xff]
        %v6851 = vld [vmem:[%s47 + $0x188] sm:$0xff]
        %v6852 = vld [vmem:[%s47 + $0x190] sm:$0xff]
        %v6853 = vld [vmem:[%s47 + $0x198] sm:$0xff]
        %v6854 = vld [vmem:[%s47 + $0x1a0] sm:$0xff]
        %v6855 = vld [vmem:[%s47 + $0x1a8] sm:$0xff]
        %v6856 = vld [vmem:[%s47 + $0x1b0] sm:$0xff]
        %v6857 = vld [vmem:[%s47 + $0x1b8] sm:$0xff]
        %v6858 = vld [vmem:[%s47 + $0x1c0] sm:$0xff]
        %v6859 = vld [vmem:[%s47 + $0x1c8] sm:$0xff]
        %v6860 = vld [vmem:[%s47 + $0x1d0] sm:$0xff]
        %v6861 = vld [vmem:[%s47 + $0x1d8] sm:$0xff]
        %v6862 = vld [vmem:[%s47 + $0x1e0] sm:$0xff]
        %v6863 = vld [vmem:[%s47 + $0x1e8] sm:$0xff]
        %v6864 = vld [vmem:[%s47 + $0x1f0] sm:$0xff]
        %v6865 = vld [vmem:[%s47 + $0x1f8] sm:$0xff]
        %v6866 = vld [vmem:[%s47 + $0x200] sm:$0xff]
        %v6867 = vld [vmem:[%s47 + $0x208] sm:$0xff]
        %v6868 = vld [vmem:[%s47 + $0x210] sm:$0xff]
        %v6869 = vld [vmem:[%s47 + $0x218] sm:$0xff]
        %v6870 = vld [vmem:[%s47 + $0x220] sm:$0xff]
        %v6871 = vld [vmem:[%s47 + $0x228] sm:$0xff]
        %v6872 = vld [vmem:[%s47 + $0x230] sm:$0xff]
        %v6873 = vld [vmem:[%s47 + $0x238] sm:$0xff]
        %v6874 = vld [vmem:[%s47 + $0x240] sm:$0xff]
        %v6875 = vld [vmem:[%s47 + $0x248] sm:$0xff]
        %v6876 = vld [vmem:[%s47 + $0x250] sm:$0xff]
        %v6877 = vld [vmem:[%s47 + $0x258] sm:$0xff]
        %v6878 = vld [vmem:[%s47 + $0x260] sm:$0xff]
        %v6879 = vld [vmem:[%s47 + $0x268] sm:$0xff]
        %v6880 = vld [vmem:[%s47 + $0x270] sm:$0xff]
        %v6881 = vld [vmem:[%s47 + $0x278] sm:$0xff]
        %v6882 = vld [vmem:[%s47 + $0x280] sm:$0xff]
        %v6883 = vld [vmem:[%s47 + $0x288] sm:$0xff]
        %v6884 = vld [vmem:[%s47 + $0x290] sm:$0xff]
        %v6885 = vld [vmem:[%s47 + $0x298] sm:$0xff]
        %v6886 = vld [vmem:[%s47 + $0x2a0] sm:$0xff]
        %v6887 = vld [vmem:[%s47 + $0x2a8] sm:$0xff]
        %v6888 = vld [vmem:[%s47 + $0x2b0] sm:$0xff]
        %v6889 = vld [vmem:[%s47 + $0x2b8] sm:$0xff]
        %v6890 = vld [vmem:[%s47 + $0x2c0] sm:$0xff]
        %v6891 = vld [vmem:[%s47 + $0x2c8] sm:$0xff]
        %v6892 = vld [vmem:[%s47 + $0x2d0] sm:$0xff]
        %v6893 = vld [vmem:[%s47 + $0x2d8] sm:$0xff]
        %v6894 = vld [vmem:[%s47 + $0x2e0] sm:$0xff]
        %v6895 = vld [vmem:[%s47 + $0x2e8] sm:$0xff]
        %v6896 = vld [vmem:[%s47 + $0x2f0] sm:$0xff]
        %v6897 = vld [vmem:[%s47 + $0x2f8] sm:$0xff]
        %v6898 = vld [vmem:[%s47 + $0x300] sm:$0xff]
        %v6899 = vld [vmem:[%s47 + $0x308] sm:$0xff]
        %v6900 = vld [vmem:[%s47 + $0x310] sm:$0xff]
        %v6901 = vld [vmem:[%s47 + $0x318] sm:$0xff]
        %v6902 = vld [vmem:[%s47 + $0x320] sm:$0xff]
        %v6903 = vld [vmem:[%s47 + $0x328] sm:$0xff]
        %v6904 = vld [vmem:[%s47 + $0x330] sm:$0xff]
        %v6905 = vld [vmem:[%s47 + $0x338] sm:$0xff]
        %v6906 = vld [vmem:[%s47 + $0x340] sm:$0xff]
        %v6907 = vld [vmem:[%s47 + $0x348] sm:$0xff]
        %v6908 = vld [vmem:[%s47 + $0x350] sm:$0xff]
        %v6909 = vld [vmem:[%s47 + $0x358] sm:$0xff]
        %v6910 = vld [vmem:[%s47 + $0x360] sm:$0xff]
        %v6911 = vld [vmem:[%s47 + $0x368] sm:$0xff]
        %v6912 = vld [vmem:[%s47 + $0x370] sm:$0xff]
        %v6913 = vld [vmem:[%s47 + $0x378] sm:$0xff]
        %s6914 = scalar_lea.vmem %s47, 896
        %v6915 = vld [vmem:[%s6914] sm:$0xff]
        %v6916 = vld [vmem:[%s6914 + $0x8] sm:$0xff]
        %v6917 = vld [vmem:[%s6914 + $0x10] sm:$0xff]
        %v6918 = vld [vmem:[%s6914 + $0x18] sm:$0xff]
        %v6919 = vld [vmem:[%s6914 + $0x20] sm:$0xff]
        %v6920 = vld [vmem:[%s6914 + $0x28] sm:$0xff]
        %v6921 = vld [vmem:[%s6914 + $0x30] sm:$0xff]
        %v6922 = vld [vmem:[%s6914 + $0x38] sm:$0xff]
        %v6923 = vld [vmem:[%s6914 + $0x40] sm:$0xff]
        %v6924 = vld [vmem:[%s6914 + $0x48] sm:$0xff]
        %v6925 = vld [vmem:[%s6914 + $0x50] sm:$0xff]
        %v6926 = vld [vmem:[%s6914 + $0x58] sm:$0xff]
        %v6927 = vld [vmem:[%s6914 + $0x60] sm:$0xff]
        %v6928 = vld [vmem:[%s6914 + $0x68] sm:$0xff]
        %v6929 = vld [vmem:[%s6914 + $0x70] sm:$0xff]
        %v6930 = vld [vmem:[%s6914 + $0x78] sm:$0xff]
        %v6931 = vld [vmem:[%s6914 + $0x80] sm:$0xff]
        %v6932 = vld [vmem:[%s6914 + $0x88] sm:$0xff]
        %v6933 = vld [vmem:[%s6914 + $0x90] sm:$0xff]
        %v6934 = vld [vmem:[%s6914 + $0x98] sm:$0xff]
        %v6935 = vld [vmem:[%s6914 + $0xa0] sm:$0xff]
        %v6936 = vld [vmem:[%s6914 + $0xa8] sm:$0xff]
        %v6937 = vld [vmem:[%s6914 + $0xb0] sm:$0xff]
        %v6938 = vld [vmem:[%s6914 + $0xb8] sm:$0xff]
        %v6939 = vld [vmem:[%s6914 + $0xc0] sm:$0xff]
        %v6940 = vld [vmem:[%s6914 + $0xc8] sm:$0xff]
        %v6941 = vld [vmem:[%s6914 + $0xd0] sm:$0xff]
        %v6942 = vld [vmem:[%s6914 + $0xd8] sm:$0xff]
        %v6943 = vld [vmem:[%s6914 + $0xe0] sm:$0xff]
        %v6944 = vld [vmem:[%s6914 + $0xe8] sm:$0xff]
        %v6945 = vld [vmem:[%s6914 + $0xf0] sm:$0xff]
        %v6946 = vld [vmem:[%s6914 + $0xf8] sm:$0xff]
        %v6947 = vld [vmem:[%s6914 + $0x100] sm:$0xff]
        %v6948 = vld [vmem:[%s6914 + $0x108] sm:$0xff]
        %v6949 = vld [vmem:[%s6914 + $0x110] sm:$0xff]
        %v6950 = vld [vmem:[%s6914 + $0x118] sm:$0xff]
        %v6951 = vld [vmem:[%s6914 + $0x120] sm:$0xff]
        %v6952 = vld [vmem:[%s6914 + $0x128] sm:$0xff]
        %v6953 = vld [vmem:[%s6914 + $0x130] sm:$0xff]
        %v6954 = vld [vmem:[%s6914 + $0x138] sm:$0xff]
        %v6955 = vld [vmem:[%s6914 + $0x140] sm:$0xff]
        %v6956 = vld [vmem:[%s6914 + $0x148] sm:$0xff]
        %v6957 = vld [vmem:[%s6914 + $0x150] sm:$0xff]
        %v6958 = vld [vmem:[%s6914 + $0x158] sm:$0xff]
        %v6959 = vld [vmem:[%s6914 + $0x160] sm:$0xff]
        %v6960 = vld [vmem:[%s6914 + $0x168] sm:$0xff]
        %v6961 = vld [vmem:[%s6914 + $0x170] sm:$0xff]
        %v6962 = vld [vmem:[%s6914 + $0x178] sm:$0xff]
        %v6963 = vld [vmem:[%s6914 + $0x180] sm:$0xff]
        %v6964 = vld [vmem:[%s6914 + $0x188] sm:$0xff]
        %v6965 = vld [vmem:[%s6914 + $0x190] sm:$0xff]
        %v6966 = vld [vmem:[%s6914 + $0x198] sm:$0xff]
        %v6967 = vld [vmem:[%s6914 + $0x1a0] sm:$0xff]
        %v6968 = vld [vmem:[%s6914 + $0x1a8] sm:$0xff]
        %v6969 = vld [vmem:[%s6914 + $0x1b0] sm:$0xff]
        %v6970 = vld [vmem:[%s6914 + $0x1b8] sm:$0xff]
        %v6971 = vld [vmem:[%s6914 + $0x1c0] sm:$0xff]
        %v6972 = vld [vmem:[%s6914 + $0x1c8] sm:$0xff]
        %v6973 = vld [vmem:[%s6914 + $0x1d0] sm:$0xff]
        %v6974 = vld [vmem:[%s6914 + $0x1d8] sm:$0xff]
        %v6975 = vld [vmem:[%s6914 + $0x1e0] sm:$0xff]
        %v6976 = vld [vmem:[%s6914 + $0x1e8] sm:$0xff]
        %v6977 = vld [vmem:[%s6914 + $0x1f0] sm:$0xff]
        %v6978 = vld [vmem:[%s6914 + $0x1f8] sm:$0xff]
        %v6979 = vld [vmem:[%s6914 + $0x200] sm:$0xff]
        %v6980 = vld [vmem:[%s6914 + $0x208] sm:$0xff]
        %v6981 = vld [vmem:[%s6914 + $0x210] sm:$0xff]
        %v6982 = vld [vmem:[%s6914 + $0x218] sm:$0xff]
        %v6983 = vld [vmem:[%s6914 + $0x220] sm:$0xff]
        %v6984 = vld [vmem:[%s6914 + $0x228] sm:$0xff]
        %v6985 = vld [vmem:[%s6914 + $0x230] sm:$0xff]
        %v6986 = vld [vmem:[%s6914 + $0x238] sm:$0xff]
        %v6987 = vld [vmem:[%s6914 + $0x240] sm:$0xff]
        %v6988 = vld [vmem:[%s6914 + $0x248] sm:$0xff]
        %v6989 = vld [vmem:[%s6914 + $0x250] sm:$0xff]
        %v6990 = vld [vmem:[%s6914 + $0x258] sm:$0xff]
        %v6991 = vld [vmem:[%s6914 + $0x260] sm:$0xff]
        %v6992 = vld [vmem:[%s6914 + $0x268] sm:$0xff]
        %v6993 = vld [vmem:[%s6914 + $0x270] sm:$0xff]
        %v6994 = vld [vmem:[%s6914 + $0x278] sm:$0xff]
        %v6995 = vld [vmem:[%s6914 + $0x280] sm:$0xff]
        %v6996 = vld [vmem:[%s6914 + $0x288] sm:$0xff]
        %v6997 = vld [vmem:[%s6914 + $0x290] sm:$0xff]
        %v6998 = vld [vmem:[%s6914 + $0x298] sm:$0xff]
        %v6999 = vld [vmem:[%s6914 + $0x2a0] sm:$0xff]
        %v7000 = vld [vmem:[%s6914 + $0x2a8] sm:$0xff]
        %v7001 = vld [vmem:[%s6914 + $0x2b0] sm:$0xff]
        %v7002 = vld [vmem:[%s6914 + $0x2b8] sm:$0xff]
        %v7003 = vld [vmem:[%s6914 + $0x2c0] sm:$0xff]
        %v7004 = vld [vmem:[%s6914 + $0x2c8] sm:$0xff]
        %v7005 = vld [vmem:[%s6914 + $0x2d0] sm:$0xff]
        %v7006 = vld [vmem:[%s6914 + $0x2d8] sm:$0xff]
        %v7007 = vld [vmem:[%s6914 + $0x2e0] sm:$0xff]
        %v7008 = vld [vmem:[%s6914 + $0x2e8] sm:$0xff]
        %v7009 = vld [vmem:[%s6914 + $0x2f0] sm:$0xff]
        %v7010 = vld [vmem:[%s6914 + $0x2f8] sm:$0xff]
        %v7011 = vld [vmem:[%s6914 + $0x300] sm:$0xff]
        %v7012 = vld [vmem:[%s6914 + $0x308] sm:$0xff]
        %v7013 = vld [vmem:[%s6914 + $0x310] sm:$0xff]
        %v7014 = vld [vmem:[%s6914 + $0x318] sm:$0xff]
        %v7015 = vld [vmem:[%s6914 + $0x320] sm:$0xff]
        %v7016 = vld [vmem:[%s6914 + $0x328] sm:$0xff]
        %v7017 = vld [vmem:[%s6914 + $0x330] sm:$0xff]
        %v7018 = vld [vmem:[%s6914 + $0x338] sm:$0xff]
        %v7019 = vld [vmem:[%s6914 + $0x340] sm:$0xff]
        %v7020 = vld [vmem:[%s6914 + $0x348] sm:$0xff]
        %v7021 = vld [vmem:[%s6914 + $0x350] sm:$0xff]
        %v7022 = vld [vmem:[%s6914 + $0x358] sm:$0xff]
        %v7023 = vld [vmem:[%s6914 + $0x360] sm:$0xff]
        %v7024 = vld [vmem:[%s6914 + $0x368] sm:$0xff]
        %v7025 = vld [vmem:[%s6914 + $0x370] sm:$0xff]
        %v7026 = vld [vmem:[%s6914 + $0x378] sm:$0xff]
        %v7035 = vrot.slane %v6728, 1
        %v7036 = vrot.slane %v6731, 1
        %v7037 = vsel %vm1044, %v7035, %v7036
        %v7038 = vrot.slane %v6751, 1
        %v7039 = vrot.slane %v6754, 1
        %v7040 = vsel %vm1044, %v7038, %v7039
        %v7041 = vrot.slane %v6774, 1
        %v7042 = vrot.slane %v6777, 1
        %v7043 = vsel %vm1044, %v7041, %v7042
        %v7044 = vrot.slane %v6797, 1
        %v7045 = vrot.slane %v6800, 1
        %v7046 = vsel %vm1044, %v7044, %v7045
        %v7053 = vsel %vm1657, %v7046, 0
        %v7055 = vsel %vm1657, %v7045, 0
        %7057 = vmatpush.msra.mxu0 %v6945
        %7058 = vmatpush.msra.mxu0 %v6943
        %7059 = vmatpush.msra.mxu0 %v6941
        %7060 = vmatpush.msra.mxu0 %v6939
        %7061 = vmatpush.msra.mxu0 %v6937
        %7062 = vmatpush.msra.mxu0 %v6935
        %7063 = vmatpush.msra.mxu0 %v6933
        %7064 = vmatpush.msra.mxu0 %v6931
        %7065 = vmatpush.msra.mxu0 %v6929
        %7066 = vmatpush.msra.mxu0 %v6927
        %7067 = vmatpush.msra.mxu0 %v6925
        %7068 = vmatpush.msra.mxu0 %v6923
        %7069 = vmatpush.msra.mxu0 %v6921
        %7070 = vmatpush.msra.mxu0 %v6919
        %7071 = vmatpush.msra.mxu0 %v6917
        %7072 = vmatpush.msra.mxu0 %v6915
        %7073 = vmatmul.f32.gmra.mxu0 %v7037
        %v7074 = vpop.f32.mrf.mxu0
        %v7075 = vadd.f32 0.0, %v7074
        %7076 = vmatmul.f32.gmra.mxu0 %v7036
        %v7077 = vpop.f32.mrf.mxu0
        %v7078 = vadd.f32 0.0, %v7077
        %7079 = vdwg.mxu0
        %7080 = vmatpush.msra.mxu0 %v6977
        %7081 = vmatpush.msra.mxu0 %v6975
        %7082 = vmatpush.msra.mxu0 %v6973
        %7083 = vmatpush.msra.mxu0 %v6971
        %7084 = vmatpush.msra.mxu0 %v6969
        %7085 = vmatpush.msra.mxu0 %v6967
        %7086 = vmatpush.msra.mxu0 %v6965
        %7087 = vmatpush.msra.mxu0 %v6963
        %7088 = vmatpush.msra.mxu0 %v6961
        %7089 = vmatpush.msra.mxu0 %v6959
        %7090 = vmatpush.msra.mxu0 %v6957
        %7091 = vmatpush.msra.mxu0 %v6955
        %7092 = vmatpush.msra.mxu0 %v6953
        %7093 = vmatpush.msra.mxu0 %v6951
        %7094 = vmatpush.msra.mxu0 %v6949
        %7095 = vmatpush.msra.mxu0 %v6947
        %7096 = vmatmul.f32.gmra.mxu0 %v7040
        %v7097 = vpop.f32.mrf.mxu0
        %v7098 = vadd.f32 %v7075, %v7097
        %7099 = vmatmul.f32.gmra.mxu0 %v7039
        %v7100 = vpop.f32.mrf.mxu0
        %v7101 = vadd.f32 %v7078, %v7100
        %7102 = vdwg.mxu0
        %7103 = vmatpush.msra.mxu0 %v7009
        %7104 = vmatpush.msra.mxu0 %v7007
        %7105 = vmatpush.msra.mxu0 %v7005
        %7106 = vmatpush.msra.mxu0 %v7003
        %7107 = vmatpush.msra.mxu0 %v7001
        %7108 = vmatpush.msra.mxu0 %v6999
        %7109 = vmatpush.msra.mxu0 %v6997
        %7110 = vmatpush.msra.mxu0 %v6995
        %7111 = vmatpush.msra.mxu0 %v6993
        %7112 = vmatpush.msra.mxu0 %v6991
        %7113 = vmatpush.msra.mxu0 %v6989
        %7114 = vmatpush.msra.mxu0 %v6987
        %7115 = vmatpush.msra.mxu0 %v6985
        %7116 = vmatpush.msra.mxu0 %v6983
        %7117 = vmatpush.msra.mxu0 %v6981
        %7118 = vmatpush.msra.mxu0 %v6979
        %7119 = vmatmul.f32.gmra.mxu0 %v7043
        %v7120 = vpop.f32.mrf.mxu0
        %v7121 = vadd.f32 %v7098, %v7120
        %7122 = vmatmul.f32.gmra.mxu0 %v7042
        %v7123 = vpop.f32.mrf.mxu0
        %v7124 = vadd.f32 %v7101, %v7123
        %7125 = vdwg.mxu0
        %7126 = vmatpush.msra.mxu0 0.0
        %7127 = vmatpush.msra.mxu0 0.0
        %7128 = vmatpush.msra.mxu0 0.0
        %7129 = vmatpush.msra.mxu0 0.0
        %7130 = vmatpush.msra.mxu0 0.0
        %7131 = vmatpush.msra.mxu0 0.0
        %7132 = vmatpush.msra.mxu0 0.0
        %7133 = vmatpush.msra.mxu0 0.0
        %7134 = vmatpush.msra.mxu0 %v7025
        %7135 = vmatpush.msra.mxu0 %v7023
        %7136 = vmatpush.msra.mxu0 %v7021
        %7137 = vmatpush.msra.mxu0 %v7019
        %7138 = vmatpush.msra.mxu0 %v7017
        %7139 = vmatpush.msra.mxu0 %v7015
        %7140 = vmatpush.msra.mxu0 %v7013
        %7141 = vmatpush.msra.mxu0 %v7011
        %7142 = vmatmul.f32.gmra.mxu0 %v7053
        %v7143 = vpop.f32.mrf.mxu0
        %v7144 = vadd.f32 %v7121, %v7143
        %7145 = vmatmul.f32.gmra.mxu0 %v7055
        %v7146 = vpop.f32.mrf.mxu0
        %v7147 = vadd.f32 %v7124, %v7146
        %7148 = vdwg.mxu0
        %7149 = vmatpush.msra.mxu0 %v6946
        %7150 = vmatpush.msra.mxu0 %v6944
        %7151 = vmatpush.msra.mxu0 %v6942
        %7152 = vmatpush.msra.mxu0 %v6940
        %7153 = vmatpush.msra.mxu0 %v6938
        %7154 = vmatpush.msra.mxu0 %v6936
        %7155 = vmatpush.msra.mxu0 %v6934
        %7156 = vmatpush.msra.mxu0 %v6932
        %7157 = vmatpush.msra.mxu0 %v6930
        %7158 = vmatpush.msra.mxu0 %v6928
        %7159 = vmatpush.msra.mxu0 %v6926
        %7160 = vmatpush.msra.mxu0 %v6924
        %7161 = vmatpush.msra.mxu0 %v6922
        %7162 = vmatpush.msra.mxu0 %v6920
        %7163 = vmatpush.msra.mxu0 %v6918
        %7164 = vmatpush.msra.mxu0 %v6916
        %7165 = vmatmul.f32.gmra.mxu0 %v7037
        %v7166 = vpop.f32.mrf.mxu0
        %v7167 = vadd.f32 0.0, %v7166
        %7168 = vmatmul.f32.gmra.mxu0 %v7036
        %v7169 = vpop.f32.mrf.mxu0
        %v7170 = vadd.f32 0.0, %v7169
        %7171 = vdwg.mxu0
        %7172 = vmatpush.msra.mxu0 %v6978
        %7173 = vmatpush.msra.mxu0 %v6976
        %7174 = vmatpush.msra.mxu0 %v6974
        %7175 = vmatpush.msra.mxu0 %v6972
        %7176 = vmatpush.msra.mxu0 %v6970
        %7177 = vmatpush.msra.mxu0 %v6968
        %7178 = vmatpush.msra.mxu0 %v6966
        %7179 = vmatpush.msra.mxu0 %v6964
        %7180 = vmatpush.msra.mxu0 %v6962
        %7181 = vmatpush.msra.mxu0 %v6960
        %7182 = vmatpush.msra.mxu0 %v6958
        %7183 = vmatpush.msra.mxu0 %v6956
        %7184 = vmatpush.msra.mxu0 %v6954
        %7185 = vmatpush.msra.mxu0 %v6952
        %7186 = vmatpush.msra.mxu0 %v6950
        %7187 = vmatpush.msra.mxu0 %v6948
        %7188 = vmatmul.f32.gmra.mxu0 %v7040
        %v7189 = vpop.f32.mrf.mxu0
        %v7190 = vadd.f32 %v7167, %v7189
        %7191 = vmatmul.f32.gmra.mxu0 %v7039
        %v7192 = vpop.f32.mrf.mxu0
        %v7193 = vadd.f32 %v7170, %v7192
        %7194 = vdwg.mxu0
        %7195 = vmatpush.msra.mxu0 %v7010
        %7196 = vmatpush.msra.mxu0 %v7008
        %7197 = vmatpush.msra.mxu0 %v7006
        %7198 = vmatpush.msra.mxu0 %v7004
        %7199 = vmatpush.msra.mxu0 %v7002
        %7200 = vmatpush.msra.mxu0 %v7000
        %7201 = vmatpush.msra.mxu0 %v6998
        %7202 = vmatpush.msra.mxu0 %v6996
        %7203 = vmatpush.msra.mxu0 %v6994
        %7204 = vmatpush.msra.mxu0 %v6992
        %7205 = vmatpush.msra.mxu0 %v6990
        %7206 = vmatpush.msra.mxu0 %v6988
        %7207 = vmatpush.msra.mxu0 %v6986
        %7208 = vmatpush.msra.mxu0 %v6984
        %7209 = vmatpush.msra.mxu0 %v6982
        %7210 = vmatpush.msra.mxu0 %v6980
        %7211 = vmatmul.f32.gmra.mxu0 %v7043
        %v7212 = vpop.f32.mrf.mxu0
        %v7213 = vadd.f32 %v7190, %v7212
        %7214 = vmatmul.f32.gmra.mxu0 %v7042
        %v7215 = vpop.f32.mrf.mxu0
        %v7216 = vadd.f32 %v7193, %v7215
        %7217 = vdwg.mxu0
        %7218 = vmatpush.msra.mxu0 0.0
        %7219 = vmatpush.msra.mxu0 0.0
        %7220 = vmatpush.msra.mxu0 0.0
        %7221 = vmatpush.msra.mxu0 0.0
        %7222 = vmatpush.msra.mxu0 0.0
        %7223 = vmatpush.msra.mxu0 0.0
        %7224 = vmatpush.msra.mxu0 0.0
        %7225 = vmatpush.msra.mxu0 0.0
        %7226 = vmatpush.msra.mxu0 %v7026
        %7227 = vmatpush.msra.mxu0 %v7024
        %7228 = vmatpush.msra.mxu0 %v7022
        %7229 = vmatpush.msra.mxu0 %v7020
        %7230 = vmatpush.msra.mxu0 %v7018
        %7231 = vmatpush.msra.mxu0 %v7016
        %7232 = vmatpush.msra.mxu0 %v7014
        %7233 = vmatpush.msra.mxu0 %v7012
        %7234 = vmatmul.f32.gmra.mxu0 %v7053
        %v7235 = vpop.f32.mrf.mxu0
        %v7236 = vadd.f32 %v7213, %v7235
        %7237 = vmatmul.f32.gmra.mxu0 %v7055
        %v7238 = vpop.f32.mrf.mxu0
        %v7239 = vadd.f32 %v7216, %v7238
        %7240 = vdwg.mxu0
        %v7241 = vsel %vm1657, %v6797, 0
        %v7243 = vsel %vm1657, %v6800, 0
        %7245 = vmatpush.msra.mxu0 %v6832
        %7246 = vmatpush.msra.mxu0 %v6830
        %7247 = vmatpush.msra.mxu0 %v6828
        %7248 = vmatpush.msra.mxu0 %v6826
        %7249 = vmatpush.msra.mxu0 %v6824
        %7250 = vmatpush.msra.mxu0 %v6822
        %7251 = vmatpush.msra.mxu0 %v6820
        %7252 = vmatpush.msra.mxu0 %v6818
        %7253 = vmatpush.msra.mxu0 %v6816
        %7254 = vmatpush.msra.mxu0 %v6814
        %7255 = vmatpush.msra.mxu0 %v6812
        %7256 = vmatpush.msra.mxu0 %v6810
        %7257 = vmatpush.msra.mxu0 %v6808
        %7258 = vmatpush.msra.mxu0 %v6806
        %7259 = vmatpush.msra.mxu0 %v6804
        %7260 = vmatpush.msra.mxu0 %v6802
        %7261 = vmatmul.f32.gmra.mxu0 %v6728
        %v7262 = vpop.f32.mrf.mxu0
        %v7263 = vadd.f32 %v7144, %v7262
        %7264 = vmatmul.f32.gmra.mxu0 %v6731
        %v7265 = vpop.f32.mrf.mxu0
        %v7266 = vadd.f32 %v7147, %v7265
        %7267 = vdwg.mxu0
        %7268 = vmatpush.msra.mxu0 %v6864
        %7269 = vmatpush.msra.mxu0 %v6862
        %7270 = vmatpush.msra.mxu0 %v6860
        %7271 = vmatpush.msra.mxu0 %v6858
        %7272 = vmatpush.msra.mxu0 %v6856
        %7273 = vmatpush.msra.mxu0 %v6854
        %7274 = vmatpush.msra.mxu0 %v6852
        %7275 = vmatpush.msra.mxu0 %v6850
        %7276 = vmatpush.msra.mxu0 %v6848
        %7277 = vmatpush.msra.mxu0 %v6846
        %7278 = vmatpush.msra.mxu0 %v6844
        %7279 = vmatpush.msra.mxu0 %v6842
        %7280 = vmatpush.msra.mxu0 %v6840
        %7281 = vmatpush.msra.mxu0 %v6838
        %7282 = vmatpush.msra.mxu0 %v6836
        %7283 = vmatpush.msra.mxu0 %v6834
        %7284 = vmatmul.f32.gmra.mxu0 %v6751
        %v7285 = vpop.f32.mrf.mxu0
        %v7286 = vadd.f32 %v7263, %v7285
        %7287 = vmatmul.f32.gmra.mxu0 %v6754
        %v7288 = vpop.f32.mrf.mxu0
        %v7289 = vadd.f32 %v7266, %v7288
        %7290 = vdwg.mxu0
        %7291 = vmatpush.msra.mxu0 %v6896
        %7292 = vmatpush.msra.mxu0 %v6894
        %7293 = vmatpush.msra.mxu0 %v6892
        %7294 = vmatpush.msra.mxu0 %v6890
        %7295 = vmatpush.msra.mxu0 %v6888
        %7296 = vmatpush.msra.mxu0 %v6886
        %7297 = vmatpush.msra.mxu0 %v6884
        %7298 = vmatpush.msra.mxu0 %v6882
        %7299 = vmatpush.msra.mxu0 %v6880
        %7300 = vmatpush.msra.mxu0 %v6878
        %7301 = vmatpush.msra.mxu0 %v6876
        %7302 = vmatpush.msra.mxu0 %v6874
        %7303 = vmatpush.msra.mxu0 %v6872
        %7304 = vmatpush.msra.mxu0 %v6870
        %7305 = vmatpush.msra.mxu0 %v6868
        %7306 = vmatpush.msra.mxu0 %v6866
        %7307 = vmatmul.f32.gmra.mxu0 %v6774
        %v7308 = vpop.f32.mrf.mxu0
        %v7309 = vadd.f32 %v7286, %v7308
        %7310 = vmatmul.f32.gmra.mxu0 %v6777
        %v7311 = vpop.f32.mrf.mxu0
        %v7312 = vadd.f32 %v7289, %v7311
        %7313 = vdwg.mxu0
        %7314 = vmatpush.msra.mxu0 0.0
        %7315 = vmatpush.msra.mxu0 0.0
        %7316 = vmatpush.msra.mxu0 0.0
        %7317 = vmatpush.msra.mxu0 0.0
        %7318 = vmatpush.msra.mxu0 0.0
        %7319 = vmatpush.msra.mxu0 0.0
        %7320 = vmatpush.msra.mxu0 0.0
        %7321 = vmatpush.msra.mxu0 0.0
        %7322 = vmatpush.msra.mxu0 %v6912
        %7323 = vmatpush.msra.mxu0 %v6910
        %7324 = vmatpush.msra.mxu0 %v6908
        %7325 = vmatpush.msra.mxu0 %v6906
        %7326 = vmatpush.msra.mxu0 %v6904
        %7327 = vmatpush.msra.mxu0 %v6902
        %7328 = vmatpush.msra.mxu0 %v6900
        %7329 = vmatpush.msra.mxu0 %v6898
        %7330 = vmatmul.f32.gmra.mxu0 %v7241
        %v7331 = vpop.f32.mrf.mxu0
        %v7332 = vadd.f32 %v7309, %v7331
        %7333 = vmatmul.f32.gmra.mxu0 %v7243
        %v7334 = vpop.f32.mrf.mxu0
        %v7335 = vadd.f32 %v7312, %v7334
        %7336 = vdwg.mxu0
        %7337 = vmatpush.msra.mxu0 %v6833
        %7338 = vmatpush.msra.mxu0 %v6831
        %7339 = vmatpush.msra.mxu0 %v6829
        %7340 = vmatpush.msra.mxu0 %v6827
        %7341 = vmatpush.msra.mxu0 %v6825
        %7342 = vmatpush.msra.mxu0 %v6823
        %7343 = vmatpush.msra.mxu0 %v6821
        %7344 = vmatpush.msra.mxu0 %v6819
        %7345 = vmatpush.msra.mxu0 %v6817
        %7346 = vmatpush.msra.mxu0 %v6815
        %7347 = vmatpush.msra.mxu0 %v6813
        %7348 = vmatpush.msra.mxu0 %v6811
        %7349 = vmatpush.msra.mxu0 %v6809
        %7350 = vmatpush.msra.mxu0 %v6807
        %7351 = vmatpush.msra.mxu0 %v6805
        %7352 = vmatpush.msra.mxu0 %v6803
        %7353 = vmatmul.f32.gmra.mxu0 %v6728
        %v7354 = vpop.f32.mrf.mxu0
        %v7355 = vadd.f32 %v7236, %v7354
        %7356 = vmatmul.f32.gmra.mxu0 %v6731
        %v7357 = vpop.f32.mrf.mxu0
        %v7358 = vadd.f32 %v7239, %v7357
        %7359 = vdwg.mxu0
        %7360 = vmatpush.msra.mxu0 %v6865
        %7361 = vmatpush.msra.mxu0 %v6863
        %7362 = vmatpush.msra.mxu0 %v6861
        %7363 = vmatpush.msra.mxu0 %v6859
        %7364 = vmatpush.msra.mxu0 %v6857
        %7365 = vmatpush.msra.mxu0 %v6855
        %7366 = vmatpush.msra.mxu0 %v6853
        %7367 = vmatpush.msra.mxu0 %v6851
        %7368 = vmatpush.msra.mxu0 %v6849
        %7369 = vmatpush.msra.mxu0 %v6847
        %7370 = vmatpush.msra.mxu0 %v6845
        %7371 = vmatpush.msra.mxu0 %v6843
        %7372 = vmatpush.msra.mxu0 %v6841
        %7373 = vmatpush.msra.mxu0 %v6839
        %7374 = vmatpush.msra.mxu0 %v6837
        %7375 = vmatpush.msra.mxu0 %v6835
        %7376 = vmatmul.f32.gmra.mxu0 %v6751
        %v7377 = vpop.f32.mrf.mxu0
        %v7378 = vadd.f32 %v7355, %v7377
        %7379 = vmatmul.f32.gmra.mxu0 %v6754
        %v7380 = vpop.f32.mrf.mxu0
        %v7381 = vadd.f32 %v7358, %v7380
        %7382 = vdwg.mxu0
        %7383 = vmatpush.msra.mxu0 %v6897
        %7384 = vmatpush.msra.mxu0 %v6895
        %7385 = vmatpush.msra.mxu0 %v6893
        %7386 = vmatpush.msra.mxu0 %v6891
        %7387 = vmatpush.msra.mxu0 %v6889
        %7388 = vmatpush.msra.mxu0 %v6887
        %7389 = vmatpush.msra.mxu0 %v6885
        %7390 = vmatpush.msra.mxu0 %v6883
        %7391 = vmatpush.msra.mxu0 %v6881
        %7392 = vmatpush.msra.mxu0 %v6879
        %7393 = vmatpush.msra.mxu0 %v6877
        %7394 = vmatpush.msra.mxu0 %v6875
        %7395 = vmatpush.msra.mxu0 %v6873
        %7396 = vmatpush.msra.mxu0 %v6871
        %7397 = vmatpush.msra.mxu0 %v6869
        %7398 = vmatpush.msra.mxu0 %v6867
        %7399 = vmatmul.f32.gmra.mxu0 %v6774
        %v7400 = vpop.f32.mrf.mxu0
        %v7401 = vadd.f32 %v7378, %v7400
        %7402 = vmatmul.f32.gmra.mxu0 %v6777
        %v7403 = vpop.f32.mrf.mxu0
        %v7404 = vadd.f32 %v7381, %v7403
        %7405 = vdwg.mxu0
        %7406 = vmatpush.msra.mxu0 0.0
        %7407 = vmatpush.msra.mxu0 0.0
        %7408 = vmatpush.msra.mxu0 0.0
        %7409 = vmatpush.msra.mxu0 0.0
        %7410 = vmatpush.msra.mxu0 0.0
        %7411 = vmatpush.msra.mxu0 0.0
        %7412 = vmatpush.msra.mxu0 0.0
        %7413 = vmatpush.msra.mxu0 0.0
        %7414 = vmatpush.msra.mxu0 %v6913
        %7415 = vmatpush.msra.mxu0 %v6911
        %7416 = vmatpush.msra.mxu0 %v6909
        %7417 = vmatpush.msra.mxu0 %v6907
        %7418 = vmatpush.msra.mxu0 %v6905
        %7419 = vmatpush.msra.mxu0 %v6903
        %7420 = vmatpush.msra.mxu0 %v6901
        %7421 = vmatpush.msra.mxu0 %v6899
        %7422 = vmatmul.f32.gmra.mxu0 %v7241
        %v7423 = vpop.f32.mrf.mxu0
        %v7424 = vadd.f32 %v7401, %v7423
        %7425 = vmatmul.f32.gmra.mxu0 %v7243
        %v7426 = vpop.f32.mrf.mxu0
        %v7427 = vadd.f32 %v7404, %v7426
        %7428 = vdwg.mxu0
        %s7429 = scalar_lea.vmem %s47, 1792
        %v7430 = vld [vmem:[%s7429] sm:$0xff]
        %v7431 = vld [vmem:[%s7429 + $0x8] sm:$0xff]
        %v7432 = vld [vmem:[%s7429 + $0x10] sm:$0xff]
        %v7433 = vld [vmem:[%s7429 + $0x18] sm:$0xff]
        %v7434 = vld [vmem:[%s7429 + $0x20] sm:$0xff]
        %v7435 = vld [vmem:[%s7429 + $0x28] sm:$0xff]
        %v7436 = vld [vmem:[%s7429 + $0x30] sm:$0xff]
        %v7437 = vld [vmem:[%s7429 + $0x38] sm:$0xff]
        %v7438 = vld [vmem:[%s7429 + $0x40] sm:$0xff]
        %v7439 = vld [vmem:[%s7429 + $0x48] sm:$0xff]
        %v7440 = vld [vmem:[%s7429 + $0x50] sm:$0xff]
        %v7441 = vld [vmem:[%s7429 + $0x58] sm:$0xff]
        %v7442 = vld [vmem:[%s7429 + $0x60] sm:$0xff]
        %v7443 = vld [vmem:[%s7429 + $0x68] sm:$0xff]
        %v7444 = vld [vmem:[%s7429 + $0x70] sm:$0xff]
        %v7445 = vld [vmem:[%s7429 + $0x78] sm:$0xff]
        %v7446 = vld [vmem:[%s7429 + $0x80] sm:$0xff]
        %v7447 = vld [vmem:[%s7429 + $0x88] sm:$0xff]
        %v7448 = vld [vmem:[%s7429 + $0x90] sm:$0xff]
        %v7449 = vld [vmem:[%s7429 + $0x98] sm:$0xff]
        %v7450 = vld [vmem:[%s7429 + $0xa0] sm:$0xff]
        %v7451 = vld [vmem:[%s7429 + $0xa8] sm:$0xff]
        %v7452 = vld [vmem:[%s7429 + $0xb0] sm:$0xff]
        %v7453 = vld [vmem:[%s7429 + $0xb8] sm:$0xff]
        %v7454 = vld [vmem:[%s7429 + $0xc0] sm:$0xff]
        %v7455 = vld [vmem:[%s7429 + $0xc8] sm:$0xff]
        %v7456 = vld [vmem:[%s7429 + $0xd0] sm:$0xff]
        %v7457 = vld [vmem:[%s7429 + $0xd8] sm:$0xff]
        %v7458 = vld [vmem:[%s7429 + $0xe0] sm:$0xff]
        %v7459 = vld [vmem:[%s7429 + $0xe8] sm:$0xff]
        %v7460 = vld [vmem:[%s7429 + $0xf0] sm:$0xff]
        %v7461 = vld [vmem:[%s7429 + $0xf8] sm:$0xff]
        %v7462 = vld [vmem:[%s7429 + $0x100] sm:$0xff]
        %v7463 = vld [vmem:[%s7429 + $0x108] sm:$0xff]
        %v7464 = vld [vmem:[%s7429 + $0x110] sm:$0xff]
        %v7465 = vld [vmem:[%s7429 + $0x118] sm:$0xff]
        %v7466 = vld [vmem:[%s7429 + $0x120] sm:$0xff]
        %v7467 = vld [vmem:[%s7429 + $0x128] sm:$0xff]
        %v7468 = vld [vmem:[%s7429 + $0x130] sm:$0xff]
        %v7469 = vld [vmem:[%s7429 + $0x138] sm:$0xff]
        %v7470 = vld [vmem:[%s7429 + $0x140] sm:$0xff]
        %v7471 = vld [vmem:[%s7429 + $0x148] sm:$0xff]
        %v7472 = vld [vmem:[%s7429 + $0x150] sm:$0xff]
        %v7473 = vld [vmem:[%s7429 + $0x158] sm:$0xff]
        %v7474 = vld [vmem:[%s7429 + $0x160] sm:$0xff]
        %v7475 = vld [vmem:[%s7429 + $0x168] sm:$0xff]
        %v7476 = vld [vmem:[%s7429 + $0x170] sm:$0xff]
        %v7477 = vld [vmem:[%s7429 + $0x178] sm:$0xff]
        %v7478 = vld [vmem:[%s7429 + $0x180] sm:$0xff]
        %v7479 = vld [vmem:[%s7429 + $0x188] sm:$0xff]
        %v7480 = vld [vmem:[%s7429 + $0x190] sm:$0xff]
        %v7481 = vld [vmem:[%s7429 + $0x198] sm:$0xff]
        %v7482 = vld [vmem:[%s7429 + $0x1a0] sm:$0xff]
        %v7483 = vld [vmem:[%s7429 + $0x1a8] sm:$0xff]
        %v7484 = vld [vmem:[%s7429 + $0x1b0] sm:$0xff]
        %v7485 = vld [vmem:[%s7429 + $0x1b8] sm:$0xff]
        %v7486 = vld [vmem:[%s7429 + $0x1c0] sm:$0xff]
        %v7487 = vld [vmem:[%s7429 + $0x1c8] sm:$0xff]
        %v7488 = vld [vmem:[%s7429 + $0x1d0] sm:$0xff]
        %v7489 = vld [vmem:[%s7429 + $0x1d8] sm:$0xff]
        %v7490 = vld [vmem:[%s7429 + $0x1e0] sm:$0xff]
        %v7491 = vld [vmem:[%s7429 + $0x1e8] sm:$0xff]
        %v7492 = vld [vmem:[%s7429 + $0x1f0] sm:$0xff]
        %v7493 = vld [vmem:[%s7429 + $0x1f8] sm:$0xff]
        %v7494 = vld [vmem:[%s7429 + $0x200] sm:$0xff]
        %v7495 = vld [vmem:[%s7429 + $0x208] sm:$0xff]
        %v7496 = vld [vmem:[%s7429 + $0x210] sm:$0xff]
        %v7497 = vld [vmem:[%s7429 + $0x218] sm:$0xff]
        %v7498 = vld [vmem:[%s7429 + $0x220] sm:$0xff]
        %v7499 = vld [vmem:[%s7429 + $0x228] sm:$0xff]
        %v7500 = vld [vmem:[%s7429 + $0x230] sm:$0xff]
        %v7501 = vld [vmem:[%s7429 + $0x238] sm:$0xff]
        %v7502 = vld [vmem:[%s7429 + $0x240] sm:$0xff]
        %v7503 = vld [vmem:[%s7429 + $0x248] sm:$0xff]
        %v7504 = vld [vmem:[%s7429 + $0x250] sm:$0xff]
        %v7505 = vld [vmem:[%s7429 + $0x258] sm:$0xff]
        %v7506 = vld [vmem:[%s7429 + $0x260] sm:$0xff]
        %v7507 = vld [vmem:[%s7429 + $0x268] sm:$0xff]
        %v7508 = vld [vmem:[%s7429 + $0x270] sm:$0xff]
        %v7509 = vld [vmem:[%s7429 + $0x278] sm:$0xff]
        %v7510 = vld [vmem:[%s7429 + $0x280] sm:$0xff]
        %v7511 = vld [vmem:[%s7429 + $0x288] sm:$0xff]
        %v7512 = vld [vmem:[%s7429 + $0x290] sm:$0xff]
        %v7513 = vld [vmem:[%s7429 + $0x298] sm:$0xff]
        %v7514 = vld [vmem:[%s7429 + $0x2a0] sm:$0xff]
        %v7515 = vld [vmem:[%s7429 + $0x2a8] sm:$0xff]
        %v7516 = vld [vmem:[%s7429 + $0x2b0] sm:$0xff]
        %v7517 = vld [vmem:[%s7429 + $0x2b8] sm:$0xff]
        %v7518 = vld [vmem:[%s7429 + $0x2c0] sm:$0xff]
        %v7519 = vld [vmem:[%s7429 + $0x2c8] sm:$0xff]
        %v7520 = vld [vmem:[%s7429 + $0x2d0] sm:$0xff]
        %v7521 = vld [vmem:[%s7429 + $0x2d8] sm:$0xff]
        %v7522 = vld [vmem:[%s7429 + $0x2e0] sm:$0xff]
        %v7523 = vld [vmem:[%s7429 + $0x2e8] sm:$0xff]
        %v7524 = vld [vmem:[%s7429 + $0x2f0] sm:$0xff]
        %v7525 = vld [vmem:[%s7429 + $0x2f8] sm:$0xff]
        %v7526 = vld [vmem:[%s7429 + $0x300] sm:$0xff]
        %v7527 = vld [vmem:[%s7429 + $0x308] sm:$0xff]
        %v7528 = vld [vmem:[%s7429 + $0x310] sm:$0xff]
        %v7529 = vld [vmem:[%s7429 + $0x318] sm:$0xff]
        %v7530 = vld [vmem:[%s7429 + $0x320] sm:$0xff]
        %v7531 = vld [vmem:[%s7429 + $0x328] sm:$0xff]
        %v7532 = vld [vmem:[%s7429 + $0x330] sm:$0xff]
        %v7533 = vld [vmem:[%s7429 + $0x338] sm:$0xff]
        %v7534 = vld [vmem:[%s7429 + $0x340] sm:$0xff]
        %v7535 = vld [vmem:[%s7429 + $0x348] sm:$0xff]
        %v7536 = vld [vmem:[%s7429 + $0x350] sm:$0xff]
        %v7537 = vld [vmem:[%s7429 + $0x358] sm:$0xff]
        %v7538 = vld [vmem:[%s7429 + $0x360] sm:$0xff]
        %v7539 = vld [vmem:[%s7429 + $0x368] sm:$0xff]
        %v7540 = vld [vmem:[%s7429 + $0x370] sm:$0xff]
        %v7541 = vld [vmem:[%s7429 + $0x378] sm:$0xff]
        %v7542 = vrot.slane %v6728, 2
        %v7543 = vrot.slane %v6731, 2
        %v7544 = vsel %vm1343, %v7542, %v7543
        %v7545 = vrot.slane %v6751, 2
        %v7546 = vrot.slane %v6754, 2
        %v7547 = vsel %vm1343, %v7545, %v7546
        %v7548 = vrot.slane %v6774, 2
        %v7549 = vrot.slane %v6777, 2
        %v7550 = vsel %vm1343, %v7548, %v7549
        %v7551 = vrot.slane %v6797, 2
        %v7552 = vrot.slane %v6800, 2
        %v7553 = vsel %vm1343, %v7551, %v7552
        %v7560 = vsel %vm1657, %v7553, 0
        %v7562 = vsel %vm1657, %v7552, 0
        %7564 = vmatpush.msra.mxu0 %v7460
        %7565 = vmatpush.msra.mxu0 %v7458
        %7566 = vmatpush.msra.mxu0 %v7456
        %7567 = vmatpush.msra.mxu0 %v7454
        %7568 = vmatpush.msra.mxu0 %v7452
        %7569 = vmatpush.msra.mxu0 %v7450
        %7570 = vmatpush.msra.mxu0 %v7448
        %7571 = vmatpush.msra.mxu0 %v7446
        %7572 = vmatpush.msra.mxu0 %v7444
        %7573 = vmatpush.msra.mxu0 %v7442
        %7574 = vmatpush.msra.mxu0 %v7440
        %7575 = vmatpush.msra.mxu0 %v7438
        %7576 = vmatpush.msra.mxu0 %v7436
        %7577 = vmatpush.msra.mxu0 %v7434
        %7578 = vmatpush.msra.mxu0 %v7432
        %7579 = vmatpush.msra.mxu0 %v7430
        %7580 = vmatmul.f32.gmra.mxu0 %v7544
        %v7581 = vpop.f32.mrf.mxu0
        %v7582 = vadd.f32 0.0, %v7581
        %7583 = vmatmul.f32.gmra.mxu0 %v7543
        %v7584 = vpop.f32.mrf.mxu0
        %v7585 = vadd.f32 0.0, %v7584
        %7586 = vdwg.mxu0
        %7587 = vmatpush.msra.mxu0 %v7492
        %7588 = vmatpush.msra.mxu0 %v7490
        %7589 = vmatpush.msra.mxu0 %v7488
        %7590 = vmatpush.msra.mxu0 %v7486
        %7591 = vmatpush.msra.mxu0 %v7484
        %7592 = vmatpush.msra.mxu0 %v7482
        %7593 = vmatpush.msra.mxu0 %v7480
        %7594 = vmatpush.msra.mxu0 %v7478
        %7595 = vmatpush.msra.mxu0 %v7476
        %7596 = vmatpush.msra.mxu0 %v7474
        %7597 = vmatpush.msra.mxu0 %v7472
        %7598 = vmatpush.msra.mxu0 %v7470
        %7599 = vmatpush.msra.mxu0 %v7468
        %7600 = vmatpush.msra.mxu0 %v7466
        %7601 = vmatpush.msra.mxu0 %v7464
        %7602 = vmatpush.msra.mxu0 %v7462
        %7603 = vmatmul.f32.gmra.mxu0 %v7547
        %v7604 = vpop.f32.mrf.mxu0
        %v7605 = vadd.f32 %v7582, %v7604
        %7606 = vmatmul.f32.gmra.mxu0 %v7546
        %v7607 = vpop.f32.mrf.mxu0
        %v7608 = vadd.f32 %v7585, %v7607
        %7609 = vdwg.mxu0
        %7610 = vmatpush.msra.mxu0 %v7524
        %7611 = vmatpush.msra.mxu0 %v7522
        %7612 = vmatpush.msra.mxu0 %v7520
        %7613 = vmatpush.msra.mxu0 %v7518
        %7614 = vmatpush.msra.mxu0 %v7516
        %7615 = vmatpush.msra.mxu0 %v7514
        %7616 = vmatpush.msra.mxu0 %v7512
        %7617 = vmatpush.msra.mxu0 %v7510
        %7618 = vmatpush.msra.mxu0 %v7508
        %7619 = vmatpush.msra.mxu0 %v7506
        %7620 = vmatpush.msra.mxu0 %v7504
        %7621 = vmatpush.msra.mxu0 %v7502
        %7622 = vmatpush.msra.mxu0 %v7500
        %7623 = vmatpush.msra.mxu0 %v7498
        %7624 = vmatpush.msra.mxu0 %v7496
        %7625 = vmatpush.msra.mxu0 %v7494
        %7626 = vmatmul.f32.gmra.mxu0 %v7550
        %v7627 = vpop.f32.mrf.mxu0
        %v7628 = vadd.f32 %v7605, %v7627
        %7629 = vmatmul.f32.gmra.mxu0 %v7549
        %v7630 = vpop.f32.mrf.mxu0
        %v7631 = vadd.f32 %v7608, %v7630
        %7632 = vdwg.mxu0
        %7633 = vmatpush.msra.mxu0 0.0
        %7634 = vmatpush.msra.mxu0 0.0
        %7635 = vmatpush.msra.mxu0 0.0
        %7636 = vmatpush.msra.mxu0 0.0
        %7637 = vmatpush.msra.mxu0 0.0
        %7638 = vmatpush.msra.mxu0 0.0
        %7639 = vmatpush.msra.mxu0 0.0
        %7640 = vmatpush.msra.mxu0 0.0
        %7641 = vmatpush.msra.mxu0 %v7540
        %7642 = vmatpush.msra.mxu0 %v7538
        %7643 = vmatpush.msra.mxu0 %v7536
        %7644 = vmatpush.msra.mxu0 %v7534
        %7645 = vmatpush.msra.mxu0 %v7532
        %7646 = vmatpush.msra.mxu0 %v7530
        %7647 = vmatpush.msra.mxu0 %v7528
        %7648 = vmatpush.msra.mxu0 %v7526
        %7649 = vmatmul.f32.gmra.mxu0 %v7560
        %v7650 = vpop.f32.mrf.mxu0
        %v7651 = vadd.f32 %v7628, %v7650
        %7652 = vmatmul.f32.gmra.mxu0 %v7562
        %v7653 = vpop.f32.mrf.mxu0
        %v7654 = vadd.f32 %v7631, %v7653
        %7655 = vdwg.mxu0
        %7656 = vmatpush.msra.mxu0 %v7461
        %7657 = vmatpush.msra.mxu0 %v7459
        %7658 = vmatpush.msra.mxu0 %v7457
        %7659 = vmatpush.msra.mxu0 %v7455
        %7660 = vmatpush.msra.mxu0 %v7453
        %7661 = vmatpush.msra.mxu0 %v7451
        %7662 = vmatpush.msra.mxu0 %v7449
        %7663 = vmatpush.msra.mxu0 %v7447
        %7664 = vmatpush.msra.mxu0 %v7445
        %7665 = vmatpush.msra.mxu0 %v7443
        %7666 = vmatpush.msra.mxu0 %v7441
        %7667 = vmatpush.msra.mxu0 %v7439
        %7668 = vmatpush.msra.mxu0 %v7437
        %7669 = vmatpush.msra.mxu0 %v7435
        %7670 = vmatpush.msra.mxu0 %v7433
        %7671 = vmatpush.msra.mxu0 %v7431
        %7672 = vmatmul.f32.gmra.mxu0 %v7544
        %v7673 = vpop.f32.mrf.mxu0
        %v7674 = vadd.f32 0.0, %v7673
        %7675 = vmatmul.f32.gmra.mxu0 %v7543
        %v7676 = vpop.f32.mrf.mxu0
        %v7677 = vadd.f32 0.0, %v7676
        %7678 = vdwg.mxu0
        %7679 = vmatpush.msra.mxu0 %v7493
        %7680 = vmatpush.msra.mxu0 %v7491
        %7681 = vmatpush.msra.mxu0 %v7489
        %7682 = vmatpush.msra.mxu0 %v7487
        %7683 = vmatpush.msra.mxu0 %v7485
        %7684 = vmatpush.msra.mxu0 %v7483
        %7685 = vmatpush.msra.mxu0 %v7481
        %7686 = vmatpush.msra.mxu0 %v7479
        %7687 = vmatpush.msra.mxu0 %v7477
        %7688 = vmatpush.msra.mxu0 %v7475
        %7689 = vmatpush.msra.mxu0 %v7473
        %7690 = vmatpush.msra.mxu0 %v7471
        %7691 = vmatpush.msra.mxu0 %v7469
        %7692 = vmatpush.msra.mxu0 %v7467
        %7693 = vmatpush.msra.mxu0 %v7465
        %7694 = vmatpush.msra.mxu0 %v7463
        %7695 = vmatmul.f32.gmra.mxu0 %v7547
        %v7696 = vpop.f32.mrf.mxu0
        %v7697 = vadd.f32 %v7674, %v7696
        %7698 = vmatmul.f32.gmra.mxu0 %v7546
        %v7699 = vpop.f32.mrf.mxu0
        %v7700 = vadd.f32 %v7677, %v7699
        %7701 = vdwg.mxu0
        %7702 = vmatpush.msra.mxu0 %v7525
        %7703 = vmatpush.msra.mxu0 %v7523
        %7704 = vmatpush.msra.mxu0 %v7521
        %7705 = vmatpush.msra.mxu0 %v7519
        %7706 = vmatpush.msra.mxu0 %v7517
        %7707 = vmatpush.msra.mxu0 %v7515
        %7708 = vmatpush.msra.mxu0 %v7513
        %7709 = vmatpush.msra.mxu0 %v7511
        %7710 = vmatpush.msra.mxu0 %v7509
        %7711 = vmatpush.msra.mxu0 %v7507
        %7712 = vmatpush.msra.mxu0 %v7505
        %7713 = vmatpush.msra.mxu0 %v7503
        %7714 = vmatpush.msra.mxu0 %v7501
        %7715 = vmatpush.msra.mxu0 %v7499
        %7716 = vmatpush.msra.mxu0 %v7497
        %7717 = vmatpush.msra.mxu0 %v7495
        %7718 = vmatmul.f32.gmra.mxu0 %v7550
        %v7719 = vpop.f32.mrf.mxu0
        %v7720 = vadd.f32 %v7697, %v7719
        %7721 = vmatmul.f32.gmra.mxu0 %v7549
        %v7722 = vpop.f32.mrf.mxu0
        %v7723 = vadd.f32 %v7700, %v7722
        %7724 = vdwg.mxu0
        %7725 = vmatpush.msra.mxu0 0.0
        %7726 = vmatpush.msra.mxu0 0.0
        %7727 = vmatpush.msra.mxu0 0.0
        %7728 = vmatpush.msra.mxu0 0.0
        %7729 = vmatpush.msra.mxu0 0.0
        %7730 = vmatpush.msra.mxu0 0.0
        %7731 = vmatpush.msra.mxu0 0.0
        %7732 = vmatpush.msra.mxu0 0.0
        %7733 = vmatpush.msra.mxu0 %v7541
        %7734 = vmatpush.msra.mxu0 %v7539
        %7735 = vmatpush.msra.mxu0 %v7537
        %7736 = vmatpush.msra.mxu0 %v7535
        %7737 = vmatpush.msra.mxu0 %v7533
        %7738 = vmatpush.msra.mxu0 %v7531
        %7739 = vmatpush.msra.mxu0 %v7529
        %7740 = vmatpush.msra.mxu0 %v7527
        %7741 = vmatmul.f32.gmra.mxu0 %v7560
        %v7742 = vpop.f32.mrf.mxu0
        %v7743 = vadd.f32 %v7720, %v7742
        %7744 = vmatmul.f32.gmra.mxu0 %v7562
        %v7745 = vpop.f32.mrf.mxu0
        %v7746 = vadd.f32 %v7723, %v7745
        %7747 = vdwg.mxu0
        %v7748 = vadd.f32 %v7332, %v7651
        %v7749 = vadd.f32 %v7424, %v7743
        %v7750 = vadd.f32 %v7335, %v7654
        %v7751 = vadd.f32 %v7427, %v7746
        %v7752 = vld [vmem:[%s49] sm:$0x3]
        %v7754 = vperm.slane %v7752, 0
        %v7755 = vperm.slane %v7752, 1
        %v7758 = vadd.f32 %v7748, %v7754
        %v7759 = vadd.f32 %v7749, %v7755
        %v7760 = vadd.f32 %v7750, %v7754
        %v7761 = vadd.f32 %v7751, %v7755
        %v7762 = vmax.f32 %v7758, 0.0
        %v7763 = vmax.f32 %v7759, 0.0
        %v7764 = vmax.f32 %v7760, 0.0
        %v7765 = vmax.f32 %v7761, 0.0
        %v7766 = vld [vmem:[%s53] sm:$0xff]
        %v7767 = vld [vmem:[%s53 + $0x8] sm:$0xff]
        %v7768 = vld [vmem:[%s53 + $0x10] sm:$0xff]
        %v7769 = vld [vmem:[%s53 + $0x18] sm:$0x3f]
        %v7770 = vld [vmem:[#allocation11] sm:$0xff]
        %v7771 = vld [vmem:[#allocation11 + $0x8] sm:$0xff]
        %v7772 = vld [vmem:[#allocation11 + $0x10] sm:$0xff]
        %v7773 = vld [vmem:[#allocation11 + $0x18] sm:$0xff]
        %v7774 = vld [vmem:[#allocation11 + $0x20] sm:$0xff]
        %v7775 = vld [vmem:[#allocation11 + $0x28] sm:$0xff]
        %v7776 = vld [vmem:[#allocation11 + $0x30] sm:$0xff]
        %v7777 = vld [vmem:[#allocation11 + $0x38] sm:$0xff]
        %v7778 = vld [vmem:[#allocation11 + $0x40] sm:$0xff]
        %v7779 = vld [vmem:[#allocation11 + $0x48] sm:$0xff]
        %v7780 = vld [vmem:[#allocation11 + $0x50] sm:$0xff]
        %v7781 = vld [vmem:[#allocation11 + $0x58] sm:$0xff]
        %v7782 = vld [vmem:[#allocation11 + $0x60] sm:$0xff]
        %v7783 = vld [vmem:[#allocation11 + $0x68] sm:$0xff]
        %v7784 = vld [vmem:[#allocation11 + $0x70] sm:$0xff]
        %v7785 = vld [vmem:[#allocation11 + $0x78] sm:$0xff]
        %v7786 = vld [vmem:[#allocation11 + $0x80] sm:$0xff]
        %v7787 = vld [vmem:[#allocation11 + $0x88] sm:$0xff]
        %v7788 = vld [vmem:[#allocation11 + $0x90] sm:$0xff]
        %v7789 = vld [vmem:[#allocation11 + $0x98] sm:$0xff]
        %v7790 = vld [vmem:[#allocation11 + $0xa0] sm:$0xff]
        %v7791 = vld [vmem:[#allocation11 + $0xa8] sm:$0xff]
        %v7792 = vld [vmem:[#allocation11 + $0xb0] sm:$0xff]
        %v7793 = vld [vmem:[#allocation11 + $0xb8] sm:$0xff]
        %v7794 = vld [vmem:[#allocation11 + $0xc0] sm:$0xff]
        %v7795 = vld [vmem:[#allocation11 + $0xc8] sm:$0xff]
        %v7796 = vld [vmem:[#allocation11 + $0xd0] sm:$0xff]
        %v7797 = vld [vmem:[#allocation11 + $0xd8] sm:$0xff]
        %v7798 = vld [vmem:[#allocation11 + $0xe0] sm:$0xff]
        %v7799 = vld [vmem:[#allocation11 + $0xe8] sm:$0xff]
        %v7800 = vld [vmem:[#allocation11 + $0xf0] sm:$0xff]
        %v7801 = vld [vmem:[#allocation11 + $0xf8] sm:$0xff]
        %v7802 = vld [vmem:[#allocation11 + $0x100] sm:$0xff]
        %v7803 = vld [vmem:[#allocation11 + $0x108] sm:$0xff]
        %v7804 = vld [vmem:[#allocation11 + $0x110] sm:$0xff]
        %v7805 = vld [vmem:[#allocation11 + $0x118] sm:$0xff]
        %v7806 = vld [vmem:[#allocation11 + $0x120] sm:$0xff]
        %v7807 = vld [vmem:[#allocation11 + $0x128] sm:$0xff]
        %v7808 = vld [vmem:[#allocation11 + $0x130] sm:$0xff]
        %v7809 = vld [vmem:[#allocation11 + $0x138] sm:$0xff]
        %v7810 = vld [vmem:[#allocation11 + $0x140] sm:$0xff]
        %v7811 = vld [vmem:[#allocation11 + $0x148] sm:$0xff]
        %v7812 = vld [vmem:[#allocation11 + $0x150] sm:$0xff]
        %v7813 = vld [vmem:[#allocation11 + $0x158] sm:$0xff]
        %v7814 = vld [vmem:[#allocation11 + $0x160] sm:$0xff]
        %v7815 = vld [vmem:[#allocation11 + $0x168] sm:$0xff]
        %v7816 = vld [vmem:[#allocation11 + $0x170] sm:$0xff]
        %v7817 = vld [vmem:[#allocation11 + $0x178] sm:$0xff]
        %v7818 = vld [vmem:[#allocation11 + $0x180] sm:$0xff]
        %v7819 = vld [vmem:[#allocation11 + $0x188] sm:$0xff]
        %v7820 = vld [vmem:[#allocation11 + $0x190] sm:$0xff]
        %v7821 = vld [vmem:[#allocation11 + $0x198] sm:$0xff]
        %v7822 = vld [vmem:[#allocation11 + $0x1a0] sm:$0xff]
        %v7823 = vld [vmem:[#allocation11 + $0x1a8] sm:$0xff]
        %v7824 = vld [vmem:[#allocation11 + $0x1b0] sm:$0xff]
        %v7825 = vld [vmem:[#allocation11 + $0x1b8] sm:$0xff]
        %v7826 = vld [vmem:[#allocation11 + $0x1c0] sm:$0xff]
        %v7827 = vld [vmem:[#allocation11 + $0x1c8] sm:$0xff]
        %v7828 = vld [vmem:[#allocation11 + $0x1d0] sm:$0xff]
        %v7829 = vld [vmem:[#allocation11 + $0x1d8] sm:$0xff]
        %v7830 = vld [vmem:[#allocation11 + $0x1e0] sm:$0xff]
        %v7831 = vld [vmem:[#allocation11 + $0x1e8] sm:$0xff]
        %v7832 = vld [vmem:[#allocation11 + $0x1f0] sm:$0xff]
        %v7833 = vld [vmem:[#allocation11 + $0x1f8] sm:$0xff]
        %v7834 = vld [vmem:[#allocation11 + $0x200] sm:$0xff]
        %v7835 = vld [vmem:[#allocation11 + $0x208] sm:$0xff]
        %v7836 = vld [vmem:[#allocation11 + $0x210] sm:$0xff]
        %v7837 = vld [vmem:[#allocation11 + $0x218] sm:$0xff]
        %v7838 = vld [vmem:[#allocation11 + $0x220] sm:$0xff]
        %v7839 = vld [vmem:[#allocation11 + $0x228] sm:$0xff]
        %v7840 = vld [vmem:[#allocation11 + $0x230] sm:$0xff]
        %v7841 = vld [vmem:[#allocation11 + $0x238] sm:$0xff]
        %v7842 = vld [vmem:[#allocation11 + $0x240] sm:$0xff]
        %v7843 = vld [vmem:[#allocation11 + $0x248] sm:$0xff]
        %v7844 = vld [vmem:[#allocation11 + $0x250] sm:$0xff]
        %v7845 = vld [vmem:[#allocation11 + $0x258] sm:$0xff]
        %v7846 = vld [vmem:[#allocation11 + $0x260] sm:$0xff]
        %v7847 = vld [vmem:[#allocation11 + $0x268] sm:$0xff]
        %v7848 = vld [vmem:[#allocation11 + $0x270] sm:$0xff]
        %v7849 = vld [vmem:[#allocation11 + $0x278] sm:$0xff]
        %v7850 = vld [vmem:[#allocation11 + $0x280] sm:$0xff]
        %v7851 = vld [vmem:[#allocation11 + $0x288] sm:$0xff]
        %v7852 = vld [vmem:[#allocation11 + $0x290] sm:$0xff]
        %v7853 = vld [vmem:[#allocation11 + $0x298] sm:$0xff]
        %v7854 = vld [vmem:[#allocation11 + $0x2a0] sm:$0xff]
        %v7855 = vld [vmem:[#allocation11 + $0x2a8] sm:$0xff]
        %v7856 = vld [vmem:[#allocation11 + $0x2b0] sm:$0xff]
        %v7857 = vld [vmem:[#allocation11 + $0x2b8] sm:$0xff]
        %v7858 = vld [vmem:[#allocation11 + $0x2c0] sm:$0xff]
        %v7859 = vld [vmem:[#allocation11 + $0x2c8] sm:$0xff]
        %v7860 = vld [vmem:[#allocation11 + $0x2d0] sm:$0xff]
        %v7861 = vld [vmem:[#allocation11 + $0x2d8] sm:$0xff]
        %v7862 = vld [vmem:[#allocation11 + $0x2e0] sm:$0xff]
        %v7863 = vld [vmem:[#allocation11 + $0x2e8] sm:$0xff]
        %v7864 = vld [vmem:[#allocation11 + $0x2f0] sm:$0xff]
        %v7865 = vld [vmem:[#allocation11 + $0x2f8] sm:$0xff]
        %v7866 = vld [vmem:[#allocation11 + $0x300] sm:$0xff]
        %v7867 = vld [vmem:[#allocation11 + $0x308] sm:$0xff]
        %v7868 = vld [vmem:[#allocation11 + $0x310] sm:$0xff]
        %v7869 = vld [vmem:[#allocation11 + $0x318] sm:$0xff]
        %v7870 = vld [vmem:[#allocation11 + $0x320] sm:$0xff]
        %v7871 = vld [vmem:[#allocation11 + $0x328] sm:$0xff]
        %v7872 = vld [vmem:[#allocation11 + $0x330] sm:$0xff]
        %v7873 = vld [vmem:[#allocation11 + $0x338] sm:$0xff]
        %v7874 = vld [vmem:[#allocation11 + $0x340] sm:$0xff]
        %v7875 = vld [vmem:[#allocation11 + $0x348] sm:$0xff]
        %v7876 = vld [vmem:[#allocation11 + $0x350] sm:$0xff]
        %v7877 = vld [vmem:[#allocation11 + $0x358] sm:$0xff]
        %v7878 = vld [vmem:[#allocation11 + $0x360] sm:$0xff]
        %v7879 = vld [vmem:[#allocation11 + $0x368] sm:$0xff]
        %v7880 = vld [vmem:[#allocation11 + $0x370] sm:$0xff]
        %v7881 = vld [vmem:[#allocation11 + $0x378] sm:$0xff]
        %v7883 = vsel %vm2611, %v7763, 0
        %v7886 = vsel %vm2611, %v7765, 0
        %7888 = vmatpush.msra.mxu0 %v7830
        %7889 = vmatpush.msra.mxu0 %v7826
        %7890 = vmatpush.msra.mxu0 %v7822
        %7891 = vmatpush.msra.mxu0 %v7818
        %7892 = vmatpush.msra.mxu0 %v7814
        %7893 = vmatpush.msra.mxu0 %v7810
        %7894 = vmatpush.msra.mxu0 %v7806
        %7895 = vmatpush.msra.mxu0 %v7802
        %7896 = vmatpush.msra.mxu0 %v7798
        %7897 = vmatpush.msra.mxu0 %v7794
        %7898 = vmatpush.msra.mxu0 %v7790
        %7899 = vmatpush.msra.mxu0 %v7786
        %7900 = vmatpush.msra.mxu0 %v7782
        %7901 = vmatpush.msra.mxu0 %v7778
        %7902 = vmatpush.msra.mxu0 %v7774
        %7903 = vmatpush.msra.mxu0 %v7770
        %7904 = vmatmul.f32.gmra.mxu0 %v7762
        %v7905 = vpop.f32.mrf.mxu0
        %v7906 = vadd.f32 0.0, %v7905
        %7907 = vmatmul.f32.gmra.mxu0 %v7764
        %v7908 = vpop.f32.mrf.mxu0
        %v7909 = vadd.f32 0.0, %v7908
        %7910 = vdwg.mxu0
        %7911 = vmatpush.msra.mxu0 0.0
        %7912 = vmatpush.msra.mxu0 0.0
        %7913 = vmatpush.msra.mxu0 0.0
        %7914 = vmatpush.msra.mxu0 0.0
        %7915 = vmatpush.msra.mxu0 %v7878
        %7916 = vmatpush.msra.mxu0 %v7874
        %7917 = vmatpush.msra.mxu0 %v7870
        %7918 = vmatpush.msra.mxu0 %v7866
        %7919 = vmatpush.msra.mxu0 %v7862
        %7920 = vmatpush.msra.mxu0 %v7858
        %7921 = vmatpush.msra.mxu0 %v7854
        %7922 = vmatpush.msra.mxu0 %v7850
        %7923 = vmatpush.msra.mxu0 %v7846
        %7924 = vmatpush.msra.mxu0 %v7842
        %7925 = vmatpush.msra.mxu0 %v7838
        %7926 = vmatpush.msra.mxu0 %v7834
        %7927 = vmatmul.f32.gmra.mxu0 %v7883
        %v7928 = vpop.f32.mrf.mxu0
        %v7929 = vadd.f32 %v7906, %v7928
        %7930 = vmatmul.f32.gmra.mxu0 %v7886
        %v7931 = vpop.f32.mrf.mxu0
        %v7932 = vadd.f32 %v7909, %v7931
        %7933 = vdwg.mxu0
        %7934 = vmatpush.msra.mxu0 %v7831
        %7935 = vmatpush.msra.mxu0 %v7827
        %7936 = vmatpush.msra.mxu0 %v7823
        %7937 = vmatpush.msra.mxu0 %v7819
        %7938 = vmatpush.msra.mxu0 %v7815
        %7939 = vmatpush.msra.mxu0 %v7811
        %7940 = vmatpush.msra.mxu0 %v7807
        %7941 = vmatpush.msra.mxu0 %v7803
        %7942 = vmatpush.msra.mxu0 %v7799
        %7943 = vmatpush.msra.mxu0 %v7795
        %7944 = vmatpush.msra.mxu0 %v7791
        %7945 = vmatpush.msra.mxu0 %v7787
        %7946 = vmatpush.msra.mxu0 %v7783
        %7947 = vmatpush.msra.mxu0 %v7779
        %7948 = vmatpush.msra.mxu0 %v7775
        %7949 = vmatpush.msra.mxu0 %v7771
        %7950 = vmatmul.f32.gmra.mxu0 %v7762
        %v7951 = vpop.f32.mrf.mxu0
        %v7952 = vadd.f32 0.0, %v7951
        %7953 = vmatmul.f32.gmra.mxu0 %v7764
        %v7954 = vpop.f32.mrf.mxu0
        %v7955 = vadd.f32 0.0, %v7954
        %7956 = vdwg.mxu0
        %7957 = vmatpush.msra.mxu0 0.0
        %7958 = vmatpush.msra.mxu0 0.0
        %7959 = vmatpush.msra.mxu0 0.0
        %7960 = vmatpush.msra.mxu0 0.0
        %7961 = vmatpush.msra.mxu0 %v7879
        %7962 = vmatpush.msra.mxu0 %v7875
        %7963 = vmatpush.msra.mxu0 %v7871
        %7964 = vmatpush.msra.mxu0 %v7867
        %7965 = vmatpush.msra.mxu0 %v7863
        %7966 = vmatpush.msra.mxu0 %v7859
        %7967 = vmatpush.msra.mxu0 %v7855
        %7968 = vmatpush.msra.mxu0 %v7851
        %7969 = vmatpush.msra.mxu0 %v7847
        %7970 = vmatpush.msra.mxu0 %v7843
        %7971 = vmatpush.msra.mxu0 %v7839
        %7972 = vmatpush.msra.mxu0 %v7835
        %7973 = vmatmul.f32.gmra.mxu0 %v7883
        %v7974 = vpop.f32.mrf.mxu0
        %v7975 = vadd.f32 %v7952, %v7974
        %7976 = vmatmul.f32.gmra.mxu0 %v7886
        %v7977 = vpop.f32.mrf.mxu0
        %v7978 = vadd.f32 %v7955, %v7977
        %7979 = vdwg.mxu0
        %7980 = vmatpush.msra.mxu0 %v7832
        %7981 = vmatpush.msra.mxu0 %v7828
        %7982 = vmatpush.msra.mxu0 %v7824
        %7983 = vmatpush.msra.mxu0 %v7820
        %7984 = vmatpush.msra.mxu0 %v7816
        %7985 = vmatpush.msra.mxu0 %v7812
        %7986 = vmatpush.msra.mxu0 %v7808
        %7987 = vmatpush.msra.mxu0 %v7804
        %7988 = vmatpush.msra.mxu0 %v7800
        %7989 = vmatpush.msra.mxu0 %v7796
        %7990 = vmatpush.msra.mxu0 %v7792
        %7991 = vmatpush.msra.mxu0 %v7788
        %7992 = vmatpush.msra.mxu0 %v7784
        %7993 = vmatpush.msra.mxu0 %v7780
        %7994 = vmatpush.msra.mxu0 %v7776
        %7995 = vmatpush.msra.mxu0 %v7772
        %7996 = vmatmul.f32.gmra.mxu0 %v7762
        %v7997 = vpop.f32.mrf.mxu0
        %v7998 = vadd.f32 0.0, %v7997
        %7999 = vmatmul.f32.gmra.mxu0 %v7764
        %v8000 = vpop.f32.mrf.mxu0
        %v8001 = vadd.f32 0.0, %v8000
        %8002 = vdwg.mxu0
        %8003 = vmatpush.msra.mxu0 0.0
        %8004 = vmatpush.msra.mxu0 0.0
        %8005 = vmatpush.msra.mxu0 0.0
        %8006 = vmatpush.msra.mxu0 0.0
        %8007 = vmatpush.msra.mxu0 %v7880
        %8008 = vmatpush.msra.mxu0 %v7876
        %8009 = vmatpush.msra.mxu0 %v7872
        %8010 = vmatpush.msra.mxu0 %v7868
        %8011 = vmatpush.msra.mxu0 %v7864
        %8012 = vmatpush.msra.mxu0 %v7860
        %8013 = vmatpush.msra.mxu0 %v7856
        %8014 = vmatpush.msra.mxu0 %v7852
        %8015 = vmatpush.msra.mxu0 %v7848
        %8016 = vmatpush.msra.mxu0 %v7844
        %8017 = vmatpush.msra.mxu0 %v7840
        %8018 = vmatpush.msra.mxu0 %v7836
        %8019 = vmatmul.f32.gmra.mxu0 %v7883
        %v8020 = vpop.f32.mrf.mxu0
        %v8021 = vadd.f32 %v7998, %v8020
        %8022 = vmatmul.f32.gmra.mxu0 %v7886
        %v8023 = vpop.f32.mrf.mxu0
        %v8024 = vadd.f32 %v8001, %v8023
        %8025 = vdwg.mxu0
        %8026 = vmatpush.msra.mxu0 %v7833
        %8027 = vmatpush.msra.mxu0 %v7829
        %8028 = vmatpush.msra.mxu0 %v7825
        %8029 = vmatpush.msra.mxu0 %v7821
        %8030 = vmatpush.msra.mxu0 %v7817
        %8031 = vmatpush.msra.mxu0 %v7813
        %8032 = vmatpush.msra.mxu0 %v7809
        %8033 = vmatpush.msra.mxu0 %v7805
        %8034 = vmatpush.msra.mxu0 %v7801
        %8035 = vmatpush.msra.mxu0 %v7797
        %8036 = vmatpush.msra.mxu0 %v7793
        %8037 = vmatpush.msra.mxu0 %v7789
        %8038 = vmatpush.msra.mxu0 %v7785
        %8039 = vmatpush.msra.mxu0 %v7781
        %8040 = vmatpush.msra.mxu0 %v7777
        %8041 = vmatpush.msra.mxu0 %v7773
        %8042 = vmatmul.f32.gmra.mxu0 %v7762
        %v8043 = vpop.f32.mrf.mxu0
        %v8044 = vadd.f32 0.0, %v8043
        %8045 = vmatmul.f32.gmra.mxu0 %v7764
        %v8046 = vpop.f32.mrf.mxu0
        %v8047 = vadd.f32 0.0, %v8046
        %8048 = vdwg.mxu0
        %8049 = vmatpush.msra.mxu0 0.0
        %8050 = vmatpush.msra.mxu0 0.0
        %8051 = vmatpush.msra.mxu0 0.0
        %8052 = vmatpush.msra.mxu0 0.0
        %8053 = vmatpush.msra.mxu0 %v7881
        %8054 = vmatpush.msra.mxu0 %v7877
        %8055 = vmatpush.msra.mxu0 %v7873
        %8056 = vmatpush.msra.mxu0 %v7869
        %8057 = vmatpush.msra.mxu0 %v7865
        %8058 = vmatpush.msra.mxu0 %v7861
        %8059 = vmatpush.msra.mxu0 %v7857
        %8060 = vmatpush.msra.mxu0 %v7853
        %8061 = vmatpush.msra.mxu0 %v7849
        %8062 = vmatpush.msra.mxu0 %v7845
        %8063 = vmatpush.msra.mxu0 %v7841
        %8064 = vmatpush.msra.mxu0 %v7837
        %8065 = vmatmul.f32.gmra.mxu0 %v7883
        %v8066 = vpop.f32.mrf.mxu0
        %v8067 = vadd.f32 %v8044, %v8066
        %8068 = vmatmul.f32.gmra.mxu0 %v7886
        %v8069 = vpop.f32.mrf.mxu0
        %v8070 = vadd.f32 %v8047, %v8069
        %8071 = vdwg.mxu0
        %v8073 = vsel %vm3935, %v7766, 0
        %v8076 = vsel %vm3935, %v7767, 0
        %v8079 = vsel %vm3935, %v7768, 0
        %v8082 = vsel %vm3935, %v7769, 0
        %v8085 = vsel %vm1343, %v7932, 0
        %v8088 = vsel %vm1343, %v7978, 0
        %v8091 = vsel %vm1343, %v8024, 0
        %v8094 = vsel %vm1343, %v8070, 0
        %8096 = vmatpush.msra.mxu0 0.0
        %8097 = vmatpush.msra.mxu0 0.0
        %8098 = vmatpush.msra.mxu0 0.0
        %8099 = vmatpush.msra.mxu0 0.0
        %8100 = vmatpush.msra.mxu0 0.0
        %8101 = vmatpush.msra.mxu0 0.0
        %8102 = vmatpush.msra.mxu0 0.0
        %8103 = vmatpush.msra.mxu0 0.0
        %8104 = vmatpush.msra.mxu0 0.0
        %8105 = vmatpush.msra.mxu0 0.0
        %8106 = vmatpush.msra.mxu0 0.0
        %8107 = vmatpush.msra.mxu0 0.0
        %8108 = vmatpush.msra.mxu0 0.0
        %8109 = vmatpush.msra.mxu0 0.0
        %8110 = vmatpush.msra.mxu0 %v8085
        %8111 = vmatpush.msra.mxu0 %v7929
        %8112 = vmatmul.f32.gmra.mxu0 %v8073
        %v8113 = vpop.f32.mrf.mxu0
        %v8114 = vadd.f32 0.0, %v8113
        %8115 = vmatmul.f32.gmra.mxu0 %v8076
        %v8116 = vpop.f32.mrf.mxu0
        %v8117 = vadd.f32 0.0, %v8116
        %8118 = vmatmul.f32.gmra.mxu0 %v8079
        %v8119 = vpop.f32.mrf.mxu0
        %v8120 = vadd.f32 0.0, %v8119
        %8121 = vmatmul.f32.gmra.mxu0 %v8082
        %v8122 = vpop.f32.mrf.mxu0
        %v8123 = vadd.f32 0.0, %v8122
        %8124 = vdwg.mxu0
        %8125 = vmatpush.msra.mxu0 0.0
        %8126 = vmatpush.msra.mxu0 0.0
        %8127 = vmatpush.msra.mxu0 0.0
        %8128 = vmatpush.msra.mxu0 0.0
        %8129 = vmatpush.msra.mxu0 0.0
        %8130 = vmatpush.msra.mxu0 0.0
        %8131 = vmatpush.msra.mxu0 0.0
        %8132 = vmatpush.msra.mxu0 0.0
        %8133 = vmatpush.msra.mxu0 0.0
        %8134 = vmatpush.msra.mxu0 0.0
        %8135 = vmatpush.msra.mxu0 0.0
        %8136 = vmatpush.msra.mxu0 0.0
        %8137 = vmatpush.msra.mxu0 0.0
        %8138 = vmatpush.msra.mxu0 0.0
        %8139 = vmatpush.msra.mxu0 %v8088
        %8140 = vmatpush.msra.mxu0 %v7975
        %8141 = vmatmul.f32.gmra.mxu0 %v8073
        %v8142 = vpop.f32.mrf.mxu0
        %v8143 = vadd.f32 0.0, %v8142
        %8144 = vmatmul.f32.gmra.mxu0 %v8076
        %v8145 = vpop.f32.mrf.mxu0
        %v8146 = vadd.f32 0.0, %v8145
        %8147 = vmatmul.f32.gmra.mxu0 %v8079
        %v8148 = vpop.f32.mrf.mxu0
        %v8149 = vadd.f32 0.0, %v8148
        %8150 = vmatmul.f32.gmra.mxu0 %v8082
        %v8151 = vpop.f32.mrf.mxu0
        %v8152 = vadd.f32 0.0, %v8151
        %8153 = vdwg.mxu0
        %8154 = vmatpush.msra.mxu0 0.0
        %8155 = vmatpush.msra.mxu0 0.0
        %8156 = vmatpush.msra.mxu0 0.0
        %8157 = vmatpush.msra.mxu0 0.0
        %8158 = vmatpush.msra.mxu0 0.0
        %8159 = vmatpush.msra.mxu0 0.0
        %8160 = vmatpush.msra.mxu0 0.0
        %8161 = vmatpush.msra.mxu0 0.0
        %8162 = vmatpush.msra.mxu0 0.0
        %8163 = vmatpush.msra.mxu0 0.0
        %8164 = vmatpush.msra.mxu0 0.0
        %8165 = vmatpush.msra.mxu0 0.0
        %8166 = vmatpush.msra.mxu0 0.0
        %8167 = vmatpush.msra.mxu0 0.0
        %8168 = vmatpush.msra.mxu0 %v8091
        %8169 = vmatpush.msra.mxu0 %v8021
        %8170 = vmatmul.f32.gmra.mxu0 %v8073
        %v8171 = vpop.f32.mrf.mxu0
        %v8172 = vadd.f32 0.0, %v8171
        %8173 = vmatmul.f32.gmra.mxu0 %v8076
        %v8174 = vpop.f32.mrf.mxu0
        %v8175 = vadd.f32 0.0, %v8174
        %8176 = vmatmul.f32.gmra.mxu0 %v8079
        %v8177 = vpop.f32.mrf.mxu0
        %v8178 = vadd.f32 0.0, %v8177
        %8179 = vmatmul.f32.gmra.mxu0 %v8082
        %v8180 = vpop.f32.mrf.mxu0
        %v8181 = vadd.f32 0.0, %v8180
        %8182 = vdwg.mxu0
        %8183 = vmatpush.msra.mxu0 0.0
        %8184 = vmatpush.msra.mxu0 0.0
        %8185 = vmatpush.msra.mxu0 0.0
        %8186 = vmatpush.msra.mxu0 0.0
        %8187 = vmatpush.msra.mxu0 0.0
        %8188 = vmatpush.msra.mxu0 0.0
        %8189 = vmatpush.msra.mxu0 0.0
        %8190 = vmatpush.msra.mxu0 0.0
        %8191 = vmatpush.msra.mxu0 0.0
        %8192 = vmatpush.msra.mxu0 0.0
        %8193 = vmatpush.msra.mxu0 0.0
        %8194 = vmatpush.msra.mxu0 0.0
        %8195 = vmatpush.msra.mxu0 0.0
        %8196 = vmatpush.msra.mxu0 0.0
        %8197 = vmatpush.msra.mxu0 %v8094
        %8198 = vmatpush.msra.mxu0 %v8067
        %8199 = vmatmul.f32.gmra.mxu0 %v8073
        %v8200 = vpop.f32.mrf.mxu0
        %v8201 = vadd.f32 0.0, %v8200
        %8202 = vmatmul.f32.gmra.mxu0 %v8076
        %v8203 = vpop.f32.mrf.mxu0
        %v8204 = vadd.f32 0.0, %v8203
        %8205 = vmatmul.f32.gmra.mxu0 %v8079
        %v8206 = vpop.f32.mrf.mxu0
        %v8207 = vadd.f32 0.0, %v8206
        %8208 = vmatmul.f32.gmra.mxu0 %v8082
        %v8209 = vpop.f32.mrf.mxu0
        %v8210 = vadd.f32 0.0, %v8209
        %8211 = vdwg.mxu0
        %v8212 = vld [vmem:[%s55] sm:$0xff]
        %v8213 = vld [vmem:[%s55 + $0x8] sm:$0xff]
        %v8214 = vld [vmem:[%s55 + $0x10] sm:$0xff]
        %v8215 = vld [vmem:[%s55 + $0x18] sm:$0xff]
        %v8216 = vld [vmem:[%s55 + $0x20] sm:$0xff]
        %v8217 = vld [vmem:[%s55 + $0x28] sm:$0xff]
        %v8218 = vld [vmem:[%s55 + $0x30] sm:$0xff]
        %v8219 = vld [vmem:[%s55 + $0x38] sm:$0xff]
        %v8220 = vld [vmem:[%s55 + $0x40] sm:$0xff]
        %v8221 = vld [vmem:[%s55 + $0x48] sm:$0xff]
        %v8222 = vld [vmem:[%s55 + $0x50] sm:$0xff]
        %v8223 = vld [vmem:[%s55 + $0x58] sm:$0xff]
        %v8224 = vld [vmem:[%s55 + $0x60] sm:$0xff]
        %v8225 = vld [vmem:[%s55 + $0x68] sm:$0xff]
        %v8226 = vld [vmem:[%s55 + $0x70] sm:$0xff]
        %v8227 = vld [vmem:[%s55 + $0x78] sm:$0xff]
        %v8228 = vld [vmem:[%s55 + $0x80] sm:$0xff]
        %v8229 = vld [vmem:[%s55 + $0x88] sm:$0xff]
        %v8230 = vld [vmem:[%s55 + $0x90] sm:$0xff]
        %v8231 = vld [vmem:[%s55 + $0x98] sm:$0xff]
        %v8232 = vld [vmem:[%s55 + $0xa0] sm:$0xff]
        %v8233 = vld [vmem:[%s55 + $0xa8] sm:$0xff]
        %v8234 = vld [vmem:[%s55 + $0xb0] sm:$0xff]
        %v8235 = vld [vmem:[%s55 + $0xb8] sm:$0xff]
        %v8236 = vld [vmem:[%s55 + $0xc0] sm:$0xff]
        %v8237 = vld [vmem:[%s55 + $0xc8] sm:$0xff]
        %v8238 = vld [vmem:[%s55 + $0xd0] sm:$0xff]
        %v8239 = vld [vmem:[%s55 + $0xd8] sm:$0xff]
        %v8240 = vld [vmem:[%s55 + $0xe0] sm:$0xff]
        %v8241 = vld [vmem:[%s55 + $0xe8] sm:$0xff]
        %v8242 = vld [vmem:[%s55 + $0xf0] sm:$0xff]
        %v8243 = vld [vmem:[%s55 + $0xf8] sm:$0xff]
        %v8244 = vld [vmem:[%s55 + $0x100] sm:$0xff]
        %v8245 = vld [vmem:[%s55 + $0x108] sm:$0xff]
        %v8246 = vld [vmem:[%s55 + $0x110] sm:$0xff]
        %v8247 = vld [vmem:[%s55 + $0x118] sm:$0xff]
        %v8248 = vld [vmem:[%s55 + $0x120] sm:$0xff]
        %v8249 = vld [vmem:[%s55 + $0x128] sm:$0xff]
        %v8250 = vld [vmem:[%s55 + $0x130] sm:$0xff]
        %v8251 = vld [vmem:[%s55 + $0x138] sm:$0xff]
        %v8252 = vld [vmem:[%s55 + $0x140] sm:$0xff]
        %v8253 = vld [vmem:[%s55 + $0x148] sm:$0xff]
        %v8254 = vld [vmem:[%s55 + $0x150] sm:$0xff]
        %v8255 = vld [vmem:[%s55 + $0x158] sm:$0xff]
        %v8256 = vld [vmem:[%s55 + $0x160] sm:$0xff]
        %v8257 = vld [vmem:[%s55 + $0x168] sm:$0xff]
        %v8258 = vld [vmem:[%s55 + $0x170] sm:$0xff]
        %v8259 = vld [vmem:[%s55 + $0x178] sm:$0xff]
        %v8260 = vld [vmem:[%s55 + $0x180] sm:$0xff]
        %v8261 = vld [vmem:[%s55 + $0x188] sm:$0xff]
        %v8262 = vld [vmem:[%s55 + $0x190] sm:$0xff]
        %v8263 = vld [vmem:[%s55 + $0x198] sm:$0xff]
        %v8264 = vld [vmem:[%s55 + $0x1a0] sm:$0xff]
        %v8265 = vld [vmem:[%s55 + $0x1a8] sm:$0xff]
        %v8266 = vld [vmem:[%s55 + $0x1b0] sm:$0xff]
        %v8267 = vld [vmem:[%s55 + $0x1b8] sm:$0xff]
        %s8268 = scalar_lea.vmem %s55, 448
        %v8269 = vld [vmem:[%s8268] sm:$0xff]
        %v8270 = vld [vmem:[%s8268 + $0x8] sm:$0xff]
        %v8271 = vld [vmem:[%s8268 + $0x10] sm:$0xff]
        %v8272 = vld [vmem:[%s8268 + $0x18] sm:$0xff]
        %v8273 = vld [vmem:[%s8268 + $0x20] sm:$0xff]
        %v8274 = vld [vmem:[%s8268 + $0x28] sm:$0xff]
        %v8275 = vld [vmem:[%s8268 + $0x30] sm:$0xff]
        %v8276 = vld [vmem:[%s8268 + $0x38] sm:$0xff]
        %v8277 = vld [vmem:[%s8268 + $0x40] sm:$0xff]
        %v8278 = vld [vmem:[%s8268 + $0x48] sm:$0xff]
        %v8279 = vld [vmem:[%s8268 + $0x50] sm:$0xff]
        %v8280 = vld [vmem:[%s8268 + $0x58] sm:$0xff]
        %v8281 = vld [vmem:[%s8268 + $0x60] sm:$0xff]
        %v8282 = vld [vmem:[%s8268 + $0x68] sm:$0xff]
        %v8283 = vld [vmem:[%s8268 + $0x70] sm:$0xff]
        %v8284 = vld [vmem:[%s8268 + $0x78] sm:$0xff]
        %v8285 = vld [vmem:[%s8268 + $0x80] sm:$0xff]
        %v8286 = vld [vmem:[%s8268 + $0x88] sm:$0xff]
        %v8287 = vld [vmem:[%s8268 + $0x90] sm:$0xff]
        %v8288 = vld [vmem:[%s8268 + $0x98] sm:$0xff]
        %v8289 = vld [vmem:[%s8268 + $0xa0] sm:$0xff]
        %v8290 = vld [vmem:[%s8268 + $0xa8] sm:$0xff]
        %v8291 = vld [vmem:[%s8268 + $0xb0] sm:$0xff]
        %v8292 = vld [vmem:[%s8268 + $0xb8] sm:$0xff]
        %v8293 = vld [vmem:[%s8268 + $0xc0] sm:$0xff]
        %v8294 = vld [vmem:[%s8268 + $0xc8] sm:$0xff]
        %v8295 = vld [vmem:[%s8268 + $0xd0] sm:$0xff]
        %v8296 = vld [vmem:[%s8268 + $0xd8] sm:$0xff]
        %v8297 = vld [vmem:[%s8268 + $0xe0] sm:$0xff]
        %v8298 = vld [vmem:[%s8268 + $0xe8] sm:$0xff]
        %v8299 = vld [vmem:[%s8268 + $0xf0] sm:$0xff]
        %v8300 = vld [vmem:[%s8268 + $0xf8] sm:$0xff]
        %v8301 = vld [vmem:[%s8268 + $0x100] sm:$0xff]
        %v8302 = vld [vmem:[%s8268 + $0x108] sm:$0xff]
        %v8303 = vld [vmem:[%s8268 + $0x110] sm:$0xff]
        %v8304 = vld [vmem:[%s8268 + $0x118] sm:$0xff]
        %v8305 = vld [vmem:[%s8268 + $0x120] sm:$0xff]
        %v8306 = vld [vmem:[%s8268 + $0x128] sm:$0xff]
        %v8307 = vld [vmem:[%s8268 + $0x130] sm:$0xff]
        %v8308 = vld [vmem:[%s8268 + $0x138] sm:$0xff]
        %v8309 = vld [vmem:[%s8268 + $0x140] sm:$0xff]
        %v8310 = vld [vmem:[%s8268 + $0x148] sm:$0xff]
        %v8311 = vld [vmem:[%s8268 + $0x150] sm:$0xff]
        %v8312 = vld [vmem:[%s8268 + $0x158] sm:$0xff]
        %v8313 = vld [vmem:[%s8268 + $0x160] sm:$0xff]
        %v8314 = vld [vmem:[%s8268 + $0x168] sm:$0xff]
        %v8315 = vld [vmem:[%s8268 + $0x170] sm:$0xff]
        %v8316 = vld [vmem:[%s8268 + $0x178] sm:$0xff]
        %v8317 = vld [vmem:[%s8268 + $0x180] sm:$0xff]
        %v8318 = vld [vmem:[%s8268 + $0x188] sm:$0xff]
        %v8319 = vld [vmem:[%s8268 + $0x190] sm:$0xff]
        %v8320 = vld [vmem:[%s8268 + $0x198] sm:$0xff]
        %v8321 = vld [vmem:[%s8268 + $0x1a0] sm:$0xff]
        %v8322 = vld [vmem:[%s8268 + $0x1a8] sm:$0xff]
        %v8323 = vld [vmem:[%s8268 + $0x1b0] sm:$0xff]
        %v8324 = vld [vmem:[%s8268 + $0x1b8] sm:$0xff]
        %v8341 = vrot.slane %v8114, 1
        %v8342 = vrot.slane %v8117, 1
        %v8343 = vsel %vm1044, %v8341, %v8342
        %v8344 = vrot.slane %v8143, 1
        %v8345 = vrot.slane %v8146, 1
        %v8346 = vsel %vm1044, %v8344, %v8345
        %v8347 = vrot.slane %v8172, 1
        %v8348 = vrot.slane %v8175, 1
        %v8349 = vsel %vm1044, %v8347, %v8348
        %v8350 = vrot.slane %v8201, 1
        %v8351 = vrot.slane %v8204, 1
        %v8352 = vsel %vm1044, %v8350, %v8351
        %v8353 = vrot.slane %v8120, 1
        %v8354 = vsel %vm1044, %v8342, %v8353
        %v8355 = vrot.slane %v8149, 1
        %v8356 = vsel %vm1044, %v8345, %v8355
        %v8357 = vrot.slane %v8178, 1
        %v8358 = vsel %vm1044, %v8348, %v8357
        %v8359 = vrot.slane %v8207, 1
        %v8360 = vsel %vm1044, %v8351, %v8359
        %v8361 = vrot.slane %v8123, 1
        %v8362 = vsel %vm1044, %v8353, %v8361
        %v8363 = vrot.slane %v8152, 1
        %v8364 = vsel %vm1044, %v8355, %v8363
        %v8365 = vrot.slane %v8181, 1
        %v8366 = vsel %vm1044, %v8357, %v8365
        %v8367 = vrot.slane %v8210, 1
        %v8368 = vsel %vm1044, %v8359, %v8367
        %v8381 = vsel %vm1657, %v8352, 0
        %v8383 = vsel %vm1657, %v8360, 0
        %v8385 = vsel %vm1657, %v8368, 0
        %v8387 = vsel %vm1657, %v8367, 0
        %8389 = vmatpush.msra.mxu0 %v8284
        %8390 = vmatpush.msra.mxu0 %v8283
        %8391 = vmatpush.msra.mxu0 %v8282
        %8392 = vmatpush.msra.mxu0 %v8281
        %8393 = vmatpush.msra.mxu0 %v8280
        %8394 = vmatpush.msra.mxu0 %v8279
        %8395 = vmatpush.msra.mxu0 %v8278
        %8396 = vmatpush.msra.mxu0 %v8277
        %8397 = vmatpush.msra.mxu0 %v8276
        %8398 = vmatpush.msra.mxu0 %v8275
        %8399 = vmatpush.msra.mxu0 %v8274
        %8400 = vmatpush.msra.mxu0 %v8273
        %8401 = vmatpush.msra.mxu0 %v8272
        %8402 = vmatpush.msra.mxu0 %v8271
        %8403 = vmatpush.msra.mxu0 %v8270
        %8404 = vmatpush.msra.mxu0 %v8269
        %8405 = vmatmul.f32.gmra.mxu0 %v8343
        %v8406 = vpop.f32.mrf.mxu0
        %v8407 = vadd.f32 0.0, %v8406
        %8408 = vmatmul.f32.gmra.mxu0 %v8354
        %v8409 = vpop.f32.mrf.mxu0
        %v8410 = vadd.f32 0.0, %v8409
        %8411 = vmatmul.f32.gmra.mxu0 %v8362
        %v8412 = vpop.f32.mrf.mxu0
        %v8413 = vadd.f32 0.0, %v8412
        %8414 = vmatmul.f32.gmra.mxu0 %v8361
        %v8415 = vpop.f32.mrf.mxu0
        %v8416 = vadd.f32 0.0, %v8415
        %8417 = vdwg.mxu0
        %8418 = vmatpush.msra.mxu0 %v8300
        %8419 = vmatpush.msra.mxu0 %v8299
        %8420 = vmatpush.msra.mxu0 %v8298
        %8421 = vmatpush.msra.mxu0 %v8297
        %8422 = vmatpush.msra.mxu0 %v8296
        %8423 = vmatpush.msra.mxu0 %v8295
        %8424 = vmatpush.msra.mxu0 %v8294
        %8425 = vmatpush.msra.mxu0 %v8293
        %8426 = vmatpush.msra.mxu0 %v8292
        %8427 = vmatpush.msra.mxu0 %v8291
        %8428 = vmatpush.msra.mxu0 %v8290
        %8429 = vmatpush.msra.mxu0 %v8289
        %8430 = vmatpush.msra.mxu0 %v8288
        %8431 = vmatpush.msra.mxu0 %v8287
        %8432 = vmatpush.msra.mxu0 %v8286
        %8433 = vmatpush.msra.mxu0 %v8285
        %8434 = vmatmul.f32.gmra.mxu0 %v8346
        %v8435 = vpop.f32.mrf.mxu0
        %v8436 = vadd.f32 %v8407, %v8435
        %8437 = vmatmul.f32.gmra.mxu0 %v8356
        %v8438 = vpop.f32.mrf.mxu0
        %v8439 = vadd.f32 %v8410, %v8438
        %8440 = vmatmul.f32.gmra.mxu0 %v8364
        %v8441 = vpop.f32.mrf.mxu0
        %v8442 = vadd.f32 %v8413, %v8441
        %8443 = vmatmul.f32.gmra.mxu0 %v8363
        %v8444 = vpop.f32.mrf.mxu0
        %v8445 = vadd.f32 %v8416, %v8444
        %8446 = vdwg.mxu0
        %8447 = vmatpush.msra.mxu0 %v8316
        %8448 = vmatpush.msra.mxu0 %v8315
        %8449 = vmatpush.msra.mxu0 %v8314
        %8450 = vmatpush.msra.mxu0 %v8313
        %8451 = vmatpush.msra.mxu0 %v8312
        %8452 = vmatpush.msra.mxu0 %v8311
        %8453 = vmatpush.msra.mxu0 %v8310
        %8454 = vmatpush.msra.mxu0 %v8309
        %8455 = vmatpush.msra.mxu0 %v8308
        %8456 = vmatpush.msra.mxu0 %v8307
        %8457 = vmatpush.msra.mxu0 %v8306
        %8458 = vmatpush.msra.mxu0 %v8305
        %8459 = vmatpush.msra.mxu0 %v8304
        %8460 = vmatpush.msra.mxu0 %v8303
        %8461 = vmatpush.msra.mxu0 %v8302
        %8462 = vmatpush.msra.mxu0 %v8301
        %8463 = vmatmul.f32.gmra.mxu0 %v8349
        %v8464 = vpop.f32.mrf.mxu0
        %v8465 = vadd.f32 %v8436, %v8464
        %8466 = vmatmul.f32.gmra.mxu0 %v8358
        %v8467 = vpop.f32.mrf.mxu0
        %v8468 = vadd.f32 %v8439, %v8467
        %8469 = vmatmul.f32.gmra.mxu0 %v8366
        %v8470 = vpop.f32.mrf.mxu0
        %v8471 = vadd.f32 %v8442, %v8470
        %8472 = vmatmul.f32.gmra.mxu0 %v8365
        %v8473 = vpop.f32.mrf.mxu0
        %v8474 = vadd.f32 %v8445, %v8473
        %8475 = vdwg.mxu0
        %8476 = vmatpush.msra.mxu0 0.0
        %8477 = vmatpush.msra.mxu0 0.0
        %8478 = vmatpush.msra.mxu0 0.0
        %8479 = vmatpush.msra.mxu0 0.0
        %8480 = vmatpush.msra.mxu0 0.0
        %8481 = vmatpush.msra.mxu0 0.0
        %8482 = vmatpush.msra.mxu0 0.0
        %8483 = vmatpush.msra.mxu0 0.0
        %8484 = vmatpush.msra.mxu0 %v8324
        %8485 = vmatpush.msra.mxu0 %v8323
        %8486 = vmatpush.msra.mxu0 %v8322
        %8487 = vmatpush.msra.mxu0 %v8321
        %8488 = vmatpush.msra.mxu0 %v8320
        %8489 = vmatpush.msra.mxu0 %v8319
        %8490 = vmatpush.msra.mxu0 %v8318
        %8491 = vmatpush.msra.mxu0 %v8317
        %8492 = vmatmul.f32.gmra.mxu0 %v8381
        %v8493 = vpop.f32.mrf.mxu0
        %v8494 = vadd.f32 %v8465, %v8493
        %8495 = vmatmul.f32.gmra.mxu0 %v8383
        %v8496 = vpop.f32.mrf.mxu0
        %v8497 = vadd.f32 %v8468, %v8496
        %8498 = vmatmul.f32.gmra.mxu0 %v8385
        %v8499 = vpop.f32.mrf.mxu0
        %v8500 = vadd.f32 %v8471, %v8499
        %8501 = vmatmul.f32.gmra.mxu0 %v8387
        %v8502 = vpop.f32.mrf.mxu0
        %v8503 = vadd.f32 %v8474, %v8502
        %8504 = vdwg.mxu0
        %v8505 = vsel %vm1657, %v8201, 0
        %v8507 = vsel %vm1657, %v8204, 0
        %v8509 = vsel %vm1657, %v8207, 0
        %v8511 = vsel %vm1657, %v8210, 0
        %8513 = vmatpush.msra.mxu0 %v8227
        %8514 = vmatpush.msra.mxu0 %v8226
        %8515 = vmatpush.msra.mxu0 %v8225
        %8516 = vmatpush.msra.mxu0 %v8224
        %8517 = vmatpush.msra.mxu0 %v8223
        %8518 = vmatpush.msra.mxu0 %v8222
        %8519 = vmatpush.msra.mxu0 %v8221
        %8520 = vmatpush.msra.mxu0 %v8220
        %8521 = vmatpush.msra.mxu0 %v8219
        %8522 = vmatpush.msra.mxu0 %v8218
        %8523 = vmatpush.msra.mxu0 %v8217
        %8524 = vmatpush.msra.mxu0 %v8216
        %8525 = vmatpush.msra.mxu0 %v8215
        %8526 = vmatpush.msra.mxu0 %v8214
        %8527 = vmatpush.msra.mxu0 %v8213
        %8528 = vmatpush.msra.mxu0 %v8212
        %8529 = vmatmul.f32.gmra.mxu0 %v8114
        %v8530 = vpop.f32.mrf.mxu0
        %v8531 = vadd.f32 %v8494, %v8530
        %8532 = vmatmul.f32.gmra.mxu0 %v8117
        %v8533 = vpop.f32.mrf.mxu0
        %v8534 = vadd.f32 %v8497, %v8533
        %8535 = vmatmul.f32.gmra.mxu0 %v8120
        %v8536 = vpop.f32.mrf.mxu0
        %v8537 = vadd.f32 %v8500, %v8536
        %8538 = vmatmul.f32.gmra.mxu0 %v8123
        %v8539 = vpop.f32.mrf.mxu0
        %v8540 = vadd.f32 %v8503, %v8539
        %8541 = vdwg.mxu0
        %8542 = vmatpush.msra.mxu0 %v8243
        %8543 = vmatpush.msra.mxu0 %v8242
        %8544 = vmatpush.msra.mxu0 %v8241
        %8545 = vmatpush.msra.mxu0 %v8240
        %8546 = vmatpush.msra.mxu0 %v8239
        %8547 = vmatpush.msra.mxu0 %v8238
        %8548 = vmatpush.msra.mxu0 %v8237
        %8549 = vmatpush.msra.mxu0 %v8236
        %8550 = vmatpush.msra.mxu0 %v8235
        %8551 = vmatpush.msra.mxu0 %v8234
        %8552 = vmatpush.msra.mxu0 %v8233
        %8553 = vmatpush.msra.mxu0 %v8232
        %8554 = vmatpush.msra.mxu0 %v8231
        %8555 = vmatpush.msra.mxu0 %v8230
        %8556 = vmatpush.msra.mxu0 %v8229
        %8557 = vmatpush.msra.mxu0 %v8228
        %8558 = vmatmul.f32.gmra.mxu0 %v8143
        %v8559 = vpop.f32.mrf.mxu0
        %v8560 = vadd.f32 %v8531, %v8559
        %8561 = vmatmul.f32.gmra.mxu0 %v8146
        %v8562 = vpop.f32.mrf.mxu0
        %v8563 = vadd.f32 %v8534, %v8562
        %8564 = vmatmul.f32.gmra.mxu0 %v8149
        %v8565 = vpop.f32.mrf.mxu0
        %v8566 = vadd.f32 %v8537, %v8565
        %8567 = vmatmul.f32.gmra.mxu0 %v8152
        %v8568 = vpop.f32.mrf.mxu0
        %v8569 = vadd.f32 %v8540, %v8568
        %8570 = vdwg.mxu0
        %8571 = vmatpush.msra.mxu0 %v8259
        %8572 = vmatpush.msra.mxu0 %v8258
        %8573 = vmatpush.msra.mxu0 %v8257
        %8574 = vmatpush.msra.mxu0 %v8256
        %8575 = vmatpush.msra.mxu0 %v8255
        %8576 = vmatpush.msra.mxu0 %v8254
        %8577 = vmatpush.msra.mxu0 %v8253
        %8578 = vmatpush.msra.mxu0 %v8252
        %8579 = vmatpush.msra.mxu0 %v8251
        %8580 = vmatpush.msra.mxu0 %v8250
        %8581 = vmatpush.msra.mxu0 %v8249
        %8582 = vmatpush.msra.mxu0 %v8248
        %8583 = vmatpush.msra.mxu0 %v8247
        %8584 = vmatpush.msra.mxu0 %v8246
        %8585 = vmatpush.msra.mxu0 %v8245
        %8586 = vmatpush.msra.mxu0 %v8244
        %8587 = vmatmul.f32.gmra.mxu0 %v8172
        %v8588 = vpop.f32.mrf.mxu0
        %v8589 = vadd.f32 %v8560, %v8588
        %8590 = vmatmul.f32.gmra.mxu0 %v8175
        %v8591 = vpop.f32.mrf.mxu0
        %v8592 = vadd.f32 %v8563, %v8591
        %8593 = vmatmul.f32.gmra.mxu0 %v8178
        %v8594 = vpop.f32.mrf.mxu0
        %v8595 = vadd.f32 %v8566, %v8594
        %8596 = vmatmul.f32.gmra.mxu0 %v8181
        %v8597 = vpop.f32.mrf.mxu0
        %v8598 = vadd.f32 %v8569, %v8597
        %8599 = vdwg.mxu0
        %8600 = vmatpush.msra.mxu0 0.0
        %8601 = vmatpush.msra.mxu0 0.0
        %8602 = vmatpush.msra.mxu0 0.0
        %8603 = vmatpush.msra.mxu0 0.0
        %8604 = vmatpush.msra.mxu0 0.0
        %8605 = vmatpush.msra.mxu0 0.0
        %8606 = vmatpush.msra.mxu0 0.0
        %8607 = vmatpush.msra.mxu0 0.0
        %8608 = vmatpush.msra.mxu0 %v8267
        %8609 = vmatpush.msra.mxu0 %v8266
        %8610 = vmatpush.msra.mxu0 %v8265
        %8611 = vmatpush.msra.mxu0 %v8264
        %8612 = vmatpush.msra.mxu0 %v8263
        %8613 = vmatpush.msra.mxu0 %v8262
        %8614 = vmatpush.msra.mxu0 %v8261
        %8615 = vmatpush.msra.mxu0 %v8260
        %8616 = vmatmul.f32.gmra.mxu0 %v8505
        %v8617 = vpop.f32.mrf.mxu0
        %v8618 = vadd.f32 %v8589, %v8617
        %8619 = vmatmul.f32.gmra.mxu0 %v8507
        %v8620 = vpop.f32.mrf.mxu0
        %v8621 = vadd.f32 %v8592, %v8620
        %8622 = vmatmul.f32.gmra.mxu0 %v8509
        %v8623 = vpop.f32.mrf.mxu0
        %v8624 = vadd.f32 %v8595, %v8623
        %8625 = vmatmul.f32.gmra.mxu0 %v8511
        %v8626 = vpop.f32.mrf.mxu0
        %v8627 = vadd.f32 %v8598, %v8626
        %8628 = vdwg.mxu0
        %s8629 = scalar_lea.vmem %s55, 896
        %v8630 = vld [vmem:[%s8629] sm:$0xff]
        %v8631 = vld [vmem:[%s8629 + $0x8] sm:$0xff]
        %v8632 = vld [vmem:[%s8629 + $0x10] sm:$0xff]
        %v8633 = vld [vmem:[%s8629 + $0x18] sm:$0xff]
        %v8634 = vld [vmem:[%s8629 + $0x20] sm:$0xff]
        %v8635 = vld [vmem:[%s8629 + $0x28] sm:$0xff]
        %v8636 = vld [vmem:[%s8629 + $0x30] sm:$0xff]
        %v8637 = vld [vmem:[%s8629 + $0x38] sm:$0xff]
        %v8638 = vld [vmem:[%s8629 + $0x40] sm:$0xff]
        %v8639 = vld [vmem:[%s8629 + $0x48] sm:$0xff]
        %v8640 = vld [vmem:[%s8629 + $0x50] sm:$0xff]
        %v8641 = vld [vmem:[%s8629 + $0x58] sm:$0xff]
        %v8642 = vld [vmem:[%s8629 + $0x60] sm:$0xff]
        %v8643 = vld [vmem:[%s8629 + $0x68] sm:$0xff]
        %v8644 = vld [vmem:[%s8629 + $0x70] sm:$0xff]
        %v8645 = vld [vmem:[%s8629 + $0x78] sm:$0xff]
        %v8646 = vld [vmem:[%s8629 + $0x80] sm:$0xff]
        %v8647 = vld [vmem:[%s8629 + $0x88] sm:$0xff]
        %v8648 = vld [vmem:[%s8629 + $0x90] sm:$0xff]
        %v8649 = vld [vmem:[%s8629 + $0x98] sm:$0xff]
        %v8650 = vld [vmem:[%s8629 + $0xa0] sm:$0xff]
        %v8651 = vld [vmem:[%s8629 + $0xa8] sm:$0xff]
        %v8652 = vld [vmem:[%s8629 + $0xb0] sm:$0xff]
        %v8653 = vld [vmem:[%s8629 + $0xb8] sm:$0xff]
        %v8654 = vld [vmem:[%s8629 + $0xc0] sm:$0xff]
        %v8655 = vld [vmem:[%s8629 + $0xc8] sm:$0xff]
        %v8656 = vld [vmem:[%s8629 + $0xd0] sm:$0xff]
        %v8657 = vld [vmem:[%s8629 + $0xd8] sm:$0xff]
        %v8658 = vld [vmem:[%s8629 + $0xe0] sm:$0xff]
        %v8659 = vld [vmem:[%s8629 + $0xe8] sm:$0xff]
        %v8660 = vld [vmem:[%s8629 + $0xf0] sm:$0xff]
        %v8661 = vld [vmem:[%s8629 + $0xf8] sm:$0xff]
        %v8662 = vld [vmem:[%s8629 + $0x100] sm:$0xff]
        %v8663 = vld [vmem:[%s8629 + $0x108] sm:$0xff]
        %v8664 = vld [vmem:[%s8629 + $0x110] sm:$0xff]
        %v8665 = vld [vmem:[%s8629 + $0x118] sm:$0xff]
        %v8666 = vld [vmem:[%s8629 + $0x120] sm:$0xff]
        %v8667 = vld [vmem:[%s8629 + $0x128] sm:$0xff]
        %v8668 = vld [vmem:[%s8629 + $0x130] sm:$0xff]
        %v8669 = vld [vmem:[%s8629 + $0x138] sm:$0xff]
        %v8670 = vld [vmem:[%s8629 + $0x140] sm:$0xff]
        %v8671 = vld [vmem:[%s8629 + $0x148] sm:$0xff]
        %v8672 = vld [vmem:[%s8629 + $0x150] sm:$0xff]
        %v8673 = vld [vmem:[%s8629 + $0x158] sm:$0xff]
        %v8674 = vld [vmem:[%s8629 + $0x160] sm:$0xff]
        %v8675 = vld [vmem:[%s8629 + $0x168] sm:$0xff]
        %v8676 = vld [vmem:[%s8629 + $0x170] sm:$0xff]
        %v8677 = vld [vmem:[%s8629 + $0x178] sm:$0xff]
        %v8678 = vld [vmem:[%s8629 + $0x180] sm:$0xff]
        %v8679 = vld [vmem:[%s8629 + $0x188] sm:$0xff]
        %v8680 = vld [vmem:[%s8629 + $0x190] sm:$0xff]
        %v8681 = vld [vmem:[%s8629 + $0x198] sm:$0xff]
        %v8682 = vld [vmem:[%s8629 + $0x1a0] sm:$0xff]
        %v8683 = vld [vmem:[%s8629 + $0x1a8] sm:$0xff]
        %v8684 = vld [vmem:[%s8629 + $0x1b0] sm:$0xff]
        %v8685 = vld [vmem:[%s8629 + $0x1b8] sm:$0xff]
        %v8686 = vrot.slane %v8114, 2
        %v8687 = vrot.slane %v8117, 2
        %v8688 = vsel %vm1343, %v8686, %v8687
        %v8689 = vrot.slane %v8143, 2
        %v8690 = vrot.slane %v8146, 2
        %v8691 = vsel %vm1343, %v8689, %v8690
        %v8692 = vrot.slane %v8172, 2
        %v8693 = vrot.slane %v8175, 2
        %v8694 = vsel %vm1343, %v8692, %v8693
        %v8695 = vrot.slane %v8201, 2
        %v8696 = vrot.slane %v8204, 2
        %v8697 = vsel %vm1343, %v8695, %v8696
        %v8698 = vrot.slane %v8120, 2
        %v8699 = vsel %vm1343, %v8687, %v8698
        %v8700 = vrot.slane %v8149, 2
        %v8701 = vsel %vm1343, %v8690, %v8700
        %v8702 = vrot.slane %v8178, 2
        %v8703 = vsel %vm1343, %v8693, %v8702
        %v8704 = vrot.slane %v8207, 2
        %v8705 = vsel %vm1343, %v8696, %v8704
        %v8706 = vrot.slane %v8123, 2
        %v8707 = vsel %vm1343, %v8698, %v8706
        %v8708 = vrot.slane %v8152, 2
        %v8709 = vsel %vm1343, %v8700, %v8708
        %v8710 = vrot.slane %v8181, 2
        %v8711 = vsel %vm1343, %v8702, %v8710
        %v8712 = vrot.slane %v8210, 2
        %v8713 = vsel %vm1343, %v8704, %v8712
        %v8726 = vsel %vm1657, %v8697, 0
        %v8728 = vsel %vm1657, %v8705, 0
        %v8730 = vsel %vm1657, %v8713, 0
        %v8732 = vsel %vm1657, %v8712, 0
        %8734 = vmatpush.msra.mxu0 %v8645
        %8735 = vmatpush.msra.mxu0 %v8644
        %8736 = vmatpush.msra.mxu0 %v8643
        %8737 = vmatpush.msra.mxu0 %v8642
        %8738 = vmatpush.msra.mxu0 %v8641
        %8739 = vmatpush.msra.mxu0 %v8640
        %8740 = vmatpush.msra.mxu0 %v8639
        %8741 = vmatpush.msra.mxu0 %v8638
        %8742 = vmatpush.msra.mxu0 %v8637
        %8743 = vmatpush.msra.mxu0 %v8636
        %8744 = vmatpush.msra.mxu0 %v8635
        %8745 = vmatpush.msra.mxu0 %v8634
        %8746 = vmatpush.msra.mxu0 %v8633
        %8747 = vmatpush.msra.mxu0 %v8632
        %8748 = vmatpush.msra.mxu0 %v8631
        %8749 = vmatpush.msra.mxu0 %v8630
        %8750 = vmatmul.f32.gmra.mxu0 %v8688
        %v8751 = vpop.f32.mrf.mxu0
        %v8752 = vadd.f32 0.0, %v8751
        %8753 = vmatmul.f32.gmra.mxu0 %v8699
        %v8754 = vpop.f32.mrf.mxu0
        %v8755 = vadd.f32 0.0, %v8754
        %8756 = vmatmul.f32.gmra.mxu0 %v8707
        %v8757 = vpop.f32.mrf.mxu0
        %v8758 = vadd.f32 0.0, %v8757
        %8759 = vmatmul.f32.gmra.mxu0 %v8706
        %v8760 = vpop.f32.mrf.mxu0
        %v8761 = vadd.f32 0.0, %v8760
        %8762 = vdwg.mxu0
        %8763 = vmatpush.msra.mxu0 %v8661
        %8764 = vmatpush.msra.mxu0 %v8660
        %8765 = vmatpush.msra.mxu0 %v8659
        %8766 = vmatpush.msra.mxu0 %v8658
        %8767 = vmatpush.msra.mxu0 %v8657
        %8768 = vmatpush.msra.mxu0 %v8656
        %8769 = vmatpush.msra.mxu0 %v8655
        %8770 = vmatpush.msra.mxu0 %v8654
        %8771 = vmatpush.msra.mxu0 %v8653
        %8772 = vmatpush.msra.mxu0 %v8652
        %8773 = vmatpush.msra.mxu0 %v8651
        %8774 = vmatpush.msra.mxu0 %v8650
        %8775 = vmatpush.msra.mxu0 %v8649
        %8776 = vmatpush.msra.mxu0 %v8648
        %8777 = vmatpush.msra.mxu0 %v8647
        %8778 = vmatpush.msra.mxu0 %v8646
        %8779 = vmatmul.f32.gmra.mxu0 %v8691
        %v8780 = vpop.f32.mrf.mxu0
        %v8781 = vadd.f32 %v8752, %v8780
        %8782 = vmatmul.f32.gmra.mxu0 %v8701
        %v8783 = vpop.f32.mrf.mxu0
        %v8784 = vadd.f32 %v8755, %v8783
        %8785 = vmatmul.f32.gmra.mxu0 %v8709
        %v8786 = vpop.f32.mrf.mxu0
        %v8787 = vadd.f32 %v8758, %v8786
        %8788 = vmatmul.f32.gmra.mxu0 %v8708
        %v8789 = vpop.f32.mrf.mxu0
        %v8790 = vadd.f32 %v8761, %v8789
        %8791 = vdwg.mxu0
        %8792 = vmatpush.msra.mxu0 %v8677
        %8793 = vmatpush.msra.mxu0 %v8676
        %8794 = vmatpush.msra.mxu0 %v8675
        %8795 = vmatpush.msra.mxu0 %v8674
        %8796 = vmatpush.msra.mxu0 %v8673
        %8797 = vmatpush.msra.mxu0 %v8672
        %8798 = vmatpush.msra.mxu0 %v8671
        %8799 = vmatpush.msra.mxu0 %v8670
        %8800 = vmatpush.msra.mxu0 %v8669
        %8801 = vmatpush.msra.mxu0 %v8668
        %8802 = vmatpush.msra.mxu0 %v8667
        %8803 = vmatpush.msra.mxu0 %v8666
        %8804 = vmatpush.msra.mxu0 %v8665
        %8805 = vmatpush.msra.mxu0 %v8664
        %8806 = vmatpush.msra.mxu0 %v8663
        %8807 = vmatpush.msra.mxu0 %v8662
        %8808 = vmatmul.f32.gmra.mxu0 %v8694
        %v8809 = vpop.f32.mrf.mxu0
        %v8810 = vadd.f32 %v8781, %v8809
        %8811 = vmatmul.f32.gmra.mxu0 %v8703
        %v8812 = vpop.f32.mrf.mxu0
        %v8813 = vadd.f32 %v8784, %v8812
        %8814 = vmatmul.f32.gmra.mxu0 %v8711
        %v8815 = vpop.f32.mrf.mxu0
        %v8816 = vadd.f32 %v8787, %v8815
        %8817 = vmatmul.f32.gmra.mxu0 %v8710
        %v8818 = vpop.f32.mrf.mxu0
        %v8819 = vadd.f32 %v8790, %v8818
        %8820 = vdwg.mxu0
        %8821 = vmatpush.msra.mxu0 0.0
        %8822 = vmatpush.msra.mxu0 0.0
        %8823 = vmatpush.msra.mxu0 0.0
        %8824 = vmatpush.msra.mxu0 0.0
        %8825 = vmatpush.msra.mxu0 0.0
        %8826 = vmatpush.msra.mxu0 0.0
        %8827 = vmatpush.msra.mxu0 0.0
        %8828 = vmatpush.msra.mxu0 0.0
        %8829 = vmatpush.msra.mxu0 %v8685
        %8830 = vmatpush.msra.mxu0 %v8684
        %8831 = vmatpush.msra.mxu0 %v8683
        %8832 = vmatpush.msra.mxu0 %v8682
        %8833 = vmatpush.msra.mxu0 %v8681
        %8834 = vmatpush.msra.mxu0 %v8680
        %8835 = vmatpush.msra.mxu0 %v8679
        %8836 = vmatpush.msra.mxu0 %v8678
        %8837 = vmatmul.f32.gmra.mxu0 %v8726
        %v8838 = vpop.f32.mrf.mxu0
        %v8839 = vadd.f32 %v8810, %v8838
        %8840 = vmatmul.f32.gmra.mxu0 %v8728
        %v8841 = vpop.f32.mrf.mxu0
        %v8842 = vadd.f32 %v8813, %v8841
        %8843 = vmatmul.f32.gmra.mxu0 %v8730
        %v8844 = vpop.f32.mrf.mxu0
        %v8845 = vadd.f32 %v8816, %v8844
        %8846 = vmatmul.f32.gmra.mxu0 %v8732
        %v8847 = vpop.f32.mrf.mxu0
        %v8848 = vadd.f32 %v8819, %v8847
        %8849 = vdwg.mxu0
        %v8850 = vadd.f32 %v8618, %v8839
        %v8851 = vadd.f32 %v8621, %v8842
        %v8852 = vadd.f32 %v8624, %v8845
        %v8853 = vadd.f32 %v8627, %v8848
        %v8854 = vld [vmem:[%s57] sm:$0x1]
        %v8856 = vperm.slane %v8854, 0
        %v8858 = vadd.f32 %v8850, %v8856
        %v8859 = vadd.f32 %v8851, %v8856
        %v8860 = vadd.f32 %v8852, %v8856
        %v8861 = vadd.f32 %v8853, %v8856
        %v8862 = vxor.u32 %v8858, 2147483648
        %v8863 = vxor.u32 %v8859, 2147483648
        %v8864 = vxor.u32 %v8860, 2147483648
        %v8865 = vxor.u32 %v8861, 2147483648
        %v8866 = vmul.f32 %v8862, 1.442695
        %v8867 = vpow.pop %v8866
        %v8868 = vmul.f32 %v8863, 1.442695
        %v8869 = vpow.pop %v8868
        %v8870 = vmul.f32 %v8864, 1.442695
        %v8871 = vpow.pop %v8870
        %v8872 = vmul.f32 %v8865, 1.442695
        %v8873 = vpow.pop %v8872
        %v8874 = vadd.f32 %v8867, 1.0
        %v8875 = vadd.f32 %v8869, 1.0
        %v8876 = vadd.f32 %v8871, 1.0
        %v8877 = vadd.f32 %v8873, 1.0
        %v8878 = vrcp.pop %v8874
        %v8879 = vmul.f32 %v8874, %v8878
        %v8880 = vsub.f32 1.0, %v8879
        %v8881 = vmul.f32 %v8878, %v8880
        %v8882 = vadd.f32 %v8878, %v8881
        %vm8883 = vweird.f32 %v8874
        %vm8884 = vweird.f32 %v8878
        %vm8885 = vmor %vm8883, %vm8884
        %v8886 = vsel %vm8885, %v8878, %v8882
        %v8887 = vand.u32 2147483647, %v8874
        %vm8888 = vcmp.eq.f32.partialorder %v8887, 8.507059e+37
        %v8889 = vand.u32 %v8874, 2147483648
        %v8890 = vor.u32 1.1754944e-38, %v8889
        %v8891 = vsel %vm8888, %v8890, %v8886
        %v8892 = vmul.f32 1.0, %v8891
        %v8893 = vrcp.pop %v8875
        %v8894 = vmul.f32 %v8875, %v8893
        %v8895 = vsub.f32 1.0, %v8894
        %v8896 = vmul.f32 %v8893, %v8895
        %v8897 = vadd.f32 %v8893, %v8896
        %vm8898 = vweird.f32 %v8875
        %vm8899 = vweird.f32 %v8893
        %vm8900 = vmor %vm8898, %vm8899
        %v8901 = vsel %vm8900, %v8893, %v8897
        %v8902 = vand.u32 2147483647, %v8875
        %vm8903 = vcmp.eq.f32.partialorder %v8902, 8.507059e+37
        %v8904 = vand.u32 %v8875, 2147483648
        %v8905 = vor.u32 1.1754944e-38, %v8904
        %v8906 = vsel %vm8903, %v8905, %v8901
        %v8907 = vmul.f32 1.0, %v8906
        %v8908 = vrcp.pop %v8876
        %v8909 = vmul.f32 %v8876, %v8908
        %v8910 = vsub.f32 1.0, %v8909
        %v8911 = vmul.f32 %v8908, %v8910
        %v8912 = vadd.f32 %v8908, %v8911
        %vm8913 = vweird.f32 %v8876
        %vm8914 = vweird.f32 %v8908
        %vm8915 = vmor %vm8913, %vm8914
        %v8916 = vsel %vm8915, %v8908, %v8912
        %v8917 = vand.u32 2147483647, %v8876
        %vm8918 = vcmp.eq.f32.partialorder %v8917, 8.507059e+37
        %v8919 = vand.u32 %v8876, 2147483648
        %v8920 = vor.u32 1.1754944e-38, %v8919
        %v8921 = vsel %vm8918, %v8920, %v8916
        %v8922 = vmul.f32 1.0, %v8921
        %v8923 = vrcp.pop %v8877
        %v8924 = vmul.f32 %v8877, %v8923
        %v8925 = vsub.f32 1.0, %v8924
        %v8926 = vmul.f32 %v8923, %v8925
        %v8927 = vadd.f32 %v8923, %v8926
        %vm8928 = vweird.f32 %v8877
        %vm8929 = vweird.f32 %v8923
        %vm8930 = vmor %vm8928, %vm8929
        %v8931 = vsel %vm8930, %v8923, %v8927
        %v8932 = vand.u32 2147483647, %v8877
        %vm8933 = vcmp.eq.f32.partialorder %v8932, 8.507059e+37
        %v8934 = vand.u32 %v8877, 2147483648
        %v8935 = vor.u32 1.1754944e-38, %v8934
        %v8936 = vsel %vm8933, %v8935, %v8931
        %v8937 = vmul.f32 1.0, %v8936
        %v8938 = vmul.f32 %v8892, 2.0
        %v8939 = vmul.f32 %v8907, 2.0
        %v8940 = vmul.f32 %v8922, 2.0
        %v8941 = vmul.f32 %v8937, 2.0
        %v8942 = vsub.f32 %v8938, 0.5
        %v8943 = vsub.f32 %v8939, 0.5
        %v8944 = vsub.f32 %v8940, 0.5
        %v8945 = vsub.f32 %v8941, 0.5
        %8946 = vst.msk [vmem:[%s1002] sm:$0xff] %vm1052, %v8942
        %8947 = vst.msk [vmem:[%s1002 + $0x8] sm:$0xff] %vm1052, %v8943
        %8948 = vst.msk [vmem:[%s1002 + $0x10] sm:$0xff] %vm1052, %v8944
        %vm8949 = vcmask 224256
        %8950 = vst.msk [vmem:[%s1002 + $0x18] sm:$0xf] %vm8949, %v8945
        %p8951 = scmp.lt.s32.totalorder %s74, 1
        %s8952 = scalar_select %p8951, %s74, 1
        %s8953 = smul.addr %s8952, 4
        %s8954 = smul.addr %s8953, 8
        %s8955 = scalar_lea.vmem %s59, %s8954
        // Predicated region
        $region161: #{ae_forward.1} parent=135 // pred_check
          %p8956 = pneg %p706
        $region162: #{ae_forward.1} parent=135 // pred_check_branch
          %8958 = sbr.rel (%p8956) target = $region164
        $region163: #{ae_forward.1} parent=135 // pred_region
          _
        $region164: #{ae_forward.1} parent=135 // pred_fallthru
          _
      $region136: #{ae_forward.1} parent=5 // pred_fallthru
        _
      %p8959 = scmp.le.s32.totalorder 2, %s69
      // Predicated region
      $region165: #{ae_forward.1} parent=5 // pred_check
        %p8960 = pneg %p8959
      $region166: #{ae_forward.1} parent=5 // pred_check_branch
        %8962 = sbr.rel (%p8960) target = $region168
      $region167: #{ae_forward.1} parent=5 // pred_region
        %s8963 = ssub.s32 %s69, 2
        // Predicated region
        $region169: #{ae_forward.1} parent=167 // pred_check
          %p8964 = pneg %p712
        $region170: #{ae_forward.1} parent=167 // pred_check_branch
          %8966 = sbr.rel (%p8964) target = $region172
        $region171: #{ae_forward.1} parent=167 // pred_region
          %p8967 = scmp.lt.s32.totalorder %s75, 1
          %s8968 = scalar_select %p8967, %s75, 1
          %s8969 = smul.addr %s8968, 4
          %s8970 = smul.addr %s8969, 8
          %s8971 = scalar_lea.vmem %s59, %s8970
        $region172: #{ae_forward.1} parent=167 // pred_fallthru
          _
      $region168: #{ae_forward.1} parent=5 // pred_fallthru
        _
    $region6: #{ae_forward.1} parent=1 // loop_footer
      %s73 = sadd.s32 1, %s69
    $region7: #{ae_forward.1} parent=1 // loop_footer_branch
      %68 = sbr.rel target = $region3
    $region8: #{ae_forward.1} parent=1 // loop_exit
      _
    %8972 = vsyncpa [#allocation4], 1
    %s8973 = scalar_lea.sflag [#allocation4], 1
    %8974 = vsyncpa %s8973, 1
    %8975 = vsyncpa [#allocation6], 1
    %8976 = vsyncpa [#allocation9], 1
    %8977 = vsyncpa [#allocation12], 1

</llo_original>
